<compile_context>
chip_gen: v7x
topology: tpu7x:2x2x1
jax: 0.10.0
libtpu: 0.0.40
codegen_flags: <defaults>
</compile_context>

<pallas_src>
import math
from functools import partial

import numpy as np
import jax
import jax.numpy as jnp
from jax.experimental import pallas as pl
from jax.experimental.pallas import tpu as pltpu

LN_EPS = 1e-5  # DenseTNT LayerNorm variance_epsilon


# ---------------------------------------------------------------------------
# In-kernel building blocks (pure jnp, traced inside the Pallas kernels)
# ---------------------------------------------------------------------------
def _layer_norm(x, gamma, beta):
    u = jnp.mean(x, axis=-1, keepdims=True)
    s = jnp.mean((x - u) ** 2, axis=-1, keepdims=True)
    return (x - u) * jax.lax.rsqrt(s + LN_EPS) * gamma + beta


# ---------------------------------------------------------------------------
# Kernels
# ---------------------------------------------------------------------------
def _subgraph_kernel(x_ref, mask_ref,
                     wm_ref, auxm_ref, wqkv_ref, bqkv_ref, ln2_ref,
                     out_ref, *, depth, num_heads):
    """G polylines per grid step: x [G,N,H], mask [G,N,N] -> encodings [G,H]."""
    G, N, H = x_ref.shape
    hd = H // num_heads
    scale = 1.0 / math.sqrt(hd)

    # Additive attention bias, computed ONCE and reused by every depth layer.
    bias = (1.0 - mask_ref[...]) * (-10000.0)                       # [G, N, N]

    h = x_ref[...].reshape(G * N, H)                                # all vectors as rows

    # layer_0 / layer_0_again: Linear -> LayerNorm -> ReLU, batched over all rows
    for i in range(2):
        aux = auxm_ref[i]                                           # [3, H]: bias, gamma, beta
        h = jnp.dot(h, wm_ref[i], preferred_element_type=jnp.float32) + aux[0:1, :]
        h = _layer_norm(h, aux[1:2, :], aux[2:3, :])
        h = jnp.maximum(h, 0.0)

    for d in range(depth):
        temp = h
        # fused q|k|v projection: one [H, 3H] matmul instead of three [H, H] ones
        qkv = jnp.dot(h, wqkv_ref[d], preferred_element_type=jnp.float32) + bqkv_ref[d]
        qkv = qkv.reshape(G, N, 3 * H)
        outs = []
        for hh in range(num_heads):                                 # static 2-iteration loop
            q = qkv[..., hh * hd:(hh + 1) * hd] * scale             # [G, N, hd]
            k = qkv[..., H + hh * hd:H + (hh + 1) * hd]
            v = qkv[..., 2 * H + hh * hd:2 * H + (hh + 1) * hd]
            s = jnp.einsum('gnd,gmd->gnm', q, k,
                           preferred_element_type=jnp.float32) + bias
            p = jax.nn.softmax(s, axis=-1)
            outs.append(jnp.einsum('gnm,gmd->gnd', p, v,
                                   preferred_element_type=jnp.float32))
        att = jnp.concatenate(outs, axis=-1).reshape(G * N, H)
        h = jnp.maximum(att, 0.0) + temp                            # ReLU, residual
        ln = ln2_ref[d]                                             # [2, H]: gamma, beta
        h = _layer_norm(h, ln[0:1, :], ln[1:2, :])

    # torch.max(hidden_states, dim=1)[0]  (padded rows included, as in reference)
    out_ref[...] = jnp.max(h.reshape(G, N, H), axis=1)              # [G, H]


def _global_kernel(es_ref, onehot_ref, gmask_ref, wqkv_ref, bqkv_ref, out_ref):
    """Fused merge_tensors + 1-head GlobalGraph over all samples in one step."""
    B, P, _ = gmask_ref.shape
    H = es_ref.shape[-1]
    scale = 1.0 / math.sqrt(H)                                      # 1 head -> head size == H

    # fused merge: inputs[b, p] = element_states[span_b + p]  (0 for padding)
    x = jnp.dot(onehot_ref[...], es_ref[...],
                preferred_element_type=jnp.float32)                 # [B*P, H]
    qkv = jnp.dot(x, wqkv_ref[...], preferred_element_type=jnp.float32) + bqkv_ref[...]
    qkv = qkv.reshape(B, P, 3 * H)
    q = qkv[..., :H] * scale
    k = qkv[..., H:2 * H]
    v = qkv[..., 2 * H:]
    bias = (1.0 - gmask_ref[...]) * (-10000.0)                      # [B, P, P]
    s = jnp.einsum('bpd,bqd->bpq', q, k, preferred_element_type=jnp.float32) + bias
    p = jax.nn.softmax(s, axis=-1)
    out_ref[...] = jnp.einsum('bpq,bqd->bpd', p, v, preferred_element_type=jnp.float32)


# ---------------------------------------------------------------------------
# Wrappers
# ---------------------------------------------------------------------------
def _const_spec(arr):
    nd = arr.ndim
    return pl.BlockSpec(arr.shape, lambda i, _n=nd: (0,) * _n)


def subgraph_forward(x, mask, p, *, depth, num_heads=2, g=None):
    """x: [TP, N, H] padded polyline vectors; mask: [TP, N, N] (square fill)."""
    TP, N, H = x.shape
    if g is None:
        g = TP                 # whole problem in one grid step at toy sizes
    assert TP % g == 0         # for realistic sizes pick g so 2*g*(N*H+N*N)*4 << VMEM
    weights = [p['w_mlp'], p['aux_mlp'], p['w_qkv'], p['b_qkv'], p['ln2']]
    return pl.pallas_call(
        partial(_subgraph_kernel, depth=depth, num_heads=num_heads),
        out_shape=jax.ShapeDtypeStruct((TP, H), jnp.float32),
        grid=(TP // g,),
        in_specs=[pl.BlockSpec((g, N, H), lambda i: (i, 0, 0)),
                  pl.BlockSpec((g, N, N), lambda i: (i, 0, 0))]
                 + [_const_spec(a) for a in weights],
        out_specs=pl.BlockSpec((g, H), lambda i: (i, 0)),
        compiler_params=pltpu.CompilerParams(dimension_semantics=("parallel",)),
    )(x, mask, *weights)


def global_forward(element_states, onehot, gmask, p):
    """element_states: [TP, H]; onehot: [B*P, TP] gather matrix; gmask: [B, P, P]."""
    B, P, _ = gmask.shape
    H = element_states.shape[-1]
    weights = [p['w_qkv'], p['b_qkv']]
    return pl.pallas_call(
        _global_kernel,
        out_shape=jax.ShapeDtypeStruct((B, P, H), jnp.float32),
        grid=(1,),
        in_specs=[_const_spec(element_states), _const_spec(onehot), _const_spec(gmask)]
                 + [_const_spec(a) for a in weights],
        out_specs=pl.BlockSpec((B, P, H), lambda i: (0, 0, 0)),
    )(element_states, onehot, gmask, *weights)


# ---------------------------------------------------------------------------
# Deterministic parameter initialization (shapes implied by the module __init__),
# packed into a few stacked slabs for fewer kernel operands.
# ---------------------------------------------------------------------------
def init_params(key, hidden, depth):
    ks = jax.random.split(key, 6)
    H = hidden

    def w(k, shape):
        return (0.02 * jax.random.normal(k, shape)).astype(jnp.float32)

    # per-MLP vectors packed as [2, 3, H]: row0 linear bias, row1 LN gamma, row2 LN beta
    aux_mlp = jnp.stack([
        jnp.stack([w(jax.random.fold_in(ks[1], i), (H,)),
                   jnp.ones((H,), jnp.float32),
                   jnp.zeros((H,), jnp.float32)])
        for i in range(2)])
    # layers_2 LayerNorm packed as [depth, 2, H]: gamma, beta
    ln2 = jnp.stack([jnp.stack([jnp.ones((H,), jnp.float32),
                                jnp.zeros((H,), jnp.float32)])
                     for _ in range(depth)])
    sub = dict(
        w_mlp=w(ks[0], (2, H, H)),               # layer_0, layer_0_again linear weights
        aux_mlp=aux_mlp,
        w_qkv=w(ks[2], (depth, H, 3 * H)),       # fused q|k|v for the 2-head attention
        b_qkv=w(ks[3], (depth, 1, 3 * H)),
        ln2=ln2,
        # NOTE: layers_3 / layers_4 are defined in __init__ but unused in forward.
    )
    glob = dict(
        w_qkv=w(ks[4], (H, 3 * H)),              # GlobalGraph (1 head) fused q|k|v
        b_qkv=jnp.zeros((1, 3 * H), jnp.float32),
    )
    return sub, glob


# ---------------------------------------------------------------------------
# Driver
# ---------------------------------------------------------------------------
if __name__ == "__main__":
    H = 32       # hidden_size
    DEPTH = 3    # args.sub_graph_depth
    N = 8        # max vectors per polyline (each sample has at least one full polyline)
    B = 2

    # per-sample vector counts per polyline (ragged, like polyline_spans)
    vec_lengths = [[8, 6, 5, 8], [7, 4, 8]]
    poly_lengths = [len(s) for s in vec_lengths]
    flat_lengths = [l for sample in vec_lengths for l in sample]
    TP = len(flat_lengths)
    P = max(poly_lengths)                       # max_poly_num
    TP_PAD = -(-TP // 8) * 8                    # pad polyline count to a sublane multiple

    key = jax.random.PRNGKey(0)
    k_par, k_dat = jax.random.split(key)
    sub_p, glob_p = init_params(k_par, H, DEPTH)

    # --- padded polyline vectors [TP_PAD,N,H] + square masks (merge_tensors) ---
    kdat = jax.random.split(k_dat, TP)
    x_np = np.zeros((TP_PAD, N, H), np.float32)
    m_np = np.zeros((TP_PAD, N, N), np.float32)
    for idx, ln in enumerate(flat_lengths):
        x_np[idx, :ln, :] = np.asarray(
            0.1 * jax.random.normal(kdat[idx], (ln, H), dtype=jnp.float32))
        m_np[idx, :ln, :ln] = 1.0
    x = jnp.asarray(x_np)
    amask = jnp.asarray(m_np)

    # --- per-sample merge (one-hot gather, consumed inside the global kernel) ---
    onehot_np = np.zeros((B * P, TP_PAD), np.float32)
    gmask_np = np.zeros((B, P, P), np.float32)
    off = 0
    for b, npoly in enumerate(poly_lengths):
        for j in range(npoly):
            onehot_np[b * P + j, off + j] = 1.0
        # faithful to reference: attention_mask[i][:length][:length].fill_(1)
        # (double row-slice -> fills the first `length` ROWS entirely)
        gmask_np[b, :npoly, :] = 1.0
        off += npoly
    onehot = jnp.asarray(onehot_np)
    gmask = jnp.asarray(gmask_np)

    # --- point-level sub graph (NewSubGraph), whole slab in one grid step ---
    element_states = subgraph_forward(x, amask, sub_p, depth=DEPTH)   # [TP_PAD, H]

    # --- fused merge + global graph (GlobalGraph, 1 head) ---
    hidden_states = global_forward(element_states, onehot, gmask, glob_p)  # [B, P, H]
    hidden_states = jax.block_until_ready(hidden_states)

    # TODO(synk): the Decoder class (and NewSubGraph's second, de-merged return value)
    # are not part of the provided reference module; the pipeline stops at the
    # global-graph hidden states, matching `self.global_graph(inputs, attention_mask)`.

    assert hidden_states.shape == (B, P, H)
    assert bool(jnp.all(jnp.isfinite(hidden_states)))
    print("KERNEL_OK")
</pallas_src>

<mosaic_0001>
module attributes {stable_mosaic.version = 11 : i64} {
  func.func @_subgraph_kernel(%arg0: i32, %arg1: memref<8x8x32xf32, #tpu.memory_space<vmem>>, %arg2: memref<8x8x8xf32, #tpu.memory_space<vmem>>, %arg3: memref<2x32x32xf32, #tpu.memory_space<vmem>>, %arg4: memref<2x3x32xf32, #tpu.memory_space<vmem>>, %arg5: memref<3x32x96xf32, #tpu.memory_space<vmem>>, %arg6: memref<3x1x96xf32, #tpu.memory_space<vmem>>, %arg7: memref<3x2x32xf32, #tpu.memory_space<vmem>>, %arg8: memref<8x32xf32, #tpu.memory_space<vmem>>) attributes {dimension_semantics = [#tpu.dimension_semantics<parallel>], iteration_bounds = array<i64: 1>, scalar_prefetch = 0 : i64, scratch_operands = 0 : i64, tpu.core_type = #tpu.core_type<tc>, window_params = [{transform_indices = @transform_0, window_bounds = array<i64: 8, 8, 32>}, {transform_indices = @transform_1, window_bounds = array<i64: 8, 8, 8>}, {pipeline_mode = #tpu.pipeline_mode<synchronous>, transform_indices = @transform_2, window_bounds = array<i64: 2, 32, 32>}, {pipeline_mode = #tpu.pipeline_mode<synchronous>, transform_indices = @transform_3, window_bounds = array<i64: 2, 3, 32>}, {pipeline_mode = #tpu.pipeline_mode<synchronous>, transform_indices = @transform_4, window_bounds = array<i64: 3, 32, 96>}, {pipeline_mode = #tpu.pipeline_mode<synchronous>, transform_indices = @transform_5, window_bounds = array<i64: 3, 1, 96>}, {pipeline_mode = #tpu.pipeline_mode<synchronous>, transform_indices = @transform_6, window_bounds = array<i64: 3, 2, 32>}, {transform_indices = @transform_7, window_bounds = array<i64: 8, 32>}]} {
    %c0 = arith.constant 0 : index
    %c0_0 = arith.constant 0 : index
    %c0_1 = arith.constant 0 : index
    %0 = vector.load %arg2[%c0, %c0_0, %c0_1] : memref<8x8x8xf32, #tpu.memory_space<vmem>>, vector<8x8x8xf32>
    %cst = arith.constant 1.000000e+00 : f32
    %1 = vector.broadcast %cst : f32 to vector<8x8x8xf32>
    %2 = arith.subf %1, %0 : vector<8x8x8xf32>
    %cst_2 = arith.constant -1.000000e+04 : f32
    %3 = vector.broadcast %cst_2 : f32 to vector<8x8x8xf32>
    %4 = arith.mulf %2, %3 : vector<8x8x8xf32>
    %c0_3 = arith.constant 0 : index
    %c0_4 = arith.constant 0 : index
    %c0_5 = arith.constant 0 : index
    %5 = vector.load %arg1[%c0_3, %c0_4, %c0_5] : memref<8x8x32xf32, #tpu.memory_space<vmem>>, vector<8x8x32xf32>
    %6 = vector.shape_cast %5 : vector<8x8x32xf32> to vector<64x32xf32>
    %c0_6 = arith.constant 0 : index
    %c0_7 = arith.constant 0 : index
    %c0_8 = arith.constant 0 : index
    %7 = vector.load %arg4[%c0_6, %c0_7, %c0_8] : memref<2x3x32xf32, #tpu.memory_space<vmem>>, vector<1x3x32xf32>
    %8 = vector.shape_cast %7 : vector<1x3x32xf32> to vector<3x32xf32>
    %c0_9 = arith.constant 0 : index
    %c0_10 = arith.constant 0 : index
    %c0_11 = arith.constant 0 : index
    %9 = vector.load %arg3[%c0_9, %c0_10, %c0_11] : memref<2x32x32xf32, #tpu.memory_space<vmem>>, vector<1x32x32xf32>
    %10 = vector.shape_cast %9 : vector<1x32x32xf32> to vector<32x32xf32>
    %cst_12 = arith.constant dense<0.000000e+00> : vector<64x32xf32>
    %11 = tpu.matmul %6, %10, %cst_12 {dimension_numbers = #tpu.dot_dimension_numbers<[1], [0], [0], [1], [0, 0, 1, 1], [], []>} : vector<64x32xf32>, vector<32x32xf32>, vector<64x32xf32> -> vector<64x32xf32>
    %12 = vector.extract_strided_slice %8 {offsets = [0, 0], sizes = [1, 32], strides = [1, 1]} : vector<3x32xf32> to vector<1x32xf32>
    %13 = vector.broadcast %12 : vector<1x32xf32> to vector<64x32xf32>
    %14 = arith.addf %11, %13 : vector<64x32xf32>
    %15 = vector.extract_strided_slice %8 {offsets = [1, 0], sizes = [1, 32], strides = [1, 1]} : vector<3x32xf32> to vector<1x32xf32>
    %16 = vector.extract_strided_slice %8 {offsets = [2, 0], sizes = [1, 32], strides = [1, 1]} : vector<3x32xf32> to vector<1x32xf32>
    %cst_13 = arith.constant dense<0.000000e+00> : vector<64xf32>
    %17 = vector.multi_reduction <add>, %14, %cst_13 [1] : vector<64x32xf32> to vector<64xf32>
    %18 = vector.shape_cast %17 : vector<64xf32> to vector<64x1xf32>
    %cst_14 = arith.constant 3.200000e+01 : f32
    %19 = vector.broadcast %cst_14 : f32 to vector<64x1xf32>
    %20 = arith.divf %18, %19 : vector<64x1xf32>
    %21 = vector.broadcast %20 : vector<64x1xf32> to vector<64x32xf32>
    %22 = arith.subf %14, %21 : vector<64x32xf32>
    %23 = arith.mulf %22, %22 : vector<64x32xf32>
    %cst_15 = arith.constant dense<0.000000e+00> : vector<64xf32>
    %24 = vector.multi_reduction <add>, %23, %cst_15 [1] : vector<64x32xf32> to vector<64xf32>
    %25 = vector.shape_cast %24 : vector<64xf32> to vector<64x1xf32>
    %cst_16 = arith.constant 3.200000e+01 : f32
    %26 = vector.broadcast %cst_16 : f32 to vector<64x1xf32>
    %27 = arith.divf %25, %26 : vector<64x1xf32>
    %28 = vector.broadcast %20 : vector<64x1xf32> to vector<64x32xf32>
    %29 = arith.subf %14, %28 : vector<64x32xf32>
    %cst_17 = arith.constant 9.99999974E-6 : f32
    %30 = vector.broadcast %cst_17 : f32 to vector<64x1xf32>
    %31 = arith.addf %27, %30 : vector<64x1xf32>
    %32 = math.rsqrt %31 : vector<64x1xf32>
    %33 = vector.broadcast %32 : vector<64x1xf32> to vector<64x32xf32>
    %34 = arith.mulf %29, %33 : vector<64x32xf32>
    %35 = vector.broadcast %15 : vector<1x32xf32> to vector<64x32xf32>
    %36 = arith.mulf %34, %35 : vector<64x32xf32>
    %37 = vector.broadcast %16 : vector<1x32xf32> to vector<64x32xf32>
    %38 = arith.addf %36, %37 : vector<64x32xf32>
    %cst_18 = arith.constant 0.000000e+00 : f32
    %39 = vector.broadcast %cst_18 : f32 to vector<64x32xf32>
    %40 = arith.maximumf %38, %39 : vector<64x32xf32>
    %c1 = arith.constant 1 : index
    %c0_19 = arith.constant 0 : index
    %c0_20 = arith.constant 0 : index
    %41 = vector.load %arg4[%c1, %c0_19, %c0_20] : memref<2x3x32xf32, #tpu.memory_space<vmem>>, vector<1x3x32xf32>
    %42 = vector.shape_cast %41 : vector<1x3x32xf32> to vector<3x32xf32>
    %c1_21 = arith.constant 1 : index
    %c0_22 = arith.constant 0 : index
    %c0_23 = arith.constant 0 : index
    %43 = vector.load %arg3[%c1_21, %c0_22, %c0_23] : memref<2x32x32xf32, #tpu.memory_space<vmem>>, vector<1x32x32xf32>
    %44 = vector.shape_cast %43 : vector<1x32x32xf32> to vector<32x32xf32>
    %cst_24 = arith.constant dense<0.000000e+00> : vector<64x32xf32>
    %45 = tpu.matmul %40, %44, %cst_24 {dimension_numbers = #tpu.dot_dimension_numbers<[1], [0], [0], [1], [0, 0, 1, 1], [], []>} : vector<64x32xf32>, vector<32x32xf32>, vector<64x32xf32> -> vector<64x32xf32>
    %46 = vector.extract_strided_slice %42 {offsets = [0, 0], sizes = [1, 32], strides = [1, 1]} : vector<3x32xf32> to vector<1x32xf32>
    %47 = vector.broadcast %46 : vector<1x32xf32> to vector<64x32xf32>
    %48 = arith.addf %45, %47 : vector<64x32xf32>
    %49 = vector.extract_strided_slice %42 {offsets = [1, 0], sizes = [1, 32], strides = [1, 1]} : vector<3x32xf32> to vector<1x32xf32>
    %50 = vector.extract_strided_slice %42 {offsets = [2, 0], sizes = [1, 32], strides = [1, 1]} : vector<3x32xf32> to vector<1x32xf32>
    %cst_25 = arith.constant dense<0.000000e+00> : vector<64xf32>
    %51 = vector.multi_reduction <add>, %48, %cst_25 [1] : vector<64x32xf32> to vector<64xf32>
    %52 = vector.shape_cast %51 : vector<64xf32> to vector<64x1xf32>
    %cst_26 = arith.constant 3.200000e+01 : f32
    %53 = vector.broadcast %cst_26 : f32 to vector<64x1xf32>
    %54 = arith.divf %52, %53 : vector<64x1xf32>
    %55 = vector.broadcast %54 : vector<64x1xf32> to vector<64x32xf32>
    %56 = arith.subf %48, %55 : vector<64x32xf32>
    %57 = arith.mulf %56, %56 : vector<64x32xf32>
    %cst_27 = arith.constant dense<0.000000e+00> : vector<64xf32>
    %58 = vector.multi_reduction <add>, %57, %cst_27 [1] : vector<64x32xf32> to vector<64xf32>
    %59 = vector.shape_cast %58 : vector<64xf32> to vector<64x1xf32>
    %cst_28 = arith.constant 3.200000e+01 : f32
    %60 = vector.broadcast %cst_28 : f32 to vector<64x1xf32>
    %61 = arith.divf %59, %60 : vector<64x1xf32>
    %62 = vector.broadcast %54 : vector<64x1xf32> to vector<64x32xf32>
    %63 = arith.subf %48, %62 : vector<64x32xf32>
    %cst_29 = arith.constant 9.99999974E-6 : f32
    %64 = vector.broadcast %cst_29 : f32 to vector<64x1xf32>
    %65 = arith.addf %61, %64 : vector<64x1xf32>
    %66 = math.rsqrt %65 : vector<64x1xf32>
    %67 = vector.broadcast %66 : vector<64x1xf32> to vector<64x32xf32>
    %68 = arith.mulf %63, %67 : vector<64x32xf32>
    %69 = vector.broadcast %49 : vector<1x32xf32> to vector<64x32xf32>
    %70 = arith.mulf %68, %69 : vector<64x32xf32>
    %71 = vector.broadcast %50 : vector<1x32xf32> to vector<64x32xf32>
    %72 = arith.addf %70, %71 : vector<64x32xf32>
    %cst_30 = arith.constant 0.000000e+00 : f32
    %73 = vector.broadcast %cst_30 : f32 to vector<64x32xf32>
    %74 = arith.maximumf %72, %73 : vector<64x32xf32>
    %c0_31 = arith.constant 0 : index
    %c0_32 = arith.constant 0 : index
    %c0_33 = arith.constant 0 : index
    %75 = vector.load %arg5[%c0_31, %c0_32, %c0_33] : memref<3x32x96xf32, #tpu.memory_space<vmem>>, vector<1x32x96xf32>
    %76 = vector.shape_cast %75 : vector<1x32x96xf32> to vector<32x96xf32>
    %cst_34 = arith.constant dense<0.000000e+00> : vector<64x96xf32>
    %77 = tpu.matmul %74, %76, %cst_34 {dimension_numbers = #tpu.dot_dimension_numbers<[1], [0], [0], [1], [0, 0, 1, 1], [], []>} : vector<64x32xf32>, vector<32x96xf32>, vector<64x96xf32> -> vector<64x96xf32>
    %c0_35 = arith.constant 0 : index
    %c0_36 = arith.constant 0 : index
    %c0_37 = arith.constant 0 : index
    %78 = vector.load %arg6[%c0_35, %c0_36, %c0_37] : memref<3x1x96xf32, #tpu.memory_space<vmem>>, vector<1x1x96xf32>
    %79 = vector.shape_cast %78 : vector<1x1x96xf32> to vector<1x96xf32>
    %80 = vector.broadcast %79 : vector<1x96xf32> to vector<64x96xf32>
    %81 = arith.addf %77, %80 : vector<64x96xf32>
    %82 = vector.shape_cast %81 : vector<64x96xf32> to vector<8x8x96xf32>
    %83 = vector.extract_strided_slice %82 {offsets = [0, 0, 0], sizes = [8, 8, 16], strides = [1, 1, 1]} : vector<8x8x96xf32> to vector<8x8x16xf32>
    %cst_38 = arith.constant 2.500000e-01 : f32
    %84 = vector.broadcast %cst_38 : f32 to vector<8x8x16xf32>
    %85 = arith.mulf %83, %84 : vector<8x8x16xf32>
    %86 = vector.extract_strided_slice %82 {offsets = [0, 0, 32], sizes = [8, 8, 16], strides = [1, 1, 1]} : vector<8x8x96xf32> to vector<8x8x16xf32>
    %87 = vector.extract_strided_slice %82 {offsets = [0, 0, 64], sizes = [8, 8, 16], strides = [1, 1, 1]} : vector<8x8x96xf32> to vector<8x8x16xf32>
    "tpu.trace_start"() <{level = 10 : i32, message = "gnd,gmd->gnm"}> : () -> ()
    %cst_39 = arith.constant dense<0.000000e+00> : vector<8x8x8xf32>
    %88 = tpu.matmul %85, %86, %cst_39 {dimension_numbers = #tpu.dot_dimension_numbers<[2], [2], [1], [1], [0, 0, 0, 1, 1, 1], [0], [0]>} : vector<8x8x16xf32>, vector<8x8x16xf32>, vector<8x8x8xf32> -> vector<8x8x8xf32>
    "tpu.trace_stop"() : () -> ()
    %89 = arith.addf %88, %4 : vector<8x8x8xf32>
    %cst_40 = arith.constant dense<0xFF800000> : vector<8x8xf32>
    %90 = vector.multi_reduction <maximumf>, %89, %cst_40 [2] : vector<8x8x8xf32> to vector<8x8xf32>
    %cst_41 = arith.constant 0xFF800000 : f32
    %91 = vector.broadcast %cst_41 : f32 to vector<8x8xf32>
    %92 = arith.maximumf %91, %90 : vector<8x8xf32>
    %93 = vector.shape_cast %92 : vector<8x8xf32> to vector<8x8x1xf32>
    %94 = vector.broadcast %93 : vector<8x8x1xf32> to vector<8x8x8xf32>
    %95 = arith.subf %89, %94 : vector<8x8x8xf32>
    %96 = math.exp %95 : vector<8x8x8xf32>
    %cst_42 = arith.constant dense<0.000000e+00> : vector<8x8xf32>
    %97 = vector.multi_reduction <add>, %96, %cst_42 [2] : vector<8x8x8xf32> to vector<8x8xf32>
    %98 = vector.shape_cast %97 : vector<8x8xf32> to vector<8x8x1xf32>
    %99 = vector.broadcast %98 : vector<8x8x1xf32> to vector<8x8x8xf32>
    %100 = arith.divf %96, %99 : vector<8x8x8xf32>
    "tpu.trace_start"() <{level = 10 : i32, message = "gnm,gmd->gnd"}> : () -> ()
    %cst_43 = arith.constant dense<0.000000e+00> : vector<8x8x16xf32>
    %101 = tpu.matmul %100, %87, %cst_43 {dimension_numbers = #tpu.dot_dimension_numbers<[2], [1], [1], [2], [0, 0, 0, 1, 1, 2], [0], [0]>} : vector<8x8x8xf32>, vector<8x8x16xf32>, vector<8x8x16xf32> -> vector<8x8x16xf32>
    "tpu.trace_stop"() : () -> ()
    %102 = vector.extract_strided_slice %82 {offsets = [0, 0, 16], sizes = [8, 8, 16], strides = [1, 1, 1]} : vector<8x8x96xf32> to vector<8x8x16xf32>
    %cst_44 = arith.constant 2.500000e-01 : f32
    %103 = vector.broadcast %cst_44 : f32 to vector<8x8x16xf32>
    %104 = arith.mulf %102, %103 : vector<8x8x16xf32>
    %105 = vector.extract_strided_slice %82 {offsets = [0, 0, 48], sizes = [8, 8, 16], strides = [1, 1, 1]} : vector<8x8x96xf32> to vector<8x8x16xf32>
    %106 = vector.extract_strided_slice %82 {offsets = [0, 0, 80], sizes = [8, 8, 16], strides = [1, 1, 1]} : vector<8x8x96xf32> to vector<8x8x16xf32>
    "tpu.trace_start"() <{level = 10 : i32, message = "gnd,gmd->gnm"}> : () -> ()
    %cst_45 = arith.constant dense<0.000000e+00> : vector<8x8x8xf32>
    %107 = tpu.matmul %104, %105, %cst_45 {dimension_numbers = #tpu.dot_dimension_numbers<[2], [2], [1], [1], [0, 0, 0, 1, 1, 1], [0], [0]>} : vector<8x8x16xf32>, vector<8x8x16xf32>, vector<8x8x8xf32> -> vector<8x8x8xf32>
    "tpu.trace_stop"() : () -> ()
    %108 = arith.addf %107, %4 : vector<8x8x8xf32>
    %cst_46 = arith.constant dense<0xFF800000> : vector<8x8xf32>
    %109 = vector.multi_reduction <maximumf>, %108, %cst_46 [2] : vector<8x8x8xf32> to vector<8x8xf32>
    %cst_47 = arith.constant 0xFF800000 : f32
    %110 = vector.broadcast %cst_47 : f32 to vector<8x8xf32>
    %111 = arith.maximumf %110, %109 : vector<8x8xf32>
    %112 = vector.shape_cast %111 : vector<8x8xf32> to vector<8x8x1xf32>
    %113 = vector.broadcast %112 : vector<8x8x1xf32> to vector<8x8x8xf32>
    %114 = arith.subf %108, %113 : vector<8x8x8xf32>
    %115 = math.exp %114 : vector<8x8x8xf32>
    %cst_48 = arith.constant dense<0.000000e+00> : vector<8x8xf32>
    %116 = vector.multi_reduction <add>, %115, %cst_48 [2] : vector<8x8x8xf32> to vector<8x8xf32>
    %117 = vector.shape_cast %116 : vector<8x8xf32> to vector<8x8x1xf32>
    %118 = vector.broadcast %117 : vector<8x8x1xf32> to vector<8x8x8xf32>
    %119 = arith.divf %115, %118 : vector<8x8x8xf32>
    "tpu.trace_start"() <{level = 10 : i32, message = "gnm,gmd->gnd"}> : () -> ()
    %cst_49 = arith.constant dense<0.000000e+00> : vector<8x8x16xf32>
    %120 = tpu.matmul %119, %106, %cst_49 {dimension_numbers = #tpu.dot_dimension_numbers<[2], [1], [1], [2], [0, 0, 0, 1, 1, 2], [0], [0]>} : vector<8x8x8xf32>, vector<8x8x16xf32>, vector<8x8x16xf32> -> vector<8x8x16xf32>
    "tpu.trace_stop"() : () -> ()
    %121 = tpu.concatenate %101, %120 in 2 : vector<8x8x16xf32>, vector<8x8x16xf32> -> vector<8x8x32xf32>
    %122 = vector.shape_cast %121 : vector<8x8x32xf32> to vector<64x32xf32>
    %cst_50 = arith.constant 0.000000e+00 : f32
    %123 = vector.broadcast %cst_50 : f32 to vector<64x32xf32>
    %124 = arith.maximumf %122, %123 : vector<64x32xf32>
    %125 = arith.addf %124, %74 : vector<64x32xf32>
    %c0_51 = arith.constant 0 : index
    %c0_52 = arith.constant 0 : index
    %c0_53 = arith.constant 0 : index
    %126 = vector.load %arg7[%c0_51, %c0_52, %c0_53] : memref<3x2x32xf32, #tpu.memory_space<vmem>>, vector<1x2x32xf32>
    %127 = vector.shape_cast %126 : vector<1x2x32xf32> to vector<2x32xf32>
    %128 = vector.extract_strided_slice %127 {offsets = [0, 0], sizes = [1, 32], strides = [1, 1]} : vector<2x32xf32> to vector<1x32xf32>
    %129 = vector.extract_strided_slice %127 {offsets = [1, 0], sizes = [1, 32], strides = [1, 1]} : vector<2x32xf32> to vector<1x32xf32>
    %cst_54 = arith.constant dense<0.000000e+00> : vector<64xf32>
    %130 = vector.multi_reduction <add>, %125, %cst_54 [1] : vector<64x32xf32> to vector<64xf32>
    %131 = vector.shape_cast %130 : vector<64xf32> to vector<64x1xf32>
    %cst_55 = arith.constant 3.200000e+01 : f32
    %132 = vector.broadcast %cst_55 : f32 to vector<64x1xf32>
    %133 = arith.divf %131, %132 : vector<64x1xf32>
    %134 = vector.broadcast %133 : vector<64x1xf32> to vector<64x32xf32>
    %135 = arith.subf %125, %134 : vector<64x32xf32>
    %136 = arith.mulf %135, %135 : vector<64x32xf32>
    %cst_56 = arith.constant dense<0.000000e+00> : vector<64xf32>
    %137 = vector.multi_reduction <add>, %136, %cst_56 [1] : vector<64x32xf32> to vector<64xf32>
    %138 = vector.shape_cast %137 : vector<64xf32> to vector<64x1xf32>
    %cst_57 = arith.constant 3.200000e+01 : f32
    %139 = vector.broadcast %cst_57 : f32 to vector<64x1xf32>
    %140 = arith.divf %138, %139 : vector<64x1xf32>
    %141 = vector.broadcast %133 : vector<64x1xf32> to vector<64x32xf32>
    %142 = arith.subf %125, %141 : vector<64x32xf32>
    %cst_58 = arith.constant 9.99999974E-6 : f32
    %143 = vector.broadcast %cst_58 : f32 to vector<64x1xf32>
    %144 = arith.addf %140, %143 : vector<64x1xf32>
    %145 = math.rsqrt %144 : vector<64x1xf32>
    %146 = vector.broadcast %145 : vector<64x1xf32> to vector<64x32xf32>
    %147 = arith.mulf %142, %146 : vector<64x32xf32>
    %148 = vector.broadcast %128 : vector<1x32xf32> to vector<64x32xf32>
    %149 = arith.mulf %147, %148 : vector<64x32xf32>
    %150 = vector.broadcast %129 : vector<1x32xf32> to vector<64x32xf32>
    %151 = arith.addf %149, %150 : vector<64x32xf32>
    %c1_59 = arith.constant 1 : index
    %c0_60 = arith.constant 0 : index
    %c0_61 = arith.constant 0 : index
    %152 = vector.load %arg5[%c1_59, %c0_60, %c0_61] : memref<3x32x96xf32, #tpu.memory_space<vmem>>, vector<1x32x96xf32>
    %153 = vector.shape_cast %152 : vector<1x32x96xf32> to vector<32x96xf32>
    %cst_62 = arith.constant dense<0.000000e+00> : vector<64x96xf32>
    %154 = tpu.matmul %151, %153, %cst_62 {dimension_numbers = #tpu.dot_dimension_numbers<[1], [0], [0], [1], [0, 0, 1, 1], [], []>} : vector<64x32xf32>, vector<32x96xf32>, vector<64x96xf32> -> vector<64x96xf32>
    %c1_63 = arith.constant 1 : index
    %c0_64 = arith.constant 0 : index
    %c0_65 = arith.constant 0 : index
    %155 = vector.load %arg6[%c1_63, %c0_64, %c0_65] : memref<3x1x96xf32, #tpu.memory_space<vmem>>, vector<1x1x96xf32>
    %156 = vector.shape_cast %155 : vector<1x1x96xf32> to vector<1x96xf32>
    %157 = vector.broadcast %156 : vector<1x96xf32> to vector<64x96xf32>
    %158 = arith.addf %154, %157 : vector<64x96xf32>
    %159 = vector.shape_cast %158 : vector<64x96xf32> to vector<8x8x96xf32>
    %160 = vector.extract_strided_slice %159 {offsets = [0, 0, 0], sizes = [8, 8, 16], strides = [1, 1, 1]} : vector<8x8x96xf32> to vector<8x8x16xf32>
    %cst_66 = arith.constant 2.500000e-01 : f32
    %161 = vector.broadcast %cst_66 : f32 to vector<8x8x16xf32>
    %162 = arith.mulf %160, %161 : vector<8x8x16xf32>
    %163 = vector.extract_strided_slice %159 {offsets = [0, 0, 32], sizes = [8, 8, 16], strides = [1, 1, 1]} : vector<8x8x96xf32> to vector<8x8x16xf32>
    %164 = vector.extract_strided_slice %159 {offsets = [0, 0, 64], sizes = [8, 8, 16], strides = [1, 1, 1]} : vector<8x8x96xf32> to vector<8x8x16xf32>
    "tpu.trace_start"() <{level = 10 : i32, message = "gnd,gmd->gnm"}> : () -> ()
    %cst_67 = arith.constant dense<0.000000e+00> : vector<8x8x8xf32>
    %165 = tpu.matmul %162, %163, %cst_67 {dimension_numbers = #tpu.dot_dimension_numbers<[2], [2], [1], [1], [0, 0, 0, 1, 1, 1], [0], [0]>} : vector<8x8x16xf32>, vector<8x8x16xf32>, vector<8x8x8xf32> -> vector<8x8x8xf32>
    "tpu.trace_stop"() : () -> ()
    %166 = arith.addf %165, %4 : vector<8x8x8xf32>
    %cst_68 = arith.constant dense<0xFF800000> : vector<8x8xf32>
    %167 = vector.multi_reduction <maximumf>, %166, %cst_68 [2] : vector<8x8x8xf32> to vector<8x8xf32>
    %cst_69 = arith.constant 0xFF800000 : f32
    %168 = vector.broadcast %cst_69 : f32 to vector<8x8xf32>
    %169 = arith.maximumf %168, %167 : vector<8x8xf32>
    %170 = vector.shape_cast %169 : vector<8x8xf32> to vector<8x8x1xf32>
    %171 = vector.broadcast %170 : vector<8x8x1xf32> to vector<8x8x8xf32>
    %172 = arith.subf %166, %171 : vector<8x8x8xf32>
    %173 = math.exp %172 : vector<8x8x8xf32>
    %cst_70 = arith.constant dense<0.000000e+00> : vector<8x8xf32>
    %174 = vector.multi_reduction <add>, %173, %cst_70 [2] : vector<8x8x8xf32> to vector<8x8xf32>
    %175 = vector.shape_cast %174 : vector<8x8xf32> to vector<8x8x1xf32>
    %176 = vector.broadcast %175 : vector<8x8x1xf32> to vector<8x8x8xf32>
    %177 = arith.divf %173, %176 : vector<8x8x8xf32>
    "tpu.trace_start"() <{level = 10 : i32, message = "gnm,gmd->gnd"}> : () -> ()
    %cst_71 = arith.constant dense<0.000000e+00> : vector<8x8x16xf32>
    %178 = tpu.matmul %177, %164, %cst_71 {dimension_numbers = #tpu.dot_dimension_numbers<[2], [1], [1], [2], [0, 0, 0, 1, 1, 2], [0], [0]>} : vector<8x8x8xf32>, vector<8x8x16xf32>, vector<8x8x16xf32> -> vector<8x8x16xf32>
    "tpu.trace_stop"() : () -> ()
    %179 = vector.extract_strided_slice %159 {offsets = [0, 0, 16], sizes = [8, 8, 16], strides = [1, 1, 1]} : vector<8x8x96xf32> to vector<8x8x16xf32>
    %cst_72 = arith.constant 2.500000e-01 : f32
    %180 = vector.broadcast %cst_72 : f32 to vector<8x8x16xf32>
    %181 = arith.mulf %179, %180 : vector<8x8x16xf32>
    %182 = vector.extract_strided_slice %159 {offsets = [0, 0, 48], sizes = [8, 8, 16], strides = [1, 1, 1]} : vector<8x8x96xf32> to vector<8x8x16xf32>
    %183 = vector.extract_strided_slice %159 {offsets = [0, 0, 80], sizes = [8, 8, 16], strides = [1, 1, 1]} : vector<8x8x96xf32> to vector<8x8x16xf32>
    "tpu.trace_start"() <{level = 10 : i32, message = "gnd,gmd->gnm"}> : () -> ()
    %cst_73 = arith.constant dense<0.000000e+00> : vector<8x8x8xf32>
    %184 = tpu.matmul %181, %182, %cst_73 {dimension_numbers = #tpu.dot_dimension_numbers<[2], [2], [1], [1], [0, 0, 0, 1, 1, 1], [0], [0]>} : vector<8x8x16xf32>, vector<8x8x16xf32>, vector<8x8x8xf32> -> vector<8x8x8xf32>
    "tpu.trace_stop"() : () -> ()
    %185 = arith.addf %184, %4 : vector<8x8x8xf32>
    %cst_74 = arith.constant dense<0xFF800000> : vector<8x8xf32>
    %186 = vector.multi_reduction <maximumf>, %185, %cst_74 [2] : vector<8x8x8xf32> to vector<8x8xf32>
    %cst_75 = arith.constant 0xFF800000 : f32
    %187 = vector.broadcast %cst_75 : f32 to vector<8x8xf32>
    %188 = arith.maximumf %187, %186 : vector<8x8xf32>
    %189 = vector.shape_cast %188 : vector<8x8xf32> to vector<8x8x1xf32>
    %190 = vector.broadcast %189 : vector<8x8x1xf32> to vector<8x8x8xf32>
    %191 = arith.subf %185, %190 : vector<8x8x8xf32>
    %192 = math.exp %191 : vector<8x8x8xf32>
    %cst_76 = arith.constant dense<0.000000e+00> : vector<8x8xf32>
    %193 = vector.multi_reduction <add>, %192, %cst_76 [2] : vector<8x8x8xf32> to vector<8x8xf32>
    %194 = vector.shape_cast %193 : vector<8x8xf32> to vector<8x8x1xf32>
    %195 = vector.broadcast %194 : vector<8x8x1xf32> to vector<8x8x8xf32>
    %196 = arith.divf %192, %195 : vector<8x8x8xf32>
    "tpu.trace_start"() <{level = 10 : i32, message = "gnm,gmd->gnd"}> : () -> ()
    %cst_77 = arith.constant dense<0.000000e+00> : vector<8x8x16xf32>
    %197 = tpu.matmul %196, %183, %cst_77 {dimension_numbers = #tpu.dot_dimension_numbers<[2], [1], [1], [2], [0, 0, 0, 1, 1, 2], [0], [0]>} : vector<8x8x8xf32>, vector<8x8x16xf32>, vector<8x8x16xf32> -> vector<8x8x16xf32>
    "tpu.trace_stop"() : () -> ()
    %198 = tpu.concatenate %178, %197 in 2 : vector<8x8x16xf32>, vector<8x8x16xf32> -> vector<8x8x32xf32>
    %199 = vector.shape_cast %198 : vector<8x8x32xf32> to vector<64x32xf32>
    %cst_78 = arith.constant 0.000000e+00 : f32
    %200 = vector.broadcast %cst_78 : f32 to vector<64x32xf32>
    %201 = arith.maximumf %199, %200 : vector<64x32xf32>
    %202 = arith.addf %201, %151 : vector<64x32xf32>
    %c1_79 = arith.constant 1 : index
    %c0_80 = arith.constant 0 : index
    %c0_81 = arith.constant 0 : index
    %203 = vector.load %arg7[%c1_79, %c0_80, %c0_81] : memref<3x2x32xf32, #tpu.memory_space<vmem>>, vector<1x2x32xf32>
    %204 = vector.shape_cast %203 : vector<1x2x32xf32> to vector<2x32xf32>
    %205 = vector.extract_strided_slice %204 {offsets = [0, 0], sizes = [1, 32], strides = [1, 1]} : vector<2x32xf32> to vector<1x32xf32>
    %206 = vector.extract_strided_slice %204 {offsets = [1, 0], sizes = [1, 32], strides = [1, 1]} : vector<2x32xf32> to vector<1x32xf32>
    %cst_82 = arith.constant dense<0.000000e+00> : vector<64xf32>
    %207 = vector.multi_reduction <add>, %202, %cst_82 [1] : vector<64x32xf32> to vector<64xf32>
    %208 = vector.shape_cast %207 : vector<64xf32> to vector<64x1xf32>
    %cst_83 = arith.constant 3.200000e+01 : f32
    %209 = vector.broadcast %cst_83 : f32 to vector<64x1xf32>
    %210 = arith.divf %208, %209 : vector<64x1xf32>
    %211 = vector.broadcast %210 : vector<64x1xf32> to vector<64x32xf32>
    %212 = arith.subf %202, %211 : vector<64x32xf32>
    %213 = arith.mulf %212, %212 : vector<64x32xf32>
    %cst_84 = arith.constant dense<0.000000e+00> : vector<64xf32>
    %214 = vector.multi_reduction <add>, %213, %cst_84 [1] : vector<64x32xf32> to vector<64xf32>
    %215 = vector.shape_cast %214 : vector<64xf32> to vector<64x1xf32>
    %cst_85 = arith.constant 3.200000e+01 : f32
    %216 = vector.broadcast %cst_85 : f32 to vector<64x1xf32>
    %217 = arith.divf %215, %216 : vector<64x1xf32>
    %218 = vector.broadcast %210 : vector<64x1xf32> to vector<64x32xf32>
    %219 = arith.subf %202, %218 : vector<64x32xf32>
    %cst_86 = arith.constant 9.99999974E-6 : f32
    %220 = vector.broadcast %cst_86 : f32 to vector<64x1xf32>
    %221 = arith.addf %217, %220 : vector<64x1xf32>
    %222 = math.rsqrt %221 : vector<64x1xf32>
    %223 = vector.broadcast %222 : vector<64x1xf32> to vector<64x32xf32>
    %224 = arith.mulf %219, %223 : vector<64x32xf32>
    %225 = vector.broadcast %205 : vector<1x32xf32> to vector<64x32xf32>
    %226 = arith.mulf %224, %225 : vector<64x32xf32>
    %227 = vector.broadcast %206 : vector<1x32xf32> to vector<64x32xf32>
    %228 = arith.addf %226, %227 : vector<64x32xf32>
    %c2 = arith.constant 2 : index
    %c0_87 = arith.constant 0 : index
    %c0_88 = arith.constant 0 : index
    %229 = vector.load %arg5[%c2, %c0_87, %c0_88] : memref<3x32x96xf32, #tpu.memory_space<vmem>>, vector<1x32x96xf32>
    %230 = vector.shape_cast %229 : vector<1x32x96xf32> to vector<32x96xf32>
    %cst_89 = arith.constant dense<0.000000e+00> : vector<64x96xf32>
    %231 = tpu.matmul %228, %230, %cst_89 {dimension_numbers = #tpu.dot_dimension_numbers<[1], [0], [0], [1], [0, 0, 1, 1], [], []>} : vector<64x32xf32>, vector<32x96xf32>, vector<64x96xf32> -> vector<64x96xf32>
    %c2_90 = arith.constant 2 : index
    %c0_91 = arith.constant 0 : index
    %c0_92 = arith.constant 0 : index
    %232 = vector.load %arg6[%c2_90, %c0_91, %c0_92] : memref<3x1x96xf32, #tpu.memory_space<vmem>>, vector<1x1x96xf32>
    %233 = vector.shape_cast %232 : vector<1x1x96xf32> to vector<1x96xf32>
    %234 = vector.broadcast %233 : vector<1x96xf32> to vector<64x96xf32>
    %235 = arith.addf %231, %234 : vector<64x96xf32>
    %236 = vector.shape_cast %235 : vector<64x96xf32> to vector<8x8x96xf32>
    %237 = vector.extract_strided_slice %236 {offsets = [0, 0, 0], sizes = [8, 8, 16], strides = [1, 1, 1]} : vector<8x8x96xf32> to vector<8x8x16xf32>
    %cst_93 = arith.constant 2.500000e-01 : f32
    %238 = vector.broadcast %cst_93 : f32 to vector<8x8x16xf32>
    %239 = arith.mulf %237, %238 : vector<8x8x16xf32>
    %240 = vector.extract_strided_slice %236 {offsets = [0, 0, 32], sizes = [8, 8, 16], strides = [1, 1, 1]} : vector<8x8x96xf32> to vector<8x8x16xf32>
    %241 = vector.extract_strided_slice %236 {offsets = [0, 0, 64], sizes = [8, 8, 16], strides = [1, 1, 1]} : vector<8x8x96xf32> to vector<8x8x16xf32>
    "tpu.trace_start"() <{level = 10 : i32, message = "gnd,gmd->gnm"}> : () -> ()
    %cst_94 = arith.constant dense<0.000000e+00> : vector<8x8x8xf32>
    %242 = tpu.matmul %239, %240, %cst_94 {dimension_numbers = #tpu.dot_dimension_numbers<[2], [2], [1], [1], [0, 0, 0, 1, 1, 1], [0], [0]>} : vector<8x8x16xf32>, vector<8x8x16xf32>, vector<8x8x8xf32> -> vector<8x8x8xf32>
    "tpu.trace_stop"() : () -> ()
    %243 = arith.addf %242, %4 : vector<8x8x8xf32>
    %cst_95 = arith.constant dense<0xFF800000> : vector<8x8xf32>
    %244 = vector.multi_reduction <maximumf>, %243, %cst_95 [2] : vector<8x8x8xf32> to vector<8x8xf32>
    %cst_96 = arith.constant 0xFF800000 : f32
    %245 = vector.broadcast %cst_96 : f32 to vector<8x8xf32>
    %246 = arith.maximumf %245, %244 : vector<8x8xf32>
    %247 = vector.shape_cast %246 : vector<8x8xf32> to vector<8x8x1xf32>
    %248 = vector.broadcast %247 : vector<8x8x1xf32> to vector<8x8x8xf32>
    %249 = arith.subf %243, %248 : vector<8x8x8xf32>
    %250 = math.exp %249 : vector<8x8x8xf32>
    %cst_97 = arith.constant dense<0.000000e+00> : vector<8x8xf32>
    %251 = vector.multi_reduction <add>, %250, %cst_97 [2] : vector<8x8x8xf32> to vector<8x8xf32>
    %252 = vector.shape_cast %251 : vector<8x8xf32> to vector<8x8x1xf32>
    %253 = vector.broadcast %252 : vector<8x8x1xf32> to vector<8x8x8xf32>
    %254 = arith.divf %250, %253 : vector<8x8x8xf32>
    "tpu.trace_start"() <{level = 10 : i32, message = "gnm,gmd->gnd"}> : () -> ()
    %cst_98 = arith.constant dense<0.000000e+00> : vector<8x8x16xf32>
    %255 = tpu.matmul %254, %241, %cst_98 {dimension_numbers = #tpu.dot_dimension_numbers<[2], [1], [1], [2], [0, 0, 0, 1, 1, 2], [0], [0]>} : vector<8x8x8xf32>, vector<8x8x16xf32>, vector<8x8x16xf32> -> vector<8x8x16xf32>
    "tpu.trace_stop"() : () -> ()
    %256 = vector.extract_strided_slice %236 {offsets = [0, 0, 16], sizes = [8, 8, 16], strides = [1, 1, 1]} : vector<8x8x96xf32> to vector<8x8x16xf32>
    %cst_99 = arith.constant 2.500000e-01 : f32
    %257 = vector.broadcast %cst_99 : f32 to vector<8x8x16xf32>
    %258 = arith.mulf %256, %257 : vector<8x8x16xf32>
    %259 = vector.extract_strided_slice %236 {offsets = [0, 0, 48], sizes = [8, 8, 16], strides = [1, 1, 1]} : vector<8x8x96xf32> to vector<8x8x16xf32>
    %260 = vector.extract_strided_slice %236 {offsets = [0, 0, 80], sizes = [8, 8, 16], strides = [1, 1, 1]} : vector<8x8x96xf32> to vector<8x8x16xf32>
    "tpu.trace_start"() <{level = 10 : i32, message = "gnd,gmd->gnm"}> : () -> ()
    %cst_100 = arith.constant dense<0.000000e+00> : vector<8x8x8xf32>
    %261 = tpu.matmul %258, %259, %cst_100 {dimension_numbers = #tpu.dot_dimension_numbers<[2], [2], [1], [1], [0, 0, 0, 1, 1, 1], [0], [0]>} : vector<8x8x16xf32>, vector<8x8x16xf32>, vector<8x8x8xf32> -> vector<8x8x8xf32>
    "tpu.trace_stop"() : () -> ()
    %262 = arith.addf %261, %4 : vector<8x8x8xf32>
    %cst_101 = arith.constant dense<0xFF800000> : vector<8x8xf32>
    %263 = vector.multi_reduction <maximumf>, %262, %cst_101 [2] : vector<8x8x8xf32> to vector<8x8xf32>
    %cst_102 = arith.constant 0xFF800000 : f32
    %264 = vector.broadcast %cst_102 : f32 to vector<8x8xf32>
    %265 = arith.maximumf %264, %263 : vector<8x8xf32>
    %266 = vector.shape_cast %265 : vector<8x8xf32> to vector<8x8x1xf32>
    %267 = vector.broadcast %266 : vector<8x8x1xf32> to vector<8x8x8xf32>
    %268 = arith.subf %262, %267 : vector<8x8x8xf32>
    %269 = math.exp %268 : vector<8x8x8xf32>
    %cst_103 = arith.constant dense<0.000000e+00> : vector<8x8xf32>
    %270 = vector.multi_reduction <add>, %269, %cst_103 [2] : vector<8x8x8xf32> to vector<8x8xf32>
    %271 = vector.shape_cast %270 : vector<8x8xf32> to vector<8x8x1xf32>
    %272 = vector.broadcast %271 : vector<8x8x1xf32> to vector<8x8x8xf32>
    %273 = arith.divf %269, %272 : vector<8x8x8xf32>
    "tpu.trace_start"() <{level = 10 : i32, message = "gnm,gmd->gnd"}> : () -> ()
    %cst_104 = arith.constant dense<0.000000e+00> : vector<8x8x16xf32>
    %274 = tpu.matmul %273, %260, %cst_104 {dimension_numbers = #tpu.dot_dimension_numbers<[2], [1], [1], [2], [0, 0, 0, 1, 1, 2], [0], [0]>} : vector<8x8x8xf32>, vector<8x8x16xf32>, vector<8x8x16xf32> -> vector<8x8x16xf32>
    "tpu.trace_stop"() : () -> ()
    %275 = tpu.concatenate %255, %274 in 2 : vector<8x8x16xf32>, vector<8x8x16xf32> -> vector<8x8x32xf32>
    %276 = vector.shape_cast %275 : vector<8x8x32xf32> to vector<64x32xf32>
    %cst_105 = arith.constant 0.000000e+00 : f32
    %277 = vector.broadcast %cst_105 : f32 to vector<64x32xf32>
    %278 = arith.maximumf %276, %277 : vector<64x32xf32>
    %279 = arith.addf %278, %228 : vector<64x32xf32>
    %c2_106 = arith.constant 2 : index
    %c0_107 = arith.constant 0 : index
    %c0_108 = arith.constant 0 : index
    %280 = vector.load %arg7[%c2_106, %c0_107, %c0_108] : memref<3x2x32xf32, #tpu.memory_space<vmem>>, vector<1x2x32xf32>
    %281 = vector.shape_cast %280 : vector<1x2x32xf32> to vector<2x32xf32>
    %282 = vector.extract_strided_slice %281 {offsets = [0, 0], sizes = [1, 32], strides = [1, 1]} : vector<2x32xf32> to vector<1x32xf32>
    %283 = vector.extract_strided_slice %281 {offsets = [1, 0], sizes = [1, 32], strides = [1, 1]} : vector<2x32xf32> to vector<1x32xf32>
    %cst_109 = arith.constant dense<0.000000e+00> : vector<64xf32>
    %284 = vector.multi_reduction <add>, %279, %cst_109 [1] : vector<64x32xf32> to vector<64xf32>
    %285 = vector.shape_cast %284 : vector<64xf32> to vector<64x1xf32>
    %cst_110 = arith.constant 3.200000e+01 : f32
    %286 = vector.broadcast %cst_110 : f32 to vector<64x1xf32>
    %287 = arith.divf %285, %286 : vector<64x1xf32>
    %288 = vector.broadcast %287 : vector<64x1xf32> to vector<64x32xf32>
    %289 = arith.subf %279, %288 : vector<64x32xf32>
    %290 = arith.mulf %289, %289 : vector<64x32xf32>
    %cst_111 = arith.constant dense<0.000000e+00> : vector<64xf32>
    %291 = vector.multi_reduction <add>, %290, %cst_111 [1] : vector<64x32xf32> to vector<64xf32>
    %292 = vector.shape_cast %291 : vector<64xf32> to vector<64x1xf32>
    %cst_112 = arith.constant 3.200000e+01 : f32
    %293 = vector.broadcast %cst_112 : f32 to vector<64x1xf32>
    %294 = arith.divf %292, %293 : vector<64x1xf32>
    %295 = vector.broadcast %287 : vector<64x1xf32> to vector<64x32xf32>
    %296 = arith.subf %279, %295 : vector<64x32xf32>
    %cst_113 = arith.constant 9.99999974E-6 : f32
    %297 = vector.broadcast %cst_113 : f32 to vector<64x1xf32>
    %298 = arith.addf %294, %297 : vector<64x1xf32>
    %299 = math.rsqrt %298 : vector<64x1xf32>
    %300 = vector.broadcast %299 : vector<64x1xf32> to vector<64x32xf32>
    %301 = arith.mulf %296, %300 : vector<64x32xf32>
    %302 = vector.broadcast %282 : vector<1x32xf32> to vector<64x32xf32>
    %303 = arith.mulf %301, %302 : vector<64x32xf32>
    %304 = vector.broadcast %283 : vector<1x32xf32> to vector<64x32xf32>
    %305 = arith.addf %303, %304 : vector<64x32xf32>
    %306 = vector.shape_cast %305 : vector<64x32xf32> to vector<8x8x32xf32>
    %cst_114 = arith.constant dense<0xFF800000> : vector<8x32xf32>
    %307 = vector.multi_reduction <maximumf>, %306, %cst_114 [1] : vector<8x8x32xf32> to vector<8x32xf32>
    %c0_115 = arith.constant 0 : index
    %c0_116 = arith.constant 0 : index
    %308 = vector.load %arg8[%c0_115, %c0_116] : memref<8x32xf32, #tpu.memory_space<vmem>>, vector<8x32xf32>
    tpu.vector_store %arg8[%c0_115, %c0_116], %307 {strides = array<i32>} : memref<8x32xf32, #tpu.memory_space<vmem>>, vector<8x32xf32>,
    return
  }
  func.func @transform_0(%arg0: i32) -> (i32, i32, i32) {
    %c0_i32 = arith.constant 0 : i32
    %c0_i32_0 = arith.constant 0 : i32
    %c0_i32_1 = arith.constant 0 : i32
    return %arg0, %c0_i32, %c0_i32_0 : i32, i32, i32
  }
  func.func @transform_1(%arg0: i32) -> (i32, i32, i32) {
    %c0_i32 = arith.constant 0 : i32
    %c0_i32_0 = arith.constant 0 : i32
    %c0_i32_1 = arith.constant 0 : i32
    return %arg0, %c0_i32, %c0_i32_0 : i32, i32, i32
  }
  func.func @transform_2(%arg0: i32) -> (i32, i32, i32) {
    %c0_i32 = arith.constant 0 : i32
    %c0_i32_0 = arith.constant 0 : i32
    %c0_i32_1 = arith.constant 0 : i32
    %c0_i32_2 = arith.constant 0 : i32
    return %c0_i32, %c0_i32_0, %c0_i32_1 : i32, i32, i32
  }
  func.func @transform_3(%arg0: i32) -> (i32, i32, i32) {
    %c0_i32 = arith.constant 0 : i32
    %c0_i32_0 = arith.constant 0 : i32
    %c0_i32_1 = arith.constant 0 : i32
    %c0_i32_2 = arith.constant 0 : i32
    return %c0_i32, %c0_i32_0, %c0_i32_1 : i32, i32, i32
  }
  func.func @transform_4(%arg0: i32) -> (i32, i32, i32) {
    %c0_i32 = arith.constant 0 : i32
    %c0_i32_0 = arith.constant 0 : i32
    %c0_i32_1 = arith.constant 0 : i32
    %c0_i32_2 = arith.constant 0 : i32
    return %c0_i32, %c0_i32_0, %c0_i32_1 : i32, i32, i32
  }
  func.func @transform_5(%arg0: i32) -> (i32, i32, i32) {
    %c0_i32 = arith.constant 0 : i32
    %c0_i32_0 = arith.constant 0 : i32
    %c0_i32_1 = arith.constant 0 : i32
    %c0_i32_2 = arith.constant 0 : i32
    return %c0_i32, %c0_i32_0, %c0_i32_1 : i32, i32, i32
  }
  func.func @transform_6(%arg0: i32) -> (i32, i32, i32) {
    %c0_i32 = arith.constant 0 : i32
    %c0_i32_0 = arith.constant 0 : i32
    %c0_i32_1 = arith.constant 0 : i32
    %c0_i32_2 = arith.constant 0 : i32
    return %c0_i32, %c0_i32_0, %c0_i32_1 : i32, i32, i32
  }
  func.func @transform_7(%arg0: i32) -> (i32, i32) {
    %c0_i32 = arith.constant 0 : i32
    %c0_i32_0 = arith.constant 0 : i32
    return %arg0, %c0_i32 : i32, i32
  }
}

</mosaic_0001>

<llo_original>
// kernel: tpu_custom_call.1
$region0: #{tpu_custom_call.1}
  #allocation0 [shape = 'u32[]', space=smem, size = 0x4, offset = 0x4, fixed_abs, tag = 'smem constant byte address 0x4 - core index']
  #allocation1 [shape = 'u32[144,128]{1,0:T(1,128)}', space=vmem, size = 0x12000, scoped, tag = 'internal scratch']
  %s0 = inlined_call_operand.hbm [shape: f32[8,8,32], index: 0, kind: input, shape index: {}]
  %s1 = inlined_call_operand.hbm [shape: f32[8,8,8], index: 1, kind: input, shape index: {}]
  %s2 = inlined_call_operand.hbm [shape: f32[2,32,32], index: 2, kind: input, shape index: {}]
  %s3 = inlined_call_operand.vmem [shape: f32[2,3,32], index: 3, kind: input, shape index: {}]
  %s4 = inlined_call_operand.hbm [shape: f32[3,32,96], index: 4, kind: input, shape index: {}]
  %s5 = inlined_call_operand.vmem [shape: f32[3,1,96], index: 5, kind: input, shape index: {}]
  %s6 = inlined_call_operand.vmem [shape: f32[3,2,32], index: 6, kind: input, shape index: {}]
  %s7 = inlined_call_operand.hbm [shape: f32[8,32], index: 7, kind: output, shape index: {}]
  %s8 = sld [smem:[#allocation0]]
  $region54: #{tpu_custom_call.1} parent=0
    _
  %s10 = ssub.s32 1, %s8
  %s11 = scalar_select 0, %s10, %s8
  $region1: #{tpu_custom_call.1} parent=0
    #allocation2 [shape = 'u8[32768]{0}', space=vmem, size = 0x8000, scoped, tag = 'input window, operand 0, single buffered']
    #allocation3 [shape = 's32[1]{0}', space=sflag, size = 0x4, scoped, tag = 'scoped memory for tpu_custom_call.1']
    #allocation4 [shape = 's32[1]{0}', space=sflag, size = 0x4, scoped, tag = 'scoped memory for tpu_custom_call.1']
    #allocation5 [shape = 'u8[32768]{0}', space=vmem, size = 0x8000, scoped, tag = 'input window, operand 1, single buffered']
    #allocation6 [shape = 's32[1]{0}', space=sflag, size = 0x4, scoped, tag = 'scoped memory for tpu_custom_call.1']
    #allocation7 [shape = 'u8[32768]{0}', space=vmem, size = 0x8000, scoped, tag = 'input window, operand 2, single buffered']
    #allocation8 [shape = 'u8[49152]{0}', space=vmem, size = 0xc000, scoped, tag = 'input window, operand 4, single buffered']
    #allocation9 [shape = 's32[1]{0}', space=sflag, size = 0x4, scoped, tag = 'scoped memory for tpu_custom_call.1']
    #allocation10 [shape = 'u8[4096]{0}', space=vmem, size = 0x1000, scoped, tag = 'output window, operand 0, single buffered']
    %12 = vsyncpa [#allocation3], 0
    %13 = vsyncpa [#allocation6], 0
    %14 = vsyncpa [#allocation9], 0
    %15 = vsyncpa [#allocation4], 0
    // Predicated region
    $region2: #{tpu_custom_call.1} parent=1 // pred_check
      _
    $region3: #{tpu_custom_call.1} parent=1 // pred_check_branch
      %17 = sbr.rel (0) target = $region5
    $region4: #{tpu_custom_call.1} parent=1 // pred_region
      %s19 = ssub.s32 1024, 1024
      %20 = vsyncadd [#allocation3], %s19
      %s21 = sshll.u32 [#allocation2], 4
      %s22 = int_to_ptr.vmem [resolvable:$true] %s21
      %27 = dma.hbm_to_vmem [thread:$0]  %s0, 1024, %s22, [#allocation3], 128, 128, 8
    $region5: #{tpu_custom_call.1} parent=1 // pred_fallthru
      _
    // Predicated region
    $region6: #{tpu_custom_call.1} parent=1 // pred_check
      _
    $region7: #{tpu_custom_call.1} parent=1 // pred_check_branch
      %29 = sbr.rel (0) target = $region9
    $region8: #{tpu_custom_call.1} parent=1 // pred_region
      %s31 = ssub.s32 1024, 1024
      %32 = vsyncadd [#allocation6], %s31
      %s33 = sshll.u32 [#allocation5], 4
      %s34 = int_to_ptr.vmem [resolvable:$true] %s33
      %39 = dma.hbm_to_vmem [thread:$0]  %s1, 1024, %s34, [#allocation6], 128, 128, 8
    $region9: #{tpu_custom_call.1} parent=1 // pred_fallthru
      _
    // Predicated region
    $region10: #{tpu_custom_call.1} parent=1 // pred_check
      _
    $region11: #{tpu_custom_call.1} parent=1 // pred_check_branch
      %41 = sbr.rel (0) target = $region13
    $region12: #{tpu_custom_call.1} parent=1 // pred_region
      %s43 = ssub.s32 1024, 1024
      %44 = vsyncadd [#allocation6], %s43
      %s45 = sshll.u32 [#allocation7], 4
      %s46 = int_to_ptr.vmem [resolvable:$true] %s45
      %51 = dma.hbm_to_vmem [thread:$0]  %s2, 1024, %s46, [#allocation6], 128, 128, 8
    $region13: #{tpu_custom_call.1} parent=1 // pred_fallthru
      _
    // Predicated region
    $region14: #{tpu_custom_call.1} parent=1 // pred_check
      _
    $region15: #{tpu_custom_call.1} parent=1 // pred_check_branch
      %53 = sbr.rel (0) target = $region17
    $region16: #{tpu_custom_call.1} parent=1 // pred_region
      _
    $region17: #{tpu_custom_call.1} parent=1 // pred_fallthru
      _
    // Predicated region
    $region18: #{tpu_custom_call.1} parent=1 // pred_check
      _
    $region19: #{tpu_custom_call.1} parent=1 // pred_check_branch
      %55 = sbr.rel (0) target = $region21
    $region20: #{tpu_custom_call.1} parent=1 // pred_region
      %s57 = ssub.s32 1536, 1536
      %58 = vsyncadd [#allocation9], %s57
      %s59 = sshll.u32 [#allocation8], 4
      %s60 = int_to_ptr.vmem [resolvable:$true] %s59
      %65 = dma.hbm_to_vmem [thread:$0]  %s4, 1536, %s60, [#allocation9], 128, 128, 8
    $region21: #{tpu_custom_call.1} parent=1 // pred_fallthru
      _
    // Predicated region
    $region22: #{tpu_custom_call.1} parent=1 // pred_check
      _
    $region23: #{tpu_custom_call.1} parent=1 // pred_check_branch
      %67 = sbr.rel (0) target = $region25
    $region24: #{tpu_custom_call.1} parent=1 // pred_region
      _
    $region25: #{tpu_custom_call.1} parent=1 // pred_fallthru
      _
    // Predicated region
    $region26: #{tpu_custom_call.1} parent=1 // pred_check
      _
    $region27: #{tpu_custom_call.1} parent=1 // pred_check_branch
      %69 = sbr.rel (0) target = $region29
    $region28: #{tpu_custom_call.1} parent=1 // pred_region
      _
    $region29: #{tpu_custom_call.1} parent=1 // pred_fallthru
      _
    // Predicated region
    $region30: #{tpu_custom_call.1} parent=1 // pred_check
      _
    $region31: #{tpu_custom_call.1} parent=1 // pred_check_branch
      %71 = sbr.rel (0) target = $region33
    $region32: #{tpu_custom_call.1} parent=1 // pred_region
      %72 = dma.done [#allocation3], 1024
    $region33: #{tpu_custom_call.1} parent=1 // pred_fallthru
      _
    // Predicated region
    $region34: #{tpu_custom_call.1} parent=1 // pred_check
      _
    $region35: #{tpu_custom_call.1} parent=1 // pred_check_branch
      %74 = sbr.rel (0) target = $region37
    $region36: #{tpu_custom_call.1} parent=1 // pred_region
      %75 = dma.done [#allocation6], 1024
    $region37: #{tpu_custom_call.1} parent=1 // pred_fallthru
      _
    // Predicated region
    $region38: #{tpu_custom_call.1} parent=1 // pred_check
      _
    $region39: #{tpu_custom_call.1} parent=1 // pred_check_branch
      %77 = sbr.rel (0) target = $region41
    $region40: #{tpu_custom_call.1} parent=1 // pred_region
      %78 = dma.done [#allocation6], 1024
    $region41: #{tpu_custom_call.1} parent=1 // pred_fallthru
      _
    // Predicated region
    $region42: #{tpu_custom_call.1} parent=1 // pred_check
      _
    $region43: #{tpu_custom_call.1} parent=1 // pred_check_branch
      %80 = sbr.rel (0) target = $region45
    $region44: #{tpu_custom_call.1} parent=1 // pred_region
      %81 = dma.done [#allocation9], 1536
    $region45: #{tpu_custom_call.1} parent=1 // pred_fallthru
      _
    %v82 = vld [vmem:[#allocation5] sm:$0xff]
    %v83 = vld [vmem:[#allocation5 + $0x8] sm:$0xff]
    %v84 = vld [vmem:[#allocation5 + $0x10] sm:$0xff]
    %v85 = vld [vmem:[#allocation5 + $0x18] sm:$0xff]
    %v86 = vld [vmem:[#allocation5 + $0x20] sm:$0xff]
    %v87 = vld [vmem:[#allocation5 + $0x28] sm:$0xff]
    %v88 = vld [vmem:[#allocation5 + $0x30] sm:$0xff]
    %v89 = vld [vmem:[#allocation5 + $0x38] sm:$0xff]
    %v90 = vsub.f32 1.0, %v82
    %v91 = vsub.f32 1.0, %v83
    %v92 = vsub.f32 1.0, %v84
    %v93 = vsub.f32 1.0, %v85
    %v94 = vsub.f32 1.0, %v86
    %v95 = vsub.f32 1.0, %v87
    %v96 = vsub.f32 1.0, %v88
    %v97 = vsub.f32 1.0, %v89
    %v98 = vmul.f32 %v90, -10000.0
    %v99 = vmul.f32 %v91, -10000.0
    %v100 = vmul.f32 %v92, -10000.0
    %v101 = vmul.f32 %v93, -10000.0
    %v102 = vmul.f32 %v94, -10000.0
    %v103 = vmul.f32 %v95, -10000.0
    %v104 = vmul.f32 %v96, -10000.0
    %v105 = vmul.f32 %v97, -10000.0
    %v106 = vld [vmem:[#allocation2] sm:$0xff]
    %v107 = vld [vmem:[#allocation2 + $0x8] sm:$0xff]
    %v108 = vld [vmem:[#allocation2 + $0x10] sm:$0xff]
    %v109 = vld [vmem:[#allocation2 + $0x18] sm:$0xff]
    %v110 = vld [vmem:[#allocation2 + $0x20] sm:$0xff]
    %v111 = vld [vmem:[#allocation2 + $0x28] sm:$0xff]
    %v112 = vld [vmem:[#allocation2 + $0x30] sm:$0xff]
    %v113 = vld [vmem:[#allocation2 + $0x38] sm:$0xff]
    %v114 = vld [vmem:[%s3] sm:$0x7]
    %v115 = vld [vmem:[#allocation7] sm:$0xff]
    %v116 = vld [vmem:[#allocation7 + $0x8] sm:$0xff]
    %v117 = vld [vmem:[#allocation7 + $0x10] sm:$0xff]
    %v118 = vld [vmem:[#allocation7 + $0x18] sm:$0xff]
    %v119 = vlaneseq
    %v120 = vshrl.u32 %v119, 7
    %v121 = vsub.s32 0, %v120
    %v122 = vrot.slane %v114, %v121
    %vm123 = vcmask 261120
    %v125 = vsel %vm123, %v106, 0
    %v128 = vsel %vm123, %v107, 0
    %v131 = vsel %vm123, %v108, 0
    %v134 = vsel %vm123, %v109, 0
    %v137 = vsel %vm123, %v110, 0
    %v140 = vsel %vm123, %v111, 0
    %v143 = vsel %vm123, %v112, 0
    %v146 = vsel %vm123, %v113, 0
    %148 = vmatprep.subr.mxu0 0.0
    %149 = vmatpush1.msra.mxu0 %v115
    %150 = vmatprep.subr.mxu0 0.0
    %151 = vmatpush1.msra.mxu0 %v116
    %152 = vmatprep.subr.mxu0 0.0
    %153 = vmatpush1.msra.mxu0 %v117
    %154 = vmatprep.subr.mxu0 0.0
    %155 = vmatpush1.msra.mxu0 %v118
    %156 = vmatprep.subr.mxu0 0.0
    %157 = vmatpush1.msra.mxu0 0.0
    %158 = vmatprep.subr.mxu0 0.0
    %159 = vmatpush1.msra.mxu0 0.0
    %160 = vmatprep.subr.mxu0 0.0
    %161 = vmatpush1.msra.mxu0 0.0
    %162 = vmatprep.subr.mxu0 0.0
    %163 = vmatpush1.msra.mxu0 0.0
    %164 = vmatprep.subr.mxu0 0.0
    %165 = vmatpush1.msra.mxu0 0.0
    %166 = vmatprep.subr.mxu0 0.0
    %167 = vmatpush1.msra.mxu0 0.0
    %168 = vmatprep.subr.mxu0 0.0
    %169 = vmatpush1.msra.mxu0 0.0
    %170 = vmatprep.subr.mxu0 0.0
    %171 = vmatpush1.msra.mxu0 0.0
    %172 = vmatprep.subr.mxu0 0.0
    %173 = vmatpush1.msra.mxu0 0.0
    %174 = vmatprep.subr.mxu0 0.0
    %175 = vmatpush1.msra.mxu0 0.0
    %176 = vmatprep.subr.mxu0 0.0
    %177 = vmatpush1.msra.mxu0 0.0
    %178 = vmatprep.subr.mxu0 0.0
    %179 = vmatpush1.msra.mxu0 0.0
    %180 = vmatprep.subr.mxu0 0.0
    %181 = vmatpush1.msra.mxu0 0.0
    %182 = vmatprep.subr.mxu0 0.0
    %183 = vmatpush1.msra.mxu0 0.0
    %184 = vmatprep.subr.mxu0 0.0
    %185 = vmatpush1.msra.mxu0 0.0
    %186 = vmatprep.subr.mxu0 0.0
    %187 = vmatpush1.msra.mxu0 0.0
    %188 = vmatprep.subr.mxu0 0.0
    %189 = vmatpush1.msra.mxu0 0.0
    %190 = vmatprep.subr.mxu0 0.0
    %191 = vmatpush1.msra.mxu0 0.0
    %192 = vmatprep.subr.mxu0 0.0
    %193 = vmatpush1.msra.mxu0 0.0
    %194 = vmatprep.subr.mxu0 0.0
    %195 = vmatpush1.msra.mxu0 0.0
    %196 = vmatprep.subr.mxu0 0.0
    %197 = vmatpush1.msra.mxu0 0.0
    %198 = vmatprep.subr.mxu0 0.0
    %199 = vmatpush1.msra.mxu0 0.0
    %200 = vmatprep.subr.mxu0 0.0
    %201 = vmatpush1.msra.mxu0 0.0
    %202 = vmatprep.subr.mxu0 0.0
    %203 = vmatpush1.msra.mxu0 0.0
    %204 = vmatprep.subr.mxu0 0.0
    %205 = vmatpush1.msra.mxu0 0.0
    %206 = vmatprep.subr.mxu0 0.0
    %207 = vmatpush1.msra.mxu0 0.0
    %208 = vmatprep.subr.mxu0 0.0
    %209 = vmatpush1.msra.mxu0 0.0
    %210 = vmatprep.subr.mxu0 0.0
    %211 = vmatpush1.msra.mxu0 0.0
    %212 = vmatprep.mubr.f32.mxu0 0.0
    %213 = vmatmul.mubr.f32.gmra.mrb[0].mxu0 %v125
    %v214 = vpop.f32.mrb[0].mxu0
    %v215 = vadd.f32 %v122, %v214
    %v216 = vpop.f32.mrb[0].mxu0
    %217 = vmatprep.mubr.f32.mxu0 0.0
    %218 = vmatmul.mubr.f32.gmra.mrb[0].mxu0 %v128
    %v219 = vpop.f32.mrb[0].mxu0
    %v220 = vadd.f32 %v122, %v219
    %v221 = vpop.f32.mrb[0].mxu0
    %222 = vmatprep.mubr.f32.mxu0 0.0
    %223 = vmatmul.mubr.f32.gmra.mrb[0].mxu0 %v131
    %v224 = vpop.f32.mrb[0].mxu0
    %v225 = vadd.f32 %v122, %v224
    %v226 = vpop.f32.mrb[0].mxu0
    %227 = vmatprep.mubr.f32.mxu0 0.0
    %228 = vmatmul.mubr.f32.gmra.mrb[0].mxu0 %v134
    %v229 = vpop.f32.mrb[0].mxu0
    %v230 = vadd.f32 %v122, %v229
    %v231 = vpop.f32.mrb[0].mxu0
    %232 = vmatprep.mubr.f32.mxu0 0.0
    %233 = vmatmul.mubr.f32.gmra.mrb[0].mxu0 %v137
    %v234 = vpop.f32.mrb[0].mxu0
    %v235 = vadd.f32 %v122, %v234
    %v236 = vpop.f32.mrb[0].mxu0
    %237 = vmatprep.mubr.f32.mxu0 0.0
    %238 = vmatmul.mubr.f32.gmra.mrb[0].mxu0 %v140
    %v239 = vpop.f32.mrb[0].mxu0
    %v240 = vadd.f32 %v122, %v239
    %v241 = vpop.f32.mrb[0].mxu0
    %242 = vmatprep.mubr.f32.mxu0 0.0
    %243 = vmatmul.mubr.f32.gmra.mrb[0].mxu0 %v143
    %v244 = vpop.f32.mrb[0].mxu0
    %v245 = vadd.f32 %v122, %v244
    %v246 = vpop.f32.mrb[0].mxu0
    %247 = vmatprep.mubr.f32.mxu0 0.0
    %248 = vmatmul.mubr.f32.gmra.mrb[0].mxu0 %v146
    %v249 = vpop.f32.mrb[0].mxu0
    %v250 = vadd.f32 %v122, %v249
    %v251 = vpop.f32.mrb[0].mxu0
    %252 = vdwg.mxu0
    %v253 = vsel %vm123, %v215, 0.0
    %254 = vadd.xlane.f32.xlu0 %v253
    %v255 = vpop.xlane.xlu0 %254
    %v256 = vsel %vm123, %v220, 0.0
    %257 = vadd.xlane.f32.xlu0 %v256
    %v258 = vpop.xlane.xlu0 %257
    %v259 = vsel %vm123, %v225, 0.0
    %260 = vadd.xlane.f32.xlu0 %v259
    %v261 = vpop.xlane.xlu0 %260
    %v262 = vsel %vm123, %v230, 0.0
    %263 = vadd.xlane.f32.xlu0 %v262
    %v264 = vpop.xlane.xlu0 %263
    %v265 = vsel %vm123, %v235, 0.0
    %266 = vadd.xlane.f32.xlu0 %v265
    %v267 = vpop.xlane.xlu0 %266
    %v268 = vsel %vm123, %v240, 0.0
    %269 = vadd.xlane.f32.xlu0 %v268
    %v270 = vpop.xlane.xlu0 %269
    %v271 = vsel %vm123, %v245, 0.0
    %272 = vadd.xlane.f32.xlu0 %v271
    %v273 = vpop.xlane.xlu0 %272
    %v274 = vsel %vm123, %v250, 0.0
    %275 = vadd.xlane.f32.xlu0 %v274
    %v276 = vpop.xlane.xlu0 %275
    %v277 = vrcp.pop 32.0
    %v278 = vmul.f32 %v255, %v277
    %v279 = vmul.f32 %v258, %v277
    %v280 = vmul.f32 %v261, %v277
    %v281 = vmul.f32 %v264, %v277
    %v282 = vmul.f32 %v267, %v277
    %v283 = vmul.f32 %v270, %v277
    %v284 = vmul.f32 %v273, %v277
    %v285 = vmul.f32 %v276, %v277
    %v286 = vsub.f32 %v215, %v278
    %v287 = vsub.f32 %v220, %v279
    %v288 = vsub.f32 %v225, %v280
    %v289 = vsub.f32 %v230, %v281
    %v290 = vsub.f32 %v235, %v282
    %v291 = vsub.f32 %v240, %v283
    %v292 = vsub.f32 %v245, %v284
    %v293 = vsub.f32 %v250, %v285
    %v294 = vmul.f32 %v286, %v286
    %v295 = vmul.f32 %v287, %v287
    %v296 = vmul.f32 %v288, %v288
    %v297 = vmul.f32 %v289, %v289
    %v298 = vmul.f32 %v290, %v290
    %v299 = vmul.f32 %v291, %v291
    %v300 = vmul.f32 %v292, %v292
    %v301 = vmul.f32 %v293, %v293
    %v302 = vsel %vm123, %v294, 0.0
    %303 = vadd.xlane.f32.xlu0 %v302
    %v304 = vpop.xlane.xlu0 %303
    %v305 = vsel %vm123, %v295, 0.0
    %306 = vadd.xlane.f32.xlu0 %v305
    %v307 = vpop.xlane.xlu0 %306
    %v308 = vsel %vm123, %v296, 0.0
    %309 = vadd.xlane.f32.xlu0 %v308
    %v310 = vpop.xlane.xlu0 %309
    %v311 = vsel %vm123, %v297, 0.0
    %312 = vadd.xlane.f32.xlu0 %v311
    %v313 = vpop.xlane.xlu0 %312
    %v314 = vsel %vm123, %v298, 0.0
    %315 = vadd.xlane.f32.xlu0 %v314
    %v316 = vpop.xlane.xlu0 %315
    %v317 = vsel %vm123, %v299, 0.0
    %318 = vadd.xlane.f32.xlu0 %v317
    %v319 = vpop.xlane.xlu0 %318
    %v320 = vsel %vm123, %v300, 0.0
    %321 = vadd.xlane.f32.xlu0 %v320
    %v322 = vpop.xlane.xlu0 %321
    %v323 = vsel %vm123, %v301, 0.0
    %324 = vadd.xlane.f32.xlu0 %v323
    %v325 = vpop.xlane.xlu0 %324
    %v326 = vmul.f32 %v304, %v277
    %v327 = vmul.f32 %v307, %v277
    %v328 = vmul.f32 %v310, %v277
    %v329 = vmul.f32 %v313, %v277
    %v330 = vmul.f32 %v316, %v277
    %v331 = vmul.f32 %v319, %v277
    %v332 = vmul.f32 %v322, %v277
    %v333 = vmul.f32 %v325, %v277
    %v334 = vadd.f32 %v326, 1e-05
    %v335 = vadd.f32 %v327, 1e-05
    %v336 = vadd.f32 %v328, 1e-05
    %v337 = vadd.f32 %v329, 1e-05
    %v338 = vadd.f32 %v330, 1e-05
    %v339 = vadd.f32 %v331, 1e-05
    %v340 = vadd.f32 %v332, 1e-05
    %v341 = vadd.f32 %v333, 1e-05
    %v342 = vrsqrt.pop %v334
    %v343 = vrsqrt.pop %v335
    %v344 = vrsqrt.pop %v336
    %v345 = vrsqrt.pop %v337
    %v346 = vrsqrt.pop %v338
    %v347 = vrsqrt.pop %v339
    %v348 = vrsqrt.pop %v340
    %v349 = vrsqrt.pop %v341
    %v350 = vmul.f32 %v286, %v342
    %v351 = vmul.f32 %v287, %v343
    %v352 = vmul.f32 %v288, %v344
    %v353 = vmul.f32 %v289, %v345
    %v354 = vmul.f32 %v290, %v346
    %v355 = vmul.f32 %v291, %v347
    %v356 = vmul.f32 %v292, %v348
    %v357 = vmul.f32 %v293, %v349
    %v358 = vlaneseq
    %v359 = vshrl.u32 %v358, 7
    %v360 = vsub.s32 1, %v359
    %v361 = vrot.slane %v114, %v360
    %v362 = vmul.f32 %v350, %v361
    %v363 = vmul.f32 %v351, %v361
    %v364 = vmul.f32 %v352, %v361
    %v365 = vmul.f32 %v353, %v361
    %v366 = vmul.f32 %v354, %v361
    %v367 = vmul.f32 %v355, %v361
    %v368 = vmul.f32 %v356, %v361
    %v369 = vmul.f32 %v357, %v361
    %v370 = vlaneseq
    %v371 = vshrl.u32 %v370, 7
    %v372 = vsub.s32 2, %v371
    %v373 = vrot.slane %v114, %v372
    %v374 = vadd.f32 %v362, %v373
    %v375 = vadd.f32 %v363, %v373
    %v376 = vadd.f32 %v364, %v373
    %v377 = vadd.f32 %v365, %v373
    %v378 = vadd.f32 %v366, %v373
    %v379 = vadd.f32 %v367, %v373
    %v380 = vadd.f32 %v368, %v373
    %v381 = vadd.f32 %v369, %v373
    %v382 = vmax.f32 %v374, 0.0
    %v383 = vmax.f32 %v375, 0.0
    %v384 = vmax.f32 %v376, 0.0
    %v385 = vmax.f32 %v377, 0.0
    %v386 = vmax.f32 %v378, 0.0
    %v387 = vmax.f32 %v379, 0.0
    %v388 = vmax.f32 %v380, 0.0
    %v389 = vmax.f32 %v381, 0.0
    %s390 = scalar_lea.vmem %s3, 4
    %v391 = vld [vmem:[%s390] sm:$0x7]
    %s392 = scalar_lea.vmem [#allocation7], 32
    %v393 = vld [vmem:[%s392] sm:$0xff]
    %v394 = vld [vmem:[%s392 + $0x8] sm:$0xff]
    %v395 = vld [vmem:[%s392 + $0x10] sm:$0xff]
    %v396 = vld [vmem:[%s392 + $0x18] sm:$0xff]
    %v397 = vlaneseq
    %v398 = vshrl.u32 %v397, 7
    %v399 = vsub.s32 0, %v398
    %v400 = vrot.slane %v391, %v399
    %v402 = vsel %vm123, %v382, 0
    %v405 = vsel %vm123, %v383, 0
    %v408 = vsel %vm123, %v384, 0
    %v411 = vsel %vm123, %v385, 0
    %v414 = vsel %vm123, %v386, 0
    %v417 = vsel %vm123, %v387, 0
    %v420 = vsel %vm123, %v388, 0
    %v423 = vsel %vm123, %v389, 0
    %425 = vmatprep.subr.mxu0 0.0
    %426 = vmatpush1.msra.mxu0 %v393
    %427 = vmatprep.subr.mxu0 0.0
    %428 = vmatpush1.msra.mxu0 %v394
    %429 = vmatprep.subr.mxu0 0.0
    %430 = vmatpush1.msra.mxu0 %v395
    %431 = vmatprep.subr.mxu0 0.0
    %432 = vmatpush1.msra.mxu0 %v396
    %433 = vmatprep.subr.mxu0 0.0
    %434 = vmatpush1.msra.mxu0 0.0
    %435 = vmatprep.subr.mxu0 0.0
    %436 = vmatpush1.msra.mxu0 0.0
    %437 = vmatprep.subr.mxu0 0.0
    %438 = vmatpush1.msra.mxu0 0.0
    %439 = vmatprep.subr.mxu0 0.0
    %440 = vmatpush1.msra.mxu0 0.0
    %441 = vmatprep.subr.mxu0 0.0
    %442 = vmatpush1.msra.mxu0 0.0
    %443 = vmatprep.subr.mxu0 0.0
    %444 = vmatpush1.msra.mxu0 0.0
    %445 = vmatprep.subr.mxu0 0.0
    %446 = vmatpush1.msra.mxu0 0.0
    %447 = vmatprep.subr.mxu0 0.0
    %448 = vmatpush1.msra.mxu0 0.0
    %449 = vmatprep.subr.mxu0 0.0
    %450 = vmatpush1.msra.mxu0 0.0
    %451 = vmatprep.subr.mxu0 0.0
    %452 = vmatpush1.msra.mxu0 0.0
    %453 = vmatprep.subr.mxu0 0.0
    %454 = vmatpush1.msra.mxu0 0.0
    %455 = vmatprep.subr.mxu0 0.0
    %456 = vmatpush1.msra.mxu0 0.0
    %457 = vmatprep.subr.mxu0 0.0
    %458 = vmatpush1.msra.mxu0 0.0
    %459 = vmatprep.subr.mxu0 0.0
    %460 = vmatpush1.msra.mxu0 0.0
    %461 = vmatprep.subr.mxu0 0.0
    %462 = vmatpush1.msra.mxu0 0.0
    %463 = vmatprep.subr.mxu0 0.0
    %464 = vmatpush1.msra.mxu0 0.0
    %465 = vmatprep.subr.mxu0 0.0
    %466 = vmatpush1.msra.mxu0 0.0
    %467 = vmatprep.subr.mxu0 0.0
    %468 = vmatpush1.msra.mxu0 0.0
    %469 = vmatprep.subr.mxu0 0.0
    %470 = vmatpush1.msra.mxu0 0.0
    %471 = vmatprep.subr.mxu0 0.0
    %472 = vmatpush1.msra.mxu0 0.0
    %473 = vmatprep.subr.mxu0 0.0
    %474 = vmatpush1.msra.mxu0 0.0
    %475 = vmatprep.subr.mxu0 0.0
    %476 = vmatpush1.msra.mxu0 0.0
    %477 = vmatprep.subr.mxu0 0.0
    %478 = vmatpush1.msra.mxu0 0.0
    %479 = vmatprep.subr.mxu0 0.0
    %480 = vmatpush1.msra.mxu0 0.0
    %481 = vmatprep.subr.mxu0 0.0
    %482 = vmatpush1.msra.mxu0 0.0
    %483 = vmatprep.subr.mxu0 0.0
    %484 = vmatpush1.msra.mxu0 0.0
    %485 = vmatprep.subr.mxu0 0.0
    %486 = vmatpush1.msra.mxu0 0.0
    %487 = vmatprep.subr.mxu0 0.0
    %488 = vmatpush1.msra.mxu0 0.0
    %489 = vmatprep.mubr.f32.mxu0 0.0
    %490 = vmatmul.mubr.f32.gmra.mrb[0].mxu0 %v402
    %v491 = vpop.f32.mrb[0].mxu0
    %v492 = vadd.f32 %v400, %v491
    %v493 = vpop.f32.mrb[0].mxu0
    %494 = vmatprep.mubr.f32.mxu0 0.0
    %495 = vmatmul.mubr.f32.gmra.mrb[0].mxu0 %v405
    %v496 = vpop.f32.mrb[0].mxu0
    %v497 = vadd.f32 %v400, %v496
    %v498 = vpop.f32.mrb[0].mxu0
    %499 = vmatprep.mubr.f32.mxu0 0.0
    %500 = vmatmul.mubr.f32.gmra.mrb[0].mxu0 %v408
    %v501 = vpop.f32.mrb[0].mxu0
    %v502 = vadd.f32 %v400, %v501
    %v503 = vpop.f32.mrb[0].mxu0
    %504 = vmatprep.mubr.f32.mxu0 0.0
    %505 = vmatmul.mubr.f32.gmra.mrb[0].mxu0 %v411
    %v506 = vpop.f32.mrb[0].mxu0
    %v507 = vadd.f32 %v400, %v506
    %v508 = vpop.f32.mrb[0].mxu0
    %509 = vmatprep.mubr.f32.mxu0 0.0
    %510 = vmatmul.mubr.f32.gmra.mrb[0].mxu0 %v414
    %v511 = vpop.f32.mrb[0].mxu0
    %v512 = vadd.f32 %v400, %v511
    %v513 = vpop.f32.mrb[0].mxu0
    %514 = vmatprep.mubr.f32.mxu0 0.0
    %515 = vmatmul.mubr.f32.gmra.mrb[0].mxu0 %v417
    %v516 = vpop.f32.mrb[0].mxu0
    %v517 = vadd.f32 %v400, %v516
    %v518 = vpop.f32.mrb[0].mxu0
    %519 = vmatprep.mubr.f32.mxu0 0.0
    %520 = vmatmul.mubr.f32.gmra.mrb[0].mxu0 %v420
    %v521 = vpop.f32.mrb[0].mxu0
    %v522 = vadd.f32 %v400, %v521
    %v523 = vpop.f32.mrb[0].mxu0
    %524 = vmatprep.mubr.f32.mxu0 0.0
    %525 = vmatmul.mubr.f32.gmra.mrb[0].mxu0 %v423
    %v526 = vpop.f32.mrb[0].mxu0
    %v527 = vadd.f32 %v400, %v526
    %v528 = vpop.f32.mrb[0].mxu0
    %529 = vdwg.mxu0
    %v530 = vsel %vm123, %v492, 0.0
    %531 = vadd.xlane.f32.xlu0 %v530
    %v532 = vpop.xlane.xlu0 %531
    %v533 = vsel %vm123, %v497, 0.0
    %534 = vadd.xlane.f32.xlu0 %v533
    %v535 = vpop.xlane.xlu0 %534
    %v536 = vsel %vm123, %v502, 0.0
    %537 = vadd.xlane.f32.xlu0 %v536
    %v538 = vpop.xlane.xlu0 %537
    %v539 = vsel %vm123, %v507, 0.0
    %540 = vadd.xlane.f32.xlu0 %v539
    %v541 = vpop.xlane.xlu0 %540
    %v542 = vsel %vm123, %v512, 0.0
    %543 = vadd.xlane.f32.xlu0 %v542
    %v544 = vpop.xlane.xlu0 %543
    %v545 = vsel %vm123, %v517, 0.0
    %546 = vadd.xlane.f32.xlu0 %v545
    %v547 = vpop.xlane.xlu0 %546
    %v548 = vsel %vm123, %v522, 0.0
    %549 = vadd.xlane.f32.xlu0 %v548
    %v550 = vpop.xlane.xlu0 %549
    %v551 = vsel %vm123, %v527, 0.0
    %552 = vadd.xlane.f32.xlu0 %v551
    %v553 = vpop.xlane.xlu0 %552
    %v554 = vmul.f32 %v532, %v277
    %v555 = vmul.f32 %v535, %v277
    %v556 = vmul.f32 %v538, %v277
    %v557 = vmul.f32 %v541, %v277
    %v558 = vmul.f32 %v544, %v277
    %v559 = vmul.f32 %v547, %v277
    %v560 = vmul.f32 %v550, %v277
    %v561 = vmul.f32 %v553, %v277
    %v562 = vsub.f32 %v492, %v554
    %v563 = vsub.f32 %v497, %v555
    %v564 = vsub.f32 %v502, %v556
    %v565 = vsub.f32 %v507, %v557
    %v566 = vsub.f32 %v512, %v558
    %v567 = vsub.f32 %v517, %v559
    %v568 = vsub.f32 %v522, %v560
    %v569 = vsub.f32 %v527, %v561
    %v570 = vmul.f32 %v562, %v562
    %v571 = vmul.f32 %v563, %v563
    %v572 = vmul.f32 %v564, %v564
    %v573 = vmul.f32 %v565, %v565
    %v574 = vmul.f32 %v566, %v566
    %v575 = vmul.f32 %v567, %v567
    %v576 = vmul.f32 %v568, %v568
    %v577 = vmul.f32 %v569, %v569
    %v578 = vsel %vm123, %v570, 0.0
    %579 = vadd.xlane.f32.xlu0 %v578
    %v580 = vpop.xlane.xlu0 %579
    %v581 = vsel %vm123, %v571, 0.0
    %582 = vadd.xlane.f32.xlu0 %v581
    %v583 = vpop.xlane.xlu0 %582
    %v584 = vsel %vm123, %v572, 0.0
    %585 = vadd.xlane.f32.xlu0 %v584
    %v586 = vpop.xlane.xlu0 %585
    %v587 = vsel %vm123, %v573, 0.0
    %588 = vadd.xlane.f32.xlu0 %v587
    %v589 = vpop.xlane.xlu0 %588
    %v590 = vsel %vm123, %v574, 0.0
    %591 = vadd.xlane.f32.xlu0 %v590
    %v592 = vpop.xlane.xlu0 %591
    %v593 = vsel %vm123, %v575, 0.0
    %594 = vadd.xlane.f32.xlu0 %v593
    %v595 = vpop.xlane.xlu0 %594
    %v596 = vsel %vm123, %v576, 0.0
    %597 = vadd.xlane.f32.xlu0 %v596
    %v598 = vpop.xlane.xlu0 %597
    %v599 = vsel %vm123, %v577, 0.0
    %600 = vadd.xlane.f32.xlu0 %v599
    %v601 = vpop.xlane.xlu0 %600
    %v602 = vmul.f32 %v580, %v277
    %v603 = vmul.f32 %v583, %v277
    %v604 = vmul.f32 %v586, %v277
    %v605 = vmul.f32 %v589, %v277
    %v606 = vmul.f32 %v592, %v277
    %v607 = vmul.f32 %v595, %v277
    %v608 = vmul.f32 %v598, %v277
    %v609 = vmul.f32 %v601, %v277
    %v610 = vadd.f32 %v602, 1e-05
    %v611 = vadd.f32 %v603, 1e-05
    %v612 = vadd.f32 %v604, 1e-05
    %v613 = vadd.f32 %v605, 1e-05
    %v614 = vadd.f32 %v606, 1e-05
    %v615 = vadd.f32 %v607, 1e-05
    %v616 = vadd.f32 %v608, 1e-05
    %v617 = vadd.f32 %v609, 1e-05
    %v618 = vrsqrt.pop %v610
    %v619 = vrsqrt.pop %v611
    %v620 = vrsqrt.pop %v612
    %v621 = vrsqrt.pop %v613
    %v622 = vrsqrt.pop %v614
    %v623 = vrsqrt.pop %v615
    %v624 = vrsqrt.pop %v616
    %v625 = vrsqrt.pop %v617
    %v626 = vmul.f32 %v562, %v618
    %v627 = vmul.f32 %v563, %v619
    %v628 = vmul.f32 %v564, %v620
    %v629 = vmul.f32 %v565, %v621
    %v630 = vmul.f32 %v566, %v622
    %v631 = vmul.f32 %v567, %v623
    %v632 = vmul.f32 %v568, %v624
    %v633 = vmul.f32 %v569, %v625
    %v634 = vlaneseq
    %v635 = vshrl.u32 %v634, 7
    %v636 = vsub.s32 1, %v635
    %v637 = vrot.slane %v391, %v636
    %v638 = vmul.f32 %v626, %v637
    %v639 = vmul.f32 %v627, %v637
    %v640 = vmul.f32 %v628, %v637
    %v641 = vmul.f32 %v629, %v637
    %v642 = vmul.f32 %v630, %v637
    %v643 = vmul.f32 %v631, %v637
    %v644 = vmul.f32 %v632, %v637
    %v645 = vmul.f32 %v633, %v637
    %v646 = vlaneseq
    %v647 = vshrl.u32 %v646, 7
    %v648 = vsub.s32 2, %v647
    %v649 = vrot.slane %v391, %v648
    %v650 = vadd.f32 %v638, %v649
    %v651 = vadd.f32 %v639, %v649
    %v652 = vadd.f32 %v640, %v649
    %v653 = vadd.f32 %v641, %v649
    %v654 = vadd.f32 %v642, %v649
    %v655 = vadd.f32 %v643, %v649
    %v656 = vadd.f32 %v644, %v649
    %v657 = vadd.f32 %v645, %v649
    %v658 = vmax.f32 %v650, 0.0
    %v659 = vmax.f32 %v651, 0.0
    %v660 = vmax.f32 %v652, 0.0
    %v661 = vmax.f32 %v653, 0.0
    %v662 = vmax.f32 %v654, 0.0
    %v663 = vmax.f32 %v655, 0.0
    %v664 = vmax.f32 %v656, 0.0
    %v665 = vmax.f32 %v657, 0.0
    %v666 = vld [vmem:[#allocation8] sm:$0xff]
    %v667 = vld [vmem:[#allocation8 + $0x8] sm:$0xff]
    %v668 = vld [vmem:[#allocation8 + $0x10] sm:$0xff]
    %v669 = vld [vmem:[#allocation8 + $0x18] sm:$0xff]
    %v670 = vld [vmem:[%s5] sm:$0x1]
    %v672 = vlaneseq
    %v673 = vshrl.u32 %v672, 7
    %v674 = vsub.s32 0, %v673
    %v675 = vrot.slane %v670, %v674
    %v678 = vsel %vm123, %v658, 0
    %v681 = vsel %vm123, %v659, 0
    %v684 = vsel %vm123, %v660, 0
    %v687 = vsel %vm123, %v661, 0
    %v690 = vsel %vm123, %v662, 0
    %v693 = vsel %vm123, %v663, 0
    %v696 = vsel %vm123, %v664, 0
    %v699 = vsel %vm123, %v665, 0
    %701 = vmatprep.subr.mxu0 0.0
    %702 = vmatpush1.msra.mxu0 %v666
    %703 = vmatprep.subr.mxu0 0.0
    %704 = vmatpush1.msra.mxu0 %v667
    %705 = vmatprep.subr.mxu0 0.0
    %706 = vmatpush1.msra.mxu0 %v668
    %707 = vmatprep.subr.mxu0 0.0
    %708 = vmatpush1.msra.mxu0 %v669
    %709 = vmatprep.subr.mxu0 0.0
    %710 = vmatpush1.msra.mxu0 0.0
    %711 = vmatprep.subr.mxu0 0.0
    %712 = vmatpush1.msra.mxu0 0.0
    %713 = vmatprep.subr.mxu0 0.0
    %714 = vmatpush1.msra.mxu0 0.0
    %715 = vmatprep.subr.mxu0 0.0
    %716 = vmatpush1.msra.mxu0 0.0
    %717 = vmatprep.subr.mxu0 0.0
    %718 = vmatpush1.msra.mxu0 0.0
    %719 = vmatprep.subr.mxu0 0.0
    %720 = vmatpush1.msra.mxu0 0.0
    %721 = vmatprep.subr.mxu0 0.0
    %722 = vmatpush1.msra.mxu0 0.0
    %723 = vmatprep.subr.mxu0 0.0
    %724 = vmatpush1.msra.mxu0 0.0
    %725 = vmatprep.subr.mxu0 0.0
    %726 = vmatpush1.msra.mxu0 0.0
    %727 = vmatprep.subr.mxu0 0.0
    %728 = vmatpush1.msra.mxu0 0.0
    %729 = vmatprep.subr.mxu0 0.0
    %730 = vmatpush1.msra.mxu0 0.0
    %731 = vmatprep.subr.mxu0 0.0
    %732 = vmatpush1.msra.mxu0 0.0
    %733 = vmatprep.subr.mxu0 0.0
    %734 = vmatpush1.msra.mxu0 0.0
    %735 = vmatprep.subr.mxu0 0.0
    %736 = vmatpush1.msra.mxu0 0.0
    %737 = vmatprep.subr.mxu0 0.0
    %738 = vmatpush1.msra.mxu0 0.0
    %739 = vmatprep.subr.mxu0 0.0
    %740 = vmatpush1.msra.mxu0 0.0
    %741 = vmatprep.subr.mxu0 0.0
    %742 = vmatpush1.msra.mxu0 0.0
    %743 = vmatprep.subr.mxu0 0.0
    %744 = vmatpush1.msra.mxu0 0.0
    %745 = vmatprep.subr.mxu0 0.0
    %746 = vmatpush1.msra.mxu0 0.0
    %747 = vmatprep.subr.mxu0 0.0
    %748 = vmatpush1.msra.mxu0 0.0
    %749 = vmatprep.subr.mxu0 0.0
    %750 = vmatpush1.msra.mxu0 0.0
    %751 = vmatprep.subr.mxu0 0.0
    %752 = vmatpush1.msra.mxu0 0.0
    %753 = vmatprep.subr.mxu0 0.0
    %754 = vmatpush1.msra.mxu0 0.0
    %755 = vmatprep.subr.mxu0 0.0
    %756 = vmatpush1.msra.mxu0 0.0
    %757 = vmatprep.subr.mxu0 0.0
    %758 = vmatpush1.msra.mxu0 0.0
    %759 = vmatprep.subr.mxu0 0.0
    %760 = vmatpush1.msra.mxu0 0.0
    %761 = vmatprep.subr.mxu0 0.0
    %762 = vmatpush1.msra.mxu0 0.0
    %763 = vmatprep.subr.mxu0 0.0
    %764 = vmatpush1.msra.mxu0 0.0
    %765 = vmatprep.mubr.f32.mxu0 0.0
    %766 = vmatmul.mubr.f32.gmra.mrb[0].mxu0 %v678
    %v767 = vpop.f32.mrb[0].mxu0
    %v768 = vadd.f32 %v675, %v767
    %v769 = vpop.f32.mrb[0].mxu0
    %770 = vmatprep.mubr.f32.mxu0 0.0
    %771 = vmatmul.mubr.f32.gmra.mrb[0].mxu0 %v681
    %v772 = vpop.f32.mrb[0].mxu0
    %v773 = vadd.f32 %v675, %v772
    %v774 = vpop.f32.mrb[0].mxu0
    %775 = vmatprep.mubr.f32.mxu0 0.0
    %776 = vmatmul.mubr.f32.gmra.mrb[0].mxu0 %v684
    %v777 = vpop.f32.mrb[0].mxu0
    %v778 = vadd.f32 %v675, %v777
    %v779 = vpop.f32.mrb[0].mxu0
    %780 = vmatprep.mubr.f32.mxu0 0.0
    %781 = vmatmul.mubr.f32.gmra.mrb[0].mxu0 %v687
    %v782 = vpop.f32.mrb[0].mxu0
    %v783 = vadd.f32 %v675, %v782
    %v784 = vpop.f32.mrb[0].mxu0
    %785 = vmatprep.mubr.f32.mxu0 0.0
    %786 = vmatmul.mubr.f32.gmra.mrb[0].mxu0 %v690
    %v787 = vpop.f32.mrb[0].mxu0
    %v788 = vadd.f32 %v675, %v787
    %v789 = vpop.f32.mrb[0].mxu0
    %790 = vmatprep.mubr.f32.mxu0 0.0
    %791 = vmatmul.mubr.f32.gmra.mrb[0].mxu0 %v693
    %v792 = vpop.f32.mrb[0].mxu0
    %v793 = vadd.f32 %v675, %v792
    %v794 = vpop.f32.mrb[0].mxu0
    %795 = vmatprep.mubr.f32.mxu0 0.0
    %796 = vmatmul.mubr.f32.gmra.mrb[0].mxu0 %v696
    %v797 = vpop.f32.mrb[0].mxu0
    %v798 = vadd.f32 %v675, %v797
    %v799 = vpop.f32.mrb[0].mxu0
    %800 = vmatprep.mubr.f32.mxu0 0.0
    %801 = vmatmul.mubr.f32.gmra.mrb[0].mxu0 %v699
    %v802 = vpop.f32.mrb[0].mxu0
    %v803 = vadd.f32 %v675, %v802
    %v804 = vpop.f32.mrb[0].mxu0
    %805 = vdwg.mxu0
    %v806 = vmul.f32 %v768, 0.25
    %v807 = vmul.f32 %v773, 0.25
    %v808 = vmul.f32 %v778, 0.25
    %v809 = vmul.f32 %v783, 0.25
    %v810 = vmul.f32 %v788, 0.25
    %v811 = vmul.f32 %v793, 0.25
    %v812 = vmul.f32 %v798, 0.25
    %v813 = vmul.f32 %v803, 0.25
    %815 = vrot.lane.b32.xlu0 %v768, 96
    %v816 = vpop.permute.xlu0 %815
    %vm817 = vcmask 130048
    %v819 = vsel %vm817, %v806, 0
    %v821 = vsel %vm817, %v816, 0
    %823 = vmatprep.subr.mxu0 0.0
    %824 = vmatpush1.xpose.msra.mxu0 %v821
    %825 = vmatprep.subr.mxu0 0.0
    %826 = vmatpush1.xpose.msra.mxu0 0.0
    %827 = vmatprep.subr.mxu0 0.0
    %828 = vmatpush1.xpose.msra.mxu0 0.0
    %829 = vmatprep.subr.mxu0 0.0
    %830 = vmatpush1.xpose.msra.mxu0 0.0
    %831 = vmatprep.subr.mxu0 0.0
    %832 = vmatpush1.xpose.msra.mxu0 0.0
    %833 = vmatprep.subr.mxu0 0.0
    %834 = vmatpush1.xpose.msra.mxu0 0.0
    %835 = vmatprep.subr.mxu0 0.0
    %836 = vmatpush1.xpose.msra.mxu0 0.0
    %837 = vmatprep.subr.mxu0 0.0
    %838 = vmatpush1.xpose.msra.mxu0 0.0
    %839 = vmatprep.subr.mxu0 0.0
    %840 = vmatpush1.xpose.msra.mxu0 0.0
    %841 = vmatprep.subr.mxu0 0.0
    %842 = vmatpush1.xpose.msra.mxu0 0.0
    %843 = vmatprep.subr.mxu0 0.0
    %844 = vmatpush1.xpose.msra.mxu0 0.0
    %845 = vmatprep.subr.mxu0 0.0
    %846 = vmatpush1.xpose.msra.mxu0 0.0
    %847 = vmatprep.subr.mxu0 0.0
    %848 = vmatpush1.xpose.msra.mxu0 0.0
    %849 = vmatprep.subr.mxu0 0.0
    %850 = vmatpush1.xpose.msra.mxu0 0.0
    %851 = vmatprep.subr.mxu0 0.0
    %852 = vmatpush1.xpose.msra.mxu0 0.0
    %853 = vmatprep.subr.mxu0 0.0
    %854 = vmatpush1.xpose.msra.mxu0 0.0
    %855 = vmatprep.subr.mxu0 0.0
    %856 = vmatpush1.xpose.msra.mxu0 0.0
    %857 = vmatprep.subr.mxu0 0.0
    %858 = vmatpush1.xpose.msra.mxu0 0.0
    %859 = vmatprep.subr.mxu0 0.0
    %860 = vmatpush1.xpose.msra.mxu0 0.0
    %861 = vmatprep.subr.mxu0 0.0
    %862 = vmatpush1.xpose.msra.mxu0 0.0
    %863 = vmatprep.subr.mxu0 0.0
    %864 = vmatpush1.xpose.msra.mxu0 0.0
    %865 = vmatprep.subr.mxu0 0.0
    %866 = vmatpush1.xpose.msra.mxu0 0.0
    %867 = vmatprep.subr.mxu0 0.0
    %868 = vmatpush1.xpose.msra.mxu0 0.0
    %869 = vmatprep.subr.mxu0 0.0
    %870 = vmatpush1.xpose.msra.mxu0 0.0
    %871 = vmatprep.subr.mxu0 0.0
    %872 = vmatpush1.xpose.msra.mxu0 0.0
    %873 = vmatprep.subr.mxu0 0.0
    %874 = vmatpush1.xpose.msra.mxu0 0.0
    %875 = vmatprep.subr.mxu0 0.0
    %876 = vmatpush1.xpose.msra.mxu0 0.0
    %877 = vmatprep.subr.mxu0 0.0
    %878 = vmatpush1.xpose.msra.mxu0 0.0
    %879 = vmatprep.subr.mxu0 0.0
    %880 = vmatpush1.xpose.msra.mxu0 0.0
    %881 = vmatprep.subr.mxu0 0.0
    %882 = vmatpush1.xpose.msra.mxu0 0.0
    %883 = vmatprep.subr.mxu0 0.0
    %884 = vmatpush1.xpose.msra.mxu0 0.0
    %885 = vmatprep.subr.mxu0 0.0
    %886 = vmatpush1.xpose.msra.mxu0 0.0
    %887 = vmatprep.mubr.f32.mxu0 0.0
    %888 = vmatmul.mubr.f32.gmra.mrb[0].mxu0 %v819
    %v889 = vpop.f32.mrb[0].mxu0
    %v890 = vadd.f32 %v98, %v889
    %v891 = vpop.f32.mrb[0].mxu0
    %892 = vdwg.mxu0
    %894 = vrot.lane.b32.xlu0 %v773, 96
    %v895 = vpop.permute.xlu0 %894
    %v897 = vsel %vm817, %v807, 0
    %v899 = vsel %vm817, %v895, 0
    %901 = vmatprep.subr.mxu0 0.0
    %902 = vmatpush1.xpose.msra.mxu0 %v899
    %903 = vmatprep.subr.mxu0 0.0
    %904 = vmatpush1.xpose.msra.mxu0 0.0
    %905 = vmatprep.subr.mxu0 0.0
    %906 = vmatpush1.xpose.msra.mxu0 0.0
    %907 = vmatprep.subr.mxu0 0.0
    %908 = vmatpush1.xpose.msra.mxu0 0.0
    %909 = vmatprep.subr.mxu0 0.0
    %910 = vmatpush1.xpose.msra.mxu0 0.0
    %911 = vmatprep.subr.mxu0 0.0
    %912 = vmatpush1.xpose.msra.mxu0 0.0
    %913 = vmatprep.subr.mxu0 0.0
    %914 = vmatpush1.xpose.msra.mxu0 0.0
    %915 = vmatprep.subr.mxu0 0.0
    %916 = vmatpush1.xpose.msra.mxu0 0.0
    %917 = vmatprep.subr.mxu0 0.0
    %918 = vmatpush1.xpose.msra.mxu0 0.0
    %919 = vmatprep.subr.mxu0 0.0
    %920 = vmatpush1.xpose.msra.mxu0 0.0
    %921 = vmatprep.subr.mxu0 0.0
    %922 = vmatpush1.xpose.msra.mxu0 0.0
    %923 = vmatprep.subr.mxu0 0.0
    %924 = vmatpush1.xpose.msra.mxu0 0.0
    %925 = vmatprep.subr.mxu0 0.0
    %926 = vmatpush1.xpose.msra.mxu0 0.0
    %927 = vmatprep.subr.mxu0 0.0
    %928 = vmatpush1.xpose.msra.mxu0 0.0
    %929 = vmatprep.subr.mxu0 0.0
    %930 = vmatpush1.xpose.msra.mxu0 0.0
    %931 = vmatprep.subr.mxu0 0.0
    %932 = vmatpush1.xpose.msra.mxu0 0.0
    %933 = vmatprep.subr.mxu0 0.0
    %934 = vmatpush1.xpose.msra.mxu0 0.0
    %935 = vmatprep.subr.mxu0 0.0
    %936 = vmatpush1.xpose.msra.mxu0 0.0
    %937 = vmatprep.subr.mxu0 0.0
    %938 = vmatpush1.xpose.msra.mxu0 0.0
    %939 = vmatprep.subr.mxu0 0.0
    %940 = vmatpush1.xpose.msra.mxu0 0.0
    %941 = vmatprep.subr.mxu0 0.0
    %942 = vmatpush1.xpose.msra.mxu0 0.0
    %943 = vmatprep.subr.mxu0 0.0
    %944 = vmatpush1.xpose.msra.mxu0 0.0
    %945 = vmatprep.subr.mxu0 0.0
    %946 = vmatpush1.xpose.msra.mxu0 0.0
    %947 = vmatprep.subr.mxu0 0.0
    %948 = vmatpush1.xpose.msra.mxu0 0.0
    %949 = vmatprep.subr.mxu0 0.0
    %950 = vmatpush1.xpose.msra.mxu0 0.0
    %951 = vmatprep.subr.mxu0 0.0
    %952 = vmatpush1.xpose.msra.mxu0 0.0
    %953 = vmatprep.subr.mxu0 0.0
    %954 = vmatpush1.xpose.msra.mxu0 0.0
    %955 = vmatprep.subr.mxu0 0.0
    %956 = vmatpush1.xpose.msra.mxu0 0.0
    %957 = vmatprep.subr.mxu0 0.0
    %958 = vmatpush1.xpose.msra.mxu0 0.0
    %959 = vmatprep.subr.mxu0 0.0
    %960 = vmatpush1.xpose.msra.mxu0 0.0
    %961 = vmatprep.subr.mxu0 0.0
    %962 = vmatpush1.xpose.msra.mxu0 0.0
    %963 = vmatprep.subr.mxu0 0.0
    %964 = vmatpush1.xpose.msra.mxu0 0.0
    %965 = vmatprep.mubr.f32.mxu0 0.0
    %966 = vmatmul.mubr.f32.gmra.mrb[0].mxu0 %v897
    %v967 = vpop.f32.mrb[0].mxu0
    %v968 = vadd.f32 %v99, %v967
    %v969 = vpop.f32.mrb[0].mxu0
    %970 = vdwg.mxu0
    %972 = vrot.lane.b32.xlu0 %v778, 96
    %v973 = vpop.permute.xlu0 %972
    %v975 = vsel %vm817, %v808, 0
    %v977 = vsel %vm817, %v973, 0
    %979 = vmatprep.subr.mxu0 0.0
    %980 = vmatpush1.xpose.msra.mxu0 %v977
    %981 = vmatprep.subr.mxu0 0.0
    %982 = vmatpush1.xpose.msra.mxu0 0.0
    %983 = vmatprep.subr.mxu0 0.0
    %984 = vmatpush1.xpose.msra.mxu0 0.0
    %985 = vmatprep.subr.mxu0 0.0
    %986 = vmatpush1.xpose.msra.mxu0 0.0
    %987 = vmatprep.subr.mxu0 0.0
    %988 = vmatpush1.xpose.msra.mxu0 0.0
    %989 = vmatprep.subr.mxu0 0.0
    %990 = vmatpush1.xpose.msra.mxu0 0.0
    %991 = vmatprep.subr.mxu0 0.0
    %992 = vmatpush1.xpose.msra.mxu0 0.0
    %993 = vmatprep.subr.mxu0 0.0
    %994 = vmatpush1.xpose.msra.mxu0 0.0
    %995 = vmatprep.subr.mxu0 0.0
    %996 = vmatpush1.xpose.msra.mxu0 0.0
    %997 = vmatprep.subr.mxu0 0.0
    %998 = vmatpush1.xpose.msra.mxu0 0.0
    %999 = vmatprep.subr.mxu0 0.0
    %1000 = vmatpush1.xpose.msra.mxu0 0.0
    %1001 = vmatprep.subr.mxu0 0.0
    %1002 = vmatpush1.xpose.msra.mxu0 0.0
    %1003 = vmatprep.subr.mxu0 0.0
    %1004 = vmatpush1.xpose.msra.mxu0 0.0
    %1005 = vmatprep.subr.mxu0 0.0
    %1006 = vmatpush1.xpose.msra.mxu0 0.0
    %1007 = vmatprep.subr.mxu0 0.0
    %1008 = vmatpush1.xpose.msra.mxu0 0.0
    %1009 = vmatprep.subr.mxu0 0.0
    %1010 = vmatpush1.xpose.msra.mxu0 0.0
    %1011 = vmatprep.subr.mxu0 0.0
    %1012 = vmatpush1.xpose.msra.mxu0 0.0
    %1013 = vmatprep.subr.mxu0 0.0
    %1014 = vmatpush1.xpose.msra.mxu0 0.0
    %1015 = vmatprep.subr.mxu0 0.0
    %1016 = vmatpush1.xpose.msra.mxu0 0.0
    %1017 = vmatprep.subr.mxu0 0.0
    %1018 = vmatpush1.xpose.msra.mxu0 0.0
    %1019 = vmatprep.subr.mxu0 0.0
    %1020 = vmatpush1.xpose.msra.mxu0 0.0
    %1021 = vmatprep.subr.mxu0 0.0
    %1022 = vmatpush1.xpose.msra.mxu0 0.0
    %1023 = vmatprep.subr.mxu0 0.0
    %1024 = vmatpush1.xpose.msra.mxu0 0.0
    %1025 = vmatprep.subr.mxu0 0.0
    %1026 = vmatpush1.xpose.msra.mxu0 0.0
    %1027 = vmatprep.subr.mxu0 0.0
    %1028 = vmatpush1.xpose.msra.mxu0 0.0
    %1029 = vmatprep.subr.mxu0 0.0
    %1030 = vmatpush1.xpose.msra.mxu0 0.0
    %1031 = vmatprep.subr.mxu0 0.0
    %1032 = vmatpush1.xpose.msra.mxu0 0.0
    %1033 = vmatprep.subr.mxu0 0.0
    %1034 = vmatpush1.xpose.msra.mxu0 0.0
    %1035 = vmatprep.subr.mxu0 0.0
    %1036 = vmatpush1.xpose.msra.mxu0 0.0
    %1037 = vmatprep.subr.mxu0 0.0
    %1038 = vmatpush1.xpose.msra.mxu0 0.0
    %1039 = vmatprep.subr.mxu0 0.0
    %1040 = vmatpush1.xpose.msra.mxu0 0.0
    %1041 = vmatprep.subr.mxu0 0.0
    %1042 = vmatpush1.xpose.msra.mxu0 0.0
    %1043 = vmatprep.mubr.f32.mxu0 0.0
    %1044 = vmatmul.mubr.f32.gmra.mrb[0].mxu0 %v975
    %v1045 = vpop.f32.mrb[0].mxu0
    %v1046 = vadd.f32 %v100, %v1045
    %v1047 = vpop.f32.mrb[0].mxu0
    %1048 = vdwg.mxu0
    %1050 = vrot.lane.b32.xlu0 %v783, 96
    %v1051 = vpop.permute.xlu0 %1050
    %v1053 = vsel %vm817, %v809, 0
    %v1055 = vsel %vm817, %v1051, 0
    %1057 = vmatprep.subr.mxu0 0.0
    %1058 = vmatpush1.xpose.msra.mxu0 %v1055
    %1059 = vmatprep.subr.mxu0 0.0
    %1060 = vmatpush1.xpose.msra.mxu0 0.0
    %1061 = vmatprep.subr.mxu0 0.0
    %1062 = vmatpush1.xpose.msra.mxu0 0.0
    %1063 = vmatprep.subr.mxu0 0.0
    %1064 = vmatpush1.xpose.msra.mxu0 0.0
    %1065 = vmatprep.subr.mxu0 0.0
    %1066 = vmatpush1.xpose.msra.mxu0 0.0
    %1067 = vmatprep.subr.mxu0 0.0
    %1068 = vmatpush1.xpose.msra.mxu0 0.0
    %1069 = vmatprep.subr.mxu0 0.0
    %1070 = vmatpush1.xpose.msra.mxu0 0.0
    %1071 = vmatprep.subr.mxu0 0.0
    %1072 = vmatpush1.xpose.msra.mxu0 0.0
    %1073 = vmatprep.subr.mxu0 0.0
    %1074 = vmatpush1.xpose.msra.mxu0 0.0
    %1075 = vmatprep.subr.mxu0 0.0
    %1076 = vmatpush1.xpose.msra.mxu0 0.0
    %1077 = vmatprep.subr.mxu0 0.0
    %1078 = vmatpush1.xpose.msra.mxu0 0.0
    %1079 = vmatprep.subr.mxu0 0.0
    %1080 = vmatpush1.xpose.msra.mxu0 0.0
    %1081 = vmatprep.subr.mxu0 0.0
    %1082 = vmatpush1.xpose.msra.mxu0 0.0
    %1083 = vmatprep.subr.mxu0 0.0
    %1084 = vmatpush1.xpose.msra.mxu0 0.0
    %1085 = vmatprep.subr.mxu0 0.0
    %1086 = vmatpush1.xpose.msra.mxu0 0.0
    %1087 = vmatprep.subr.mxu0 0.0
    %1088 = vmatpush1.xpose.msra.mxu0 0.0
    %1089 = vmatprep.subr.mxu0 0.0
    %1090 = vmatpush1.xpose.msra.mxu0 0.0
    %1091 = vmatprep.subr.mxu0 0.0
    %1092 = vmatpush1.xpose.msra.mxu0 0.0
    %1093 = vmatprep.subr.mxu0 0.0
    %1094 = vmatpush1.xpose.msra.mxu0 0.0
    %1095 = vmatprep.subr.mxu0 0.0
    %1096 = vmatpush1.xpose.msra.mxu0 0.0
    %1097 = vmatprep.subr.mxu0 0.0
    %1098 = vmatpush1.xpose.msra.mxu0 0.0
    %1099 = vmatprep.subr.mxu0 0.0
    %1100 = vmatpush1.xpose.msra.mxu0 0.0
    %1101 = vmatprep.subr.mxu0 0.0
    %1102 = vmatpush1.xpose.msra.mxu0 0.0
    %1103 = vmatprep.subr.mxu0 0.0
    %1104 = vmatpush1.xpose.msra.mxu0 0.0
    %1105 = vmatprep.subr.mxu0 0.0
    %1106 = vmatpush1.xpose.msra.mxu0 0.0
    %1107 = vmatprep.subr.mxu0 0.0
    %1108 = vmatpush1.xpose.msra.mxu0 0.0
    %1109 = vmatprep.subr.mxu0 0.0
    %1110 = vmatpush1.xpose.msra.mxu0 0.0
    %1111 = vmatprep.subr.mxu0 0.0
    %1112 = vmatpush1.xpose.msra.mxu0 0.0
    %1113 = vmatprep.subr.mxu0 0.0
    %1114 = vmatpush1.xpose.msra.mxu0 0.0
    %1115 = vmatprep.subr.mxu0 0.0
    %1116 = vmatpush1.xpose.msra.mxu0 0.0
    %1117 = vmatprep.subr.mxu0 0.0
    %1118 = vmatpush1.xpose.msra.mxu0 0.0
    %1119 = vmatprep.subr.mxu0 0.0
    %1120 = vmatpush1.xpose.msra.mxu0 0.0
    %1121 = vmatprep.mubr.f32.mxu0 0.0
    %1122 = vmatmul.mubr.f32.gmra.mrb[0].mxu0 %v1053
    %v1123 = vpop.f32.mrb[0].mxu0
    %v1124 = vadd.f32 %v101, %v1123
    %v1125 = vpop.f32.mrb[0].mxu0
    %1126 = vdwg.mxu0
    %1128 = vrot.lane.b32.xlu0 %v788, 96
    %v1129 = vpop.permute.xlu0 %1128
    %v1131 = vsel %vm817, %v810, 0
    %v1133 = vsel %vm817, %v1129, 0
    %1135 = vmatprep.subr.mxu0 0.0
    %1136 = vmatpush1.xpose.msra.mxu0 %v1133
    %1137 = vmatprep.subr.mxu0 0.0
    %1138 = vmatpush1.xpose.msra.mxu0 0.0
    %1139 = vmatprep.subr.mxu0 0.0
    %1140 = vmatpush1.xpose.msra.mxu0 0.0
    %1141 = vmatprep.subr.mxu0 0.0
    %1142 = vmatpush1.xpose.msra.mxu0 0.0
    %1143 = vmatprep.subr.mxu0 0.0
    %1144 = vmatpush1.xpose.msra.mxu0 0.0
    %1145 = vmatprep.subr.mxu0 0.0
    %1146 = vmatpush1.xpose.msra.mxu0 0.0
    %1147 = vmatprep.subr.mxu0 0.0
    %1148 = vmatpush1.xpose.msra.mxu0 0.0
    %1149 = vmatprep.subr.mxu0 0.0
    %1150 = vmatpush1.xpose.msra.mxu0 0.0
    %1151 = vmatprep.subr.mxu0 0.0
    %1152 = vmatpush1.xpose.msra.mxu0 0.0
    %1153 = vmatprep.subr.mxu0 0.0
    %1154 = vmatpush1.xpose.msra.mxu0 0.0
    %1155 = vmatprep.subr.mxu0 0.0
    %1156 = vmatpush1.xpose.msra.mxu0 0.0
    %1157 = vmatprep.subr.mxu0 0.0
    %1158 = vmatpush1.xpose.msra.mxu0 0.0
    %1159 = vmatprep.subr.mxu0 0.0
    %1160 = vmatpush1.xpose.msra.mxu0 0.0
    %1161 = vmatprep.subr.mxu0 0.0
    %1162 = vmatpush1.xpose.msra.mxu0 0.0
    %1163 = vmatprep.subr.mxu0 0.0
    %1164 = vmatpush1.xpose.msra.mxu0 0.0
    %1165 = vmatprep.subr.mxu0 0.0
    %1166 = vmatpush1.xpose.msra.mxu0 0.0
    %1167 = vmatprep.subr.mxu0 0.0
    %1168 = vmatpush1.xpose.msra.mxu0 0.0
    %1169 = vmatprep.subr.mxu0 0.0
    %1170 = vmatpush1.xpose.msra.mxu0 0.0
    %1171 = vmatprep.subr.mxu0 0.0
    %1172 = vmatpush1.xpose.msra.mxu0 0.0
    %1173 = vmatprep.subr.mxu0 0.0
    %1174 = vmatpush1.xpose.msra.mxu0 0.0
    %1175 = vmatprep.subr.mxu0 0.0
    %1176 = vmatpush1.xpose.msra.mxu0 0.0
    %1177 = vmatprep.subr.mxu0 0.0
    %1178 = vmatpush1.xpose.msra.mxu0 0.0
    %1179 = vmatprep.subr.mxu0 0.0
    %1180 = vmatpush1.xpose.msra.mxu0 0.0
    %1181 = vmatprep.subr.mxu0 0.0
    %1182 = vmatpush1.xpose.msra.mxu0 0.0
    %1183 = vmatprep.subr.mxu0 0.0
    %1184 = vmatpush1.xpose.msra.mxu0 0.0
    %1185 = vmatprep.subr.mxu0 0.0
    %1186 = vmatpush1.xpose.msra.mxu0 0.0
    %1187 = vmatprep.subr.mxu0 0.0
    %1188 = vmatpush1.xpose.msra.mxu0 0.0
    %1189 = vmatprep.subr.mxu0 0.0
    %1190 = vmatpush1.xpose.msra.mxu0 0.0
    %1191 = vmatprep.subr.mxu0 0.0
    %1192 = vmatpush1.xpose.msra.mxu0 0.0
    %1193 = vmatprep.subr.mxu0 0.0
    %1194 = vmatpush1.xpose.msra.mxu0 0.0
    %1195 = vmatprep.subr.mxu0 0.0
    %1196 = vmatpush1.xpose.msra.mxu0 0.0
    %1197 = vmatprep.subr.mxu0 0.0
    %1198 = vmatpush1.xpose.msra.mxu0 0.0
    %1199 = vmatprep.mubr.f32.mxu0 0.0
    %1200 = vmatmul.mubr.f32.gmra.mrb[0].mxu0 %v1131
    %v1201 = vpop.f32.mrb[0].mxu0
    %v1202 = vadd.f32 %v102, %v1201
    %v1203 = vpop.f32.mrb[0].mxu0
    %1204 = vdwg.mxu0
    %1206 = vrot.lane.b32.xlu0 %v793, 96
    %v1207 = vpop.permute.xlu0 %1206
    %v1209 = vsel %vm817, %v811, 0
    %v1211 = vsel %vm817, %v1207, 0
    %1213 = vmatprep.subr.mxu0 0.0
    %1214 = vmatpush1.xpose.msra.mxu0 %v1211
    %1215 = vmatprep.subr.mxu0 0.0
    %1216 = vmatpush1.xpose.msra.mxu0 0.0
    %1217 = vmatprep.subr.mxu0 0.0
    %1218 = vmatpush1.xpose.msra.mxu0 0.0
    %1219 = vmatprep.subr.mxu0 0.0
    %1220 = vmatpush1.xpose.msra.mxu0 0.0
    %1221 = vmatprep.subr.mxu0 0.0
    %1222 = vmatpush1.xpose.msra.mxu0 0.0
    %1223 = vmatprep.subr.mxu0 0.0
    %1224 = vmatpush1.xpose.msra.mxu0 0.0
    %1225 = vmatprep.subr.mxu0 0.0
    %1226 = vmatpush1.xpose.msra.mxu0 0.0
    %1227 = vmatprep.subr.mxu0 0.0
    %1228 = vmatpush1.xpose.msra.mxu0 0.0
    %1229 = vmatprep.subr.mxu0 0.0
    %1230 = vmatpush1.xpose.msra.mxu0 0.0
    %1231 = vmatprep.subr.mxu0 0.0
    %1232 = vmatpush1.xpose.msra.mxu0 0.0
    %1233 = vmatprep.subr.mxu0 0.0
    %1234 = vmatpush1.xpose.msra.mxu0 0.0
    %1235 = vmatprep.subr.mxu0 0.0
    %1236 = vmatpush1.xpose.msra.mxu0 0.0
    %1237 = vmatprep.subr.mxu0 0.0
    %1238 = vmatpush1.xpose.msra.mxu0 0.0
    %1239 = vmatprep.subr.mxu0 0.0
    %1240 = vmatpush1.xpose.msra.mxu0 0.0
    %1241 = vmatprep.subr.mxu0 0.0
    %1242 = vmatpush1.xpose.msra.mxu0 0.0
    %1243 = vmatprep.subr.mxu0 0.0
    %1244 = vmatpush1.xpose.msra.mxu0 0.0
    %1245 = vmatprep.subr.mxu0 0.0
    %1246 = vmatpush1.xpose.msra.mxu0 0.0
    %1247 = vmatprep.subr.mxu0 0.0
    %1248 = vmatpush1.xpose.msra.mxu0 0.0
    %1249 = vmatprep.subr.mxu0 0.0
    %1250 = vmatpush1.xpose.msra.mxu0 0.0
    %1251 = vmatprep.subr.mxu0 0.0
    %1252 = vmatpush1.xpose.msra.mxu0 0.0
    %1253 = vmatprep.subr.mxu0 0.0
    %1254 = vmatpush1.xpose.msra.mxu0 0.0
    %1255 = vmatprep.subr.mxu0 0.0
    %1256 = vmatpush1.xpose.msra.mxu0 0.0
    %1257 = vmatprep.subr.mxu0 0.0
    %1258 = vmatpush1.xpose.msra.mxu0 0.0
    %1259 = vmatprep.subr.mxu0 0.0
    %1260 = vmatpush1.xpose.msra.mxu0 0.0
    %1261 = vmatprep.subr.mxu0 0.0
    %1262 = vmatpush1.xpose.msra.mxu0 0.0
    %1263 = vmatprep.subr.mxu0 0.0
    %1264 = vmatpush1.xpose.msra.mxu0 0.0
    %1265 = vmatprep.subr.mxu0 0.0
    %1266 = vmatpush1.xpose.msra.mxu0 0.0
    %1267 = vmatprep.subr.mxu0 0.0
    %1268 = vmatpush1.xpose.msra.mxu0 0.0
    %1269 = vmatprep.subr.mxu0 0.0
    %1270 = vmatpush1.xpose.msra.mxu0 0.0
    %1271 = vmatprep.subr.mxu0 0.0
    %1272 = vmatpush1.xpose.msra.mxu0 0.0
    %1273 = vmatprep.subr.mxu0 0.0
    %1274 = vmatpush1.xpose.msra.mxu0 0.0
    %1275 = vmatprep.subr.mxu0 0.0
    %1276 = vmatpush1.xpose.msra.mxu0 0.0
    %1277 = vmatprep.mubr.f32.mxu0 0.0
    %1278 = vmatmul.mubr.f32.gmra.mrb[0].mxu0 %v1209
    %v1279 = vpop.f32.mrb[0].mxu0
    %v1280 = vadd.f32 %v103, %v1279
    %v1281 = vpop.f32.mrb[0].mxu0
    %1282 = vdwg.mxu0
    %1284 = vrot.lane.b32.xlu0 %v798, 96
    %v1285 = vpop.permute.xlu0 %1284
    %v1287 = vsel %vm817, %v812, 0
    %v1289 = vsel %vm817, %v1285, 0
    %1291 = vmatprep.subr.mxu0 0.0
    %1292 = vmatpush1.xpose.msra.mxu0 %v1289
    %1293 = vmatprep.subr.mxu0 0.0
    %1294 = vmatpush1.xpose.msra.mxu0 0.0
    %1295 = vmatprep.subr.mxu0 0.0
    %1296 = vmatpush1.xpose.msra.mxu0 0.0
    %1297 = vmatprep.subr.mxu0 0.0
    %1298 = vmatpush1.xpose.msra.mxu0 0.0
    %1299 = vmatprep.subr.mxu0 0.0
    %1300 = vmatpush1.xpose.msra.mxu0 0.0
    %1301 = vmatprep.subr.mxu0 0.0
    %1302 = vmatpush1.xpose.msra.mxu0 0.0
    %1303 = vmatprep.subr.mxu0 0.0
    %1304 = vmatpush1.xpose.msra.mxu0 0.0
    %1305 = vmatprep.subr.mxu0 0.0
    %1306 = vmatpush1.xpose.msra.mxu0 0.0
    %1307 = vmatprep.subr.mxu0 0.0
    %1308 = vmatpush1.xpose.msra.mxu0 0.0
    %1309 = vmatprep.subr.mxu0 0.0
    %1310 = vmatpush1.xpose.msra.mxu0 0.0
    %1311 = vmatprep.subr.mxu0 0.0
    %1312 = vmatpush1.xpose.msra.mxu0 0.0
    %1313 = vmatprep.subr.mxu0 0.0
    %1314 = vmatpush1.xpose.msra.mxu0 0.0
    %1315 = vmatprep.subr.mxu0 0.0
    %1316 = vmatpush1.xpose.msra.mxu0 0.0
    %1317 = vmatprep.subr.mxu0 0.0
    %1318 = vmatpush1.xpose.msra.mxu0 0.0
    %1319 = vmatprep.subr.mxu0 0.0
    %1320 = vmatpush1.xpose.msra.mxu0 0.0
    %1321 = vmatprep.subr.mxu0 0.0
    %1322 = vmatpush1.xpose.msra.mxu0 0.0
    %1323 = vmatprep.subr.mxu0 0.0
    %1324 = vmatpush1.xpose.msra.mxu0 0.0
    %1325 = vmatprep.subr.mxu0 0.0
    %1326 = vmatpush1.xpose.msra.mxu0 0.0
    %1327 = vmatprep.subr.mxu0 0.0
    %1328 = vmatpush1.xpose.msra.mxu0 0.0
    %1329 = vmatprep.subr.mxu0 0.0
    %1330 = vmatpush1.xpose.msra.mxu0 0.0
    %1331 = vmatprep.subr.mxu0 0.0
    %1332 = vmatpush1.xpose.msra.mxu0 0.0
    %1333 = vmatprep.subr.mxu0 0.0
    %1334 = vmatpush1.xpose.msra.mxu0 0.0
    %1335 = vmatprep.subr.mxu0 0.0
    %1336 = vmatpush1.xpose.msra.mxu0 0.0
    %1337 = vmatprep.subr.mxu0 0.0
    %1338 = vmatpush1.xpose.msra.mxu0 0.0
    %1339 = vmatprep.subr.mxu0 0.0
    %1340 = vmatpush1.xpose.msra.mxu0 0.0
    %1341 = vmatprep.subr.mxu0 0.0
    %1342 = vmatpush1.xpose.msra.mxu0 0.0
    %1343 = vmatprep.subr.mxu0 0.0
    %1344 = vmatpush1.xpose.msra.mxu0 0.0
    %1345 = vmatprep.subr.mxu0 0.0
    %1346 = vmatpush1.xpose.msra.mxu0 0.0
    %1347 = vmatprep.subr.mxu0 0.0
    %1348 = vmatpush1.xpose.msra.mxu0 0.0
    %1349 = vmatprep.subr.mxu0 0.0
    %1350 = vmatpush1.xpose.msra.mxu0 0.0
    %1351 = vmatprep.subr.mxu0 0.0
    %1352 = vmatpush1.xpose.msra.mxu0 0.0
    %1353 = vmatprep.subr.mxu0 0.0
    %1354 = vmatpush1.xpose.msra.mxu0 0.0
    %1355 = vmatprep.mubr.f32.mxu0 0.0
    %1356 = vmatmul.mubr.f32.gmra.mrb[0].mxu0 %v1287
    %v1357 = vpop.f32.mrb[0].mxu0
    %v1358 = vadd.f32 %v104, %v1357
    %v1359 = vpop.f32.mrb[0].mxu0
    %1360 = vdwg.mxu0
    %1362 = vrot.lane.b32.xlu0 %v803, 96
    %v1363 = vpop.permute.xlu0 %1362
    %v1365 = vsel %vm817, %v813, 0
    %v1367 = vsel %vm817, %v1363, 0
    %1369 = vmatprep.subr.mxu0 0.0
    %1370 = vmatpush1.xpose.msra.mxu0 %v1367
    %1371 = vmatprep.subr.mxu0 0.0
    %1372 = vmatpush1.xpose.msra.mxu0 0.0
    %1373 = vmatprep.subr.mxu0 0.0
    %1374 = vmatpush1.xpose.msra.mxu0 0.0
    %1375 = vmatprep.subr.mxu0 0.0
    %1376 = vmatpush1.xpose.msra.mxu0 0.0
    %1377 = vmatprep.subr.mxu0 0.0
    %1378 = vmatpush1.xpose.msra.mxu0 0.0
    %1379 = vmatprep.subr.mxu0 0.0
    %1380 = vmatpush1.xpose.msra.mxu0 0.0
    %1381 = vmatprep.subr.mxu0 0.0
    %1382 = vmatpush1.xpose.msra.mxu0 0.0
    %1383 = vmatprep.subr.mxu0 0.0
    %1384 = vmatpush1.xpose.msra.mxu0 0.0
    %1385 = vmatprep.subr.mxu0 0.0
    %1386 = vmatpush1.xpose.msra.mxu0 0.0
    %1387 = vmatprep.subr.mxu0 0.0
    %1388 = vmatpush1.xpose.msra.mxu0 0.0
    %1389 = vmatprep.subr.mxu0 0.0
    %1390 = vmatpush1.xpose.msra.mxu0 0.0
    %1391 = vmatprep.subr.mxu0 0.0
    %1392 = vmatpush1.xpose.msra.mxu0 0.0
    %1393 = vmatprep.subr.mxu0 0.0
    %1394 = vmatpush1.xpose.msra.mxu0 0.0
    %1395 = vmatprep.subr.mxu0 0.0
    %1396 = vmatpush1.xpose.msra.mxu0 0.0
    %1397 = vmatprep.subr.mxu0 0.0
    %1398 = vmatpush1.xpose.msra.mxu0 0.0
    %1399 = vmatprep.subr.mxu0 0.0
    %1400 = vmatpush1.xpose.msra.mxu0 0.0
    %1401 = vmatprep.subr.mxu0 0.0
    %1402 = vmatpush1.xpose.msra.mxu0 0.0
    %1403 = vmatprep.subr.mxu0 0.0
    %1404 = vmatpush1.xpose.msra.mxu0 0.0
    %1405 = vmatprep.subr.mxu0 0.0
    %1406 = vmatpush1.xpose.msra.mxu0 0.0
    %1407 = vmatprep.subr.mxu0 0.0
    %1408 = vmatpush1.xpose.msra.mxu0 0.0
    %1409 = vmatprep.subr.mxu0 0.0
    %1410 = vmatpush1.xpose.msra.mxu0 0.0
    %1411 = vmatprep.subr.mxu0 0.0
    %1412 = vmatpush1.xpose.msra.mxu0 0.0
    %1413 = vmatprep.subr.mxu0 0.0
    %1414 = vmatpush1.xpose.msra.mxu0 0.0
    %1415 = vmatprep.subr.mxu0 0.0
    %1416 = vmatpush1.xpose.msra.mxu0 0.0
    %1417 = vmatprep.subr.mxu0 0.0
    %1418 = vmatpush1.xpose.msra.mxu0 0.0
    %1419 = vmatprep.subr.mxu0 0.0
    %1420 = vmatpush1.xpose.msra.mxu0 0.0
    %1421 = vmatprep.subr.mxu0 0.0
    %1422 = vmatpush1.xpose.msra.mxu0 0.0
    %1423 = vmatprep.subr.mxu0 0.0
    %1424 = vmatpush1.xpose.msra.mxu0 0.0
    %1425 = vmatprep.subr.mxu0 0.0
    %1426 = vmatpush1.xpose.msra.mxu0 0.0
    %1427 = vmatprep.subr.mxu0 0.0
    %1428 = vmatpush1.xpose.msra.mxu0 0.0
    %1429 = vmatprep.subr.mxu0 0.0
    %1430 = vmatpush1.xpose.msra.mxu0 0.0
    %1431 = vmatprep.subr.mxu0 0.0
    %1432 = vmatpush1.xpose.msra.mxu0 0.0
    %1433 = vmatprep.mubr.f32.mxu0 0.0
    %1434 = vmatmul.mubr.f32.gmra.mrb[0].mxu0 %v1365
    %v1435 = vpop.f32.mrb[0].mxu0
    %v1436 = vadd.f32 %v105, %v1435
    %v1437 = vpop.f32.mrb[0].mxu0
    %1438 = vdwg.mxu0
    %vm1439 = vcmask 64512
    %v1440 = vsel %vm1439, %v890, -inf
    %1441 = vmax.xlane.f32.xlu0 %v1440
    %v1442 = vpop.xlane.xlu0 %1441
    %v1443 = vsel %vm1439, %v968, -inf
    %1444 = vmax.xlane.f32.xlu0 %v1443
    %v1445 = vpop.xlane.xlu0 %1444
    %v1446 = vsel %vm1439, %v1046, -inf
    %1447 = vmax.xlane.f32.xlu0 %v1446
    %v1448 = vpop.xlane.xlu0 %1447
    %v1449 = vsel %vm1439, %v1124, -inf
    %1450 = vmax.xlane.f32.xlu0 %v1449
    %v1451 = vpop.xlane.xlu0 %1450
    %v1452 = vsel %vm1439, %v1202, -inf
    %1453 = vmax.xlane.f32.xlu0 %v1452
    %v1454 = vpop.xlane.xlu0 %1453
    %v1455 = vsel %vm1439, %v1280, -inf
    %1456 = vmax.xlane.f32.xlu0 %v1455
    %v1457 = vpop.xlane.xlu0 %1456
    %v1458 = vsel %vm1439, %v1358, -inf
    %1459 = vmax.xlane.f32.xlu0 %v1458
    %v1460 = vpop.xlane.xlu0 %1459
    %v1461 = vsel %vm1439, %v1436, -inf
    %1462 = vmax.xlane.f32.xlu0 %v1461
    %v1463 = vpop.xlane.xlu0 %1462
    %v1464 = vsub.f32 %v890, %v1442
    %v1465 = vsub.f32 %v968, %v1445
    %v1466 = vsub.f32 %v1046, %v1448
    %v1467 = vsub.f32 %v1124, %v1451
    %v1468 = vsub.f32 %v1202, %v1454
    %v1469 = vsub.f32 %v1280, %v1457
    %v1470 = vsub.f32 %v1358, %v1460
    %v1471 = vsub.f32 %v1436, %v1463
    %v1472 = vmul.f32 %v1464, 1.442695
    %v1473 = vpow.pop %v1472
    %v1474 = vmul.f32 %v1465, 1.442695
    %v1475 = vpow.pop %v1474
    %v1476 = vmul.f32 %v1466, 1.442695
    %v1477 = vpow.pop %v1476
    %v1478 = vmul.f32 %v1467, 1.442695
    %v1479 = vpow.pop %v1478
    %v1480 = vmul.f32 %v1468, 1.442695
    %v1481 = vpow.pop %v1480
    %v1482 = vmul.f32 %v1469, 1.442695
    %v1483 = vpow.pop %v1482
    %v1484 = vmul.f32 %v1470, 1.442695
    %v1485 = vpow.pop %v1484
    %v1486 = vmul.f32 %v1471, 1.442695
    %v1487 = vpow.pop %v1486
    %v1488 = vsel %vm1439, %v1473, 0.0
    %1489 = vadd.xlane.f32.xlu0 %v1488
    %v1490 = vpop.xlane.xlu0 %1489
    %v1491 = vsel %vm1439, %v1475, 0.0
    %1492 = vadd.xlane.f32.xlu0 %v1491
    %v1493 = vpop.xlane.xlu0 %1492
    %v1494 = vsel %vm1439, %v1477, 0.0
    %1495 = vadd.xlane.f32.xlu0 %v1494
    %v1496 = vpop.xlane.xlu0 %1495
    %v1497 = vsel %vm1439, %v1479, 0.0
    %1498 = vadd.xlane.f32.xlu0 %v1497
    %v1499 = vpop.xlane.xlu0 %1498
    %v1500 = vsel %vm1439, %v1481, 0.0
    %1501 = vadd.xlane.f32.xlu0 %v1500
    %v1502 = vpop.xlane.xlu0 %1501
    %v1503 = vsel %vm1439, %v1483, 0.0
    %1504 = vadd.xlane.f32.xlu0 %v1503
    %v1505 = vpop.xlane.xlu0 %1504
    %v1506 = vsel %vm1439, %v1485, 0.0
    %1507 = vadd.xlane.f32.xlu0 %v1506
    %v1508 = vpop.xlane.xlu0 %1507
    %v1509 = vsel %vm1439, %v1487, 0.0
    %1510 = vadd.xlane.f32.xlu0 %v1509
    %v1511 = vpop.xlane.xlu0 %1510
    %v1512 = vrcp.pop %v1490
    %v1513 = vmul.f32 %v1473, %v1512
    %v1514 = vrcp.pop %v1493
    %v1515 = vmul.f32 %v1475, %v1514
    %v1516 = vrcp.pop %v1496
    %v1517 = vmul.f32 %v1477, %v1516
    %v1518 = vrcp.pop %v1499
    %v1519 = vmul.f32 %v1479, %v1518
    %v1520 = vrcp.pop %v1502
    %v1521 = vmul.f32 %v1481, %v1520
    %v1522 = vrcp.pop %v1505
    %v1523 = vmul.f32 %v1483, %v1522
    %v1524 = vrcp.pop %v1508
    %v1525 = vmul.f32 %v1485, %v1524
    %v1526 = vrcp.pop %v1511
    %v1527 = vmul.f32 %v1487, %v1526
    %1528 = vrot.lane.b32.xlu0 %v768, 64
    %v1529 = vpop.permute.xlu0 %1528
    %v1532 = vsel %vm1439, %v1513, 0
    %1534 = vmatprep.subr.mxu0 0.0
    %1535 = vmatpush1.msra.mxu0 %v1529
    %1536 = vmatprep.subr.mxu0 0.0
    %1537 = vmatpush1.msra.mxu0 0.0
    %1538 = vmatprep.subr.mxu0 0.0
    %1539 = vmatpush1.msra.mxu0 0.0
    %1540 = vmatprep.subr.mxu0 0.0
    %1541 = vmatpush1.msra.mxu0 0.0
    %1542 = vmatprep.subr.mxu0 0.0
    %1543 = vmatpush1.msra.mxu0 0.0
    %1544 = vmatprep.subr.mxu0 0.0
    %1545 = vmatpush1.msra.mxu0 0.0
    %1546 = vmatprep.subr.mxu0 0.0
    %1547 = vmatpush1.msra.mxu0 0.0
    %1548 = vmatprep.subr.mxu0 0.0
    %1549 = vmatpush1.msra.mxu0 0.0
    %1550 = vmatprep.subr.mxu0 0.0
    %1551 = vmatpush1.msra.mxu0 0.0
    %1552 = vmatprep.subr.mxu0 0.0
    %1553 = vmatpush1.msra.mxu0 0.0
    %1554 = vmatprep.subr.mxu0 0.0
    %1555 = vmatpush1.msra.mxu0 0.0
    %1556 = vmatprep.subr.mxu0 0.0
    %1557 = vmatpush1.msra.mxu0 0.0
    %1558 = vmatprep.subr.mxu0 0.0
    %1559 = vmatpush1.msra.mxu0 0.0
    %1560 = vmatprep.subr.mxu0 0.0
    %1561 = vmatpush1.msra.mxu0 0.0
    %1562 = vmatprep.subr.mxu0 0.0
    %1563 = vmatpush1.msra.mxu0 0.0
    %1564 = vmatprep.subr.mxu0 0.0
    %1565 = vmatpush1.msra.mxu0 0.0
    %1566 = vmatprep.subr.mxu0 0.0
    %1567 = vmatpush1.msra.mxu0 0.0
    %1568 = vmatprep.subr.mxu0 0.0
    %1569 = vmatpush1.msra.mxu0 0.0
    %1570 = vmatprep.subr.mxu0 0.0
    %1571 = vmatpush1.msra.mxu0 0.0
    %1572 = vmatprep.subr.mxu0 0.0
    %1573 = vmatpush1.msra.mxu0 0.0
    %1574 = vmatprep.subr.mxu0 0.0
    %1575 = vmatpush1.msra.mxu0 0.0
    %1576 = vmatprep.subr.mxu0 0.0
    %1577 = vmatpush1.msra.mxu0 0.0
    %1578 = vmatprep.subr.mxu0 0.0
    %1579 = vmatpush1.msra.mxu0 0.0
    %1580 = vmatprep.subr.mxu0 0.0
    %1581 = vmatpush1.msra.mxu0 0.0
    %1582 = vmatprep.subr.mxu0 0.0
    %1583 = vmatpush1.msra.mxu0 0.0
    %1584 = vmatprep.subr.mxu0 0.0
    %1585 = vmatpush1.msra.mxu0 0.0
    %1586 = vmatprep.subr.mxu0 0.0
    %1587 = vmatpush1.msra.mxu0 0.0
    %1588 = vmatprep.subr.mxu0 0.0
    %1589 = vmatpush1.msra.mxu0 0.0
    %1590 = vmatprep.subr.mxu0 0.0
    %1591 = vmatpush1.msra.mxu0 0.0
    %1592 = vmatprep.subr.mxu0 0.0
    %1593 = vmatpush1.msra.mxu0 0.0
    %1594 = vmatprep.subr.mxu0 0.0
    %1595 = vmatpush1.msra.mxu0 0.0
    %1596 = vmatprep.subr.mxu0 0.0
    %1597 = vmatpush1.msra.mxu0 0.0
    %1598 = vmatprep.mubr.f32.mxu0 0.0
    %1599 = vmatmul.mubr.f32.gmra.mrb[0].mxu0 %v1532
    %v1600 = vpop.f32.mrb[0].mxu0
    %v1601 = vadd.f32 0.0, %v1600
    %v1602 = vpop.f32.mrb[0].mxu0
    %1603 = vdwg.mxu0
    %1604 = vrot.lane.b32.xlu0 %v773, 64
    %v1605 = vpop.permute.xlu0 %1604
    %v1608 = vsel %vm1439, %v1515, 0
    %1610 = vmatprep.subr.mxu0 0.0
    %1611 = vmatpush1.msra.mxu0 %v1605
    %1612 = vmatprep.subr.mxu0 0.0
    %1613 = vmatpush1.msra.mxu0 0.0
    %1614 = vmatprep.subr.mxu0 0.0
    %1615 = vmatpush1.msra.mxu0 0.0
    %1616 = vmatprep.subr.mxu0 0.0
    %1617 = vmatpush1.msra.mxu0 0.0
    %1618 = vmatprep.subr.mxu0 0.0
    %1619 = vmatpush1.msra.mxu0 0.0
    %1620 = vmatprep.subr.mxu0 0.0
    %1621 = vmatpush1.msra.mxu0 0.0
    %1622 = vmatprep.subr.mxu0 0.0
    %1623 = vmatpush1.msra.mxu0 0.0
    %1624 = vmatprep.subr.mxu0 0.0
    %1625 = vmatpush1.msra.mxu0 0.0
    %1626 = vmatprep.subr.mxu0 0.0
    %1627 = vmatpush1.msra.mxu0 0.0
    %1628 = vmatprep.subr.mxu0 0.0
    %1629 = vmatpush1.msra.mxu0 0.0
    %1630 = vmatprep.subr.mxu0 0.0
    %1631 = vmatpush1.msra.mxu0 0.0
    %1632 = vmatprep.subr.mxu0 0.0
    %1633 = vmatpush1.msra.mxu0 0.0
    %1634 = vmatprep.subr.mxu0 0.0
    %1635 = vmatpush1.msra.mxu0 0.0
    %1636 = vmatprep.subr.mxu0 0.0
    %1637 = vmatpush1.msra.mxu0 0.0
    %1638 = vmatprep.subr.mxu0 0.0
    %1639 = vmatpush1.msra.mxu0 0.0
    %1640 = vmatprep.subr.mxu0 0.0
    %1641 = vmatpush1.msra.mxu0 0.0
    %1642 = vmatprep.subr.mxu0 0.0
    %1643 = vmatpush1.msra.mxu0 0.0
    %1644 = vmatprep.subr.mxu0 0.0
    %1645 = vmatpush1.msra.mxu0 0.0
    %1646 = vmatprep.subr.mxu0 0.0
    %1647 = vmatpush1.msra.mxu0 0.0
    %1648 = vmatprep.subr.mxu0 0.0
    %1649 = vmatpush1.msra.mxu0 0.0
    %1650 = vmatprep.subr.mxu0 0.0
    %1651 = vmatpush1.msra.mxu0 0.0
    %1652 = vmatprep.subr.mxu0 0.0
    %1653 = vmatpush1.msra.mxu0 0.0
    %1654 = vmatprep.subr.mxu0 0.0
    %1655 = vmatpush1.msra.mxu0 0.0
    %1656 = vmatprep.subr.mxu0 0.0
    %1657 = vmatpush1.msra.mxu0 0.0
    %1658 = vmatprep.subr.mxu0 0.0
    %1659 = vmatpush1.msra.mxu0 0.0
    %1660 = vmatprep.subr.mxu0 0.0
    %1661 = vmatpush1.msra.mxu0 0.0
    %1662 = vmatprep.subr.mxu0 0.0
    %1663 = vmatpush1.msra.mxu0 0.0
    %1664 = vmatprep.subr.mxu0 0.0
    %1665 = vmatpush1.msra.mxu0 0.0
    %1666 = vmatprep.subr.mxu0 0.0
    %1667 = vmatpush1.msra.mxu0 0.0
    %1668 = vmatprep.subr.mxu0 0.0
    %1669 = vmatpush1.msra.mxu0 0.0
    %1670 = vmatprep.subr.mxu0 0.0
    %1671 = vmatpush1.msra.mxu0 0.0
    %1672 = vmatprep.subr.mxu0 0.0
    %1673 = vmatpush1.msra.mxu0 0.0
    %1674 = vmatprep.mubr.f32.mxu0 0.0
    %1675 = vmatmul.mubr.f32.gmra.mrb[0].mxu0 %v1608
    %v1676 = vpop.f32.mrb[0].mxu0
    %v1677 = vadd.f32 0.0, %v1676
    %v1678 = vpop.f32.mrb[0].mxu0
    %1679 = vdwg.mxu0
    %1680 = vrot.lane.b32.xlu0 %v778, 64
    %v1681 = vpop.permute.xlu0 %1680
    %v1684 = vsel %vm1439, %v1517, 0
    %1686 = vmatprep.subr.mxu0 0.0
    %1687 = vmatpush1.msra.mxu0 %v1681
    %1688 = vmatprep.subr.mxu0 0.0
    %1689 = vmatpush1.msra.mxu0 0.0
    %1690 = vmatprep.subr.mxu0 0.0
    %1691 = vmatpush1.msra.mxu0 0.0
    %1692 = vmatprep.subr.mxu0 0.0
    %1693 = vmatpush1.msra.mxu0 0.0
    %1694 = vmatprep.subr.mxu0 0.0
    %1695 = vmatpush1.msra.mxu0 0.0
    %1696 = vmatprep.subr.mxu0 0.0
    %1697 = vmatpush1.msra.mxu0 0.0
    %1698 = vmatprep.subr.mxu0 0.0
    %1699 = vmatpush1.msra.mxu0 0.0
    %1700 = vmatprep.subr.mxu0 0.0
    %1701 = vmatpush1.msra.mxu0 0.0
    %1702 = vmatprep.subr.mxu0 0.0
    %1703 = vmatpush1.msra.mxu0 0.0
    %1704 = vmatprep.subr.mxu0 0.0
    %1705 = vmatpush1.msra.mxu0 0.0
    %1706 = vmatprep.subr.mxu0 0.0
    %1707 = vmatpush1.msra.mxu0 0.0
    %1708 = vmatprep.subr.mxu0 0.0
    %1709 = vmatpush1.msra.mxu0 0.0
    %1710 = vmatprep.subr.mxu0 0.0
    %1711 = vmatpush1.msra.mxu0 0.0
    %1712 = vmatprep.subr.mxu0 0.0
    %1713 = vmatpush1.msra.mxu0 0.0
    %1714 = vmatprep.subr.mxu0 0.0
    %1715 = vmatpush1.msra.mxu0 0.0
    %1716 = vmatprep.subr.mxu0 0.0
    %1717 = vmatpush1.msra.mxu0 0.0
    %1718 = vmatprep.subr.mxu0 0.0
    %1719 = vmatpush1.msra.mxu0 0.0
    %1720 = vmatprep.subr.mxu0 0.0
    %1721 = vmatpush1.msra.mxu0 0.0
    %1722 = vmatprep.subr.mxu0 0.0
    %1723 = vmatpush1.msra.mxu0 0.0
    %1724 = vmatprep.subr.mxu0 0.0
    %1725 = vmatpush1.msra.mxu0 0.0
    %1726 = vmatprep.subr.mxu0 0.0
    %1727 = vmatpush1.msra.mxu0 0.0
    %1728 = vmatprep.subr.mxu0 0.0
    %1729 = vmatpush1.msra.mxu0 0.0
    %1730 = vmatprep.subr.mxu0 0.0
    %1731 = vmatpush1.msra.mxu0 0.0
    %1732 = vmatprep.subr.mxu0 0.0
    %1733 = vmatpush1.msra.mxu0 0.0
    %1734 = vmatprep.subr.mxu0 0.0
    %1735 = vmatpush1.msra.mxu0 0.0
    %1736 = vmatprep.subr.mxu0 0.0
    %1737 = vmatpush1.msra.mxu0 0.0
    %1738 = vmatprep.subr.mxu0 0.0
    %1739 = vmatpush1.msra.mxu0 0.0
    %1740 = vmatprep.subr.mxu0 0.0
    %1741 = vmatpush1.msra.mxu0 0.0
    %1742 = vmatprep.subr.mxu0 0.0
    %1743 = vmatpush1.msra.mxu0 0.0
    %1744 = vmatprep.subr.mxu0 0.0
    %1745 = vmatpush1.msra.mxu0 0.0
    %1746 = vmatprep.subr.mxu0 0.0
    %1747 = vmatpush1.msra.mxu0 0.0
    %1748 = vmatprep.subr.mxu0 0.0
    %1749 = vmatpush1.msra.mxu0 0.0
    %1750 = vmatprep.mubr.f32.mxu0 0.0
    %1751 = vmatmul.mubr.f32.gmra.mrb[0].mxu0 %v1684
    %v1752 = vpop.f32.mrb[0].mxu0
    %v1753 = vadd.f32 0.0, %v1752
    %v1754 = vpop.f32.mrb[0].mxu0
    %1755 = vdwg.mxu0
    %1756 = vrot.lane.b32.xlu0 %v783, 64
    %v1757 = vpop.permute.xlu0 %1756
    %v1760 = vsel %vm1439, %v1519, 0
    %1762 = vmatprep.subr.mxu0 0.0
    %1763 = vmatpush1.msra.mxu0 %v1757
    %1764 = vmatprep.subr.mxu0 0.0
    %1765 = vmatpush1.msra.mxu0 0.0
    %1766 = vmatprep.subr.mxu0 0.0
    %1767 = vmatpush1.msra.mxu0 0.0
    %1768 = vmatprep.subr.mxu0 0.0
    %1769 = vmatpush1.msra.mxu0 0.0
    %1770 = vmatprep.subr.mxu0 0.0
    %1771 = vmatpush1.msra.mxu0 0.0
    %1772 = vmatprep.subr.mxu0 0.0
    %1773 = vmatpush1.msra.mxu0 0.0
    %1774 = vmatprep.subr.mxu0 0.0
    %1775 = vmatpush1.msra.mxu0 0.0
    %1776 = vmatprep.subr.mxu0 0.0
    %1777 = vmatpush1.msra.mxu0 0.0
    %1778 = vmatprep.subr.mxu0 0.0
    %1779 = vmatpush1.msra.mxu0 0.0
    %1780 = vmatprep.subr.mxu0 0.0
    %1781 = vmatpush1.msra.mxu0 0.0
    %1782 = vmatprep.subr.mxu0 0.0
    %1783 = vmatpush1.msra.mxu0 0.0
    %1784 = vmatprep.subr.mxu0 0.0
    %1785 = vmatpush1.msra.mxu0 0.0
    %1786 = vmatprep.subr.mxu0 0.0
    %1787 = vmatpush1.msra.mxu0 0.0
    %1788 = vmatprep.subr.mxu0 0.0
    %1789 = vmatpush1.msra.mxu0 0.0
    %1790 = vmatprep.subr.mxu0 0.0
    %1791 = vmatpush1.msra.mxu0 0.0
    %1792 = vmatprep.subr.mxu0 0.0
    %1793 = vmatpush1.msra.mxu0 0.0
    %1794 = vmatprep.subr.mxu0 0.0
    %1795 = vmatpush1.msra.mxu0 0.0
    %1796 = vmatprep.subr.mxu0 0.0
    %1797 = vmatpush1.msra.mxu0 0.0
    %1798 = vmatprep.subr.mxu0 0.0
    %1799 = vmatpush1.msra.mxu0 0.0
    %1800 = vmatprep.subr.mxu0 0.0
    %1801 = vmatpush1.msra.mxu0 0.0
    %1802 = vmatprep.subr.mxu0 0.0
    %1803 = vmatpush1.msra.mxu0 0.0
    %1804 = vmatprep.subr.mxu0 0.0
    %1805 = vmatpush1.msra.mxu0 0.0
    %1806 = vmatprep.subr.mxu0 0.0
    %1807 = vmatpush1.msra.mxu0 0.0
    %1808 = vmatprep.subr.mxu0 0.0
    %1809 = vmatpush1.msra.mxu0 0.0
    %1810 = vmatprep.subr.mxu0 0.0
    %1811 = vmatpush1.msra.mxu0 0.0
    %1812 = vmatprep.subr.mxu0 0.0
    %1813 = vmatpush1.msra.mxu0 0.0
    %1814 = vmatprep.subr.mxu0 0.0
    %1815 = vmatpush1.msra.mxu0 0.0
    %1816 = vmatprep.subr.mxu0 0.0
    %1817 = vmatpush1.msra.mxu0 0.0
    %1818 = vmatprep.subr.mxu0 0.0
    %1819 = vmatpush1.msra.mxu0 0.0
    %1820 = vmatprep.subr.mxu0 0.0
    %1821 = vmatpush1.msra.mxu0 0.0
    %1822 = vmatprep.subr.mxu0 0.0
    %1823 = vmatpush1.msra.mxu0 0.0
    %1824 = vmatprep.subr.mxu0 0.0
    %1825 = vmatpush1.msra.mxu0 0.0
    %1826 = vmatprep.mubr.f32.mxu0 0.0
    %1827 = vmatmul.mubr.f32.gmra.mrb[0].mxu0 %v1760
    %v1828 = vpop.f32.mrb[0].mxu0
    %v1829 = vadd.f32 0.0, %v1828
    %v1830 = vpop.f32.mrb[0].mxu0
    %1831 = vdwg.mxu0
    %1832 = vrot.lane.b32.xlu0 %v788, 64
    %v1833 = vpop.permute.xlu0 %1832
    %v1836 = vsel %vm1439, %v1521, 0
    %1838 = vmatprep.subr.mxu0 0.0
    %1839 = vmatpush1.msra.mxu0 %v1833
    %1840 = vmatprep.subr.mxu0 0.0
    %1841 = vmatpush1.msra.mxu0 0.0
    %1842 = vmatprep.subr.mxu0 0.0
    %1843 = vmatpush1.msra.mxu0 0.0
    %1844 = vmatprep.subr.mxu0 0.0
    %1845 = vmatpush1.msra.mxu0 0.0
    %1846 = vmatprep.subr.mxu0 0.0
    %1847 = vmatpush1.msra.mxu0 0.0
    %1848 = vmatprep.subr.mxu0 0.0
    %1849 = vmatpush1.msra.mxu0 0.0
    %1850 = vmatprep.subr.mxu0 0.0
    %1851 = vmatpush1.msra.mxu0 0.0
    %1852 = vmatprep.subr.mxu0 0.0
    %1853 = vmatpush1.msra.mxu0 0.0
    %1854 = vmatprep.subr.mxu0 0.0
    %1855 = vmatpush1.msra.mxu0 0.0
    %1856 = vmatprep.subr.mxu0 0.0
    %1857 = vmatpush1.msra.mxu0 0.0
    %1858 = vmatprep.subr.mxu0 0.0
    %1859 = vmatpush1.msra.mxu0 0.0
    %1860 = vmatprep.subr.mxu0 0.0
    %1861 = vmatpush1.msra.mxu0 0.0
    %1862 = vmatprep.subr.mxu0 0.0
    %1863 = vmatpush1.msra.mxu0 0.0
    %1864 = vmatprep.subr.mxu0 0.0
    %1865 = vmatpush1.msra.mxu0 0.0
    %1866 = vmatprep.subr.mxu0 0.0
    %1867 = vmatpush1.msra.mxu0 0.0
    %1868 = vmatprep.subr.mxu0 0.0
    %1869 = vmatpush1.msra.mxu0 0.0
    %1870 = vmatprep.subr.mxu0 0.0
    %1871 = vmatpush1.msra.mxu0 0.0
    %1872 = vmatprep.subr.mxu0 0.0
    %1873 = vmatpush1.msra.mxu0 0.0
    %1874 = vmatprep.subr.mxu0 0.0
    %1875 = vmatpush1.msra.mxu0 0.0
    %1876 = vmatprep.subr.mxu0 0.0
    %1877 = vmatpush1.msra.mxu0 0.0
    %1878 = vmatprep.subr.mxu0 0.0
    %1879 = vmatpush1.msra.mxu0 0.0
    %1880 = vmatprep.subr.mxu0 0.0
    %1881 = vmatpush1.msra.mxu0 0.0
    %1882 = vmatprep.subr.mxu0 0.0
    %1883 = vmatpush1.msra.mxu0 0.0
    %1884 = vmatprep.subr.mxu0 0.0
    %1885 = vmatpush1.msra.mxu0 0.0
    %1886 = vmatprep.subr.mxu0 0.0
    %1887 = vmatpush1.msra.mxu0 0.0
    %1888 = vmatprep.subr.mxu0 0.0
    %1889 = vmatpush1.msra.mxu0 0.0
    %1890 = vmatprep.subr.mxu0 0.0
    %1891 = vmatpush1.msra.mxu0 0.0
    %1892 = vmatprep.subr.mxu0 0.0
    %1893 = vmatpush1.msra.mxu0 0.0
    %1894 = vmatprep.subr.mxu0 0.0
    %1895 = vmatpush1.msra.mxu0 0.0
    %1896 = vmatprep.subr.mxu0 0.0
    %1897 = vmatpush1.msra.mxu0 0.0
    %1898 = vmatprep.subr.mxu0 0.0
    %1899 = vmatpush1.msra.mxu0 0.0
    %1900 = vmatprep.subr.mxu0 0.0
    %1901 = vmatpush1.msra.mxu0 0.0
    %1902 = vmatprep.mubr.f32.mxu0 0.0
    %1903 = vmatmul.mubr.f32.gmra.mrb[0].mxu0 %v1836
    %v1904 = vpop.f32.mrb[0].mxu0
    %v1905 = vadd.f32 0.0, %v1904
    %v1906 = vpop.f32.mrb[0].mxu0
    %1907 = vdwg.mxu0
    %1908 = vrot.lane.b32.xlu0 %v793, 64
    %v1909 = vpop.permute.xlu0 %1908
    %v1912 = vsel %vm1439, %v1523, 0
    %1914 = vmatprep.subr.mxu0 0.0
    %1915 = vmatpush1.msra.mxu0 %v1909
    %1916 = vmatprep.subr.mxu0 0.0
    %1917 = vmatpush1.msra.mxu0 0.0
    %1918 = vmatprep.subr.mxu0 0.0
    %1919 = vmatpush1.msra.mxu0 0.0
    %1920 = vmatprep.subr.mxu0 0.0
    %1921 = vmatpush1.msra.mxu0 0.0
    %1922 = vmatprep.subr.mxu0 0.0
    %1923 = vmatpush1.msra.mxu0 0.0
    %1924 = vmatprep.subr.mxu0 0.0
    %1925 = vmatpush1.msra.mxu0 0.0
    %1926 = vmatprep.subr.mxu0 0.0
    %1927 = vmatpush1.msra.mxu0 0.0
    %1928 = vmatprep.subr.mxu0 0.0
    %1929 = vmatpush1.msra.mxu0 0.0
    %1930 = vmatprep.subr.mxu0 0.0
    %1931 = vmatpush1.msra.mxu0 0.0
    %1932 = vmatprep.subr.mxu0 0.0
    %1933 = vmatpush1.msra.mxu0 0.0
    %1934 = vmatprep.subr.mxu0 0.0
    %1935 = vmatpush1.msra.mxu0 0.0
    %1936 = vmatprep.subr.mxu0 0.0
    %1937 = vmatpush1.msra.mxu0 0.0
    %1938 = vmatprep.subr.mxu0 0.0
    %1939 = vmatpush1.msra.mxu0 0.0
    %1940 = vmatprep.subr.mxu0 0.0
    %1941 = vmatpush1.msra.mxu0 0.0
    %1942 = vmatprep.subr.mxu0 0.0
    %1943 = vmatpush1.msra.mxu0 0.0
    %1944 = vmatprep.subr.mxu0 0.0
    %1945 = vmatpush1.msra.mxu0 0.0
    %1946 = vmatprep.subr.mxu0 0.0
    %1947 = vmatpush1.msra.mxu0 0.0
    %1948 = vmatprep.subr.mxu0 0.0
    %1949 = vmatpush1.msra.mxu0 0.0
    %1950 = vmatprep.subr.mxu0 0.0
    %1951 = vmatpush1.msra.mxu0 0.0
    %1952 = vmatprep.subr.mxu0 0.0
    %1953 = vmatpush1.msra.mxu0 0.0
    %1954 = vmatprep.subr.mxu0 0.0
    %1955 = vmatpush1.msra.mxu0 0.0
    %1956 = vmatprep.subr.mxu0 0.0
    %1957 = vmatpush1.msra.mxu0 0.0
    %1958 = vmatprep.subr.mxu0 0.0
    %1959 = vmatpush1.msra.mxu0 0.0
    %1960 = vmatprep.subr.mxu0 0.0
    %1961 = vmatpush1.msra.mxu0 0.0
    %1962 = vmatprep.subr.mxu0 0.0
    %1963 = vmatpush1.msra.mxu0 0.0
    %1964 = vmatprep.subr.mxu0 0.0
    %1965 = vmatpush1.msra.mxu0 0.0
    %1966 = vmatprep.subr.mxu0 0.0
    %1967 = vmatpush1.msra.mxu0 0.0
    %1968 = vmatprep.subr.mxu0 0.0
    %1969 = vmatpush1.msra.mxu0 0.0
    %1970 = vmatprep.subr.mxu0 0.0
    %1971 = vmatpush1.msra.mxu0 0.0
    %1972 = vmatprep.subr.mxu0 0.0
    %1973 = vmatpush1.msra.mxu0 0.0
    %1974 = vmatprep.subr.mxu0 0.0
    %1975 = vmatpush1.msra.mxu0 0.0
    %1976 = vmatprep.subr.mxu0 0.0
    %1977 = vmatpush1.msra.mxu0 0.0
    %1978 = vmatprep.mubr.f32.mxu0 0.0
    %1979 = vmatmul.mubr.f32.gmra.mrb[0].mxu0 %v1912
    %v1980 = vpop.f32.mrb[0].mxu0
    %v1981 = vadd.f32 0.0, %v1980
    %v1982 = vpop.f32.mrb[0].mxu0
    %1983 = vdwg.mxu0
    %1984 = vrot.lane.b32.xlu0 %v798, 64
    %v1985 = vpop.permute.xlu0 %1984
    %v1988 = vsel %vm1439, %v1525, 0
    %1990 = vmatprep.subr.mxu0 0.0
    %1991 = vmatpush1.msra.mxu0 %v1985
    %1992 = vmatprep.subr.mxu0 0.0
    %1993 = vmatpush1.msra.mxu0 0.0
    %1994 = vmatprep.subr.mxu0 0.0
    %1995 = vmatpush1.msra.mxu0 0.0
    %1996 = vmatprep.subr.mxu0 0.0
    %1997 = vmatpush1.msra.mxu0 0.0
    %1998 = vmatprep.subr.mxu0 0.0
    %1999 = vmatpush1.msra.mxu0 0.0
    %2000 = vmatprep.subr.mxu0 0.0
    %2001 = vmatpush1.msra.mxu0 0.0
    %2002 = vmatprep.subr.mxu0 0.0
    %2003 = vmatpush1.msra.mxu0 0.0
    %2004 = vmatprep.subr.mxu0 0.0
    %2005 = vmatpush1.msra.mxu0 0.0
    %2006 = vmatprep.subr.mxu0 0.0
    %2007 = vmatpush1.msra.mxu0 0.0
    %2008 = vmatprep.subr.mxu0 0.0
    %2009 = vmatpush1.msra.mxu0 0.0
    %2010 = vmatprep.subr.mxu0 0.0
    %2011 = vmatpush1.msra.mxu0 0.0
    %2012 = vmatprep.subr.mxu0 0.0
    %2013 = vmatpush1.msra.mxu0 0.0
    %2014 = vmatprep.subr.mxu0 0.0
    %2015 = vmatpush1.msra.mxu0 0.0
    %2016 = vmatprep.subr.mxu0 0.0
    %2017 = vmatpush1.msra.mxu0 0.0
    %2018 = vmatprep.subr.mxu0 0.0
    %2019 = vmatpush1.msra.mxu0 0.0
    %2020 = vmatprep.subr.mxu0 0.0
    %2021 = vmatpush1.msra.mxu0 0.0
    %2022 = vmatprep.subr.mxu0 0.0
    %2023 = vmatpush1.msra.mxu0 0.0
    %2024 = vmatprep.subr.mxu0 0.0
    %2025 = vmatpush1.msra.mxu0 0.0
    %2026 = vmatprep.subr.mxu0 0.0
    %2027 = vmatpush1.msra.mxu0 0.0
    %2028 = vmatprep.subr.mxu0 0.0
    %2029 = vmatpush1.msra.mxu0 0.0
    %2030 = vmatprep.subr.mxu0 0.0
    %2031 = vmatpush1.msra.mxu0 0.0
    %2032 = vmatprep.subr.mxu0 0.0
    %2033 = vmatpush1.msra.mxu0 0.0
    %2034 = vmatprep.subr.mxu0 0.0
    %2035 = vmatpush1.msra.mxu0 0.0
    %2036 = vmatprep.subr.mxu0 0.0
    %2037 = vmatpush1.msra.mxu0 0.0
    %2038 = vmatprep.subr.mxu0 0.0
    %2039 = vmatpush1.msra.mxu0 0.0
    %2040 = vmatprep.subr.mxu0 0.0
    %2041 = vmatpush1.msra.mxu0 0.0
    %2042 = vmatprep.subr.mxu0 0.0
    %2043 = vmatpush1.msra.mxu0 0.0
    %2044 = vmatprep.subr.mxu0 0.0
    %2045 = vmatpush1.msra.mxu0 0.0
    %2046 = vmatprep.subr.mxu0 0.0
    %2047 = vmatpush1.msra.mxu0 0.0
    %2048 = vmatprep.subr.mxu0 0.0
    %2049 = vmatpush1.msra.mxu0 0.0
    %2050 = vmatprep.subr.mxu0 0.0
    %2051 = vmatpush1.msra.mxu0 0.0
    %2052 = vmatprep.subr.mxu0 0.0
    %2053 = vmatpush1.msra.mxu0 0.0
    %2054 = vmatprep.mubr.f32.mxu0 0.0
    %2055 = vmatmul.mubr.f32.gmra.mrb[0].mxu0 %v1988
    %v2056 = vpop.f32.mrb[0].mxu0
    %v2057 = vadd.f32 0.0, %v2056
    %v2058 = vpop.f32.mrb[0].mxu0
    %2059 = vdwg.mxu0
    %2060 = vrot.lane.b32.xlu0 %v803, 64
    %v2061 = vpop.permute.xlu0 %2060
    %v2064 = vsel %vm1439, %v1527, 0
    %2066 = vmatprep.subr.mxu0 0.0
    %2067 = vmatpush1.msra.mxu0 %v2061
    %2068 = vmatprep.subr.mxu0 0.0
    %2069 = vmatpush1.msra.mxu0 0.0
    %2070 = vmatprep.subr.mxu0 0.0
    %2071 = vmatpush1.msra.mxu0 0.0
    %2072 = vmatprep.subr.mxu0 0.0
    %2073 = vmatpush1.msra.mxu0 0.0
    %2074 = vmatprep.subr.mxu0 0.0
    %2075 = vmatpush1.msra.mxu0 0.0
    %2076 = vmatprep.subr.mxu0 0.0
    %2077 = vmatpush1.msra.mxu0 0.0
    %2078 = vmatprep.subr.mxu0 0.0
    %2079 = vmatpush1.msra.mxu0 0.0
    %2080 = vmatprep.subr.mxu0 0.0
    %2081 = vmatpush1.msra.mxu0 0.0
    %2082 = vmatprep.subr.mxu0 0.0
    %2083 = vmatpush1.msra.mxu0 0.0
    %2084 = vmatprep.subr.mxu0 0.0
    %2085 = vmatpush1.msra.mxu0 0.0
    %2086 = vmatprep.subr.mxu0 0.0
    %2087 = vmatpush1.msra.mxu0 0.0
    %2088 = vmatprep.subr.mxu0 0.0
    %2089 = vmatpush1.msra.mxu0 0.0
    %2090 = vmatprep.subr.mxu0 0.0
    %2091 = vmatpush1.msra.mxu0 0.0
    %2092 = vmatprep.subr.mxu0 0.0
    %2093 = vmatpush1.msra.mxu0 0.0
    %2094 = vmatprep.subr.mxu0 0.0
    %2095 = vmatpush1.msra.mxu0 0.0
    %2096 = vmatprep.subr.mxu0 0.0
    %2097 = vmatpush1.msra.mxu0 0.0
    %2098 = vmatprep.subr.mxu0 0.0
    %2099 = vmatpush1.msra.mxu0 0.0
    %2100 = vmatprep.subr.mxu0 0.0
    %2101 = vmatpush1.msra.mxu0 0.0
    %2102 = vmatprep.subr.mxu0 0.0
    %2103 = vmatpush1.msra.mxu0 0.0
    %2104 = vmatprep.subr.mxu0 0.0
    %2105 = vmatpush1.msra.mxu0 0.0
    %2106 = vmatprep.subr.mxu0 0.0
    %2107 = vmatpush1.msra.mxu0 0.0
    %2108 = vmatprep.subr.mxu0 0.0
    %2109 = vmatpush1.msra.mxu0 0.0
    %2110 = vmatprep.subr.mxu0 0.0
    %2111 = vmatpush1.msra.mxu0 0.0
    %2112 = vmatprep.subr.mxu0 0.0
    %2113 = vmatpush1.msra.mxu0 0.0
    %2114 = vmatprep.subr.mxu0 0.0
    %2115 = vmatpush1.msra.mxu0 0.0
    %2116 = vmatprep.subr.mxu0 0.0
    %2117 = vmatpush1.msra.mxu0 0.0
    %2118 = vmatprep.subr.mxu0 0.0
    %2119 = vmatpush1.msra.mxu0 0.0
    %2120 = vmatprep.subr.mxu0 0.0
    %2121 = vmatpush1.msra.mxu0 0.0
    %2122 = vmatprep.subr.mxu0 0.0
    %2123 = vmatpush1.msra.mxu0 0.0
    %2124 = vmatprep.subr.mxu0 0.0
    %2125 = vmatpush1.msra.mxu0 0.0
    %2126 = vmatprep.subr.mxu0 0.0
    %2127 = vmatpush1.msra.mxu0 0.0
    %2128 = vmatprep.subr.mxu0 0.0
    %2129 = vmatpush1.msra.mxu0 0.0
    %2130 = vmatprep.mubr.f32.mxu0 0.0
    %2131 = vmatmul.mubr.f32.gmra.mrb[0].mxu0 %v2064
    %v2132 = vpop.f32.mrb[0].mxu0
    %v2133 = vadd.f32 0.0, %v2132
    %v2134 = vpop.f32.mrb[0].mxu0
    %2135 = vdwg.mxu0
    %2136 = vrot.lane.b32.xlu0 %v806, 112
    %v2137 = vpop.permute.xlu0 %2136
    %2138 = vrot.lane.b32.xlu0 %v768, 80
    %v2139 = vpop.permute.xlu0 %2138
    %v2140 = vsel %vm817, %v2137, 0
    %v2142 = vsel %vm817, %v2139, 0
    %2144 = vmatprep.subr.mxu0 0.0
    %2145 = vmatpush1.xpose.msra.mxu0 %v2142
    %2146 = vmatprep.subr.mxu0 0.0
    %2147 = vmatpush1.xpose.msra.mxu0 0.0
    %2148 = vmatprep.subr.mxu0 0.0
    %2149 = vmatpush1.xpose.msra.mxu0 0.0
    %2150 = vmatprep.subr.mxu0 0.0
    %2151 = vmatpush1.xpose.msra.mxu0 0.0
    %2152 = vmatprep.subr.mxu0 0.0
    %2153 = vmatpush1.xpose.msra.mxu0 0.0
    %2154 = vmatprep.subr.mxu0 0.0
    %2155 = vmatpush1.xpose.msra.mxu0 0.0
    %2156 = vmatprep.subr.mxu0 0.0
    %2157 = vmatpush1.xpose.msra.mxu0 0.0
    %2158 = vmatprep.subr.mxu0 0.0
    %2159 = vmatpush1.xpose.msra.mxu0 0.0
    %2160 = vmatprep.subr.mxu0 0.0
    %2161 = vmatpush1.xpose.msra.mxu0 0.0
    %2162 = vmatprep.subr.mxu0 0.0
    %2163 = vmatpush1.xpose.msra.mxu0 0.0
    %2164 = vmatprep.subr.mxu0 0.0
    %2165 = vmatpush1.xpose.msra.mxu0 0.0
    %2166 = vmatprep.subr.mxu0 0.0
    %2167 = vmatpush1.xpose.msra.mxu0 0.0
    %2168 = vmatprep.subr.mxu0 0.0
    %2169 = vmatpush1.xpose.msra.mxu0 0.0
    %2170 = vmatprep.subr.mxu0 0.0
    %2171 = vmatpush1.xpose.msra.mxu0 0.0
    %2172 = vmatprep.subr.mxu0 0.0
    %2173 = vmatpush1.xpose.msra.mxu0 0.0
    %2174 = vmatprep.subr.mxu0 0.0
    %2175 = vmatpush1.xpose.msra.mxu0 0.0
    %2176 = vmatprep.subr.mxu0 0.0
    %2177 = vmatpush1.xpose.msra.mxu0 0.0
    %2178 = vmatprep.subr.mxu0 0.0
    %2179 = vmatpush1.xpose.msra.mxu0 0.0
    %2180 = vmatprep.subr.mxu0 0.0
    %2181 = vmatpush1.xpose.msra.mxu0 0.0
    %2182 = vmatprep.subr.mxu0 0.0
    %2183 = vmatpush1.xpose.msra.mxu0 0.0
    %2184 = vmatprep.subr.mxu0 0.0
    %2185 = vmatpush1.xpose.msra.mxu0 0.0
    %2186 = vmatprep.subr.mxu0 0.0
    %2187 = vmatpush1.xpose.msra.mxu0 0.0
    %2188 = vmatprep.subr.mxu0 0.0
    %2189 = vmatpush1.xpose.msra.mxu0 0.0
    %2190 = vmatprep.subr.mxu0 0.0
    %2191 = vmatpush1.xpose.msra.mxu0 0.0
    %2192 = vmatprep.subr.mxu0 0.0
    %2193 = vmatpush1.xpose.msra.mxu0 0.0
    %2194 = vmatprep.subr.mxu0 0.0
    %2195 = vmatpush1.xpose.msra.mxu0 0.0
    %2196 = vmatprep.subr.mxu0 0.0
    %2197 = vmatpush1.xpose.msra.mxu0 0.0
    %2198 = vmatprep.subr.mxu0 0.0
    %2199 = vmatpush1.xpose.msra.mxu0 0.0
    %2200 = vmatprep.subr.mxu0 0.0
    %2201 = vmatpush1.xpose.msra.mxu0 0.0
    %2202 = vmatprep.subr.mxu0 0.0
    %2203 = vmatpush1.xpose.msra.mxu0 0.0
    %2204 = vmatprep.subr.mxu0 0.0
    %2205 = vmatpush1.xpose.msra.mxu0 0.0
    %2206 = vmatprep.subr.mxu0 0.0
    %2207 = vmatpush1.xpose.msra.mxu0 0.0
    %2208 = vmatprep.mubr.f32.mxu0 0.0
    %2209 = vmatmul.mubr.f32.gmra.mrb[0].mxu0 %v2140
    %v2210 = vpop.f32.mrb[0].mxu0
    %v2211 = vadd.f32 %v98, %v2210
    %v2212 = vpop.f32.mrb[0].mxu0
    %2213 = vdwg.mxu0
    %2214 = vrot.lane.b32.xlu0 %v807, 112
    %v2215 = vpop.permute.xlu0 %2214
    %2216 = vrot.lane.b32.xlu0 %v773, 80
    %v2217 = vpop.permute.xlu0 %2216
    %v2218 = vsel %vm817, %v2215, 0
    %v2220 = vsel %vm817, %v2217, 0
    %2222 = vmatprep.subr.mxu0 0.0
    %2223 = vmatpush1.xpose.msra.mxu0 %v2220
    %2224 = vmatprep.subr.mxu0 0.0
    %2225 = vmatpush1.xpose.msra.mxu0 0.0
    %2226 = vmatprep.subr.mxu0 0.0
    %2227 = vmatpush1.xpose.msra.mxu0 0.0
    %2228 = vmatprep.subr.mxu0 0.0
    %2229 = vmatpush1.xpose.msra.mxu0 0.0
    %2230 = vmatprep.subr.mxu0 0.0
    %2231 = vmatpush1.xpose.msra.mxu0 0.0
    %2232 = vmatprep.subr.mxu0 0.0
    %2233 = vmatpush1.xpose.msra.mxu0 0.0
    %2234 = vmatprep.subr.mxu0 0.0
    %2235 = vmatpush1.xpose.msra.mxu0 0.0
    %2236 = vmatprep.subr.mxu0 0.0
    %2237 = vmatpush1.xpose.msra.mxu0 0.0
    %2238 = vmatprep.subr.mxu0 0.0
    %2239 = vmatpush1.xpose.msra.mxu0 0.0
    %2240 = vmatprep.subr.mxu0 0.0
    %2241 = vmatpush1.xpose.msra.mxu0 0.0
    %2242 = vmatprep.subr.mxu0 0.0
    %2243 = vmatpush1.xpose.msra.mxu0 0.0
    %2244 = vmatprep.subr.mxu0 0.0
    %2245 = vmatpush1.xpose.msra.mxu0 0.0
    %2246 = vmatprep.subr.mxu0 0.0
    %2247 = vmatpush1.xpose.msra.mxu0 0.0
    %2248 = vmatprep.subr.mxu0 0.0
    %2249 = vmatpush1.xpose.msra.mxu0 0.0
    %2250 = vmatprep.subr.mxu0 0.0
    %2251 = vmatpush1.xpose.msra.mxu0 0.0
    %2252 = vmatprep.subr.mxu0 0.0
    %2253 = vmatpush1.xpose.msra.mxu0 0.0
    %2254 = vmatprep.subr.mxu0 0.0
    %2255 = vmatpush1.xpose.msra.mxu0 0.0
    %2256 = vmatprep.subr.mxu0 0.0
    %2257 = vmatpush1.xpose.msra.mxu0 0.0
    %2258 = vmatprep.subr.mxu0 0.0
    %2259 = vmatpush1.xpose.msra.mxu0 0.0
    %2260 = vmatprep.subr.mxu0 0.0
    %2261 = vmatpush1.xpose.msra.mxu0 0.0
    %2262 = vmatprep.subr.mxu0 0.0
    %2263 = vmatpush1.xpose.msra.mxu0 0.0
    %2264 = vmatprep.subr.mxu0 0.0
    %2265 = vmatpush1.xpose.msra.mxu0 0.0
    %2266 = vmatprep.subr.mxu0 0.0
    %2267 = vmatpush1.xpose.msra.mxu0 0.0
    %2268 = vmatprep.subr.mxu0 0.0
    %2269 = vmatpush1.xpose.msra.mxu0 0.0
    %2270 = vmatprep.subr.mxu0 0.0
    %2271 = vmatpush1.xpose.msra.mxu0 0.0
    %2272 = vmatprep.subr.mxu0 0.0
    %2273 = vmatpush1.xpose.msra.mxu0 0.0
    %2274 = vmatprep.subr.mxu0 0.0
    %2275 = vmatpush1.xpose.msra.mxu0 0.0
    %2276 = vmatprep.subr.mxu0 0.0
    %2277 = vmatpush1.xpose.msra.mxu0 0.0
    %2278 = vmatprep.subr.mxu0 0.0
    %2279 = vmatpush1.xpose.msra.mxu0 0.0
    %2280 = vmatprep.subr.mxu0 0.0
    %2281 = vmatpush1.xpose.msra.mxu0 0.0
    %2282 = vmatprep.subr.mxu0 0.0
    %2283 = vmatpush1.xpose.msra.mxu0 0.0
    %2284 = vmatprep.subr.mxu0 0.0
    %2285 = vmatpush1.xpose.msra.mxu0 0.0
    %2286 = vmatprep.mubr.f32.mxu0 0.0
    %2287 = vmatmul.mubr.f32.gmra.mrb[0].mxu0 %v2218
    %v2288 = vpop.f32.mrb[0].mxu0
    %v2289 = vadd.f32 %v99, %v2288
    %v2290 = vpop.f32.mrb[0].mxu0
    %2291 = vdwg.mxu0
    %2292 = vrot.lane.b32.xlu0 %v808, 112
    %v2293 = vpop.permute.xlu0 %2292
    %2294 = vrot.lane.b32.xlu0 %v778, 80
    %v2295 = vpop.permute.xlu0 %2294
    %v2296 = vsel %vm817, %v2293, 0
    %v2298 = vsel %vm817, %v2295, 0
    %2300 = vmatprep.subr.mxu0 0.0
    %2301 = vmatpush1.xpose.msra.mxu0 %v2298
    %2302 = vmatprep.subr.mxu0 0.0
    %2303 = vmatpush1.xpose.msra.mxu0 0.0
    %2304 = vmatprep.subr.mxu0 0.0
    %2305 = vmatpush1.xpose.msra.mxu0 0.0
    %2306 = vmatprep.subr.mxu0 0.0
    %2307 = vmatpush1.xpose.msra.mxu0 0.0
    %2308 = vmatprep.subr.mxu0 0.0
    %2309 = vmatpush1.xpose.msra.mxu0 0.0
    %2310 = vmatprep.subr.mxu0 0.0
    %2311 = vmatpush1.xpose.msra.mxu0 0.0
    %2312 = vmatprep.subr.mxu0 0.0
    %2313 = vmatpush1.xpose.msra.mxu0 0.0
    %2314 = vmatprep.subr.mxu0 0.0
    %2315 = vmatpush1.xpose.msra.mxu0 0.0
    %2316 = vmatprep.subr.mxu0 0.0
    %2317 = vmatpush1.xpose.msra.mxu0 0.0
    %2318 = vmatprep.subr.mxu0 0.0
    %2319 = vmatpush1.xpose.msra.mxu0 0.0
    %2320 = vmatprep.subr.mxu0 0.0
    %2321 = vmatpush1.xpose.msra.mxu0 0.0
    %2322 = vmatprep.subr.mxu0 0.0
    %2323 = vmatpush1.xpose.msra.mxu0 0.0
    %2324 = vmatprep.subr.mxu0 0.0
    %2325 = vmatpush1.xpose.msra.mxu0 0.0
    %2326 = vmatprep.subr.mxu0 0.0
    %2327 = vmatpush1.xpose.msra.mxu0 0.0
    %2328 = vmatprep.subr.mxu0 0.0
    %2329 = vmatpush1.xpose.msra.mxu0 0.0
    %2330 = vmatprep.subr.mxu0 0.0
    %2331 = vmatpush1.xpose.msra.mxu0 0.0
    %2332 = vmatprep.subr.mxu0 0.0
    %2333 = vmatpush1.xpose.msra.mxu0 0.0
    %2334 = vmatprep.subr.mxu0 0.0
    %2335 = vmatpush1.xpose.msra.mxu0 0.0
    %2336 = vmatprep.subr.mxu0 0.0
    %2337 = vmatpush1.xpose.msra.mxu0 0.0
    %2338 = vmatprep.subr.mxu0 0.0
    %2339 = vmatpush1.xpose.msra.mxu0 0.0
    %2340 = vmatprep.subr.mxu0 0.0
    %2341 = vmatpush1.xpose.msra.mxu0 0.0
    %2342 = vmatprep.subr.mxu0 0.0
    %2343 = vmatpush1.xpose.msra.mxu0 0.0
    %2344 = vmatprep.subr.mxu0 0.0
    %2345 = vmatpush1.xpose.msra.mxu0 0.0
    %2346 = vmatprep.subr.mxu0 0.0
    %2347 = vmatpush1.xpose.msra.mxu0 0.0
    %2348 = vmatprep.subr.mxu0 0.0
    %2349 = vmatpush1.xpose.msra.mxu0 0.0
    %2350 = vmatprep.subr.mxu0 0.0
    %2351 = vmatpush1.xpose.msra.mxu0 0.0
    %2352 = vmatprep.subr.mxu0 0.0
    %2353 = vmatpush1.xpose.msra.mxu0 0.0
    %2354 = vmatprep.subr.mxu0 0.0
    %2355 = vmatpush1.xpose.msra.mxu0 0.0
    %2356 = vmatprep.subr.mxu0 0.0
    %2357 = vmatpush1.xpose.msra.mxu0 0.0
    %2358 = vmatprep.subr.mxu0 0.0
    %2359 = vmatpush1.xpose.msra.mxu0 0.0
    %2360 = vmatprep.subr.mxu0 0.0
    %2361 = vmatpush1.xpose.msra.mxu0 0.0
    %2362 = vmatprep.subr.mxu0 0.0
    %2363 = vmatpush1.xpose.msra.mxu0 0.0
    %2364 = vmatprep.mubr.f32.mxu0 0.0
    %2365 = vmatmul.mubr.f32.gmra.mrb[0].mxu0 %v2296
    %v2366 = vpop.f32.mrb[0].mxu0
    %v2367 = vadd.f32 %v100, %v2366
    %v2368 = vpop.f32.mrb[0].mxu0
    %2369 = vdwg.mxu0
    %2370 = vrot.lane.b32.xlu0 %v809, 112
    %v2371 = vpop.permute.xlu0 %2370
    %2372 = vrot.lane.b32.xlu0 %v783, 80
    %v2373 = vpop.permute.xlu0 %2372
    %v2374 = vsel %vm817, %v2371, 0
    %v2376 = vsel %vm817, %v2373, 0
    %2378 = vmatprep.subr.mxu0 0.0
    %2379 = vmatpush1.xpose.msra.mxu0 %v2376
    %2380 = vmatprep.subr.mxu0 0.0
    %2381 = vmatpush1.xpose.msra.mxu0 0.0
    %2382 = vmatprep.subr.mxu0 0.0
    %2383 = vmatpush1.xpose.msra.mxu0 0.0
    %2384 = vmatprep.subr.mxu0 0.0
    %2385 = vmatpush1.xpose.msra.mxu0 0.0
    %2386 = vmatprep.subr.mxu0 0.0
    %2387 = vmatpush1.xpose.msra.mxu0 0.0
    %2388 = vmatprep.subr.mxu0 0.0
    %2389 = vmatpush1.xpose.msra.mxu0 0.0
    %2390 = vmatprep.subr.mxu0 0.0
    %2391 = vmatpush1.xpose.msra.mxu0 0.0
    %2392 = vmatprep.subr.mxu0 0.0
    %2393 = vmatpush1.xpose.msra.mxu0 0.0
    %2394 = vmatprep.subr.mxu0 0.0
    %2395 = vmatpush1.xpose.msra.mxu0 0.0
    %2396 = vmatprep.subr.mxu0 0.0
    %2397 = vmatpush1.xpose.msra.mxu0 0.0
    %2398 = vmatprep.subr.mxu0 0.0
    %2399 = vmatpush1.xpose.msra.mxu0 0.0
    %2400 = vmatprep.subr.mxu0 0.0
    %2401 = vmatpush1.xpose.msra.mxu0 0.0
    %2402 = vmatprep.subr.mxu0 0.0
    %2403 = vmatpush1.xpose.msra.mxu0 0.0
    %2404 = vmatprep.subr.mxu0 0.0
    %2405 = vmatpush1.xpose.msra.mxu0 0.0
    %2406 = vmatprep.subr.mxu0 0.0
    %2407 = vmatpush1.xpose.msra.mxu0 0.0
    %2408 = vmatprep.subr.mxu0 0.0
    %2409 = vmatpush1.xpose.msra.mxu0 0.0
    %2410 = vmatprep.subr.mxu0 0.0
    %2411 = vmatpush1.xpose.msra.mxu0 0.0
    %2412 = vmatprep.subr.mxu0 0.0
    %2413 = vmatpush1.xpose.msra.mxu0 0.0
    %2414 = vmatprep.subr.mxu0 0.0
    %2415 = vmatpush1.xpose.msra.mxu0 0.0
    %2416 = vmatprep.subr.mxu0 0.0
    %2417 = vmatpush1.xpose.msra.mxu0 0.0
    %2418 = vmatprep.subr.mxu0 0.0
    %2419 = vmatpush1.xpose.msra.mxu0 0.0
    %2420 = vmatprep.subr.mxu0 0.0
    %2421 = vmatpush1.xpose.msra.mxu0 0.0
    %2422 = vmatprep.subr.mxu0 0.0
    %2423 = vmatpush1.xpose.msra.mxu0 0.0
    %2424 = vmatprep.subr.mxu0 0.0
    %2425 = vmatpush1.xpose.msra.mxu0 0.0
    %2426 = vmatprep.subr.mxu0 0.0
    %2427 = vmatpush1.xpose.msra.mxu0 0.0
    %2428 = vmatprep.subr.mxu0 0.0
    %2429 = vmatpush1.xpose.msra.mxu0 0.0
    %2430 = vmatprep.subr.mxu0 0.0
    %2431 = vmatpush1.xpose.msra.mxu0 0.0
    %2432 = vmatprep.subr.mxu0 0.0
    %2433 = vmatpush1.xpose.msra.mxu0 0.0
    %2434 = vmatprep.subr.mxu0 0.0
    %2435 = vmatpush1.xpose.msra.mxu0 0.0
    %2436 = vmatprep.subr.mxu0 0.0
    %2437 = vmatpush1.xpose.msra.mxu0 0.0
    %2438 = vmatprep.subr.mxu0 0.0
    %2439 = vmatpush1.xpose.msra.mxu0 0.0
    %2440 = vmatprep.subr.mxu0 0.0
    %2441 = vmatpush1.xpose.msra.mxu0 0.0
    %2442 = vmatprep.mubr.f32.mxu0 0.0
    %2443 = vmatmul.mubr.f32.gmra.mrb[0].mxu0 %v2374
    %v2444 = vpop.f32.mrb[0].mxu0
    %v2445 = vadd.f32 %v101, %v2444
    %v2446 = vpop.f32.mrb[0].mxu0
    %2447 = vdwg.mxu0
    %2448 = vrot.lane.b32.xlu0 %v810, 112
    %v2449 = vpop.permute.xlu0 %2448
    %2450 = vrot.lane.b32.xlu0 %v788, 80
    %v2451 = vpop.permute.xlu0 %2450
    %v2452 = vsel %vm817, %v2449, 0
    %v2454 = vsel %vm817, %v2451, 0
    %2456 = vmatprep.subr.mxu0 0.0
    %2457 = vmatpush1.xpose.msra.mxu0 %v2454
    %2458 = vmatprep.subr.mxu0 0.0
    %2459 = vmatpush1.xpose.msra.mxu0 0.0
    %2460 = vmatprep.subr.mxu0 0.0
    %2461 = vmatpush1.xpose.msra.mxu0 0.0
    %2462 = vmatprep.subr.mxu0 0.0
    %2463 = vmatpush1.xpose.msra.mxu0 0.0
    %2464 = vmatprep.subr.mxu0 0.0
    %2465 = vmatpush1.xpose.msra.mxu0 0.0
    %2466 = vmatprep.subr.mxu0 0.0
    %2467 = vmatpush1.xpose.msra.mxu0 0.0
    %2468 = vmatprep.subr.mxu0 0.0
    %2469 = vmatpush1.xpose.msra.mxu0 0.0
    %2470 = vmatprep.subr.mxu0 0.0
    %2471 = vmatpush1.xpose.msra.mxu0 0.0
    %2472 = vmatprep.subr.mxu0 0.0
    %2473 = vmatpush1.xpose.msra.mxu0 0.0
    %2474 = vmatprep.subr.mxu0 0.0
    %2475 = vmatpush1.xpose.msra.mxu0 0.0
    %2476 = vmatprep.subr.mxu0 0.0
    %2477 = vmatpush1.xpose.msra.mxu0 0.0
    %2478 = vmatprep.subr.mxu0 0.0
    %2479 = vmatpush1.xpose.msra.mxu0 0.0
    %2480 = vmatprep.subr.mxu0 0.0
    %2481 = vmatpush1.xpose.msra.mxu0 0.0
    %2482 = vmatprep.subr.mxu0 0.0
    %2483 = vmatpush1.xpose.msra.mxu0 0.0
    %2484 = vmatprep.subr.mxu0 0.0
    %2485 = vmatpush1.xpose.msra.mxu0 0.0
    %2486 = vmatprep.subr.mxu0 0.0
    %2487 = vmatpush1.xpose.msra.mxu0 0.0
    %2488 = vmatprep.subr.mxu0 0.0
    %2489 = vmatpush1.xpose.msra.mxu0 0.0
    %2490 = vmatprep.subr.mxu0 0.0
    %2491 = vmatpush1.xpose.msra.mxu0 0.0
    %2492 = vmatprep.subr.mxu0 0.0
    %2493 = vmatpush1.xpose.msra.mxu0 0.0
    %2494 = vmatprep.subr.mxu0 0.0
    %2495 = vmatpush1.xpose.msra.mxu0 0.0
    %2496 = vmatprep.subr.mxu0 0.0
    %2497 = vmatpush1.xpose.msra.mxu0 0.0
    %2498 = vmatprep.subr.mxu0 0.0
    %2499 = vmatpush1.xpose.msra.mxu0 0.0
    %2500 = vmatprep.subr.mxu0 0.0
    %2501 = vmatpush1.xpose.msra.mxu0 0.0
    %2502 = vmatprep.subr.mxu0 0.0
    %2503 = vmatpush1.xpose.msra.mxu0 0.0
    %2504 = vmatprep.subr.mxu0 0.0
    %2505 = vmatpush1.xpose.msra.mxu0 0.0
    %2506 = vmatprep.subr.mxu0 0.0
    %2507 = vmatpush1.xpose.msra.mxu0 0.0
    %2508 = vmatprep.subr.mxu0 0.0
    %2509 = vmatpush1.xpose.msra.mxu0 0.0
    %2510 = vmatprep.subr.mxu0 0.0
    %2511 = vmatpush1.xpose.msra.mxu0 0.0
    %2512 = vmatprep.subr.mxu0 0.0
    %2513 = vmatpush1.xpose.msra.mxu0 0.0
    %2514 = vmatprep.subr.mxu0 0.0
    %2515 = vmatpush1.xpose.msra.mxu0 0.0
    %2516 = vmatprep.subr.mxu0 0.0
    %2517 = vmatpush1.xpose.msra.mxu0 0.0
    %2518 = vmatprep.subr.mxu0 0.0
    %2519 = vmatpush1.xpose.msra.mxu0 0.0
    %2520 = vmatprep.mubr.f32.mxu0 0.0
    %2521 = vmatmul.mubr.f32.gmra.mrb[0].mxu0 %v2452
    %v2522 = vpop.f32.mrb[0].mxu0
    %v2523 = vadd.f32 %v102, %v2522
    %v2524 = vpop.f32.mrb[0].mxu0
    %2525 = vdwg.mxu0
    %2526 = vrot.lane.b32.xlu0 %v811, 112
    %v2527 = vpop.permute.xlu0 %2526
    %2528 = vrot.lane.b32.xlu0 %v793, 80
    %v2529 = vpop.permute.xlu0 %2528
    %v2530 = vsel %vm817, %v2527, 0
    %v2532 = vsel %vm817, %v2529, 0
    %2534 = vmatprep.subr.mxu0 0.0
    %2535 = vmatpush1.xpose.msra.mxu0 %v2532
    %2536 = vmatprep.subr.mxu0 0.0
    %2537 = vmatpush1.xpose.msra.mxu0 0.0
    %2538 = vmatprep.subr.mxu0 0.0
    %2539 = vmatpush1.xpose.msra.mxu0 0.0
    %2540 = vmatprep.subr.mxu0 0.0
    %2541 = vmatpush1.xpose.msra.mxu0 0.0
    %2542 = vmatprep.subr.mxu0 0.0
    %2543 = vmatpush1.xpose.msra.mxu0 0.0
    %2544 = vmatprep.subr.mxu0 0.0
    %2545 = vmatpush1.xpose.msra.mxu0 0.0
    %2546 = vmatprep.subr.mxu0 0.0
    %2547 = vmatpush1.xpose.msra.mxu0 0.0
    %2548 = vmatprep.subr.mxu0 0.0
    %2549 = vmatpush1.xpose.msra.mxu0 0.0
    %2550 = vmatprep.subr.mxu0 0.0
    %2551 = vmatpush1.xpose.msra.mxu0 0.0
    %2552 = vmatprep.subr.mxu0 0.0
    %2553 = vmatpush1.xpose.msra.mxu0 0.0
    %2554 = vmatprep.subr.mxu0 0.0
    %2555 = vmatpush1.xpose.msra.mxu0 0.0
    %2556 = vmatprep.subr.mxu0 0.0
    %2557 = vmatpush1.xpose.msra.mxu0 0.0
    %2558 = vmatprep.subr.mxu0 0.0
    %2559 = vmatpush1.xpose.msra.mxu0 0.0
    %2560 = vmatprep.subr.mxu0 0.0
    %2561 = vmatpush1.xpose.msra.mxu0 0.0
    %2562 = vmatprep.subr.mxu0 0.0
    %2563 = vmatpush1.xpose.msra.mxu0 0.0
    %2564 = vmatprep.subr.mxu0 0.0
    %2565 = vmatpush1.xpose.msra.mxu0 0.0
    %2566 = vmatprep.subr.mxu0 0.0
    %2567 = vmatpush1.xpose.msra.mxu0 0.0
    %2568 = vmatprep.subr.mxu0 0.0
    %2569 = vmatpush1.xpose.msra.mxu0 0.0
    %2570 = vmatprep.subr.mxu0 0.0
    %2571 = vmatpush1.xpose.msra.mxu0 0.0
    %2572 = vmatprep.subr.mxu0 0.0
    %2573 = vmatpush1.xpose.msra.mxu0 0.0
    %2574 = vmatprep.subr.mxu0 0.0
    %2575 = vmatpush1.xpose.msra.mxu0 0.0
    %2576 = vmatprep.subr.mxu0 0.0
    %2577 = vmatpush1.xpose.msra.mxu0 0.0
    %2578 = vmatprep.subr.mxu0 0.0
    %2579 = vmatpush1.xpose.msra.mxu0 0.0
    %2580 = vmatprep.subr.mxu0 0.0
    %2581 = vmatpush1.xpose.msra.mxu0 0.0
    %2582 = vmatprep.subr.mxu0 0.0
    %2583 = vmatpush1.xpose.msra.mxu0 0.0
    %2584 = vmatprep.subr.mxu0 0.0
    %2585 = vmatpush1.xpose.msra.mxu0 0.0
    %2586 = vmatprep.subr.mxu0 0.0
    %2587 = vmatpush1.xpose.msra.mxu0 0.0
    %2588 = vmatprep.subr.mxu0 0.0
    %2589 = vmatpush1.xpose.msra.mxu0 0.0
    %2590 = vmatprep.subr.mxu0 0.0
    %2591 = vmatpush1.xpose.msra.mxu0 0.0
    %2592 = vmatprep.subr.mxu0 0.0
    %2593 = vmatpush1.xpose.msra.mxu0 0.0
    %2594 = vmatprep.subr.mxu0 0.0
    %2595 = vmatpush1.xpose.msra.mxu0 0.0
    %2596 = vmatprep.subr.mxu0 0.0
    %2597 = vmatpush1.xpose.msra.mxu0 0.0
    %2598 = vmatprep.mubr.f32.mxu0 0.0
    %2599 = vmatmul.mubr.f32.gmra.mrb[0].mxu0 %v2530
    %v2600 = vpop.f32.mrb[0].mxu0
    %v2601 = vadd.f32 %v103, %v2600
    %v2602 = vpop.f32.mrb[0].mxu0
    %2603 = vdwg.mxu0
    %2604 = vrot.lane.b32.xlu0 %v812, 112
    %v2605 = vpop.permute.xlu0 %2604
    %2606 = vrot.lane.b32.xlu0 %v798, 80
    %v2607 = vpop.permute.xlu0 %2606
    %v2608 = vsel %vm817, %v2605, 0
    %v2610 = vsel %vm817, %v2607, 0
    %2612 = vmatprep.subr.mxu0 0.0
    %2613 = vmatpush1.xpose.msra.mxu0 %v2610
    %2614 = vmatprep.subr.mxu0 0.0
    %2615 = vmatpush1.xpose.msra.mxu0 0.0
    %2616 = vmatprep.subr.mxu0 0.0
    %2617 = vmatpush1.xpose.msra.mxu0 0.0
    %2618 = vmatprep.subr.mxu0 0.0
    %2619 = vmatpush1.xpose.msra.mxu0 0.0
    %2620 = vmatprep.subr.mxu0 0.0
    %2621 = vmatpush1.xpose.msra.mxu0 0.0
    %2622 = vmatprep.subr.mxu0 0.0
    %2623 = vmatpush1.xpose.msra.mxu0 0.0
    %2624 = vmatprep.subr.mxu0 0.0
    %2625 = vmatpush1.xpose.msra.mxu0 0.0
    %2626 = vmatprep.subr.mxu0 0.0
    %2627 = vmatpush1.xpose.msra.mxu0 0.0
    %2628 = vmatprep.subr.mxu0 0.0
    %2629 = vmatpush1.xpose.msra.mxu0 0.0
    %2630 = vmatprep.subr.mxu0 0.0
    %2631 = vmatpush1.xpose.msra.mxu0 0.0
    %2632 = vmatprep.subr.mxu0 0.0
    %2633 = vmatpush1.xpose.msra.mxu0 0.0
    %2634 = vmatprep.subr.mxu0 0.0
    %2635 = vmatpush1.xpose.msra.mxu0 0.0
    %2636 = vmatprep.subr.mxu0 0.0
    %2637 = vmatpush1.xpose.msra.mxu0 0.0
    %2638 = vmatprep.subr.mxu0 0.0
    %2639 = vmatpush1.xpose.msra.mxu0 0.0
    %2640 = vmatprep.subr.mxu0 0.0
    %2641 = vmatpush1.xpose.msra.mxu0 0.0
    %2642 = vmatprep.subr.mxu0 0.0
    %2643 = vmatpush1.xpose.msra.mxu0 0.0
    %2644 = vmatprep.subr.mxu0 0.0
    %2645 = vmatpush1.xpose.msra.mxu0 0.0
    %2646 = vmatprep.subr.mxu0 0.0
    %2647 = vmatpush1.xpose.msra.mxu0 0.0
    %2648 = vmatprep.subr.mxu0 0.0
    %2649 = vmatpush1.xpose.msra.mxu0 0.0
    %2650 = vmatprep.subr.mxu0 0.0
    %2651 = vmatpush1.xpose.msra.mxu0 0.0
    %2652 = vmatprep.subr.mxu0 0.0
    %2653 = vmatpush1.xpose.msra.mxu0 0.0
    %2654 = vmatprep.subr.mxu0 0.0
    %2655 = vmatpush1.xpose.msra.mxu0 0.0
    %2656 = vmatprep.subr.mxu0 0.0
    %2657 = vmatpush1.xpose.msra.mxu0 0.0
    %2658 = vmatprep.subr.mxu0 0.0
    %2659 = vmatpush1.xpose.msra.mxu0 0.0
    %2660 = vmatprep.subr.mxu0 0.0
    %2661 = vmatpush1.xpose.msra.mxu0 0.0
    %2662 = vmatprep.subr.mxu0 0.0
    %2663 = vmatpush1.xpose.msra.mxu0 0.0
    %2664 = vmatprep.subr.mxu0 0.0
    %2665 = vmatpush1.xpose.msra.mxu0 0.0
    %2666 = vmatprep.subr.mxu0 0.0
    %2667 = vmatpush1.xpose.msra.mxu0 0.0
    %2668 = vmatprep.subr.mxu0 0.0
    %2669 = vmatpush1.xpose.msra.mxu0 0.0
    %2670 = vmatprep.subr.mxu0 0.0
    %2671 = vmatpush1.xpose.msra.mxu0 0.0
    %2672 = vmatprep.subr.mxu0 0.0
    %2673 = vmatpush1.xpose.msra.mxu0 0.0
    %2674 = vmatprep.subr.mxu0 0.0
    %2675 = vmatpush1.xpose.msra.mxu0 0.0
    %2676 = vmatprep.mubr.f32.mxu0 0.0
    %2677 = vmatmul.mubr.f32.gmra.mrb[0].mxu0 %v2608
    %v2678 = vpop.f32.mrb[0].mxu0
    %v2679 = vadd.f32 %v104, %v2678
    %v2680 = vpop.f32.mrb[0].mxu0
    %2681 = vdwg.mxu0
    %2682 = vrot.lane.b32.xlu0 %v813, 112
    %v2683 = vpop.permute.xlu0 %2682
    %2684 = vrot.lane.b32.xlu0 %v803, 80
    %v2685 = vpop.permute.xlu0 %2684
    %v2686 = vsel %vm817, %v2683, 0
    %v2688 = vsel %vm817, %v2685, 0
    %2690 = vmatprep.subr.mxu0 0.0
    %2691 = vmatpush1.xpose.msra.mxu0 %v2688
    %2692 = vmatprep.subr.mxu0 0.0
    %2693 = vmatpush1.xpose.msra.mxu0 0.0
    %2694 = vmatprep.subr.mxu0 0.0
    %2695 = vmatpush1.xpose.msra.mxu0 0.0
    %2696 = vmatprep.subr.mxu0 0.0
    %2697 = vmatpush1.xpose.msra.mxu0 0.0
    %2698 = vmatprep.subr.mxu0 0.0
    %2699 = vmatpush1.xpose.msra.mxu0 0.0
    %2700 = vmatprep.subr.mxu0 0.0
    %2701 = vmatpush1.xpose.msra.mxu0 0.0
    %2702 = vmatprep.subr.mxu0 0.0
    %2703 = vmatpush1.xpose.msra.mxu0 0.0
    %2704 = vmatprep.subr.mxu0 0.0
    %2705 = vmatpush1.xpose.msra.mxu0 0.0
    %2706 = vmatprep.subr.mxu0 0.0
    %2707 = vmatpush1.xpose.msra.mxu0 0.0
    %2708 = vmatprep.subr.mxu0 0.0
    %2709 = vmatpush1.xpose.msra.mxu0 0.0
    %2710 = vmatprep.subr.mxu0 0.0
    %2711 = vmatpush1.xpose.msra.mxu0 0.0
    %2712 = vmatprep.subr.mxu0 0.0
    %2713 = vmatpush1.xpose.msra.mxu0 0.0
    %2714 = vmatprep.subr.mxu0 0.0
    %2715 = vmatpush1.xpose.msra.mxu0 0.0
    %2716 = vmatprep.subr.mxu0 0.0
    %2717 = vmatpush1.xpose.msra.mxu0 0.0
    %2718 = vmatprep.subr.mxu0 0.0
    %2719 = vmatpush1.xpose.msra.mxu0 0.0
    %2720 = vmatprep.subr.mxu0 0.0
    %2721 = vmatpush1.xpose.msra.mxu0 0.0
    %2722 = vmatprep.subr.mxu0 0.0
    %2723 = vmatpush1.xpose.msra.mxu0 0.0
    %2724 = vmatprep.subr.mxu0 0.0
    %2725 = vmatpush1.xpose.msra.mxu0 0.0
    %2726 = vmatprep.subr.mxu0 0.0
    %2727 = vmatpush1.xpose.msra.mxu0 0.0
    %2728 = vmatprep.subr.mxu0 0.0
    %2729 = vmatpush1.xpose.msra.mxu0 0.0
    %2730 = vmatprep.subr.mxu0 0.0
    %2731 = vmatpush1.xpose.msra.mxu0 0.0
    %2732 = vmatprep.subr.mxu0 0.0
    %2733 = vmatpush1.xpose.msra.mxu0 0.0
    %2734 = vmatprep.subr.mxu0 0.0
    %2735 = vmatpush1.xpose.msra.mxu0 0.0
    %2736 = vmatprep.subr.mxu0 0.0
    %2737 = vmatpush1.xpose.msra.mxu0 0.0
    %2738 = vmatprep.subr.mxu0 0.0
    %2739 = vmatpush1.xpose.msra.mxu0 0.0
    %2740 = vmatprep.subr.mxu0 0.0
    %2741 = vmatpush1.xpose.msra.mxu0 0.0
    %2742 = vmatprep.subr.mxu0 0.0
    %2743 = vmatpush1.xpose.msra.mxu0 0.0
    %2744 = vmatprep.subr.mxu0 0.0
    %2745 = vmatpush1.xpose.msra.mxu0 0.0
    %2746 = vmatprep.subr.mxu0 0.0
    %2747 = vmatpush1.xpose.msra.mxu0 0.0
    %2748 = vmatprep.subr.mxu0 0.0
    %2749 = vmatpush1.xpose.msra.mxu0 0.0
    %2750 = vmatprep.subr.mxu0 0.0
    %2751 = vmatpush1.xpose.msra.mxu0 0.0
    %2752 = vmatprep.subr.mxu0 0.0
    %2753 = vmatpush1.xpose.msra.mxu0 0.0
    %2754 = vmatprep.mubr.f32.mxu0 0.0
    %2755 = vmatmul.mubr.f32.gmra.mrb[0].mxu0 %v2686
    %v2756 = vpop.f32.mrb[0].mxu0
    %v2757 = vadd.f32 %v105, %v2756
    %v2758 = vpop.f32.mrb[0].mxu0
    %2759 = vdwg.mxu0
    %v2760 = vsel %vm1439, %v2211, -inf
    %2761 = vmax.xlane.f32.xlu0 %v2760
    %v2762 = vpop.xlane.xlu0 %2761
    %v2763 = vsel %vm1439, %v2289, -inf
    %2764 = vmax.xlane.f32.xlu0 %v2763
    %v2765 = vpop.xlane.xlu0 %2764
    %v2766 = vsel %vm1439, %v2367, -inf
    %2767 = vmax.xlane.f32.xlu0 %v2766
    %v2768 = vpop.xlane.xlu0 %2767
    %v2769 = vsel %vm1439, %v2445, -inf
    %2770 = vmax.xlane.f32.xlu0 %v2769
    %v2771 = vpop.xlane.xlu0 %2770
    %v2772 = vsel %vm1439, %v2523, -inf
    %2773 = vmax.xlane.f32.xlu0 %v2772
    %v2774 = vpop.xlane.xlu0 %2773
    %v2775 = vsel %vm1439, %v2601, -inf
    %2776 = vmax.xlane.f32.xlu0 %v2775
    %v2777 = vpop.xlane.xlu0 %2776
    %v2778 = vsel %vm1439, %v2679, -inf
    %2779 = vmax.xlane.f32.xlu0 %v2778
    %v2780 = vpop.xlane.xlu0 %2779
    %v2781 = vsel %vm1439, %v2757, -inf
    %2782 = vmax.xlane.f32.xlu0 %v2781
    %v2783 = vpop.xlane.xlu0 %2782
    %v2784 = vsub.f32 %v2211, %v2762
    %v2785 = vsub.f32 %v2289, %v2765
    %v2786 = vsub.f32 %v2367, %v2768
    %v2787 = vsub.f32 %v2445, %v2771
    %v2788 = vsub.f32 %v2523, %v2774
    %v2789 = vsub.f32 %v2601, %v2777
    %v2790 = vsub.f32 %v2679, %v2780
    %v2791 = vsub.f32 %v2757, %v2783
    %v2792 = vmul.f32 %v2784, 1.442695
    %v2793 = vpow.pop %v2792
    %v2794 = vmul.f32 %v2785, 1.442695
    %v2795 = vpow.pop %v2794
    %v2796 = vmul.f32 %v2786, 1.442695
    %v2797 = vpow.pop %v2796
    %v2798 = vmul.f32 %v2787, 1.442695
    %v2799 = vpow.pop %v2798
    %v2800 = vmul.f32 %v2788, 1.442695
    %v2801 = vpow.pop %v2800
    %v2802 = vmul.f32 %v2789, 1.442695
    %v2803 = vpow.pop %v2802
    %v2804 = vmul.f32 %v2790, 1.442695
    %v2805 = vpow.pop %v2804
    %v2806 = vmul.f32 %v2791, 1.442695
    %v2807 = vpow.pop %v2806
    %v2808 = vsel %vm1439, %v2793, 0.0
    %2809 = vadd.xlane.f32.xlu0 %v2808
    %v2810 = vpop.xlane.xlu0 %2809
    %v2811 = vsel %vm1439, %v2795, 0.0
    %2812 = vadd.xlane.f32.xlu0 %v2811
    %v2813 = vpop.xlane.xlu0 %2812
    %v2814 = vsel %vm1439, %v2797, 0.0
    %2815 = vadd.xlane.f32.xlu0 %v2814
    %v2816 = vpop.xlane.xlu0 %2815
    %v2817 = vsel %vm1439, %v2799, 0.0
    %2818 = vadd.xlane.f32.xlu0 %v2817
    %v2819 = vpop.xlane.xlu0 %2818
    %v2820 = vsel %vm1439, %v2801, 0.0
    %2821 = vadd.xlane.f32.xlu0 %v2820
    %v2822 = vpop.xlane.xlu0 %2821
    %v2823 = vsel %vm1439, %v2803, 0.0
    %2824 = vadd.xlane.f32.xlu0 %v2823
    %v2825 = vpop.xlane.xlu0 %2824
    %v2826 = vsel %vm1439, %v2805, 0.0
    %2827 = vadd.xlane.f32.xlu0 %v2826
    %v2828 = vpop.xlane.xlu0 %2827
    %v2829 = vsel %vm1439, %v2807, 0.0
    %2830 = vadd.xlane.f32.xlu0 %v2829
    %v2831 = vpop.xlane.xlu0 %2830
    %v2832 = vrcp.pop %v2810
    %v2833 = vmul.f32 %v2793, %v2832
    %v2834 = vrcp.pop %v2813
    %v2835 = vmul.f32 %v2795, %v2834
    %v2836 = vrcp.pop %v2816
    %v2837 = vmul.f32 %v2797, %v2836
    %v2838 = vrcp.pop %v2819
    %v2839 = vmul.f32 %v2799, %v2838
    %v2840 = vrcp.pop %v2822
    %v2841 = vmul.f32 %v2801, %v2840
    %v2842 = vrcp.pop %v2825
    %v2843 = vmul.f32 %v2803, %v2842
    %v2844 = vrcp.pop %v2828
    %v2845 = vmul.f32 %v2805, %v2844
    %v2846 = vrcp.pop %v2831
    %v2847 = vmul.f32 %v2807, %v2846
    %2848 = vrot.lane.b32.xlu0 %v768, 48
    %v2849 = vpop.permute.xlu0 %2848
    %v2852 = vsel %vm1439, %v2833, 0
    %2854 = vmatprep.subr.mxu0 0.0
    %2855 = vmatpush1.msra.mxu0 %v2849
    %2856 = vmatprep.subr.mxu0 0.0
    %2857 = vmatpush1.msra.mxu0 0.0
    %2858 = vmatprep.subr.mxu0 0.0
    %2859 = vmatpush1.msra.mxu0 0.0
    %2860 = vmatprep.subr.mxu0 0.0
    %2861 = vmatpush1.msra.mxu0 0.0
    %2862 = vmatprep.subr.mxu0 0.0
    %2863 = vmatpush1.msra.mxu0 0.0
    %2864 = vmatprep.subr.mxu0 0.0
    %2865 = vmatpush1.msra.mxu0 0.0
    %2866 = vmatprep.subr.mxu0 0.0
    %2867 = vmatpush1.msra.mxu0 0.0
    %2868 = vmatprep.subr.mxu0 0.0
    %2869 = vmatpush1.msra.mxu0 0.0
    %2870 = vmatprep.subr.mxu0 0.0
    %2871 = vmatpush1.msra.mxu0 0.0
    %2872 = vmatprep.subr.mxu0 0.0
    %2873 = vmatpush1.msra.mxu0 0.0
    %2874 = vmatprep.subr.mxu0 0.0
    %2875 = vmatpush1.msra.mxu0 0.0
    %2876 = vmatprep.subr.mxu0 0.0
    %2877 = vmatpush1.msra.mxu0 0.0
    %2878 = vmatprep.subr.mxu0 0.0
    %2879 = vmatpush1.msra.mxu0 0.0
    %2880 = vmatprep.subr.mxu0 0.0
    %2881 = vmatpush1.msra.mxu0 0.0
    %2882 = vmatprep.subr.mxu0 0.0
    %2883 = vmatpush1.msra.mxu0 0.0
    %2884 = vmatprep.subr.mxu0 0.0
    %2885 = vmatpush1.msra.mxu0 0.0
    %2886 = vmatprep.subr.mxu0 0.0
    %2887 = vmatpush1.msra.mxu0 0.0
    %2888 = vmatprep.subr.mxu0 0.0
    %2889 = vmatpush1.msra.mxu0 0.0
    %2890 = vmatprep.subr.mxu0 0.0
    %2891 = vmatpush1.msra.mxu0 0.0
    %2892 = vmatprep.subr.mxu0 0.0
    %2893 = vmatpush1.msra.mxu0 0.0
    %2894 = vmatprep.subr.mxu0 0.0
    %2895 = vmatpush1.msra.mxu0 0.0
    %2896 = vmatprep.subr.mxu0 0.0
    %2897 = vmatpush1.msra.mxu0 0.0
    %2898 = vmatprep.subr.mxu0 0.0
    %2899 = vmatpush1.msra.mxu0 0.0
    %2900 = vmatprep.subr.mxu0 0.0
    %2901 = vmatpush1.msra.mxu0 0.0
    %2902 = vmatprep.subr.mxu0 0.0
    %2903 = vmatpush1.msra.mxu0 0.0
    %2904 = vmatprep.subr.mxu0 0.0
    %2905 = vmatpush1.msra.mxu0 0.0
    %2906 = vmatprep.subr.mxu0 0.0
    %2907 = vmatpush1.msra.mxu0 0.0
    %2908 = vmatprep.subr.mxu0 0.0
    %2909 = vmatpush1.msra.mxu0 0.0
    %2910 = vmatprep.subr.mxu0 0.0
    %2911 = vmatpush1.msra.mxu0 0.0
    %2912 = vmatprep.subr.mxu0 0.0
    %2913 = vmatpush1.msra.mxu0 0.0
    %2914 = vmatprep.subr.mxu0 0.0
    %2915 = vmatpush1.msra.mxu0 0.0
    %2916 = vmatprep.subr.mxu0 0.0
    %2917 = vmatpush1.msra.mxu0 0.0
    %2918 = vmatprep.mubr.f32.mxu0 0.0
    %2919 = vmatmul.mubr.f32.gmra.mrb[0].mxu0 %v2852
    %v2920 = vpop.f32.mrb[0].mxu0
    %v2921 = vadd.f32 0.0, %v2920
    %v2922 = vpop.f32.mrb[0].mxu0
    %2923 = vdwg.mxu0
    %2924 = vrot.lane.b32.xlu0 %v773, 48
    %v2925 = vpop.permute.xlu0 %2924
    %v2928 = vsel %vm1439, %v2835, 0
    %2930 = vmatprep.subr.mxu0 0.0
    %2931 = vmatpush1.msra.mxu0 %v2925
    %2932 = vmatprep.subr.mxu0 0.0
    %2933 = vmatpush1.msra.mxu0 0.0
    %2934 = vmatprep.subr.mxu0 0.0
    %2935 = vmatpush1.msra.mxu0 0.0
    %2936 = vmatprep.subr.mxu0 0.0
    %2937 = vmatpush1.msra.mxu0 0.0
    %2938 = vmatprep.subr.mxu0 0.0
    %2939 = vmatpush1.msra.mxu0 0.0
    %2940 = vmatprep.subr.mxu0 0.0
    %2941 = vmatpush1.msra.mxu0 0.0
    %2942 = vmatprep.subr.mxu0 0.0
    %2943 = vmatpush1.msra.mxu0 0.0
    %2944 = vmatprep.subr.mxu0 0.0
    %2945 = vmatpush1.msra.mxu0 0.0
    %2946 = vmatprep.subr.mxu0 0.0
    %2947 = vmatpush1.msra.mxu0 0.0
    %2948 = vmatprep.subr.mxu0 0.0
    %2949 = vmatpush1.msra.mxu0 0.0
    %2950 = vmatprep.subr.mxu0 0.0
    %2951 = vmatpush1.msra.mxu0 0.0
    %2952 = vmatprep.subr.mxu0 0.0
    %2953 = vmatpush1.msra.mxu0 0.0
    %2954 = vmatprep.subr.mxu0 0.0
    %2955 = vmatpush1.msra.mxu0 0.0
    %2956 = vmatprep.subr.mxu0 0.0
    %2957 = vmatpush1.msra.mxu0 0.0
    %2958 = vmatprep.subr.mxu0 0.0
    %2959 = vmatpush1.msra.mxu0 0.0
    %2960 = vmatprep.subr.mxu0 0.0
    %2961 = vmatpush1.msra.mxu0 0.0
    %2962 = vmatprep.subr.mxu0 0.0
    %2963 = vmatpush1.msra.mxu0 0.0
    %2964 = vmatprep.subr.mxu0 0.0
    %2965 = vmatpush1.msra.mxu0 0.0
    %2966 = vmatprep.subr.mxu0 0.0
    %2967 = vmatpush1.msra.mxu0 0.0
    %2968 = vmatprep.subr.mxu0 0.0
    %2969 = vmatpush1.msra.mxu0 0.0
    %2970 = vmatprep.subr.mxu0 0.0
    %2971 = vmatpush1.msra.mxu0 0.0
    %2972 = vmatprep.subr.mxu0 0.0
    %2973 = vmatpush1.msra.mxu0 0.0
    %2974 = vmatprep.subr.mxu0 0.0
    %2975 = vmatpush1.msra.mxu0 0.0
    %2976 = vmatprep.subr.mxu0 0.0
    %2977 = vmatpush1.msra.mxu0 0.0
    %2978 = vmatprep.subr.mxu0 0.0
    %2979 = vmatpush1.msra.mxu0 0.0
    %2980 = vmatprep.subr.mxu0 0.0
    %2981 = vmatpush1.msra.mxu0 0.0
    %2982 = vmatprep.subr.mxu0 0.0
    %2983 = vmatpush1.msra.mxu0 0.0
    %2984 = vmatprep.subr.mxu0 0.0
    %2985 = vmatpush1.msra.mxu0 0.0
    %2986 = vmatprep.subr.mxu0 0.0
    %2987 = vmatpush1.msra.mxu0 0.0
    %2988 = vmatprep.subr.mxu0 0.0
    %2989 = vmatpush1.msra.mxu0 0.0
    %2990 = vmatprep.subr.mxu0 0.0
    %2991 = vmatpush1.msra.mxu0 0.0
    %2992 = vmatprep.subr.mxu0 0.0
    %2993 = vmatpush1.msra.mxu0 0.0
    %2994 = vmatprep.mubr.f32.mxu0 0.0
    %2995 = vmatmul.mubr.f32.gmra.mrb[0].mxu0 %v2928
    %v2996 = vpop.f32.mrb[0].mxu0
    %v2997 = vadd.f32 0.0, %v2996
    %v2998 = vpop.f32.mrb[0].mxu0
    %2999 = vdwg.mxu0
    %3000 = vrot.lane.b32.xlu0 %v778, 48
    %v3001 = vpop.permute.xlu0 %3000
    %v3004 = vsel %vm1439, %v2837, 0
    %3006 = vmatprep.subr.mxu0 0.0
    %3007 = vmatpush1.msra.mxu0 %v3001
    %3008 = vmatprep.subr.mxu0 0.0
    %3009 = vmatpush1.msra.mxu0 0.0
    %3010 = vmatprep.subr.mxu0 0.0
    %3011 = vmatpush1.msra.mxu0 0.0
    %3012 = vmatprep.subr.mxu0 0.0
    %3013 = vmatpush1.msra.mxu0 0.0
    %3014 = vmatprep.subr.mxu0 0.0
    %3015 = vmatpush1.msra.mxu0 0.0
    %3016 = vmatprep.subr.mxu0 0.0
    %3017 = vmatpush1.msra.mxu0 0.0
    %3018 = vmatprep.subr.mxu0 0.0
    %3019 = vmatpush1.msra.mxu0 0.0
    %3020 = vmatprep.subr.mxu0 0.0
    %3021 = vmatpush1.msra.mxu0 0.0
    %3022 = vmatprep.subr.mxu0 0.0
    %3023 = vmatpush1.msra.mxu0 0.0
    %3024 = vmatprep.subr.mxu0 0.0
    %3025 = vmatpush1.msra.mxu0 0.0
    %3026 = vmatprep.subr.mxu0 0.0
    %3027 = vmatpush1.msra.mxu0 0.0
    %3028 = vmatprep.subr.mxu0 0.0
    %3029 = vmatpush1.msra.mxu0 0.0
    %3030 = vmatprep.subr.mxu0 0.0
    %3031 = vmatpush1.msra.mxu0 0.0
    %3032 = vmatprep.subr.mxu0 0.0
    %3033 = vmatpush1.msra.mxu0 0.0
    %3034 = vmatprep.subr.mxu0 0.0
    %3035 = vmatpush1.msra.mxu0 0.0
    %3036 = vmatprep.subr.mxu0 0.0
    %3037 = vmatpush1.msra.mxu0 0.0
    %3038 = vmatprep.subr.mxu0 0.0
    %3039 = vmatpush1.msra.mxu0 0.0
    %3040 = vmatprep.subr.mxu0 0.0
    %3041 = vmatpush1.msra.mxu0 0.0
    %3042 = vmatprep.subr.mxu0 0.0
    %3043 = vmatpush1.msra.mxu0 0.0
    %3044 = vmatprep.subr.mxu0 0.0
    %3045 = vmatpush1.msra.mxu0 0.0
    %3046 = vmatprep.subr.mxu0 0.0
    %3047 = vmatpush1.msra.mxu0 0.0
    %3048 = vmatprep.subr.mxu0 0.0
    %3049 = vmatpush1.msra.mxu0 0.0
    %3050 = vmatprep.subr.mxu0 0.0
    %3051 = vmatpush1.msra.mxu0 0.0
    %3052 = vmatprep.subr.mxu0 0.0
    %3053 = vmatpush1.msra.mxu0 0.0
    %3054 = vmatprep.subr.mxu0 0.0
    %3055 = vmatpush1.msra.mxu0 0.0
    %3056 = vmatprep.subr.mxu0 0.0
    %3057 = vmatpush1.msra.mxu0 0.0
    %3058 = vmatprep.subr.mxu0 0.0
    %3059 = vmatpush1.msra.mxu0 0.0
    %3060 = vmatprep.subr.mxu0 0.0
    %3061 = vmatpush1.msra.mxu0 0.0
    %3062 = vmatprep.subr.mxu0 0.0
    %3063 = vmatpush1.msra.mxu0 0.0
    %3064 = vmatprep.subr.mxu0 0.0
    %3065 = vmatpush1.msra.mxu0 0.0
    %3066 = vmatprep.subr.mxu0 0.0
    %3067 = vmatpush1.msra.mxu0 0.0
    %3068 = vmatprep.subr.mxu0 0.0
    %3069 = vmatpush1.msra.mxu0 0.0
    %3070 = vmatprep.mubr.f32.mxu0 0.0
    %3071 = vmatmul.mubr.f32.gmra.mrb[0].mxu0 %v3004
    %v3072 = vpop.f32.mrb[0].mxu0
    %v3073 = vadd.f32 0.0, %v3072
    %v3074 = vpop.f32.mrb[0].mxu0
    %3075 = vdwg.mxu0
    %3076 = vrot.lane.b32.xlu0 %v783, 48
    %v3077 = vpop.permute.xlu0 %3076
    %v3080 = vsel %vm1439, %v2839, 0
    %3082 = vmatprep.subr.mxu0 0.0
    %3083 = vmatpush1.msra.mxu0 %v3077
    %3084 = vmatprep.subr.mxu0 0.0
    %3085 = vmatpush1.msra.mxu0 0.0
    %3086 = vmatprep.subr.mxu0 0.0
    %3087 = vmatpush1.msra.mxu0 0.0
    %3088 = vmatprep.subr.mxu0 0.0
    %3089 = vmatpush1.msra.mxu0 0.0
    %3090 = vmatprep.subr.mxu0 0.0
    %3091 = vmatpush1.msra.mxu0 0.0
    %3092 = vmatprep.subr.mxu0 0.0
    %3093 = vmatpush1.msra.mxu0 0.0
    %3094 = vmatprep.subr.mxu0 0.0
    %3095 = vmatpush1.msra.mxu0 0.0
    %3096 = vmatprep.subr.mxu0 0.0
    %3097 = vmatpush1.msra.mxu0 0.0
    %3098 = vmatprep.subr.mxu0 0.0
    %3099 = vmatpush1.msra.mxu0 0.0
    %3100 = vmatprep.subr.mxu0 0.0
    %3101 = vmatpush1.msra.mxu0 0.0
    %3102 = vmatprep.subr.mxu0 0.0
    %3103 = vmatpush1.msra.mxu0 0.0
    %3104 = vmatprep.subr.mxu0 0.0
    %3105 = vmatpush1.msra.mxu0 0.0
    %3106 = vmatprep.subr.mxu0 0.0
    %3107 = vmatpush1.msra.mxu0 0.0
    %3108 = vmatprep.subr.mxu0 0.0
    %3109 = vmatpush1.msra.mxu0 0.0
    %3110 = vmatprep.subr.mxu0 0.0
    %3111 = vmatpush1.msra.mxu0 0.0
    %3112 = vmatprep.subr.mxu0 0.0
    %3113 = vmatpush1.msra.mxu0 0.0
    %3114 = vmatprep.subr.mxu0 0.0
    %3115 = vmatpush1.msra.mxu0 0.0
    %3116 = vmatprep.subr.mxu0 0.0
    %3117 = vmatpush1.msra.mxu0 0.0
    %3118 = vmatprep.subr.mxu0 0.0
    %3119 = vmatpush1.msra.mxu0 0.0
    %3120 = vmatprep.subr.mxu0 0.0
    %3121 = vmatpush1.msra.mxu0 0.0
    %3122 = vmatprep.subr.mxu0 0.0
    %3123 = vmatpush1.msra.mxu0 0.0
    %3124 = vmatprep.subr.mxu0 0.0
    %3125 = vmatpush1.msra.mxu0 0.0
    %3126 = vmatprep.subr.mxu0 0.0
    %3127 = vmatpush1.msra.mxu0 0.0
    %3128 = vmatprep.subr.mxu0 0.0
    %3129 = vmatpush1.msra.mxu0 0.0
    %3130 = vmatprep.subr.mxu0 0.0
    %3131 = vmatpush1.msra.mxu0 0.0
    %3132 = vmatprep.subr.mxu0 0.0
    %3133 = vmatpush1.msra.mxu0 0.0
    %3134 = vmatprep.subr.mxu0 0.0
    %3135 = vmatpush1.msra.mxu0 0.0
    %3136 = vmatprep.subr.mxu0 0.0
    %3137 = vmatpush1.msra.mxu0 0.0
    %3138 = vmatprep.subr.mxu0 0.0
    %3139 = vmatpush1.msra.mxu0 0.0
    %3140 = vmatprep.subr.mxu0 0.0
    %3141 = vmatpush1.msra.mxu0 0.0
    %3142 = vmatprep.subr.mxu0 0.0
    %3143 = vmatpush1.msra.mxu0 0.0
    %3144 = vmatprep.subr.mxu0 0.0
    %3145 = vmatpush1.msra.mxu0 0.0
    %3146 = vmatprep.mubr.f32.mxu0 0.0
    %3147 = vmatmul.mubr.f32.gmra.mrb[0].mxu0 %v3080
    %v3148 = vpop.f32.mrb[0].mxu0
    %v3149 = vadd.f32 0.0, %v3148
    %v3150 = vpop.f32.mrb[0].mxu0
    %3151 = vdwg.mxu0
    %3152 = vrot.lane.b32.xlu0 %v788, 48
    %v3153 = vpop.permute.xlu0 %3152
    %v3156 = vsel %vm1439, %v2841, 0
    %3158 = vmatprep.subr.mxu0 0.0
    %3159 = vmatpush1.msra.mxu0 %v3153
    %3160 = vmatprep.subr.mxu0 0.0
    %3161 = vmatpush1.msra.mxu0 0.0
    %3162 = vmatprep.subr.mxu0 0.0
    %3163 = vmatpush1.msra.mxu0 0.0
    %3164 = vmatprep.subr.mxu0 0.0
    %3165 = vmatpush1.msra.mxu0 0.0
    %3166 = vmatprep.subr.mxu0 0.0
    %3167 = vmatpush1.msra.mxu0 0.0
    %3168 = vmatprep.subr.mxu0 0.0
    %3169 = vmatpush1.msra.mxu0 0.0
    %3170 = vmatprep.subr.mxu0 0.0
    %3171 = vmatpush1.msra.mxu0 0.0
    %3172 = vmatprep.subr.mxu0 0.0
    %3173 = vmatpush1.msra.mxu0 0.0
    %3174 = vmatprep.subr.mxu0 0.0
    %3175 = vmatpush1.msra.mxu0 0.0
    %3176 = vmatprep.subr.mxu0 0.0
    %3177 = vmatpush1.msra.mxu0 0.0
    %3178 = vmatprep.subr.mxu0 0.0
    %3179 = vmatpush1.msra.mxu0 0.0
    %3180 = vmatprep.subr.mxu0 0.0
    %3181 = vmatpush1.msra.mxu0 0.0
    %3182 = vmatprep.subr.mxu0 0.0
    %3183 = vmatpush1.msra.mxu0 0.0
    %3184 = vmatprep.subr.mxu0 0.0
    %3185 = vmatpush1.msra.mxu0 0.0
    %3186 = vmatprep.subr.mxu0 0.0
    %3187 = vmatpush1.msra.mxu0 0.0
    %3188 = vmatprep.subr.mxu0 0.0
    %3189 = vmatpush1.msra.mxu0 0.0
    %3190 = vmatprep.subr.mxu0 0.0
    %3191 = vmatpush1.msra.mxu0 0.0
    %3192 = vmatprep.subr.mxu0 0.0
    %3193 = vmatpush1.msra.mxu0 0.0
    %3194 = vmatprep.subr.mxu0 0.0
    %3195 = vmatpush1.msra.mxu0 0.0
    %3196 = vmatprep.subr.mxu0 0.0
    %3197 = vmatpush1.msra.mxu0 0.0
    %3198 = vmatprep.subr.mxu0 0.0
    %3199 = vmatpush1.msra.mxu0 0.0
    %3200 = vmatprep.subr.mxu0 0.0
    %3201 = vmatpush1.msra.mxu0 0.0
    %3202 = vmatprep.subr.mxu0 0.0
    %3203 = vmatpush1.msra.mxu0 0.0
    %3204 = vmatprep.subr.mxu0 0.0
    %3205 = vmatpush1.msra.mxu0 0.0
    %3206 = vmatprep.subr.mxu0 0.0
    %3207 = vmatpush1.msra.mxu0 0.0
    %3208 = vmatprep.subr.mxu0 0.0
    %3209 = vmatpush1.msra.mxu0 0.0
    %3210 = vmatprep.subr.mxu0 0.0
    %3211 = vmatpush1.msra.mxu0 0.0
    %3212 = vmatprep.subr.mxu0 0.0
    %3213 = vmatpush1.msra.mxu0 0.0
    %3214 = vmatprep.subr.mxu0 0.0
    %3215 = vmatpush1.msra.mxu0 0.0
    %3216 = vmatprep.subr.mxu0 0.0
    %3217 = vmatpush1.msra.mxu0 0.0
    %3218 = vmatprep.subr.mxu0 0.0
    %3219 = vmatpush1.msra.mxu0 0.0
    %3220 = vmatprep.subr.mxu0 0.0
    %3221 = vmatpush1.msra.mxu0 0.0
    %3222 = vmatprep.mubr.f32.mxu0 0.0
    %3223 = vmatmul.mubr.f32.gmra.mrb[0].mxu0 %v3156
    %v3224 = vpop.f32.mrb[0].mxu0
    %v3225 = vadd.f32 0.0, %v3224
    %v3226 = vpop.f32.mrb[0].mxu0
    %3227 = vdwg.mxu0
    %3228 = vrot.lane.b32.xlu0 %v793, 48
    %v3229 = vpop.permute.xlu0 %3228
    %v3232 = vsel %vm1439, %v2843, 0
    %3234 = vmatprep.subr.mxu0 0.0
    %3235 = vmatpush1.msra.mxu0 %v3229
    %3236 = vmatprep.subr.mxu0 0.0
    %3237 = vmatpush1.msra.mxu0 0.0
    %3238 = vmatprep.subr.mxu0 0.0
    %3239 = vmatpush1.msra.mxu0 0.0
    %3240 = vmatprep.subr.mxu0 0.0
    %3241 = vmatpush1.msra.mxu0 0.0
    %3242 = vmatprep.subr.mxu0 0.0
    %3243 = vmatpush1.msra.mxu0 0.0
    %3244 = vmatprep.subr.mxu0 0.0
    %3245 = vmatpush1.msra.mxu0 0.0
    %3246 = vmatprep.subr.mxu0 0.0
    %3247 = vmatpush1.msra.mxu0 0.0
    %3248 = vmatprep.subr.mxu0 0.0
    %3249 = vmatpush1.msra.mxu0 0.0
    %3250 = vmatprep.subr.mxu0 0.0
    %3251 = vmatpush1.msra.mxu0 0.0
    %3252 = vmatprep.subr.mxu0 0.0
    %3253 = vmatpush1.msra.mxu0 0.0
    %3254 = vmatprep.subr.mxu0 0.0
    %3255 = vmatpush1.msra.mxu0 0.0
    %3256 = vmatprep.subr.mxu0 0.0
    %3257 = vmatpush1.msra.mxu0 0.0
    %3258 = vmatprep.subr.mxu0 0.0
    %3259 = vmatpush1.msra.mxu0 0.0
    %3260 = vmatprep.subr.mxu0 0.0
    %3261 = vmatpush1.msra.mxu0 0.0
    %3262 = vmatprep.subr.mxu0 0.0
    %3263 = vmatpush1.msra.mxu0 0.0
    %3264 = vmatprep.subr.mxu0 0.0
    %3265 = vmatpush1.msra.mxu0 0.0
    %3266 = vmatprep.subr.mxu0 0.0
    %3267 = vmatpush1.msra.mxu0 0.0
    %3268 = vmatprep.subr.mxu0 0.0
    %3269 = vmatpush1.msra.mxu0 0.0
    %3270 = vmatprep.subr.mxu0 0.0
    %3271 = vmatpush1.msra.mxu0 0.0
    %3272 = vmatprep.subr.mxu0 0.0
    %3273 = vmatpush1.msra.mxu0 0.0
    %3274 = vmatprep.subr.mxu0 0.0
    %3275 = vmatpush1.msra.mxu0 0.0
    %3276 = vmatprep.subr.mxu0 0.0
    %3277 = vmatpush1.msra.mxu0 0.0
    %3278 = vmatprep.subr.mxu0 0.0
    %3279 = vmatpush1.msra.mxu0 0.0
    %3280 = vmatprep.subr.mxu0 0.0
    %3281 = vmatpush1.msra.mxu0 0.0
    %3282 = vmatprep.subr.mxu0 0.0
    %3283 = vmatpush1.msra.mxu0 0.0
    %3284 = vmatprep.subr.mxu0 0.0
    %3285 = vmatpush1.msra.mxu0 0.0
    %3286 = vmatprep.subr.mxu0 0.0
    %3287 = vmatpush1.msra.mxu0 0.0
    %3288 = vmatprep.subr.mxu0 0.0
    %3289 = vmatpush1.msra.mxu0 0.0
    %3290 = vmatprep.subr.mxu0 0.0
    %3291 = vmatpush1.msra.mxu0 0.0
    %3292 = vmatprep.subr.mxu0 0.0
    %3293 = vmatpush1.msra.mxu0 0.0
    %3294 = vmatprep.subr.mxu0 0.0
    %3295 = vmatpush1.msra.mxu0 0.0
    %3296 = vmatprep.subr.mxu0 0.0
    %3297 = vmatpush1.msra.mxu0 0.0
    %3298 = vmatprep.mubr.f32.mxu0 0.0
    %3299 = vmatmul.mubr.f32.gmra.mrb[0].mxu0 %v3232
    %v3300 = vpop.f32.mrb[0].mxu0
    %v3301 = vadd.f32 0.0, %v3300
    %v3302 = vpop.f32.mrb[0].mxu0
    %3303 = vdwg.mxu0
    %3304 = vrot.lane.b32.xlu0 %v798, 48
    %v3305 = vpop.permute.xlu0 %3304
    %v3308 = vsel %vm1439, %v2845, 0
    %3310 = vmatprep.subr.mxu0 0.0
    %3311 = vmatpush1.msra.mxu0 %v3305
    %3312 = vmatprep.subr.mxu0 0.0
    %3313 = vmatpush1.msra.mxu0 0.0
    %3314 = vmatprep.subr.mxu0 0.0
    %3315 = vmatpush1.msra.mxu0 0.0
    %3316 = vmatprep.subr.mxu0 0.0
    %3317 = vmatpush1.msra.mxu0 0.0
    %3318 = vmatprep.subr.mxu0 0.0
    %3319 = vmatpush1.msra.mxu0 0.0
    %3320 = vmatprep.subr.mxu0 0.0
    %3321 = vmatpush1.msra.mxu0 0.0
    %3322 = vmatprep.subr.mxu0 0.0
    %3323 = vmatpush1.msra.mxu0 0.0
    %3324 = vmatprep.subr.mxu0 0.0
    %3325 = vmatpush1.msra.mxu0 0.0
    %3326 = vmatprep.subr.mxu0 0.0
    %3327 = vmatpush1.msra.mxu0 0.0
    %3328 = vmatprep.subr.mxu0 0.0
    %3329 = vmatpush1.msra.mxu0 0.0
    %3330 = vmatprep.subr.mxu0 0.0
    %3331 = vmatpush1.msra.mxu0 0.0
    %3332 = vmatprep.subr.mxu0 0.0
    %3333 = vmatpush1.msra.mxu0 0.0
    %3334 = vmatprep.subr.mxu0 0.0
    %3335 = vmatpush1.msra.mxu0 0.0
    %3336 = vmatprep.subr.mxu0 0.0
    %3337 = vmatpush1.msra.mxu0 0.0
    %3338 = vmatprep.subr.mxu0 0.0
    %3339 = vmatpush1.msra.mxu0 0.0
    %3340 = vmatprep.subr.mxu0 0.0
    %3341 = vmatpush1.msra.mxu0 0.0
    %3342 = vmatprep.subr.mxu0 0.0
    %3343 = vmatpush1.msra.mxu0 0.0
    %3344 = vmatprep.subr.mxu0 0.0
    %3345 = vmatpush1.msra.mxu0 0.0
    %3346 = vmatprep.subr.mxu0 0.0
    %3347 = vmatpush1.msra.mxu0 0.0
    %3348 = vmatprep.subr.mxu0 0.0
    %3349 = vmatpush1.msra.mxu0 0.0
    %3350 = vmatprep.subr.mxu0 0.0
    %3351 = vmatpush1.msra.mxu0 0.0
    %3352 = vmatprep.subr.mxu0 0.0
    %3353 = vmatpush1.msra.mxu0 0.0
    %3354 = vmatprep.subr.mxu0 0.0
    %3355 = vmatpush1.msra.mxu0 0.0
    %3356 = vmatprep.subr.mxu0 0.0
    %3357 = vmatpush1.msra.mxu0 0.0
    %3358 = vmatprep.subr.mxu0 0.0
    %3359 = vmatpush1.msra.mxu0 0.0
    %3360 = vmatprep.subr.mxu0 0.0
    %3361 = vmatpush1.msra.mxu0 0.0
    %3362 = vmatprep.subr.mxu0 0.0
    %3363 = vmatpush1.msra.mxu0 0.0
    %3364 = vmatprep.subr.mxu0 0.0
    %3365 = vmatpush1.msra.mxu0 0.0
    %3366 = vmatprep.subr.mxu0 0.0
    %3367 = vmatpush1.msra.mxu0 0.0
    %3368 = vmatprep.subr.mxu0 0.0
    %3369 = vmatpush1.msra.mxu0 0.0
    %3370 = vmatprep.subr.mxu0 0.0
    %3371 = vmatpush1.msra.mxu0 0.0
    %3372 = vmatprep.subr.mxu0 0.0
    %3373 = vmatpush1.msra.mxu0 0.0
    %3374 = vmatprep.mubr.f32.mxu0 0.0
    %3375 = vmatmul.mubr.f32.gmra.mrb[0].mxu0 %v3308
    %v3376 = vpop.f32.mrb[0].mxu0
    %v3377 = vadd.f32 0.0, %v3376
    %v3378 = vpop.f32.mrb[0].mxu0
    %3379 = vdwg.mxu0
    %3380 = vrot.lane.b32.xlu0 %v803, 48
    %v3381 = vpop.permute.xlu0 %3380
    %v3384 = vsel %vm1439, %v2847, 0
    %3386 = vmatprep.subr.mxu0 0.0
    %3387 = vmatpush1.msra.mxu0 %v3381
    %3388 = vmatprep.subr.mxu0 0.0
    %3389 = vmatpush1.msra.mxu0 0.0
    %3390 = vmatprep.subr.mxu0 0.0
    %3391 = vmatpush1.msra.mxu0 0.0
    %3392 = vmatprep.subr.mxu0 0.0
    %3393 = vmatpush1.msra.mxu0 0.0
    %3394 = vmatprep.subr.mxu0 0.0
    %3395 = vmatpush1.msra.mxu0 0.0
    %3396 = vmatprep.subr.mxu0 0.0
    %3397 = vmatpush1.msra.mxu0 0.0
    %3398 = vmatprep.subr.mxu0 0.0
    %3399 = vmatpush1.msra.mxu0 0.0
    %3400 = vmatprep.subr.mxu0 0.0
    %3401 = vmatpush1.msra.mxu0 0.0
    %3402 = vmatprep.subr.mxu0 0.0
    %3403 = vmatpush1.msra.mxu0 0.0
    %3404 = vmatprep.subr.mxu0 0.0
    %3405 = vmatpush1.msra.mxu0 0.0
    %3406 = vmatprep.subr.mxu0 0.0
    %3407 = vmatpush1.msra.mxu0 0.0
    %3408 = vmatprep.subr.mxu0 0.0
    %3409 = vmatpush1.msra.mxu0 0.0
    %3410 = vmatprep.subr.mxu0 0.0
    %3411 = vmatpush1.msra.mxu0 0.0
    %3412 = vmatprep.subr.mxu0 0.0
    %3413 = vmatpush1.msra.mxu0 0.0
    %3414 = vmatprep.subr.mxu0 0.0
    %3415 = vmatpush1.msra.mxu0 0.0
    %3416 = vmatprep.subr.mxu0 0.0
    %3417 = vmatpush1.msra.mxu0 0.0
    %3418 = vmatprep.subr.mxu0 0.0
    %3419 = vmatpush1.msra.mxu0 0.0
    %3420 = vmatprep.subr.mxu0 0.0
    %3421 = vmatpush1.msra.mxu0 0.0
    %3422 = vmatprep.subr.mxu0 0.0
    %3423 = vmatpush1.msra.mxu0 0.0
    %3424 = vmatprep.subr.mxu0 0.0
    %3425 = vmatpush1.msra.mxu0 0.0
    %3426 = vmatprep.subr.mxu0 0.0
    %3427 = vmatpush1.msra.mxu0 0.0
    %3428 = vmatprep.subr.mxu0 0.0
    %3429 = vmatpush1.msra.mxu0 0.0
    %3430 = vmatprep.subr.mxu0 0.0
    %3431 = vmatpush1.msra.mxu0 0.0
    %3432 = vmatprep.subr.mxu0 0.0
    %3433 = vmatpush1.msra.mxu0 0.0
    %3434 = vmatprep.subr.mxu0 0.0
    %3435 = vmatpush1.msra.mxu0 0.0
    %3436 = vmatprep.subr.mxu0 0.0
    %3437 = vmatpush1.msra.mxu0 0.0
    %3438 = vmatprep.subr.mxu0 0.0
    %3439 = vmatpush1.msra.mxu0 0.0
    %3440 = vmatprep.subr.mxu0 0.0
    %3441 = vmatpush1.msra.mxu0 0.0
    %3442 = vmatprep.subr.mxu0 0.0
    %3443 = vmatpush1.msra.mxu0 0.0
    %3444 = vmatprep.subr.mxu0 0.0
    %3445 = vmatpush1.msra.mxu0 0.0
    %3446 = vmatprep.subr.mxu0 0.0
    %3447 = vmatpush1.msra.mxu0 0.0
    %3448 = vmatprep.subr.mxu0 0.0
    %3449 = vmatpush1.msra.mxu0 0.0
    %3450 = vmatprep.mubr.f32.mxu0 0.0
    %3451 = vmatmul.mubr.f32.gmra.mrb[0].mxu0 %v3384
    %v3452 = vpop.f32.mrb[0].mxu0
    %v3453 = vadd.f32 0.0, %v3452
    %v3454 = vpop.f32.mrb[0].mxu0
    %3455 = vdwg.mxu0
    %3464 = vrot.lane.b32.xlu0 %v2921, 16
    %v3465 = vpop.permute.xlu0 %3464
    %3466 = vrot.lane.b32.xlu0 %v2997, 16
    %v3467 = vpop.permute.xlu0 %3466
    %3468 = vrot.lane.b32.xlu0 %v3073, 16
    %v3469 = vpop.permute.xlu0 %3468
    %3470 = vrot.lane.b32.xlu0 %v3149, 16
    %v3471 = vpop.permute.xlu0 %3470
    %3472 = vrot.lane.b32.xlu0 %v3225, 16
    %v3473 = vpop.permute.xlu0 %3472
    %3474 = vrot.lane.b32.xlu0 %v3301, 16
    %v3475 = vpop.permute.xlu0 %3474
    %3476 = vrot.lane.b32.xlu0 %v3377, 16
    %v3477 = vpop.permute.xlu0 %3476
    %3478 = vrot.lane.b32.xlu0 %v3453, 16
    %v3479 = vpop.permute.xlu0 %3478
    %v3488 = vsel %vm817, %v1601, %v3465
    %v3489 = vsel %vm817, %v1677, %v3467
    %v3490 = vsel %vm817, %v1753, %v3469
    %v3491 = vsel %vm817, %v1829, %v3471
    %v3492 = vsel %vm817, %v1905, %v3473
    %v3493 = vsel %vm817, %v1981, %v3475
    %v3494 = vsel %vm817, %v2057, %v3477
    %v3495 = vsel %vm817, %v2133, %v3479
    %v3496 = vmax.f32 %v3488, 0.0
    %v3497 = vmax.f32 %v3489, 0.0
    %v3498 = vmax.f32 %v3490, 0.0
    %v3499 = vmax.f32 %v3491, 0.0
    %v3500 = vmax.f32 %v3492, 0.0
    %v3501 = vmax.f32 %v3493, 0.0
    %v3502 = vmax.f32 %v3494, 0.0
    %v3503 = vmax.f32 %v3495, 0.0
    %v3504 = vadd.f32 %v3496, %v658
    %v3505 = vadd.f32 %v3497, %v659
    %v3506 = vadd.f32 %v3498, %v660
    %v3507 = vadd.f32 %v3499, %v661
    %v3508 = vadd.f32 %v3500, %v662
    %v3509 = vadd.f32 %v3501, %v663
    %v3510 = vadd.f32 %v3502, %v664
    %v3511 = vadd.f32 %v3503, %v665
    %v3512 = vld [vmem:[%s6] sm:$0x3]
    %v3513 = vsel %vm123, %v3504, 0.0
    %3514 = vadd.xlane.f32.xlu0 %v3513
    %v3515 = vpop.xlane.xlu0 %3514
    %v3516 = vsel %vm123, %v3505, 0.0
    %3517 = vadd.xlane.f32.xlu0 %v3516
    %v3518 = vpop.xlane.xlu0 %3517
    %v3519 = vsel %vm123, %v3506, 0.0
    %3520 = vadd.xlane.f32.xlu0 %v3519
    %v3521 = vpop.xlane.xlu0 %3520
    %v3522 = vsel %vm123, %v3507, 0.0
    %3523 = vadd.xlane.f32.xlu0 %v3522
    %v3524 = vpop.xlane.xlu0 %3523
    %v3525 = vsel %vm123, %v3508, 0.0
    %3526 = vadd.xlane.f32.xlu0 %v3525
    %v3527 = vpop.xlane.xlu0 %3526
    %v3528 = vsel %vm123, %v3509, 0.0
    %3529 = vadd.xlane.f32.xlu0 %v3528
    %v3530 = vpop.xlane.xlu0 %3529
    %v3531 = vsel %vm123, %v3510, 0.0
    %3532 = vadd.xlane.f32.xlu0 %v3531
    %v3533 = vpop.xlane.xlu0 %3532
    %v3534 = vsel %vm123, %v3511, 0.0
    %3535 = vadd.xlane.f32.xlu0 %v3534
    %v3536 = vpop.xlane.xlu0 %3535
    %v3537 = vmul.f32 %v3515, %v277
    %v3538 = vmul.f32 %v3518, %v277
    %v3539 = vmul.f32 %v3521, %v277
    %v3540 = vmul.f32 %v3524, %v277
    %v3541 = vmul.f32 %v3527, %v277
    %v3542 = vmul.f32 %v3530, %v277
    %v3543 = vmul.f32 %v3533, %v277
    %v3544 = vmul.f32 %v3536, %v277
    %v3545 = vsub.f32 %v3504, %v3537
    %v3546 = vsub.f32 %v3505, %v3538
    %v3547 = vsub.f32 %v3506, %v3539
    %v3548 = vsub.f32 %v3507, %v3540
    %v3549 = vsub.f32 %v3508, %v3541
    %v3550 = vsub.f32 %v3509, %v3542
    %v3551 = vsub.f32 %v3510, %v3543
    %v3552 = vsub.f32 %v3511, %v3544
    %v3553 = vmul.f32 %v3545, %v3545
    %v3554 = vmul.f32 %v3546, %v3546
    %v3555 = vmul.f32 %v3547, %v3547
    %v3556 = vmul.f32 %v3548, %v3548
    %v3557 = vmul.f32 %v3549, %v3549
    %v3558 = vmul.f32 %v3550, %v3550
    %v3559 = vmul.f32 %v3551, %v3551
    %v3560 = vmul.f32 %v3552, %v3552
    %v3561 = vsel %vm123, %v3553, 0.0
    %3562 = vadd.xlane.f32.xlu0 %v3561
    %v3563 = vpop.xlane.xlu0 %3562
    %v3564 = vsel %vm123, %v3554, 0.0
    %3565 = vadd.xlane.f32.xlu0 %v3564
    %v3566 = vpop.xlane.xlu0 %3565
    %v3567 = vsel %vm123, %v3555, 0.0
    %3568 = vadd.xlane.f32.xlu0 %v3567
    %v3569 = vpop.xlane.xlu0 %3568
    %v3570 = vsel %vm123, %v3556, 0.0
    %3571 = vadd.xlane.f32.xlu0 %v3570
    %v3572 = vpop.xlane.xlu0 %3571
    %v3573 = vsel %vm123, %v3557, 0.0
    %3574 = vadd.xlane.f32.xlu0 %v3573
    %v3575 = vpop.xlane.xlu0 %3574
    %v3576 = vsel %vm123, %v3558, 0.0
    %3577 = vadd.xlane.f32.xlu0 %v3576
    %v3578 = vpop.xlane.xlu0 %3577
    %v3579 = vsel %vm123, %v3559, 0.0
    %3580 = vadd.xlane.f32.xlu0 %v3579
    %v3581 = vpop.xlane.xlu0 %3580
    %v3582 = vsel %vm123, %v3560, 0.0
    %3583 = vadd.xlane.f32.xlu0 %v3582
    %v3584 = vpop.xlane.xlu0 %3583
    %v3585 = vmul.f32 %v3563, %v277
    %v3586 = vmul.f32 %v3566, %v277
    %v3587 = vmul.f32 %v3569, %v277
    %v3588 = vmul.f32 %v3572, %v277
    %v3589 = vmul.f32 %v3575, %v277
    %v3590 = vmul.f32 %v3578, %v277
    %v3591 = vmul.f32 %v3581, %v277
    %v3592 = vmul.f32 %v3584, %v277
    %v3593 = vadd.f32 %v3585, 1e-05
    %v3594 = vadd.f32 %v3586, 1e-05
    %v3595 = vadd.f32 %v3587, 1e-05
    %v3596 = vadd.f32 %v3588, 1e-05
    %v3597 = vadd.f32 %v3589, 1e-05
    %v3598 = vadd.f32 %v3590, 1e-05
    %v3599 = vadd.f32 %v3591, 1e-05
    %v3600 = vadd.f32 %v3592, 1e-05
    %v3601 = vrsqrt.pop %v3593
    %v3602 = vrsqrt.pop %v3594
    %v3603 = vrsqrt.pop %v3595
    %v3604 = vrsqrt.pop %v3596
    %v3605 = vrsqrt.pop %v3597
    %v3606 = vrsqrt.pop %v3598
    %v3607 = vrsqrt.pop %v3599
    %v3608 = vrsqrt.pop %v3600
    %v3609 = vmul.f32 %v3545, %v3601
    %v3610 = vmul.f32 %v3546, %v3602
    %v3611 = vmul.f32 %v3547, %v3603
    %v3612 = vmul.f32 %v3548, %v3604
    %v3613 = vmul.f32 %v3549, %v3605
    %v3614 = vmul.f32 %v3550, %v3606
    %v3615 = vmul.f32 %v3551, %v3607
    %v3616 = vmul.f32 %v3552, %v3608
    %v3617 = vlaneseq
    %v3618 = vshrl.u32 %v3617, 7
    %v3619 = vsub.s32 0, %v3618
    %v3620 = vrot.slane %v3512, %v3619
    %v3621 = vmul.f32 %v3609, %v3620
    %v3622 = vmul.f32 %v3610, %v3620
    %v3623 = vmul.f32 %v3611, %v3620
    %v3624 = vmul.f32 %v3612, %v3620
    %v3625 = vmul.f32 %v3613, %v3620
    %v3626 = vmul.f32 %v3614, %v3620
    %v3627 = vmul.f32 %v3615, %v3620
    %v3628 = vmul.f32 %v3616, %v3620
    %v3629 = vlaneseq
    %v3630 = vshrl.u32 %v3629, 7
    %v3631 = vsub.s32 1, %v3630
    %v3632 = vrot.slane %v3512, %v3631
    %v3633 = vadd.f32 %v3621, %v3632
    %v3634 = vadd.f32 %v3622, %v3632
    %v3635 = vadd.f32 %v3623, %v3632
    %v3636 = vadd.f32 %v3624, %v3632
    %v3637 = vadd.f32 %v3625, %v3632
    %v3638 = vadd.f32 %v3626, %v3632
    %v3639 = vadd.f32 %v3627, %v3632
    %v3640 = vadd.f32 %v3628, %v3632
    %s3641 = scalar_lea.vmem [#allocation8], 32
    %v3642 = vld [vmem:[%s3641] sm:$0xff]
    %v3643 = vld [vmem:[%s3641 + $0x8] sm:$0xff]
    %v3644 = vld [vmem:[%s3641 + $0x10] sm:$0xff]
    %v3645 = vld [vmem:[%s3641 + $0x18] sm:$0xff]
    %s3646 = scalar_lea.vmem %s5, 1
    %v3647 = vld [vmem:[%s3646] sm:$0x1]
    %v3649 = vlaneseq
    %v3650 = vshrl.u32 %v3649, 7
    %v3651 = vsub.s32 0, %v3650
    %v3652 = vrot.slane %v3647, %v3651
    %v3655 = vsel %vm123, %v3633, 0
    %v3658 = vsel %vm123, %v3634, 0
    %v3661 = vsel %vm123, %v3635, 0
    %v3664 = vsel %vm123, %v3636, 0
    %v3667 = vsel %vm123, %v3637, 0
    %v3670 = vsel %vm123, %v3638, 0
    %v3673 = vsel %vm123, %v3639, 0
    %v3676 = vsel %vm123, %v3640, 0
    %3678 = vmatprep.subr.mxu0 0.0
    %3679 = vmatpush1.msra.mxu0 %v3642
    %3680 = vmatprep.subr.mxu0 0.0
    %3681 = vmatpush1.msra.mxu0 %v3643
    %3682 = vmatprep.subr.mxu0 0.0
    %3683 = vmatpush1.msra.mxu0 %v3644
    %3684 = vmatprep.subr.mxu0 0.0
    %3685 = vmatpush1.msra.mxu0 %v3645
    %3686 = vmatprep.subr.mxu0 0.0
    %3687 = vmatpush1.msra.mxu0 0.0
    %3688 = vmatprep.subr.mxu0 0.0
    %3689 = vmatpush1.msra.mxu0 0.0
    %3690 = vmatprep.subr.mxu0 0.0
    %3691 = vmatpush1.msra.mxu0 0.0
    %3692 = vmatprep.subr.mxu0 0.0
    %3693 = vmatpush1.msra.mxu0 0.0
    %3694 = vmatprep.subr.mxu0 0.0
    %3695 = vmatpush1.msra.mxu0 0.0
    %3696 = vmatprep.subr.mxu0 0.0
    %3697 = vmatpush1.msra.mxu0 0.0
    %3698 = vmatprep.subr.mxu0 0.0
    %3699 = vmatpush1.msra.mxu0 0.0
    %3700 = vmatprep.subr.mxu0 0.0
    %3701 = vmatpush1.msra.mxu0 0.0
    %3702 = vmatprep.subr.mxu0 0.0
    %3703 = vmatpush1.msra.mxu0 0.0
    %3704 = vmatprep.subr.mxu0 0.0
    %3705 = vmatpush1.msra.mxu0 0.0
    %3706 = vmatprep.subr.mxu0 0.0
    %3707 = vmatpush1.msra.mxu0 0.0
    %3708 = vmatprep.subr.mxu0 0.0
    %3709 = vmatpush1.msra.mxu0 0.0
    %3710 = vmatprep.subr.mxu0 0.0
    %3711 = vmatpush1.msra.mxu0 0.0
    %3712 = vmatprep.subr.mxu0 0.0
    %3713 = vmatpush1.msra.mxu0 0.0
    %3714 = vmatprep.subr.mxu0 0.0
    %3715 = vmatpush1.msra.mxu0 0.0
    %3716 = vmatprep.subr.mxu0 0.0
    %3717 = vmatpush1.msra.mxu0 0.0
    %3718 = vmatprep.subr.mxu0 0.0
    %3719 = vmatpush1.msra.mxu0 0.0
    %3720 = vmatprep.subr.mxu0 0.0
    %3721 = vmatpush1.msra.mxu0 0.0
    %3722 = vmatprep.subr.mxu0 0.0
    %3723 = vmatpush1.msra.mxu0 0.0
    %3724 = vmatprep.subr.mxu0 0.0
    %3725 = vmatpush1.msra.mxu0 0.0
    %3726 = vmatprep.subr.mxu0 0.0
    %3727 = vmatpush1.msra.mxu0 0.0
    %3728 = vmatprep.subr.mxu0 0.0
    %3729 = vmatpush1.msra.mxu0 0.0
    %3730 = vmatprep.subr.mxu0 0.0
    %3731 = vmatpush1.msra.mxu0 0.0
    %3732 = vmatprep.subr.mxu0 0.0
    %3733 = vmatpush1.msra.mxu0 0.0
    %3734 = vmatprep.subr.mxu0 0.0
    %3735 = vmatpush1.msra.mxu0 0.0
    %3736 = vmatprep.subr.mxu0 0.0
    %3737 = vmatpush1.msra.mxu0 0.0
    %3738 = vmatprep.subr.mxu0 0.0
    %3739 = vmatpush1.msra.mxu0 0.0
    %3740 = vmatprep.subr.mxu0 0.0
    %3741 = vmatpush1.msra.mxu0 0.0
    %3742 = vmatprep.mubr.f32.mxu0 0.0
    %3743 = vmatmul.mubr.f32.gmra.mrb[0].mxu0 %v3655
    %v3744 = vpop.f32.mrb[0].mxu0
    %v3745 = vadd.f32 %v3652, %v3744
    %v3746 = vpop.f32.mrb[0].mxu0
    %3747 = vmatprep.mubr.f32.mxu0 0.0
    %3748 = vmatmul.mubr.f32.gmra.mrb[0].mxu0 %v3658
    %v3749 = vpop.f32.mrb[0].mxu0
    %v3750 = vadd.f32 %v3652, %v3749
    %v3751 = vpop.f32.mrb[0].mxu0
    %3752 = vmatprep.mubr.f32.mxu0 0.0
    %3753 = vmatmul.mubr.f32.gmra.mrb[0].mxu0 %v3661
    %v3754 = vpop.f32.mrb[0].mxu0
    %v3755 = vadd.f32 %v3652, %v3754
    %v3756 = vpop.f32.mrb[0].mxu0
    %3757 = vmatprep.mubr.f32.mxu0 0.0
    %3758 = vmatmul.mubr.f32.gmra.mrb[0].mxu0 %v3664
    %v3759 = vpop.f32.mrb[0].mxu0
    %v3760 = vadd.f32 %v3652, %v3759
    %v3761 = vpop.f32.mrb[0].mxu0
    %3762 = vmatprep.mubr.f32.mxu0 0.0
    %3763 = vmatmul.mubr.f32.gmra.mrb[0].mxu0 %v3667
    %v3764 = vpop.f32.mrb[0].mxu0
    %v3765 = vadd.f32 %v3652, %v3764
    %v3766 = vpop.f32.mrb[0].mxu0
    %3767 = vmatprep.mubr.f32.mxu0 0.0
    %3768 = vmatmul.mubr.f32.gmra.mrb[0].mxu0 %v3670
    %v3769 = vpop.f32.mrb[0].mxu0
    %v3770 = vadd.f32 %v3652, %v3769
    %v3771 = vpop.f32.mrb[0].mxu0
    %3772 = vmatprep.mubr.f32.mxu0 0.0
    %3773 = vmatmul.mubr.f32.gmra.mrb[0].mxu0 %v3673
    %v3774 = vpop.f32.mrb[0].mxu0
    %v3775 = vadd.f32 %v3652, %v3774
    %v3776 = vpop.f32.mrb[0].mxu0
    %3777 = vmatprep.mubr.f32.mxu0 0.0
    %3778 = vmatmul.mubr.f32.gmra.mrb[0].mxu0 %v3676
    %v3779 = vpop.f32.mrb[0].mxu0
    %v3780 = vadd.f32 %v3652, %v3779
    %v3781 = vpop.f32.mrb[0].mxu0
    %3782 = vdwg.mxu0
    %v3783 = vmul.f32 %v3745, 0.25
    %v3784 = vmul.f32 %v3750, 0.25
    %v3785 = vmul.f32 %v3755, 0.25
    %v3786 = vmul.f32 %v3760, 0.25
    %v3787 = vmul.f32 %v3765, 0.25
    %v3788 = vmul.f32 %v3770, 0.25
    %v3789 = vmul.f32 %v3775, 0.25
    %v3790 = vmul.f32 %v3780, 0.25
    %3792 = vrot.lane.b32.xlu0 %v3745, 96
    %v3793 = vpop.permute.xlu0 %3792
    %v3795 = vsel %vm817, %v3783, 0
    %v3797 = vsel %vm817, %v3793, 0
    %3799 = vmatprep.subr.mxu0 0.0
    %3800 = vmatpush1.xpose.msra.mxu0 %v3797
    %3801 = vmatprep.subr.mxu0 0.0
    %3802 = vmatpush1.xpose.msra.mxu0 0.0
    %3803 = vmatprep.subr.mxu0 0.0
    %3804 = vmatpush1.xpose.msra.mxu0 0.0
    %3805 = vmatprep.subr.mxu0 0.0
    %3806 = vmatpush1.xpose.msra.mxu0 0.0
    %3807 = vmatprep.subr.mxu0 0.0
    %3808 = vmatpush1.xpose.msra.mxu0 0.0
    %3809 = vmatprep.subr.mxu0 0.0
    %3810 = vmatpush1.xpose.msra.mxu0 0.0
    %3811 = vmatprep.subr.mxu0 0.0
    %3812 = vmatpush1.xpose.msra.mxu0 0.0
    %3813 = vmatprep.subr.mxu0 0.0
    %3814 = vmatpush1.xpose.msra.mxu0 0.0
    %3815 = vmatprep.subr.mxu0 0.0
    %3816 = vmatpush1.xpose.msra.mxu0 0.0
    %3817 = vmatprep.subr.mxu0 0.0
    %3818 = vmatpush1.xpose.msra.mxu0 0.0
    %3819 = vmatprep.subr.mxu0 0.0
    %3820 = vmatpush1.xpose.msra.mxu0 0.0
    %3821 = vmatprep.subr.mxu0 0.0
    %3822 = vmatpush1.xpose.msra.mxu0 0.0
    %3823 = vmatprep.subr.mxu0 0.0
    %3824 = vmatpush1.xpose.msra.mxu0 0.0
    %3825 = vmatprep.subr.mxu0 0.0
    %3826 = vmatpush1.xpose.msra.mxu0 0.0
    %3827 = vmatprep.subr.mxu0 0.0
    %3828 = vmatpush1.xpose.msra.mxu0 0.0
    %3829 = vmatprep.subr.mxu0 0.0
    %3830 = vmatpush1.xpose.msra.mxu0 0.0
    %3831 = vmatprep.subr.mxu0 0.0
    %3832 = vmatpush1.xpose.msra.mxu0 0.0
    %3833 = vmatprep.subr.mxu0 0.0
    %3834 = vmatpush1.xpose.msra.mxu0 0.0
    %3835 = vmatprep.subr.mxu0 0.0
    %3836 = vmatpush1.xpose.msra.mxu0 0.0
    %3837 = vmatprep.subr.mxu0 0.0
    %3838 = vmatpush1.xpose.msra.mxu0 0.0
    %3839 = vmatprep.subr.mxu0 0.0
    %3840 = vmatpush1.xpose.msra.mxu0 0.0
    %3841 = vmatprep.subr.mxu0 0.0
    %3842 = vmatpush1.xpose.msra.mxu0 0.0
    %3843 = vmatprep.subr.mxu0 0.0
    %3844 = vmatpush1.xpose.msra.mxu0 0.0
    %3845 = vmatprep.subr.mxu0 0.0
    %3846 = vmatpush1.xpose.msra.mxu0 0.0
    %3847 = vmatprep.subr.mxu0 0.0
    %3848 = vmatpush1.xpose.msra.mxu0 0.0
    %3849 = vmatprep.subr.mxu0 0.0
    %3850 = vmatpush1.xpose.msra.mxu0 0.0
    %3851 = vmatprep.subr.mxu0 0.0
    %3852 = vmatpush1.xpose.msra.mxu0 0.0
    %3853 = vmatprep.subr.mxu0 0.0
    %3854 = vmatpush1.xpose.msra.mxu0 0.0
    %3855 = vmatprep.subr.mxu0 0.0
    %3856 = vmatpush1.xpose.msra.mxu0 0.0
    %3857 = vmatprep.subr.mxu0 0.0
    %3858 = vmatpush1.xpose.msra.mxu0 0.0
    %3859 = vmatprep.subr.mxu0 0.0
    %3860 = vmatpush1.xpose.msra.mxu0 0.0
    %3861 = vmatprep.subr.mxu0 0.0
    %3862 = vmatpush1.xpose.msra.mxu0 0.0
    %3863 = vmatprep.mubr.f32.mxu0 0.0
    %3864 = vmatmul.mubr.f32.gmra.mrb[0].mxu0 %v3795
    %v3865 = vpop.f32.mrb[0].mxu0
    %v3866 = vadd.f32 %v98, %v3865
    %v3867 = vpop.f32.mrb[0].mxu0
    %3868 = vdwg.mxu0
    %3870 = vrot.lane.b32.xlu0 %v3750, 96
    %v3871 = vpop.permute.xlu0 %3870
    %v3873 = vsel %vm817, %v3784, 0
    %v3875 = vsel %vm817, %v3871, 0
    %3877 = vmatprep.subr.mxu0 0.0
    %3878 = vmatpush1.xpose.msra.mxu0 %v3875
    %3879 = vmatprep.subr.mxu0 0.0
    %3880 = vmatpush1.xpose.msra.mxu0 0.0
    %3881 = vmatprep.subr.mxu0 0.0
    %3882 = vmatpush1.xpose.msra.mxu0 0.0
    %3883 = vmatprep.subr.mxu0 0.0
    %3884 = vmatpush1.xpose.msra.mxu0 0.0
    %3885 = vmatprep.subr.mxu0 0.0
    %3886 = vmatpush1.xpose.msra.mxu0 0.0
    %3887 = vmatprep.subr.mxu0 0.0
    %3888 = vmatpush1.xpose.msra.mxu0 0.0
    %3889 = vmatprep.subr.mxu0 0.0
    %3890 = vmatpush1.xpose.msra.mxu0 0.0
    %3891 = vmatprep.subr.mxu0 0.0
    %3892 = vmatpush1.xpose.msra.mxu0 0.0
    %3893 = vmatprep.subr.mxu0 0.0
    %3894 = vmatpush1.xpose.msra.mxu0 0.0
    %3895 = vmatprep.subr.mxu0 0.0
    %3896 = vmatpush1.xpose.msra.mxu0 0.0
    %3897 = vmatprep.subr.mxu0 0.0
    %3898 = vmatpush1.xpose.msra.mxu0 0.0
    %3899 = vmatprep.subr.mxu0 0.0
    %3900 = vmatpush1.xpose.msra.mxu0 0.0
    %3901 = vmatprep.subr.mxu0 0.0
    %3902 = vmatpush1.xpose.msra.mxu0 0.0
    %3903 = vmatprep.subr.mxu0 0.0
    %3904 = vmatpush1.xpose.msra.mxu0 0.0
    %3905 = vmatprep.subr.mxu0 0.0
    %3906 = vmatpush1.xpose.msra.mxu0 0.0
    %3907 = vmatprep.subr.mxu0 0.0
    %3908 = vmatpush1.xpose.msra.mxu0 0.0
    %3909 = vmatprep.subr.mxu0 0.0
    %3910 = vmatpush1.xpose.msra.mxu0 0.0
    %3911 = vmatprep.subr.mxu0 0.0
    %3912 = vmatpush1.xpose.msra.mxu0 0.0
    %3913 = vmatprep.subr.mxu0 0.0
    %3914 = vmatpush1.xpose.msra.mxu0 0.0
    %3915 = vmatprep.subr.mxu0 0.0
    %3916 = vmatpush1.xpose.msra.mxu0 0.0
    %3917 = vmatprep.subr.mxu0 0.0
    %3918 = vmatpush1.xpose.msra.mxu0 0.0
    %3919 = vmatprep.subr.mxu0 0.0
    %3920 = vmatpush1.xpose.msra.mxu0 0.0
    %3921 = vmatprep.subr.mxu0 0.0
    %3922 = vmatpush1.xpose.msra.mxu0 0.0
    %3923 = vmatprep.subr.mxu0 0.0
    %3924 = vmatpush1.xpose.msra.mxu0 0.0
    %3925 = vmatprep.subr.mxu0 0.0
    %3926 = vmatpush1.xpose.msra.mxu0 0.0
    %3927 = vmatprep.subr.mxu0 0.0
    %3928 = vmatpush1.xpose.msra.mxu0 0.0
    %3929 = vmatprep.subr.mxu0 0.0
    %3930 = vmatpush1.xpose.msra.mxu0 0.0
    %3931 = vmatprep.subr.mxu0 0.0
    %3932 = vmatpush1.xpose.msra.mxu0 0.0
    %3933 = vmatprep.subr.mxu0 0.0
    %3934 = vmatpush1.xpose.msra.mxu0 0.0
    %3935 = vmatprep.subr.mxu0 0.0
    %3936 = vmatpush1.xpose.msra.mxu0 0.0
    %3937 = vmatprep.subr.mxu0 0.0
    %3938 = vmatpush1.xpose.msra.mxu0 0.0
    %3939 = vmatprep.subr.mxu0 0.0
    %3940 = vmatpush1.xpose.msra.mxu0 0.0
    %3941 = vmatprep.mubr.f32.mxu0 0.0
    %3942 = vmatmul.mubr.f32.gmra.mrb[0].mxu0 %v3873
    %v3943 = vpop.f32.mrb[0].mxu0
    %v3944 = vadd.f32 %v99, %v3943
    %v3945 = vpop.f32.mrb[0].mxu0
    %3946 = vdwg.mxu0
    %3948 = vrot.lane.b32.xlu0 %v3755, 96
    %v3949 = vpop.permute.xlu0 %3948
    %v3951 = vsel %vm817, %v3785, 0
    %v3953 = vsel %vm817, %v3949, 0
    %3955 = vmatprep.subr.mxu0 0.0
    %3956 = vmatpush1.xpose.msra.mxu0 %v3953
    %3957 = vmatprep.subr.mxu0 0.0
    %3958 = vmatpush1.xpose.msra.mxu0 0.0
    %3959 = vmatprep.subr.mxu0 0.0
    %3960 = vmatpush1.xpose.msra.mxu0 0.0
    %3961 = vmatprep.subr.mxu0 0.0
    %3962 = vmatpush1.xpose.msra.mxu0 0.0
    %3963 = vmatprep.subr.mxu0 0.0
    %3964 = vmatpush1.xpose.msra.mxu0 0.0
    %3965 = vmatprep.subr.mxu0 0.0
    %3966 = vmatpush1.xpose.msra.mxu0 0.0
    %3967 = vmatprep.subr.mxu0 0.0
    %3968 = vmatpush1.xpose.msra.mxu0 0.0
    %3969 = vmatprep.subr.mxu0 0.0
    %3970 = vmatpush1.xpose.msra.mxu0 0.0
    %3971 = vmatprep.subr.mxu0 0.0
    %3972 = vmatpush1.xpose.msra.mxu0 0.0
    %3973 = vmatprep.subr.mxu0 0.0
    %3974 = vmatpush1.xpose.msra.mxu0 0.0
    %3975 = vmatprep.subr.mxu0 0.0
    %3976 = vmatpush1.xpose.msra.mxu0 0.0
    %3977 = vmatprep.subr.mxu0 0.0
    %3978 = vmatpush1.xpose.msra.mxu0 0.0
    %3979 = vmatprep.subr.mxu0 0.0
    %3980 = vmatpush1.xpose.msra.mxu0 0.0
    %3981 = vmatprep.subr.mxu0 0.0
    %3982 = vmatpush1.xpose.msra.mxu0 0.0
    %3983 = vmatprep.subr.mxu0 0.0
    %3984 = vmatpush1.xpose.msra.mxu0 0.0
    %3985 = vmatprep.subr.mxu0 0.0
    %3986 = vmatpush1.xpose.msra.mxu0 0.0
    %3987 = vmatprep.subr.mxu0 0.0
    %3988 = vmatpush1.xpose.msra.mxu0 0.0
    %3989 = vmatprep.subr.mxu0 0.0
    %3990 = vmatpush1.xpose.msra.mxu0 0.0
    %3991 = vmatprep.subr.mxu0 0.0
    %3992 = vmatpush1.xpose.msra.mxu0 0.0
    %3993 = vmatprep.subr.mxu0 0.0
    %3994 = vmatpush1.xpose.msra.mxu0 0.0
    %3995 = vmatprep.subr.mxu0 0.0
    %3996 = vmatpush1.xpose.msra.mxu0 0.0
    %3997 = vmatprep.subr.mxu0 0.0
    %3998 = vmatpush1.xpose.msra.mxu0 0.0
    %3999 = vmatprep.subr.mxu0 0.0
    %4000 = vmatpush1.xpose.msra.mxu0 0.0
    %4001 = vmatprep.subr.mxu0 0.0
    %4002 = vmatpush1.xpose.msra.mxu0 0.0
    %4003 = vmatprep.subr.mxu0 0.0
    %4004 = vmatpush1.xpose.msra.mxu0 0.0
    %4005 = vmatprep.subr.mxu0 0.0
    %4006 = vmatpush1.xpose.msra.mxu0 0.0
    %4007 = vmatprep.subr.mxu0 0.0
    %4008 = vmatpush1.xpose.msra.mxu0 0.0
    %4009 = vmatprep.subr.mxu0 0.0
    %4010 = vmatpush1.xpose.msra.mxu0 0.0
    %4011 = vmatprep.subr.mxu0 0.0
    %4012 = vmatpush1.xpose.msra.mxu0 0.0
    %4013 = vmatprep.subr.mxu0 0.0
    %4014 = vmatpush1.xpose.msra.mxu0 0.0
    %4015 = vmatprep.subr.mxu0 0.0
    %4016 = vmatpush1.xpose.msra.mxu0 0.0
    %4017 = vmatprep.subr.mxu0 0.0
    %4018 = vmatpush1.xpose.msra.mxu0 0.0
    %4019 = vmatprep.mubr.f32.mxu0 0.0
    %4020 = vmatmul.mubr.f32.gmra.mrb[0].mxu0 %v3951
    %v4021 = vpop.f32.mrb[0].mxu0
    %v4022 = vadd.f32 %v100, %v4021
    %v4023 = vpop.f32.mrb[0].mxu0
    %4024 = vdwg.mxu0
    %4026 = vrot.lane.b32.xlu0 %v3760, 96
    %v4027 = vpop.permute.xlu0 %4026
    %v4029 = vsel %vm817, %v3786, 0
    %v4031 = vsel %vm817, %v4027, 0
    %4033 = vmatprep.subr.mxu0 0.0
    %4034 = vmatpush1.xpose.msra.mxu0 %v4031
    %4035 = vmatprep.subr.mxu0 0.0
    %4036 = vmatpush1.xpose.msra.mxu0 0.0
    %4037 = vmatprep.subr.mxu0 0.0
    %4038 = vmatpush1.xpose.msra.mxu0 0.0
    %4039 = vmatprep.subr.mxu0 0.0
    %4040 = vmatpush1.xpose.msra.mxu0 0.0
    %4041 = vmatprep.subr.mxu0 0.0
    %4042 = vmatpush1.xpose.msra.mxu0 0.0
    %4043 = vmatprep.subr.mxu0 0.0
    %4044 = vmatpush1.xpose.msra.mxu0 0.0
    %4045 = vmatprep.subr.mxu0 0.0
    %4046 = vmatpush1.xpose.msra.mxu0 0.0
    %4047 = vmatprep.subr.mxu0 0.0
    %4048 = vmatpush1.xpose.msra.mxu0 0.0
    %4049 = vmatprep.subr.mxu0 0.0
    %4050 = vmatpush1.xpose.msra.mxu0 0.0
    %4051 = vmatprep.subr.mxu0 0.0
    %4052 = vmatpush1.xpose.msra.mxu0 0.0
    %4053 = vmatprep.subr.mxu0 0.0
    %4054 = vmatpush1.xpose.msra.mxu0 0.0
    %4055 = vmatprep.subr.mxu0 0.0
    %4056 = vmatpush1.xpose.msra.mxu0 0.0
    %4057 = vmatprep.subr.mxu0 0.0
    %4058 = vmatpush1.xpose.msra.mxu0 0.0
    %4059 = vmatprep.subr.mxu0 0.0
    %4060 = vmatpush1.xpose.msra.mxu0 0.0
    %4061 = vmatprep.subr.mxu0 0.0
    %4062 = vmatpush1.xpose.msra.mxu0 0.0
    %4063 = vmatprep.subr.mxu0 0.0
    %4064 = vmatpush1.xpose.msra.mxu0 0.0
    %4065 = vmatprep.subr.mxu0 0.0
    %4066 = vmatpush1.xpose.msra.mxu0 0.0
    %4067 = vmatprep.subr.mxu0 0.0
    %4068 = vmatpush1.xpose.msra.mxu0 0.0
    %4069 = vmatprep.subr.mxu0 0.0
    %4070 = vmatpush1.xpose.msra.mxu0 0.0
    %4071 = vmatprep.subr.mxu0 0.0
    %4072 = vmatpush1.xpose.msra.mxu0 0.0
    %4073 = vmatprep.subr.mxu0 0.0
    %4074 = vmatpush1.xpose.msra.mxu0 0.0
    %4075 = vmatprep.subr.mxu0 0.0
    %4076 = vmatpush1.xpose.msra.mxu0 0.0
    %4077 = vmatprep.subr.mxu0 0.0
    %4078 = vmatpush1.xpose.msra.mxu0 0.0
    %4079 = vmatprep.subr.mxu0 0.0
    %4080 = vmatpush1.xpose.msra.mxu0 0.0
    %4081 = vmatprep.subr.mxu0 0.0
    %4082 = vmatpush1.xpose.msra.mxu0 0.0
    %4083 = vmatprep.subr.mxu0 0.0
    %4084 = vmatpush1.xpose.msra.mxu0 0.0
    %4085 = vmatprep.subr.mxu0 0.0
    %4086 = vmatpush1.xpose.msra.mxu0 0.0
    %4087 = vmatprep.subr.mxu0 0.0
    %4088 = vmatpush1.xpose.msra.mxu0 0.0
    %4089 = vmatprep.subr.mxu0 0.0
    %4090 = vmatpush1.xpose.msra.mxu0 0.0
    %4091 = vmatprep.subr.mxu0 0.0
    %4092 = vmatpush1.xpose.msra.mxu0 0.0
    %4093 = vmatprep.subr.mxu0 0.0
    %4094 = vmatpush1.xpose.msra.mxu0 0.0
    %4095 = vmatprep.subr.mxu0 0.0
    %4096 = vmatpush1.xpose.msra.mxu0 0.0
    %4097 = vmatprep.mubr.f32.mxu0 0.0
    %4098 = vmatmul.mubr.f32.gmra.mrb[0].mxu0 %v4029
    %v4099 = vpop.f32.mrb[0].mxu0
    %v4100 = vadd.f32 %v101, %v4099
    %v4101 = vpop.f32.mrb[0].mxu0
    %4102 = vdwg.mxu0
    %4104 = vrot.lane.b32.xlu0 %v3765, 96
    %v4105 = vpop.permute.xlu0 %4104
    %v4107 = vsel %vm817, %v3787, 0
    %v4109 = vsel %vm817, %v4105, 0
    %4111 = vmatprep.subr.mxu0 0.0
    %4112 = vmatpush1.xpose.msra.mxu0 %v4109
    %4113 = vmatprep.subr.mxu0 0.0
    %4114 = vmatpush1.xpose.msra.mxu0 0.0
    %4115 = vmatprep.subr.mxu0 0.0
    %4116 = vmatpush1.xpose.msra.mxu0 0.0
    %4117 = vmatprep.subr.mxu0 0.0
    %4118 = vmatpush1.xpose.msra.mxu0 0.0
    %4119 = vmatprep.subr.mxu0 0.0
    %4120 = vmatpush1.xpose.msra.mxu0 0.0
    %4121 = vmatprep.subr.mxu0 0.0
    %4122 = vmatpush1.xpose.msra.mxu0 0.0
    %4123 = vmatprep.subr.mxu0 0.0
    %4124 = vmatpush1.xpose.msra.mxu0 0.0
    %4125 = vmatprep.subr.mxu0 0.0
    %4126 = vmatpush1.xpose.msra.mxu0 0.0
    %4127 = vmatprep.subr.mxu0 0.0
    %4128 = vmatpush1.xpose.msra.mxu0 0.0
    %4129 = vmatprep.subr.mxu0 0.0
    %4130 = vmatpush1.xpose.msra.mxu0 0.0
    %4131 = vmatprep.subr.mxu0 0.0
    %4132 = vmatpush1.xpose.msra.mxu0 0.0
    %4133 = vmatprep.subr.mxu0 0.0
    %4134 = vmatpush1.xpose.msra.mxu0 0.0
    %4135 = vmatprep.subr.mxu0 0.0
    %4136 = vmatpush1.xpose.msra.mxu0 0.0
    %4137 = vmatprep.subr.mxu0 0.0
    %4138 = vmatpush1.xpose.msra.mxu0 0.0
    %4139 = vmatprep.subr.mxu0 0.0
    %4140 = vmatpush1.xpose.msra.mxu0 0.0
    %4141 = vmatprep.subr.mxu0 0.0
    %4142 = vmatpush1.xpose.msra.mxu0 0.0
    %4143 = vmatprep.subr.mxu0 0.0
    %4144 = vmatpush1.xpose.msra.mxu0 0.0
    %4145 = vmatprep.subr.mxu0 0.0
    %4146 = vmatpush1.xpose.msra.mxu0 0.0
    %4147 = vmatprep.subr.mxu0 0.0
    %4148 = vmatpush1.xpose.msra.mxu0 0.0
    %4149 = vmatprep.subr.mxu0 0.0
    %4150 = vmatpush1.xpose.msra.mxu0 0.0
    %4151 = vmatprep.subr.mxu0 0.0
    %4152 = vmatpush1.xpose.msra.mxu0 0.0
    %4153 = vmatprep.subr.mxu0 0.0
    %4154 = vmatpush1.xpose.msra.mxu0 0.0
    %4155 = vmatprep.subr.mxu0 0.0
    %4156 = vmatpush1.xpose.msra.mxu0 0.0
    %4157 = vmatprep.subr.mxu0 0.0
    %4158 = vmatpush1.xpose.msra.mxu0 0.0
    %4159 = vmatprep.subr.mxu0 0.0
    %4160 = vmatpush1.xpose.msra.mxu0 0.0
    %4161 = vmatprep.subr.mxu0 0.0
    %4162 = vmatpush1.xpose.msra.mxu0 0.0
    %4163 = vmatprep.subr.mxu0 0.0
    %4164 = vmatpush1.xpose.msra.mxu0 0.0
    %4165 = vmatprep.subr.mxu0 0.0
    %4166 = vmatpush1.xpose.msra.mxu0 0.0
    %4167 = vmatprep.subr.mxu0 0.0
    %4168 = vmatpush1.xpose.msra.mxu0 0.0
    %4169 = vmatprep.subr.mxu0 0.0
    %4170 = vmatpush1.xpose.msra.mxu0 0.0
    %4171 = vmatprep.subr.mxu0 0.0
    %4172 = vmatpush1.xpose.msra.mxu0 0.0
    %4173 = vmatprep.subr.mxu0 0.0
    %4174 = vmatpush1.xpose.msra.mxu0 0.0
    %4175 = vmatprep.mubr.f32.mxu0 0.0
    %4176 = vmatmul.mubr.f32.gmra.mrb[0].mxu0 %v4107
    %v4177 = vpop.f32.mrb[0].mxu0
    %v4178 = vadd.f32 %v102, %v4177
    %v4179 = vpop.f32.mrb[0].mxu0
    %4180 = vdwg.mxu0
    %4182 = vrot.lane.b32.xlu0 %v3770, 96
    %v4183 = vpop.permute.xlu0 %4182
    %v4185 = vsel %vm817, %v3788, 0
    %v4187 = vsel %vm817, %v4183, 0
    %4189 = vmatprep.subr.mxu0 0.0
    %4190 = vmatpush1.xpose.msra.mxu0 %v4187
    %4191 = vmatprep.subr.mxu0 0.0
    %4192 = vmatpush1.xpose.msra.mxu0 0.0
    %4193 = vmatprep.subr.mxu0 0.0
    %4194 = vmatpush1.xpose.msra.mxu0 0.0
    %4195 = vmatprep.subr.mxu0 0.0
    %4196 = vmatpush1.xpose.msra.mxu0 0.0
    %4197 = vmatprep.subr.mxu0 0.0
    %4198 = vmatpush1.xpose.msra.mxu0 0.0
    %4199 = vmatprep.subr.mxu0 0.0
    %4200 = vmatpush1.xpose.msra.mxu0 0.0
    %4201 = vmatprep.subr.mxu0 0.0
    %4202 = vmatpush1.xpose.msra.mxu0 0.0
    %4203 = vmatprep.subr.mxu0 0.0
    %4204 = vmatpush1.xpose.msra.mxu0 0.0
    %4205 = vmatprep.subr.mxu0 0.0
    %4206 = vmatpush1.xpose.msra.mxu0 0.0
    %4207 = vmatprep.subr.mxu0 0.0
    %4208 = vmatpush1.xpose.msra.mxu0 0.0
    %4209 = vmatprep.subr.mxu0 0.0
    %4210 = vmatpush1.xpose.msra.mxu0 0.0
    %4211 = vmatprep.subr.mxu0 0.0
    %4212 = vmatpush1.xpose.msra.mxu0 0.0
    %4213 = vmatprep.subr.mxu0 0.0
    %4214 = vmatpush1.xpose.msra.mxu0 0.0
    %4215 = vmatprep.subr.mxu0 0.0
    %4216 = vmatpush1.xpose.msra.mxu0 0.0
    %4217 = vmatprep.subr.mxu0 0.0
    %4218 = vmatpush1.xpose.msra.mxu0 0.0
    %4219 = vmatprep.subr.mxu0 0.0
    %4220 = vmatpush1.xpose.msra.mxu0 0.0
    %4221 = vmatprep.subr.mxu0 0.0
    %4222 = vmatpush1.xpose.msra.mxu0 0.0
    %4223 = vmatprep.subr.mxu0 0.0
    %4224 = vmatpush1.xpose.msra.mxu0 0.0
    %4225 = vmatprep.subr.mxu0 0.0
    %4226 = vmatpush1.xpose.msra.mxu0 0.0
    %4227 = vmatprep.subr.mxu0 0.0
    %4228 = vmatpush1.xpose.msra.mxu0 0.0
    %4229 = vmatprep.subr.mxu0 0.0
    %4230 = vmatpush1.xpose.msra.mxu0 0.0
    %4231 = vmatprep.subr.mxu0 0.0
    %4232 = vmatpush1.xpose.msra.mxu0 0.0
    %4233 = vmatprep.subr.mxu0 0.0
    %4234 = vmatpush1.xpose.msra.mxu0 0.0
    %4235 = vmatprep.subr.mxu0 0.0
    %4236 = vmatpush1.xpose.msra.mxu0 0.0
    %4237 = vmatprep.subr.mxu0 0.0
    %4238 = vmatpush1.xpose.msra.mxu0 0.0
    %4239 = vmatprep.subr.mxu0 0.0
    %4240 = vmatpush1.xpose.msra.mxu0 0.0
    %4241 = vmatprep.subr.mxu0 0.0
    %4242 = vmatpush1.xpose.msra.mxu0 0.0
    %4243 = vmatprep.subr.mxu0 0.0
    %4244 = vmatpush1.xpose.msra.mxu0 0.0
    %4245 = vmatprep.subr.mxu0 0.0
    %4246 = vmatpush1.xpose.msra.mxu0 0.0
    %4247 = vmatprep.subr.mxu0 0.0
    %4248 = vmatpush1.xpose.msra.mxu0 0.0
    %4249 = vmatprep.subr.mxu0 0.0
    %4250 = vmatpush1.xpose.msra.mxu0 0.0
    %4251 = vmatprep.subr.mxu0 0.0
    %4252 = vmatpush1.xpose.msra.mxu0 0.0
    %4253 = vmatprep.mubr.f32.mxu0 0.0
    %4254 = vmatmul.mubr.f32.gmra.mrb[0].mxu0 %v4185
    %v4255 = vpop.f32.mrb[0].mxu0
    %v4256 = vadd.f32 %v103, %v4255
    %v4257 = vpop.f32.mrb[0].mxu0
    %4258 = vdwg.mxu0
    %4260 = vrot.lane.b32.xlu0 %v3775, 96
    %v4261 = vpop.permute.xlu0 %4260
    %v4263 = vsel %vm817, %v3789, 0
    %v4265 = vsel %vm817, %v4261, 0
    %4267 = vmatprep.subr.mxu0 0.0
    %4268 = vmatpush1.xpose.msra.mxu0 %v4265
    %4269 = vmatprep.subr.mxu0 0.0
    %4270 = vmatpush1.xpose.msra.mxu0 0.0
    %4271 = vmatprep.subr.mxu0 0.0
    %4272 = vmatpush1.xpose.msra.mxu0 0.0
    %4273 = vmatprep.subr.mxu0 0.0
    %4274 = vmatpush1.xpose.msra.mxu0 0.0
    %4275 = vmatprep.subr.mxu0 0.0
    %4276 = vmatpush1.xpose.msra.mxu0 0.0
    %4277 = vmatprep.subr.mxu0 0.0
    %4278 = vmatpush1.xpose.msra.mxu0 0.0
    %4279 = vmatprep.subr.mxu0 0.0
    %4280 = vmatpush1.xpose.msra.mxu0 0.0
    %4281 = vmatprep.subr.mxu0 0.0
    %4282 = vmatpush1.xpose.msra.mxu0 0.0
    %4283 = vmatprep.subr.mxu0 0.0
    %4284 = vmatpush1.xpose.msra.mxu0 0.0
    %4285 = vmatprep.subr.mxu0 0.0
    %4286 = vmatpush1.xpose.msra.mxu0 0.0
    %4287 = vmatprep.subr.mxu0 0.0
    %4288 = vmatpush1.xpose.msra.mxu0 0.0
    %4289 = vmatprep.subr.mxu0 0.0
    %4290 = vmatpush1.xpose.msra.mxu0 0.0
    %4291 = vmatprep.subr.mxu0 0.0
    %4292 = vmatpush1.xpose.msra.mxu0 0.0
    %4293 = vmatprep.subr.mxu0 0.0
    %4294 = vmatpush1.xpose.msra.mxu0 0.0
    %4295 = vmatprep.subr.mxu0 0.0
    %4296 = vmatpush1.xpose.msra.mxu0 0.0
    %4297 = vmatprep.subr.mxu0 0.0
    %4298 = vmatpush1.xpose.msra.mxu0 0.0
    %4299 = vmatprep.subr.mxu0 0.0
    %4300 = vmatpush1.xpose.msra.mxu0 0.0
    %4301 = vmatprep.subr.mxu0 0.0
    %4302 = vmatpush1.xpose.msra.mxu0 0.0
    %4303 = vmatprep.subr.mxu0 0.0
    %4304 = vmatpush1.xpose.msra.mxu0 0.0
    %4305 = vmatprep.subr.mxu0 0.0
    %4306 = vmatpush1.xpose.msra.mxu0 0.0
    %4307 = vmatprep.subr.mxu0 0.0
    %4308 = vmatpush1.xpose.msra.mxu0 0.0
    %4309 = vmatprep.subr.mxu0 0.0
    %4310 = vmatpush1.xpose.msra.mxu0 0.0
    %4311 = vmatprep.subr.mxu0 0.0
    %4312 = vmatpush1.xpose.msra.mxu0 0.0
    %4313 = vmatprep.subr.mxu0 0.0
    %4314 = vmatpush1.xpose.msra.mxu0 0.0
    %4315 = vmatprep.subr.mxu0 0.0
    %4316 = vmatpush1.xpose.msra.mxu0 0.0
    %4317 = vmatprep.subr.mxu0 0.0
    %4318 = vmatpush1.xpose.msra.mxu0 0.0
    %4319 = vmatprep.subr.mxu0 0.0
    %4320 = vmatpush1.xpose.msra.mxu0 0.0
    %4321 = vmatprep.subr.mxu0 0.0
    %4322 = vmatpush1.xpose.msra.mxu0 0.0
    %4323 = vmatprep.subr.mxu0 0.0
    %4324 = vmatpush1.xpose.msra.mxu0 0.0
    %4325 = vmatprep.subr.mxu0 0.0
    %4326 = vmatpush1.xpose.msra.mxu0 0.0
    %4327 = vmatprep.subr.mxu0 0.0
    %4328 = vmatpush1.xpose.msra.mxu0 0.0
    %4329 = vmatprep.subr.mxu0 0.0
    %4330 = vmatpush1.xpose.msra.mxu0 0.0
    %4331 = vmatprep.mubr.f32.mxu0 0.0
    %4332 = vmatmul.mubr.f32.gmra.mrb[0].mxu0 %v4263
    %v4333 = vpop.f32.mrb[0].mxu0
    %v4334 = vadd.f32 %v104, %v4333
    %v4335 = vpop.f32.mrb[0].mxu0
    %4336 = vdwg.mxu0
    %4338 = vrot.lane.b32.xlu0 %v3780, 96
    %v4339 = vpop.permute.xlu0 %4338
    %v4341 = vsel %vm817, %v3790, 0
    %v4343 = vsel %vm817, %v4339, 0
    %4345 = vmatprep.subr.mxu0 0.0
    %4346 = vmatpush1.xpose.msra.mxu0 %v4343
    %4347 = vmatprep.subr.mxu0 0.0
    %4348 = vmatpush1.xpose.msra.mxu0 0.0
    %4349 = vmatprep.subr.mxu0 0.0
    %4350 = vmatpush1.xpose.msra.mxu0 0.0
    %4351 = vmatprep.subr.mxu0 0.0
    %4352 = vmatpush1.xpose.msra.mxu0 0.0
    %4353 = vmatprep.subr.mxu0 0.0
    %4354 = vmatpush1.xpose.msra.mxu0 0.0
    %4355 = vmatprep.subr.mxu0 0.0
    %4356 = vmatpush1.xpose.msra.mxu0 0.0
    %4357 = vmatprep.subr.mxu0 0.0
    %4358 = vmatpush1.xpose.msra.mxu0 0.0
    %4359 = vmatprep.subr.mxu0 0.0
    %4360 = vmatpush1.xpose.msra.mxu0 0.0
    %4361 = vmatprep.subr.mxu0 0.0
    %4362 = vmatpush1.xpose.msra.mxu0 0.0
    %4363 = vmatprep.subr.mxu0 0.0
    %4364 = vmatpush1.xpose.msra.mxu0 0.0
    %4365 = vmatprep.subr.mxu0 0.0
    %4366 = vmatpush1.xpose.msra.mxu0 0.0
    %4367 = vmatprep.subr.mxu0 0.0
    %4368 = vmatpush1.xpose.msra.mxu0 0.0
    %4369 = vmatprep.subr.mxu0 0.0
    %4370 = vmatpush1.xpose.msra.mxu0 0.0
    %4371 = vmatprep.subr.mxu0 0.0
    %4372 = vmatpush1.xpose.msra.mxu0 0.0
    %4373 = vmatprep.subr.mxu0 0.0
    %4374 = vmatpush1.xpose.msra.mxu0 0.0
    %4375 = vmatprep.subr.mxu0 0.0
    %4376 = vmatpush1.xpose.msra.mxu0 0.0
    %4377 = vmatprep.subr.mxu0 0.0
    %4378 = vmatpush1.xpose.msra.mxu0 0.0
    %4379 = vmatprep.subr.mxu0 0.0
    %4380 = vmatpush1.xpose.msra.mxu0 0.0
    %4381 = vmatprep.subr.mxu0 0.0
    %4382 = vmatpush1.xpose.msra.mxu0 0.0
    %4383 = vmatprep.subr.mxu0 0.0
    %4384 = vmatpush1.xpose.msra.mxu0 0.0
    %4385 = vmatprep.subr.mxu0 0.0
    %4386 = vmatpush1.xpose.msra.mxu0 0.0
    %4387 = vmatprep.subr.mxu0 0.0
    %4388 = vmatpush1.xpose.msra.mxu0 0.0
    %4389 = vmatprep.subr.mxu0 0.0
    %4390 = vmatpush1.xpose.msra.mxu0 0.0
    %4391 = vmatprep.subr.mxu0 0.0
    %4392 = vmatpush1.xpose.msra.mxu0 0.0
    %4393 = vmatprep.subr.mxu0 0.0
    %4394 = vmatpush1.xpose.msra.mxu0 0.0
    %4395 = vmatprep.subr.mxu0 0.0
    %4396 = vmatpush1.xpose.msra.mxu0 0.0
    %4397 = vmatprep.subr.mxu0 0.0
    %4398 = vmatpush1.xpose.msra.mxu0 0.0
    %4399 = vmatprep.subr.mxu0 0.0
    %4400 = vmatpush1.xpose.msra.mxu0 0.0
    %4401 = vmatprep.subr.mxu0 0.0
    %4402 = vmatpush1.xpose.msra.mxu0 0.0
    %4403 = vmatprep.subr.mxu0 0.0
    %4404 = vmatpush1.xpose.msra.mxu0 0.0
    %4405 = vmatprep.subr.mxu0 0.0
    %4406 = vmatpush1.xpose.msra.mxu0 0.0
    %4407 = vmatprep.subr.mxu0 0.0
    %4408 = vmatpush1.xpose.msra.mxu0 0.0
    %4409 = vmatprep.mubr.f32.mxu0 0.0
    %4410 = vmatmul.mubr.f32.gmra.mrb[0].mxu0 %v4341
    %v4411 = vpop.f32.mrb[0].mxu0
    %v4412 = vadd.f32 %v105, %v4411
    %v4413 = vpop.f32.mrb[0].mxu0
    %4414 = vdwg.mxu0
    %v4415 = vsel %vm1439, %v3866, -inf
    %4416 = vmax.xlane.f32.xlu0 %v4415
    %v4417 = vpop.xlane.xlu0 %4416
    %v4418 = vsel %vm1439, %v3944, -inf
    %4419 = vmax.xlane.f32.xlu0 %v4418
    %v4420 = vpop.xlane.xlu0 %4419
    %v4421 = vsel %vm1439, %v4022, -inf
    %4422 = vmax.xlane.f32.xlu0 %v4421
    %v4423 = vpop.xlane.xlu0 %4422
    %v4424 = vsel %vm1439, %v4100, -inf
    %4425 = vmax.xlane.f32.xlu0 %v4424
    %v4426 = vpop.xlane.xlu0 %4425
    %v4427 = vsel %vm1439, %v4178, -inf
    %4428 = vmax.xlane.f32.xlu0 %v4427
    %v4429 = vpop.xlane.xlu0 %4428
    %v4430 = vsel %vm1439, %v4256, -inf
    %4431 = vmax.xlane.f32.xlu0 %v4430
    %v4432 = vpop.xlane.xlu0 %4431
    %v4433 = vsel %vm1439, %v4334, -inf
    %4434 = vmax.xlane.f32.xlu0 %v4433
    %v4435 = vpop.xlane.xlu0 %4434
    %v4436 = vsel %vm1439, %v4412, -inf
    %4437 = vmax.xlane.f32.xlu0 %v4436
    %v4438 = vpop.xlane.xlu0 %4437
    %v4439 = vsub.f32 %v3866, %v4417
    %v4440 = vsub.f32 %v3944, %v4420
    %v4441 = vsub.f32 %v4022, %v4423
    %v4442 = vsub.f32 %v4100, %v4426
    %v4443 = vsub.f32 %v4178, %v4429
    %v4444 = vsub.f32 %v4256, %v4432
    %v4445 = vsub.f32 %v4334, %v4435
    %v4446 = vsub.f32 %v4412, %v4438
    %v4447 = vmul.f32 %v4439, 1.442695
    %v4448 = vpow.pop %v4447
    %v4449 = vmul.f32 %v4440, 1.442695
    %v4450 = vpow.pop %v4449
    %v4451 = vmul.f32 %v4441, 1.442695
    %v4452 = vpow.pop %v4451
    %v4453 = vmul.f32 %v4442, 1.442695
    %v4454 = vpow.pop %v4453
    %v4455 = vmul.f32 %v4443, 1.442695
    %v4456 = vpow.pop %v4455
    %v4457 = vmul.f32 %v4444, 1.442695
    %v4458 = vpow.pop %v4457
    %v4459 = vmul.f32 %v4445, 1.442695
    %v4460 = vpow.pop %v4459
    %v4461 = vmul.f32 %v4446, 1.442695
    %v4462 = vpow.pop %v4461
    %v4463 = vsel %vm1439, %v4448, 0.0
    %4464 = vadd.xlane.f32.xlu0 %v4463
    %v4465 = vpop.xlane.xlu0 %4464
    %v4466 = vsel %vm1439, %v4450, 0.0
    %4467 = vadd.xlane.f32.xlu0 %v4466
    %v4468 = vpop.xlane.xlu0 %4467
    %v4469 = vsel %vm1439, %v4452, 0.0
    %4470 = vadd.xlane.f32.xlu0 %v4469
    %v4471 = vpop.xlane.xlu0 %4470
    %v4472 = vsel %vm1439, %v4454, 0.0
    %4473 = vadd.xlane.f32.xlu0 %v4472
    %v4474 = vpop.xlane.xlu0 %4473
    %v4475 = vsel %vm1439, %v4456, 0.0
    %4476 = vadd.xlane.f32.xlu0 %v4475
    %v4477 = vpop.xlane.xlu0 %4476
    %v4478 = vsel %vm1439, %v4458, 0.0
    %4479 = vadd.xlane.f32.xlu0 %v4478
    %v4480 = vpop.xlane.xlu0 %4479
    %v4481 = vsel %vm1439, %v4460, 0.0
    %4482 = vadd.xlane.f32.xlu0 %v4481
    %v4483 = vpop.xlane.xlu0 %4482
    %v4484 = vsel %vm1439, %v4462, 0.0
    %4485 = vadd.xlane.f32.xlu0 %v4484
    %v4486 = vpop.xlane.xlu0 %4485
    %v4487 = vrcp.pop %v4465
    %v4488 = vmul.f32 %v4448, %v4487
    %v4489 = vrcp.pop %v4468
    %v4490 = vmul.f32 %v4450, %v4489
    %v4491 = vrcp.pop %v4471
    %v4492 = vmul.f32 %v4452, %v4491
    %v4493 = vrcp.pop %v4474
    %v4494 = vmul.f32 %v4454, %v4493
    %v4495 = vrcp.pop %v4477
    %v4496 = vmul.f32 %v4456, %v4495
    %v4497 = vrcp.pop %v4480
    %v4498 = vmul.f32 %v4458, %v4497
    %v4499 = vrcp.pop %v4483
    %v4500 = vmul.f32 %v4460, %v4499
    %v4501 = vrcp.pop %v4486
    %v4502 = vmul.f32 %v4462, %v4501
    %4503 = vrot.lane.b32.xlu0 %v3745, 64
    %v4504 = vpop.permute.xlu0 %4503
    %v4507 = vsel %vm1439, %v4488, 0
    %4509 = vmatprep.subr.mxu0 0.0
    %4510 = vmatpush1.msra.mxu0 %v4504
    %4511 = vmatprep.subr.mxu0 0.0
    %4512 = vmatpush1.msra.mxu0 0.0
    %4513 = vmatprep.subr.mxu0 0.0
    %4514 = vmatpush1.msra.mxu0 0.0
    %4515 = vmatprep.subr.mxu0 0.0
    %4516 = vmatpush1.msra.mxu0 0.0
    %4517 = vmatprep.subr.mxu0 0.0
    %4518 = vmatpush1.msra.mxu0 0.0
    %4519 = vmatprep.subr.mxu0 0.0
    %4520 = vmatpush1.msra.mxu0 0.0
    %4521 = vmatprep.subr.mxu0 0.0
    %4522 = vmatpush1.msra.mxu0 0.0
    %4523 = vmatprep.subr.mxu0 0.0
    %4524 = vmatpush1.msra.mxu0 0.0
    %4525 = vmatprep.subr.mxu0 0.0
    %4526 = vmatpush1.msra.mxu0 0.0
    %4527 = vmatprep.subr.mxu0 0.0
    %4528 = vmatpush1.msra.mxu0 0.0
    %4529 = vmatprep.subr.mxu0 0.0
    %4530 = vmatpush1.msra.mxu0 0.0
    %4531 = vmatprep.subr.mxu0 0.0
    %4532 = vmatpush1.msra.mxu0 0.0
    %4533 = vmatprep.subr.mxu0 0.0
    %4534 = vmatpush1.msra.mxu0 0.0
    %4535 = vmatprep.subr.mxu0 0.0
    %4536 = vmatpush1.msra.mxu0 0.0
    %4537 = vmatprep.subr.mxu0 0.0
    %4538 = vmatpush1.msra.mxu0 0.0
    %4539 = vmatprep.subr.mxu0 0.0
    %4540 = vmatpush1.msra.mxu0 0.0
    %4541 = vmatprep.subr.mxu0 0.0
    %4542 = vmatpush1.msra.mxu0 0.0
    %4543 = vmatprep.subr.mxu0 0.0
    %4544 = vmatpush1.msra.mxu0 0.0
    %4545 = vmatprep.subr.mxu0 0.0
    %4546 = vmatpush1.msra.mxu0 0.0
    %4547 = vmatprep.subr.mxu0 0.0
    %4548 = vmatpush1.msra.mxu0 0.0
    %4549 = vmatprep.subr.mxu0 0.0
    %4550 = vmatpush1.msra.mxu0 0.0
    %4551 = vmatprep.subr.mxu0 0.0
    %4552 = vmatpush1.msra.mxu0 0.0
    %4553 = vmatprep.subr.mxu0 0.0
    %4554 = vmatpush1.msra.mxu0 0.0
    %4555 = vmatprep.subr.mxu0 0.0
    %4556 = vmatpush1.msra.mxu0 0.0
    %4557 = vmatprep.subr.mxu0 0.0
    %4558 = vmatpush1.msra.mxu0 0.0
    %4559 = vmatprep.subr.mxu0 0.0
    %4560 = vmatpush1.msra.mxu0 0.0
    %4561 = vmatprep.subr.mxu0 0.0
    %4562 = vmatpush1.msra.mxu0 0.0
    %4563 = vmatprep.subr.mxu0 0.0
    %4564 = vmatpush1.msra.mxu0 0.0
    %4565 = vmatprep.subr.mxu0 0.0
    %4566 = vmatpush1.msra.mxu0 0.0
    %4567 = vmatprep.subr.mxu0 0.0
    %4568 = vmatpush1.msra.mxu0 0.0
    %4569 = vmatprep.subr.mxu0 0.0
    %4570 = vmatpush1.msra.mxu0 0.0
    %4571 = vmatprep.subr.mxu0 0.0
    %4572 = vmatpush1.msra.mxu0 0.0
    %4573 = vmatprep.mubr.f32.mxu0 0.0
    %4574 = vmatmul.mubr.f32.gmra.mrb[0].mxu0 %v4507
    %v4575 = vpop.f32.mrb[0].mxu0
    %v4576 = vadd.f32 0.0, %v4575
    %v4577 = vpop.f32.mrb[0].mxu0
    %4578 = vdwg.mxu0
    %4579 = vrot.lane.b32.xlu0 %v3750, 64
    %v4580 = vpop.permute.xlu0 %4579
    %v4583 = vsel %vm1439, %v4490, 0
    %4585 = vmatprep.subr.mxu0 0.0
    %4586 = vmatpush1.msra.mxu0 %v4580
    %4587 = vmatprep.subr.mxu0 0.0
    %4588 = vmatpush1.msra.mxu0 0.0
    %4589 = vmatprep.subr.mxu0 0.0
    %4590 = vmatpush1.msra.mxu0 0.0
    %4591 = vmatprep.subr.mxu0 0.0
    %4592 = vmatpush1.msra.mxu0 0.0
    %4593 = vmatprep.subr.mxu0 0.0
    %4594 = vmatpush1.msra.mxu0 0.0
    %4595 = vmatprep.subr.mxu0 0.0
    %4596 = vmatpush1.msra.mxu0 0.0
    %4597 = vmatprep.subr.mxu0 0.0
    %4598 = vmatpush1.msra.mxu0 0.0
    %4599 = vmatprep.subr.mxu0 0.0
    %4600 = vmatpush1.msra.mxu0 0.0
    %4601 = vmatprep.subr.mxu0 0.0
    %4602 = vmatpush1.msra.mxu0 0.0
    %4603 = vmatprep.subr.mxu0 0.0
    %4604 = vmatpush1.msra.mxu0 0.0
    %4605 = vmatprep.subr.mxu0 0.0
    %4606 = vmatpush1.msra.mxu0 0.0
    %4607 = vmatprep.subr.mxu0 0.0
    %4608 = vmatpush1.msra.mxu0 0.0
    %4609 = vmatprep.subr.mxu0 0.0
    %4610 = vmatpush1.msra.mxu0 0.0
    %4611 = vmatprep.subr.mxu0 0.0
    %4612 = vmatpush1.msra.mxu0 0.0
    %4613 = vmatprep.subr.mxu0 0.0
    %4614 = vmatpush1.msra.mxu0 0.0
    %4615 = vmatprep.subr.mxu0 0.0
    %4616 = vmatpush1.msra.mxu0 0.0
    %4617 = vmatprep.subr.mxu0 0.0
    %4618 = vmatpush1.msra.mxu0 0.0
    %4619 = vmatprep.subr.mxu0 0.0
    %4620 = vmatpush1.msra.mxu0 0.0
    %4621 = vmatprep.subr.mxu0 0.0
    %4622 = vmatpush1.msra.mxu0 0.0
    %4623 = vmatprep.subr.mxu0 0.0
    %4624 = vmatpush1.msra.mxu0 0.0
    %4625 = vmatprep.subr.mxu0 0.0
    %4626 = vmatpush1.msra.mxu0 0.0
    %4627 = vmatprep.subr.mxu0 0.0
    %4628 = vmatpush1.msra.mxu0 0.0
    %4629 = vmatprep.subr.mxu0 0.0
    %4630 = vmatpush1.msra.mxu0 0.0
    %4631 = vmatprep.subr.mxu0 0.0
    %4632 = vmatpush1.msra.mxu0 0.0
    %4633 = vmatprep.subr.mxu0 0.0
    %4634 = vmatpush1.msra.mxu0 0.0
    %4635 = vmatprep.subr.mxu0 0.0
    %4636 = vmatpush1.msra.mxu0 0.0
    %4637 = vmatprep.subr.mxu0 0.0
    %4638 = vmatpush1.msra.mxu0 0.0
    %4639 = vmatprep.subr.mxu0 0.0
    %4640 = vmatpush1.msra.mxu0 0.0
    %4641 = vmatprep.subr.mxu0 0.0
    %4642 = vmatpush1.msra.mxu0 0.0
    %4643 = vmatprep.subr.mxu0 0.0
    %4644 = vmatpush1.msra.mxu0 0.0
    %4645 = vmatprep.subr.mxu0 0.0
    %4646 = vmatpush1.msra.mxu0 0.0
    %4647 = vmatprep.subr.mxu0 0.0
    %4648 = vmatpush1.msra.mxu0 0.0
    %4649 = vmatprep.mubr.f32.mxu0 0.0
    %4650 = vmatmul.mubr.f32.gmra.mrb[0].mxu0 %v4583
    %v4651 = vpop.f32.mrb[0].mxu0
    %v4652 = vadd.f32 0.0, %v4651
    %v4653 = vpop.f32.mrb[0].mxu0
    %4654 = vdwg.mxu0
    %4655 = vrot.lane.b32.xlu0 %v3755, 64
    %v4656 = vpop.permute.xlu0 %4655
    %v4659 = vsel %vm1439, %v4492, 0
    %4661 = vmatprep.subr.mxu0 0.0
    %4662 = vmatpush1.msra.mxu0 %v4656
    %4663 = vmatprep.subr.mxu0 0.0
    %4664 = vmatpush1.msra.mxu0 0.0
    %4665 = vmatprep.subr.mxu0 0.0
    %4666 = vmatpush1.msra.mxu0 0.0
    %4667 = vmatprep.subr.mxu0 0.0
    %4668 = vmatpush1.msra.mxu0 0.0
    %4669 = vmatprep.subr.mxu0 0.0
    %4670 = vmatpush1.msra.mxu0 0.0
    %4671 = vmatprep.subr.mxu0 0.0
    %4672 = vmatpush1.msra.mxu0 0.0
    %4673 = vmatprep.subr.mxu0 0.0
    %4674 = vmatpush1.msra.mxu0 0.0
    %4675 = vmatprep.subr.mxu0 0.0
    %4676 = vmatpush1.msra.mxu0 0.0
    %4677 = vmatprep.subr.mxu0 0.0
    %4678 = vmatpush1.msra.mxu0 0.0
    %4679 = vmatprep.subr.mxu0 0.0
    %4680 = vmatpush1.msra.mxu0 0.0
    %4681 = vmatprep.subr.mxu0 0.0
    %4682 = vmatpush1.msra.mxu0 0.0
    %4683 = vmatprep.subr.mxu0 0.0
    %4684 = vmatpush1.msra.mxu0 0.0
    %4685 = vmatprep.subr.mxu0 0.0
    %4686 = vmatpush1.msra.mxu0 0.0
    %4687 = vmatprep.subr.mxu0 0.0
    %4688 = vmatpush1.msra.mxu0 0.0
    %4689 = vmatprep.subr.mxu0 0.0
    %4690 = vmatpush1.msra.mxu0 0.0
    %4691 = vmatprep.subr.mxu0 0.0
    %4692 = vmatpush1.msra.mxu0 0.0
    %4693 = vmatprep.subr.mxu0 0.0
    %4694 = vmatpush1.msra.mxu0 0.0
    %4695 = vmatprep.subr.mxu0 0.0
    %4696 = vmatpush1.msra.mxu0 0.0
    %4697 = vmatprep.subr.mxu0 0.0
    %4698 = vmatpush1.msra.mxu0 0.0
    %4699 = vmatprep.subr.mxu0 0.0
    %4700 = vmatpush1.msra.mxu0 0.0
    %4701 = vmatprep.subr.mxu0 0.0
    %4702 = vmatpush1.msra.mxu0 0.0
    %4703 = vmatprep.subr.mxu0 0.0
    %4704 = vmatpush1.msra.mxu0 0.0
    %4705 = vmatprep.subr.mxu0 0.0
    %4706 = vmatpush1.msra.mxu0 0.0
    %4707 = vmatprep.subr.mxu0 0.0
    %4708 = vmatpush1.msra.mxu0 0.0
    %4709 = vmatprep.subr.mxu0 0.0
    %4710 = vmatpush1.msra.mxu0 0.0
    %4711 = vmatprep.subr.mxu0 0.0
    %4712 = vmatpush1.msra.mxu0 0.0
    %4713 = vmatprep.subr.mxu0 0.0
    %4714 = vmatpush1.msra.mxu0 0.0
    %4715 = vmatprep.subr.mxu0 0.0
    %4716 = vmatpush1.msra.mxu0 0.0
    %4717 = vmatprep.subr.mxu0 0.0
    %4718 = vmatpush1.msra.mxu0 0.0
    %4719 = vmatprep.subr.mxu0 0.0
    %4720 = vmatpush1.msra.mxu0 0.0
    %4721 = vmatprep.subr.mxu0 0.0
    %4722 = vmatpush1.msra.mxu0 0.0
    %4723 = vmatprep.subr.mxu0 0.0
    %4724 = vmatpush1.msra.mxu0 0.0
    %4725 = vmatprep.mubr.f32.mxu0 0.0
    %4726 = vmatmul.mubr.f32.gmra.mrb[0].mxu0 %v4659
    %v4727 = vpop.f32.mrb[0].mxu0
    %v4728 = vadd.f32 0.0, %v4727
    %v4729 = vpop.f32.mrb[0].mxu0
    %4730 = vdwg.mxu0
    %4731 = vrot.lane.b32.xlu0 %v3760, 64
    %v4732 = vpop.permute.xlu0 %4731
    %v4735 = vsel %vm1439, %v4494, 0
    %4737 = vmatprep.subr.mxu0 0.0
    %4738 = vmatpush1.msra.mxu0 %v4732
    %4739 = vmatprep.subr.mxu0 0.0
    %4740 = vmatpush1.msra.mxu0 0.0
    %4741 = vmatprep.subr.mxu0 0.0
    %4742 = vmatpush1.msra.mxu0 0.0
    %4743 = vmatprep.subr.mxu0 0.0
    %4744 = vmatpush1.msra.mxu0 0.0
    %4745 = vmatprep.subr.mxu0 0.0
    %4746 = vmatpush1.msra.mxu0 0.0
    %4747 = vmatprep.subr.mxu0 0.0
    %4748 = vmatpush1.msra.mxu0 0.0
    %4749 = vmatprep.subr.mxu0 0.0
    %4750 = vmatpush1.msra.mxu0 0.0
    %4751 = vmatprep.subr.mxu0 0.0
    %4752 = vmatpush1.msra.mxu0 0.0
    %4753 = vmatprep.subr.mxu0 0.0
    %4754 = vmatpush1.msra.mxu0 0.0
    %4755 = vmatprep.subr.mxu0 0.0
    %4756 = vmatpush1.msra.mxu0 0.0
    %4757 = vmatprep.subr.mxu0 0.0
    %4758 = vmatpush1.msra.mxu0 0.0
    %4759 = vmatprep.subr.mxu0 0.0
    %4760 = vmatpush1.msra.mxu0 0.0
    %4761 = vmatprep.subr.mxu0 0.0
    %4762 = vmatpush1.msra.mxu0 0.0
    %4763 = vmatprep.subr.mxu0 0.0
    %4764 = vmatpush1.msra.mxu0 0.0
    %4765 = vmatprep.subr.mxu0 0.0
    %4766 = vmatpush1.msra.mxu0 0.0
    %4767 = vmatprep.subr.mxu0 0.0
    %4768 = vmatpush1.msra.mxu0 0.0
    %4769 = vmatprep.subr.mxu0 0.0
    %4770 = vmatpush1.msra.mxu0 0.0
    %4771 = vmatprep.subr.mxu0 0.0
    %4772 = vmatpush1.msra.mxu0 0.0
    %4773 = vmatprep.subr.mxu0 0.0
    %4774 = vmatpush1.msra.mxu0 0.0
    %4775 = vmatprep.subr.mxu0 0.0
    %4776 = vmatpush1.msra.mxu0 0.0
    %4777 = vmatprep.subr.mxu0 0.0
    %4778 = vmatpush1.msra.mxu0 0.0
    %4779 = vmatprep.subr.mxu0 0.0
    %4780 = vmatpush1.msra.mxu0 0.0
    %4781 = vmatprep.subr.mxu0 0.0
    %4782 = vmatpush1.msra.mxu0 0.0
    %4783 = vmatprep.subr.mxu0 0.0
    %4784 = vmatpush1.msra.mxu0 0.0
    %4785 = vmatprep.subr.mxu0 0.0
    %4786 = vmatpush1.msra.mxu0 0.0
    %4787 = vmatprep.subr.mxu0 0.0
    %4788 = vmatpush1.msra.mxu0 0.0
    %4789 = vmatprep.subr.mxu0 0.0
    %4790 = vmatpush1.msra.mxu0 0.0
    %4791 = vmatprep.subr.mxu0 0.0
    %4792 = vmatpush1.msra.mxu0 0.0
    %4793 = vmatprep.subr.mxu0 0.0
    %4794 = vmatpush1.msra.mxu0 0.0
    %4795 = vmatprep.subr.mxu0 0.0
    %4796 = vmatpush1.msra.mxu0 0.0
    %4797 = vmatprep.subr.mxu0 0.0
    %4798 = vmatpush1.msra.mxu0 0.0
    %4799 = vmatprep.subr.mxu0 0.0
    %4800 = vmatpush1.msra.mxu0 0.0
    %4801 = vmatprep.mubr.f32.mxu0 0.0
    %4802 = vmatmul.mubr.f32.gmra.mrb[0].mxu0 %v4735
    %v4803 = vpop.f32.mrb[0].mxu0
    %v4804 = vadd.f32 0.0, %v4803
    %v4805 = vpop.f32.mrb[0].mxu0
    %4806 = vdwg.mxu0
    %4807 = vrot.lane.b32.xlu0 %v3765, 64
    %v4808 = vpop.permute.xlu0 %4807
    %v4811 = vsel %vm1439, %v4496, 0
    %4813 = vmatprep.subr.mxu0 0.0
    %4814 = vmatpush1.msra.mxu0 %v4808
    %4815 = vmatprep.subr.mxu0 0.0
    %4816 = vmatpush1.msra.mxu0 0.0
    %4817 = vmatprep.subr.mxu0 0.0
    %4818 = vmatpush1.msra.mxu0 0.0
    %4819 = vmatprep.subr.mxu0 0.0
    %4820 = vmatpush1.msra.mxu0 0.0
    %4821 = vmatprep.subr.mxu0 0.0
    %4822 = vmatpush1.msra.mxu0 0.0
    %4823 = vmatprep.subr.mxu0 0.0
    %4824 = vmatpush1.msra.mxu0 0.0
    %4825 = vmatprep.subr.mxu0 0.0
    %4826 = vmatpush1.msra.mxu0 0.0
    %4827 = vmatprep.subr.mxu0 0.0
    %4828 = vmatpush1.msra.mxu0 0.0
    %4829 = vmatprep.subr.mxu0 0.0
    %4830 = vmatpush1.msra.mxu0 0.0
    %4831 = vmatprep.subr.mxu0 0.0
    %4832 = vmatpush1.msra.mxu0 0.0
    %4833 = vmatprep.subr.mxu0 0.0
    %4834 = vmatpush1.msra.mxu0 0.0
    %4835 = vmatprep.subr.mxu0 0.0
    %4836 = vmatpush1.msra.mxu0 0.0
    %4837 = vmatprep.subr.mxu0 0.0
    %4838 = vmatpush1.msra.mxu0 0.0
    %4839 = vmatprep.subr.mxu0 0.0
    %4840 = vmatpush1.msra.mxu0 0.0
    %4841 = vmatprep.subr.mxu0 0.0
    %4842 = vmatpush1.msra.mxu0 0.0
    %4843 = vmatprep.subr.mxu0 0.0
    %4844 = vmatpush1.msra.mxu0 0.0
    %4845 = vmatprep.subr.mxu0 0.0
    %4846 = vmatpush1.msra.mxu0 0.0
    %4847 = vmatprep.subr.mxu0 0.0
    %4848 = vmatpush1.msra.mxu0 0.0
    %4849 = vmatprep.subr.mxu0 0.0
    %4850 = vmatpush1.msra.mxu0 0.0
    %4851 = vmatprep.subr.mxu0 0.0
    %4852 = vmatpush1.msra.mxu0 0.0
    %4853 = vmatprep.subr.mxu0 0.0
    %4854 = vmatpush1.msra.mxu0 0.0
    %4855 = vmatprep.subr.mxu0 0.0
    %4856 = vmatpush1.msra.mxu0 0.0
    %4857 = vmatprep.subr.mxu0 0.0
    %4858 = vmatpush1.msra.mxu0 0.0
    %4859 = vmatprep.subr.mxu0 0.0
    %4860 = vmatpush1.msra.mxu0 0.0
    %4861 = vmatprep.subr.mxu0 0.0
    %4862 = vmatpush1.msra.mxu0 0.0
    %4863 = vmatprep.subr.mxu0 0.0
    %4864 = vmatpush1.msra.mxu0 0.0
    %4865 = vmatprep.subr.mxu0 0.0
    %4866 = vmatpush1.msra.mxu0 0.0
    %4867 = vmatprep.subr.mxu0 0.0
    %4868 = vmatpush1.msra.mxu0 0.0
    %4869 = vmatprep.subr.mxu0 0.0
    %4870 = vmatpush1.msra.mxu0 0.0
    %4871 = vmatprep.subr.mxu0 0.0
    %4872 = vmatpush1.msra.mxu0 0.0
    %4873 = vmatprep.subr.mxu0 0.0
    %4874 = vmatpush1.msra.mxu0 0.0
    %4875 = vmatprep.subr.mxu0 0.0
    %4876 = vmatpush1.msra.mxu0 0.0
    %4877 = vmatprep.mubr.f32.mxu0 0.0
    %4878 = vmatmul.mubr.f32.gmra.mrb[0].mxu0 %v4811
    %v4879 = vpop.f32.mrb[0].mxu0
    %v4880 = vadd.f32 0.0, %v4879
    %v4881 = vpop.f32.mrb[0].mxu0
    %4882 = vdwg.mxu0
    %4883 = vrot.lane.b32.xlu0 %v3770, 64
    %v4884 = vpop.permute.xlu0 %4883
    %v4887 = vsel %vm1439, %v4498, 0
    %4889 = vmatprep.subr.mxu0 0.0
    %4890 = vmatpush1.msra.mxu0 %v4884
    %4891 = vmatprep.subr.mxu0 0.0
    %4892 = vmatpush1.msra.mxu0 0.0
    %4893 = vmatprep.subr.mxu0 0.0
    %4894 = vmatpush1.msra.mxu0 0.0
    %4895 = vmatprep.subr.mxu0 0.0
    %4896 = vmatpush1.msra.mxu0 0.0
    %4897 = vmatprep.subr.mxu0 0.0
    %4898 = vmatpush1.msra.mxu0 0.0
    %4899 = vmatprep.subr.mxu0 0.0
    %4900 = vmatpush1.msra.mxu0 0.0
    %4901 = vmatprep.subr.mxu0 0.0
    %4902 = vmatpush1.msra.mxu0 0.0
    %4903 = vmatprep.subr.mxu0 0.0
    %4904 = vmatpush1.msra.mxu0 0.0
    %4905 = vmatprep.subr.mxu0 0.0
    %4906 = vmatpush1.msra.mxu0 0.0
    %4907 = vmatprep.subr.mxu0 0.0
    %4908 = vmatpush1.msra.mxu0 0.0
    %4909 = vmatprep.subr.mxu0 0.0
    %4910 = vmatpush1.msra.mxu0 0.0
    %4911 = vmatprep.subr.mxu0 0.0
    %4912 = vmatpush1.msra.mxu0 0.0
    %4913 = vmatprep.subr.mxu0 0.0
    %4914 = vmatpush1.msra.mxu0 0.0
    %4915 = vmatprep.subr.mxu0 0.0
    %4916 = vmatpush1.msra.mxu0 0.0
    %4917 = vmatprep.subr.mxu0 0.0
    %4918 = vmatpush1.msra.mxu0 0.0
    %4919 = vmatprep.subr.mxu0 0.0
    %4920 = vmatpush1.msra.mxu0 0.0
    %4921 = vmatprep.subr.mxu0 0.0
    %4922 = vmatpush1.msra.mxu0 0.0
    %4923 = vmatprep.subr.mxu0 0.0
    %4924 = vmatpush1.msra.mxu0 0.0
    %4925 = vmatprep.subr.mxu0 0.0
    %4926 = vmatpush1.msra.mxu0 0.0
    %4927 = vmatprep.subr.mxu0 0.0
    %4928 = vmatpush1.msra.mxu0 0.0
    %4929 = vmatprep.subr.mxu0 0.0
    %4930 = vmatpush1.msra.mxu0 0.0
    %4931 = vmatprep.subr.mxu0 0.0
    %4932 = vmatpush1.msra.mxu0 0.0
    %4933 = vmatprep.subr.mxu0 0.0
    %4934 = vmatpush1.msra.mxu0 0.0
    %4935 = vmatprep.subr.mxu0 0.0
    %4936 = vmatpush1.msra.mxu0 0.0
    %4937 = vmatprep.subr.mxu0 0.0
    %4938 = vmatpush1.msra.mxu0 0.0
    %4939 = vmatprep.subr.mxu0 0.0
    %4940 = vmatpush1.msra.mxu0 0.0
    %4941 = vmatprep.subr.mxu0 0.0
    %4942 = vmatpush1.msra.mxu0 0.0
    %4943 = vmatprep.subr.mxu0 0.0
    %4944 = vmatpush1.msra.mxu0 0.0
    %4945 = vmatprep.subr.mxu0 0.0
    %4946 = vmatpush1.msra.mxu0 0.0
    %4947 = vmatprep.subr.mxu0 0.0
    %4948 = vmatpush1.msra.mxu0 0.0
    %4949 = vmatprep.subr.mxu0 0.0
    %4950 = vmatpush1.msra.mxu0 0.0
    %4951 = vmatprep.subr.mxu0 0.0
    %4952 = vmatpush1.msra.mxu0 0.0
    %4953 = vmatprep.mubr.f32.mxu0 0.0
    %4954 = vmatmul.mubr.f32.gmra.mrb[0].mxu0 %v4887
    %v4955 = vpop.f32.mrb[0].mxu0
    %v4956 = vadd.f32 0.0, %v4955
    %v4957 = vpop.f32.mrb[0].mxu0
    %4958 = vdwg.mxu0
    %4959 = vrot.lane.b32.xlu0 %v3775, 64
    %v4960 = vpop.permute.xlu0 %4959
    %v4963 = vsel %vm1439, %v4500, 0
    %4965 = vmatprep.subr.mxu0 0.0
    %4966 = vmatpush1.msra.mxu0 %v4960
    %4967 = vmatprep.subr.mxu0 0.0
    %4968 = vmatpush1.msra.mxu0 0.0
    %4969 = vmatprep.subr.mxu0 0.0
    %4970 = vmatpush1.msra.mxu0 0.0
    %4971 = vmatprep.subr.mxu0 0.0
    %4972 = vmatpush1.msra.mxu0 0.0
    %4973 = vmatprep.subr.mxu0 0.0
    %4974 = vmatpush1.msra.mxu0 0.0
    %4975 = vmatprep.subr.mxu0 0.0
    %4976 = vmatpush1.msra.mxu0 0.0
    %4977 = vmatprep.subr.mxu0 0.0
    %4978 = vmatpush1.msra.mxu0 0.0
    %4979 = vmatprep.subr.mxu0 0.0
    %4980 = vmatpush1.msra.mxu0 0.0
    %4981 = vmatprep.subr.mxu0 0.0
    %4982 = vmatpush1.msra.mxu0 0.0
    %4983 = vmatprep.subr.mxu0 0.0
    %4984 = vmatpush1.msra.mxu0 0.0
    %4985 = vmatprep.subr.mxu0 0.0
    %4986 = vmatpush1.msra.mxu0 0.0
    %4987 = vmatprep.subr.mxu0 0.0
    %4988 = vmatpush1.msra.mxu0 0.0
    %4989 = vmatprep.subr.mxu0 0.0
    %4990 = vmatpush1.msra.mxu0 0.0
    %4991 = vmatprep.subr.mxu0 0.0
    %4992 = vmatpush1.msra.mxu0 0.0
    %4993 = vmatprep.subr.mxu0 0.0
    %4994 = vmatpush1.msra.mxu0 0.0
    %4995 = vmatprep.subr.mxu0 0.0
    %4996 = vmatpush1.msra.mxu0 0.0
    %4997 = vmatprep.subr.mxu0 0.0
    %4998 = vmatpush1.msra.mxu0 0.0
    %4999 = vmatprep.subr.mxu0 0.0
    %5000 = vmatpush1.msra.mxu0 0.0
    %5001 = vmatprep.subr.mxu0 0.0
    %5002 = vmatpush1.msra.mxu0 0.0
    %5003 = vmatprep.subr.mxu0 0.0
    %5004 = vmatpush1.msra.mxu0 0.0
    %5005 = vmatprep.subr.mxu0 0.0
    %5006 = vmatpush1.msra.mxu0 0.0
    %5007 = vmatprep.subr.mxu0 0.0
    %5008 = vmatpush1.msra.mxu0 0.0
    %5009 = vmatprep.subr.mxu0 0.0
    %5010 = vmatpush1.msra.mxu0 0.0
    %5011 = vmatprep.subr.mxu0 0.0
    %5012 = vmatpush1.msra.mxu0 0.0
    %5013 = vmatprep.subr.mxu0 0.0
    %5014 = vmatpush1.msra.mxu0 0.0
    %5015 = vmatprep.subr.mxu0 0.0
    %5016 = vmatpush1.msra.mxu0 0.0
    %5017 = vmatprep.subr.mxu0 0.0
    %5018 = vmatpush1.msra.mxu0 0.0
    %5019 = vmatprep.subr.mxu0 0.0
    %5020 = vmatpush1.msra.mxu0 0.0
    %5021 = vmatprep.subr.mxu0 0.0
    %5022 = vmatpush1.msra.mxu0 0.0
    %5023 = vmatprep.subr.mxu0 0.0
    %5024 = vmatpush1.msra.mxu0 0.0
    %5025 = vmatprep.subr.mxu0 0.0
    %5026 = vmatpush1.msra.mxu0 0.0
    %5027 = vmatprep.subr.mxu0 0.0
    %5028 = vmatpush1.msra.mxu0 0.0
    %5029 = vmatprep.mubr.f32.mxu0 0.0
    %5030 = vmatmul.mubr.f32.gmra.mrb[0].mxu0 %v4963
    %v5031 = vpop.f32.mrb[0].mxu0
    %v5032 = vadd.f32 0.0, %v5031
    %v5033 = vpop.f32.mrb[0].mxu0
    %5034 = vdwg.mxu0
    %5035 = vrot.lane.b32.xlu0 %v3780, 64
    %v5036 = vpop.permute.xlu0 %5035
    %v5039 = vsel %vm1439, %v4502, 0
    %5041 = vmatprep.subr.mxu0 0.0
    %5042 = vmatpush1.msra.mxu0 %v5036
    %5043 = vmatprep.subr.mxu0 0.0
    %5044 = vmatpush1.msra.mxu0 0.0
    %5045 = vmatprep.subr.mxu0 0.0
    %5046 = vmatpush1.msra.mxu0 0.0
    %5047 = vmatprep.subr.mxu0 0.0
    %5048 = vmatpush1.msra.mxu0 0.0
    %5049 = vmatprep.subr.mxu0 0.0
    %5050 = vmatpush1.msra.mxu0 0.0
    %5051 = vmatprep.subr.mxu0 0.0
    %5052 = vmatpush1.msra.mxu0 0.0
    %5053 = vmatprep.subr.mxu0 0.0
    %5054 = vmatpush1.msra.mxu0 0.0
    %5055 = vmatprep.subr.mxu0 0.0
    %5056 = vmatpush1.msra.mxu0 0.0
    %5057 = vmatprep.subr.mxu0 0.0
    %5058 = vmatpush1.msra.mxu0 0.0
    %5059 = vmatprep.subr.mxu0 0.0
    %5060 = vmatpush1.msra.mxu0 0.0
    %5061 = vmatprep.subr.mxu0 0.0
    %5062 = vmatpush1.msra.mxu0 0.0
    %5063 = vmatprep.subr.mxu0 0.0
    %5064 = vmatpush1.msra.mxu0 0.0
    %5065 = vmatprep.subr.mxu0 0.0
    %5066 = vmatpush1.msra.mxu0 0.0
    %5067 = vmatprep.subr.mxu0 0.0
    %5068 = vmatpush1.msra.mxu0 0.0
    %5069 = vmatprep.subr.mxu0 0.0
    %5070 = vmatpush1.msra.mxu0 0.0
    %5071 = vmatprep.subr.mxu0 0.0
    %5072 = vmatpush1.msra.mxu0 0.0
    %5073 = vmatprep.subr.mxu0 0.0
    %5074 = vmatpush1.msra.mxu0 0.0
    %5075 = vmatprep.subr.mxu0 0.0
    %5076 = vmatpush1.msra.mxu0 0.0
    %5077 = vmatprep.subr.mxu0 0.0
    %5078 = vmatpush1.msra.mxu0 0.0
    %5079 = vmatprep.subr.mxu0 0.0
    %5080 = vmatpush1.msra.mxu0 0.0
    %5081 = vmatprep.subr.mxu0 0.0
    %5082 = vmatpush1.msra.mxu0 0.0
    %5083 = vmatprep.subr.mxu0 0.0
    %5084 = vmatpush1.msra.mxu0 0.0
    %5085 = vmatprep.subr.mxu0 0.0
    %5086 = vmatpush1.msra.mxu0 0.0
    %5087 = vmatprep.subr.mxu0 0.0
    %5088 = vmatpush1.msra.mxu0 0.0
    %5089 = vmatprep.subr.mxu0 0.0
    %5090 = vmatpush1.msra.mxu0 0.0
    %5091 = vmatprep.subr.mxu0 0.0
    %5092 = vmatpush1.msra.mxu0 0.0
    %5093 = vmatprep.subr.mxu0 0.0
    %5094 = vmatpush1.msra.mxu0 0.0
    %5095 = vmatprep.subr.mxu0 0.0
    %5096 = vmatpush1.msra.mxu0 0.0
    %5097 = vmatprep.subr.mxu0 0.0
    %5098 = vmatpush1.msra.mxu0 0.0
    %5099 = vmatprep.subr.mxu0 0.0
    %5100 = vmatpush1.msra.mxu0 0.0
    %5101 = vmatprep.subr.mxu0 0.0
    %5102 = vmatpush1.msra.mxu0 0.0
    %5103 = vmatprep.subr.mxu0 0.0
    %5104 = vmatpush1.msra.mxu0 0.0
    %5105 = vmatprep.mubr.f32.mxu0 0.0
    %5106 = vmatmul.mubr.f32.gmra.mrb[0].mxu0 %v5039
    %v5107 = vpop.f32.mrb[0].mxu0
    %v5108 = vadd.f32 0.0, %v5107
    %v5109 = vpop.f32.mrb[0].mxu0
    %5110 = vdwg.mxu0
    %5111 = vrot.lane.b32.xlu0 %v3783, 112
    %v5112 = vpop.permute.xlu0 %5111
    %5113 = vrot.lane.b32.xlu0 %v3745, 80
    %v5114 = vpop.permute.xlu0 %5113
    %v5115 = vsel %vm817, %v5112, 0
    %v5117 = vsel %vm817, %v5114, 0
    %5119 = vmatprep.subr.mxu0 0.0
    %5120 = vmatpush1.xpose.msra.mxu0 %v5117
    %5121 = vmatprep.subr.mxu0 0.0
    %5122 = vmatpush1.xpose.msra.mxu0 0.0
    %5123 = vmatprep.subr.mxu0 0.0
    %5124 = vmatpush1.xpose.msra.mxu0 0.0
    %5125 = vmatprep.subr.mxu0 0.0
    %5126 = vmatpush1.xpose.msra.mxu0 0.0
    %5127 = vmatprep.subr.mxu0 0.0
    %5128 = vmatpush1.xpose.msra.mxu0 0.0
    %5129 = vmatprep.subr.mxu0 0.0
    %5130 = vmatpush1.xpose.msra.mxu0 0.0
    %5131 = vmatprep.subr.mxu0 0.0
    %5132 = vmatpush1.xpose.msra.mxu0 0.0
    %5133 = vmatprep.subr.mxu0 0.0
    %5134 = vmatpush1.xpose.msra.mxu0 0.0
    %5135 = vmatprep.subr.mxu0 0.0
    %5136 = vmatpush1.xpose.msra.mxu0 0.0
    %5137 = vmatprep.subr.mxu0 0.0
    %5138 = vmatpush1.xpose.msra.mxu0 0.0
    %5139 = vmatprep.subr.mxu0 0.0
    %5140 = vmatpush1.xpose.msra.mxu0 0.0
    %5141 = vmatprep.subr.mxu0 0.0
    %5142 = vmatpush1.xpose.msra.mxu0 0.0
    %5143 = vmatprep.subr.mxu0 0.0
    %5144 = vmatpush1.xpose.msra.mxu0 0.0
    %5145 = vmatprep.subr.mxu0 0.0
    %5146 = vmatpush1.xpose.msra.mxu0 0.0
    %5147 = vmatprep.subr.mxu0 0.0
    %5148 = vmatpush1.xpose.msra.mxu0 0.0
    %5149 = vmatprep.subr.mxu0 0.0
    %5150 = vmatpush1.xpose.msra.mxu0 0.0
    %5151 = vmatprep.subr.mxu0 0.0
    %5152 = vmatpush1.xpose.msra.mxu0 0.0
    %5153 = vmatprep.subr.mxu0 0.0
    %5154 = vmatpush1.xpose.msra.mxu0 0.0
    %5155 = vmatprep.subr.mxu0 0.0
    %5156 = vmatpush1.xpose.msra.mxu0 0.0
    %5157 = vmatprep.subr.mxu0 0.0
    %5158 = vmatpush1.xpose.msra.mxu0 0.0
    %5159 = vmatprep.subr.mxu0 0.0
    %5160 = vmatpush1.xpose.msra.mxu0 0.0
    %5161 = vmatprep.subr.mxu0 0.0
    %5162 = vmatpush1.xpose.msra.mxu0 0.0
    %5163 = vmatprep.subr.mxu0 0.0
    %5164 = vmatpush1.xpose.msra.mxu0 0.0
    %5165 = vmatprep.subr.mxu0 0.0
    %5166 = vmatpush1.xpose.msra.mxu0 0.0
    %5167 = vmatprep.subr.mxu0 0.0
    %5168 = vmatpush1.xpose.msra.mxu0 0.0
    %5169 = vmatprep.subr.mxu0 0.0
    %5170 = vmatpush1.xpose.msra.mxu0 0.0
    %5171 = vmatprep.subr.mxu0 0.0
    %5172 = vmatpush1.xpose.msra.mxu0 0.0
    %5173 = vmatprep.subr.mxu0 0.0
    %5174 = vmatpush1.xpose.msra.mxu0 0.0
    %5175 = vmatprep.subr.mxu0 0.0
    %5176 = vmatpush1.xpose.msra.mxu0 0.0
    %5177 = vmatprep.subr.mxu0 0.0
    %5178 = vmatpush1.xpose.msra.mxu0 0.0
    %5179 = vmatprep.subr.mxu0 0.0
    %5180 = vmatpush1.xpose.msra.mxu0 0.0
    %5181 = vmatprep.subr.mxu0 0.0
    %5182 = vmatpush1.xpose.msra.mxu0 0.0
    %5183 = vmatprep.mubr.f32.mxu0 0.0
    %5184 = vmatmul.mubr.f32.gmra.mrb[0].mxu0 %v5115
    %v5185 = vpop.f32.mrb[0].mxu0
    %v5186 = vadd.f32 %v98, %v5185
    %v5187 = vpop.f32.mrb[0].mxu0
    %5188 = vdwg.mxu0
    %5189 = vrot.lane.b32.xlu0 %v3784, 112
    %v5190 = vpop.permute.xlu0 %5189
    %5191 = vrot.lane.b32.xlu0 %v3750, 80
    %v5192 = vpop.permute.xlu0 %5191
    %v5193 = vsel %vm817, %v5190, 0
    %v5195 = vsel %vm817, %v5192, 0
    %5197 = vmatprep.subr.mxu0 0.0
    %5198 = vmatpush1.xpose.msra.mxu0 %v5195
    %5199 = vmatprep.subr.mxu0 0.0
    %5200 = vmatpush1.xpose.msra.mxu0 0.0
    %5201 = vmatprep.subr.mxu0 0.0
    %5202 = vmatpush1.xpose.msra.mxu0 0.0
    %5203 = vmatprep.subr.mxu0 0.0
    %5204 = vmatpush1.xpose.msra.mxu0 0.0
    %5205 = vmatprep.subr.mxu0 0.0
    %5206 = vmatpush1.xpose.msra.mxu0 0.0
    %5207 = vmatprep.subr.mxu0 0.0
    %5208 = vmatpush1.xpose.msra.mxu0 0.0
    %5209 = vmatprep.subr.mxu0 0.0
    %5210 = vmatpush1.xpose.msra.mxu0 0.0
    %5211 = vmatprep.subr.mxu0 0.0
    %5212 = vmatpush1.xpose.msra.mxu0 0.0
    %5213 = vmatprep.subr.mxu0 0.0
    %5214 = vmatpush1.xpose.msra.mxu0 0.0
    %5215 = vmatprep.subr.mxu0 0.0
    %5216 = vmatpush1.xpose.msra.mxu0 0.0
    %5217 = vmatprep.subr.mxu0 0.0
    %5218 = vmatpush1.xpose.msra.mxu0 0.0
    %5219 = vmatprep.subr.mxu0 0.0
    %5220 = vmatpush1.xpose.msra.mxu0 0.0
    %5221 = vmatprep.subr.mxu0 0.0
    %5222 = vmatpush1.xpose.msra.mxu0 0.0
    %5223 = vmatprep.subr.mxu0 0.0
    %5224 = vmatpush1.xpose.msra.mxu0 0.0
    %5225 = vmatprep.subr.mxu0 0.0
    %5226 = vmatpush1.xpose.msra.mxu0 0.0
    %5227 = vmatprep.subr.mxu0 0.0
    %5228 = vmatpush1.xpose.msra.mxu0 0.0
    %5229 = vmatprep.subr.mxu0 0.0
    %5230 = vmatpush1.xpose.msra.mxu0 0.0
    %5231 = vmatprep.subr.mxu0 0.0
    %5232 = vmatpush1.xpose.msra.mxu0 0.0
    %5233 = vmatprep.subr.mxu0 0.0
    %5234 = vmatpush1.xpose.msra.mxu0 0.0
    %5235 = vmatprep.subr.mxu0 0.0
    %5236 = vmatpush1.xpose.msra.mxu0 0.0
    %5237 = vmatprep.subr.mxu0 0.0
    %5238 = vmatpush1.xpose.msra.mxu0 0.0
    %5239 = vmatprep.subr.mxu0 0.0
    %5240 = vmatpush1.xpose.msra.mxu0 0.0
    %5241 = vmatprep.subr.mxu0 0.0
    %5242 = vmatpush1.xpose.msra.mxu0 0.0
    %5243 = vmatprep.subr.mxu0 0.0
    %5244 = vmatpush1.xpose.msra.mxu0 0.0
    %5245 = vmatprep.subr.mxu0 0.0
    %5246 = vmatpush1.xpose.msra.mxu0 0.0
    %5247 = vmatprep.subr.mxu0 0.0
    %5248 = vmatpush1.xpose.msra.mxu0 0.0
    %5249 = vmatprep.subr.mxu0 0.0
    %5250 = vmatpush1.xpose.msra.mxu0 0.0
    %5251 = vmatprep.subr.mxu0 0.0
    %5252 = vmatpush1.xpose.msra.mxu0 0.0
    %5253 = vmatprep.subr.mxu0 0.0
    %5254 = vmatpush1.xpose.msra.mxu0 0.0
    %5255 = vmatprep.subr.mxu0 0.0
    %5256 = vmatpush1.xpose.msra.mxu0 0.0
    %5257 = vmatprep.subr.mxu0 0.0
    %5258 = vmatpush1.xpose.msra.mxu0 0.0
    %5259 = vmatprep.subr.mxu0 0.0
    %5260 = vmatpush1.xpose.msra.mxu0 0.0
    %5261 = vmatprep.mubr.f32.mxu0 0.0
    %5262 = vmatmul.mubr.f32.gmra.mrb[0].mxu0 %v5193
    %v5263 = vpop.f32.mrb[0].mxu0
    %v5264 = vadd.f32 %v99, %v5263
    %v5265 = vpop.f32.mrb[0].mxu0
    %5266 = vdwg.mxu0
    %5267 = vrot.lane.b32.xlu0 %v3785, 112
    %v5268 = vpop.permute.xlu0 %5267
    %5269 = vrot.lane.b32.xlu0 %v3755, 80
    %v5270 = vpop.permute.xlu0 %5269
    %v5271 = vsel %vm817, %v5268, 0
    %v5273 = vsel %vm817, %v5270, 0
    %5275 = vmatprep.subr.mxu0 0.0
    %5276 = vmatpush1.xpose.msra.mxu0 %v5273
    %5277 = vmatprep.subr.mxu0 0.0
    %5278 = vmatpush1.xpose.msra.mxu0 0.0
    %5279 = vmatprep.subr.mxu0 0.0
    %5280 = vmatpush1.xpose.msra.mxu0 0.0
    %5281 = vmatprep.subr.mxu0 0.0
    %5282 = vmatpush1.xpose.msra.mxu0 0.0
    %5283 = vmatprep.subr.mxu0 0.0
    %5284 = vmatpush1.xpose.msra.mxu0 0.0
    %5285 = vmatprep.subr.mxu0 0.0
    %5286 = vmatpush1.xpose.msra.mxu0 0.0
    %5287 = vmatprep.subr.mxu0 0.0
    %5288 = vmatpush1.xpose.msra.mxu0 0.0
    %5289 = vmatprep.subr.mxu0 0.0
    %5290 = vmatpush1.xpose.msra.mxu0 0.0
    %5291 = vmatprep.subr.mxu0 0.0
    %5292 = vmatpush1.xpose.msra.mxu0 0.0
    %5293 = vmatprep.subr.mxu0 0.0
    %5294 = vmatpush1.xpose.msra.mxu0 0.0
    %5295 = vmatprep.subr.mxu0 0.0
    %5296 = vmatpush1.xpose.msra.mxu0 0.0
    %5297 = vmatprep.subr.mxu0 0.0
    %5298 = vmatpush1.xpose.msra.mxu0 0.0
    %5299 = vmatprep.subr.mxu0 0.0
    %5300 = vmatpush1.xpose.msra.mxu0 0.0
    %5301 = vmatprep.subr.mxu0 0.0
    %5302 = vmatpush1.xpose.msra.mxu0 0.0
    %5303 = vmatprep.subr.mxu0 0.0
    %5304 = vmatpush1.xpose.msra.mxu0 0.0
    %5305 = vmatprep.subr.mxu0 0.0
    %5306 = vmatpush1.xpose.msra.mxu0 0.0
    %5307 = vmatprep.subr.mxu0 0.0
    %5308 = vmatpush1.xpose.msra.mxu0 0.0
    %5309 = vmatprep.subr.mxu0 0.0
    %5310 = vmatpush1.xpose.msra.mxu0 0.0
    %5311 = vmatprep.subr.mxu0 0.0
    %5312 = vmatpush1.xpose.msra.mxu0 0.0
    %5313 = vmatprep.subr.mxu0 0.0
    %5314 = vmatpush1.xpose.msra.mxu0 0.0
    %5315 = vmatprep.subr.mxu0 0.0
    %5316 = vmatpush1.xpose.msra.mxu0 0.0
    %5317 = vmatprep.subr.mxu0 0.0
    %5318 = vmatpush1.xpose.msra.mxu0 0.0
    %5319 = vmatprep.subr.mxu0 0.0
    %5320 = vmatpush1.xpose.msra.mxu0 0.0
    %5321 = vmatprep.subr.mxu0 0.0
    %5322 = vmatpush1.xpose.msra.mxu0 0.0
    %5323 = vmatprep.subr.mxu0 0.0
    %5324 = vmatpush1.xpose.msra.mxu0 0.0
    %5325 = vmatprep.subr.mxu0 0.0
    %5326 = vmatpush1.xpose.msra.mxu0 0.0
    %5327 = vmatprep.subr.mxu0 0.0
    %5328 = vmatpush1.xpose.msra.mxu0 0.0
    %5329 = vmatprep.subr.mxu0 0.0
    %5330 = vmatpush1.xpose.msra.mxu0 0.0
    %5331 = vmatprep.subr.mxu0 0.0
    %5332 = vmatpush1.xpose.msra.mxu0 0.0
    %5333 = vmatprep.subr.mxu0 0.0
    %5334 = vmatpush1.xpose.msra.mxu0 0.0
    %5335 = vmatprep.subr.mxu0 0.0
    %5336 = vmatpush1.xpose.msra.mxu0 0.0
    %5337 = vmatprep.subr.mxu0 0.0
    %5338 = vmatpush1.xpose.msra.mxu0 0.0
    %5339 = vmatprep.mubr.f32.mxu0 0.0
    %5340 = vmatmul.mubr.f32.gmra.mrb[0].mxu0 %v5271
    %v5341 = vpop.f32.mrb[0].mxu0
    %v5342 = vadd.f32 %v100, %v5341
    %v5343 = vpop.f32.mrb[0].mxu0
    %5344 = vdwg.mxu0
    %5345 = vrot.lane.b32.xlu0 %v3786, 112
    %v5346 = vpop.permute.xlu0 %5345
    %5347 = vrot.lane.b32.xlu0 %v3760, 80
    %v5348 = vpop.permute.xlu0 %5347
    %v5349 = vsel %vm817, %v5346, 0
    %v5351 = vsel %vm817, %v5348, 0
    %5353 = vmatprep.subr.mxu0 0.0
    %5354 = vmatpush1.xpose.msra.mxu0 %v5351
    %5355 = vmatprep.subr.mxu0 0.0
    %5356 = vmatpush1.xpose.msra.mxu0 0.0
    %5357 = vmatprep.subr.mxu0 0.0
    %5358 = vmatpush1.xpose.msra.mxu0 0.0
    %5359 = vmatprep.subr.mxu0 0.0
    %5360 = vmatpush1.xpose.msra.mxu0 0.0
    %5361 = vmatprep.subr.mxu0 0.0
    %5362 = vmatpush1.xpose.msra.mxu0 0.0
    %5363 = vmatprep.subr.mxu0 0.0
    %5364 = vmatpush1.xpose.msra.mxu0 0.0
    %5365 = vmatprep.subr.mxu0 0.0
    %5366 = vmatpush1.xpose.msra.mxu0 0.0
    %5367 = vmatprep.subr.mxu0 0.0
    %5368 = vmatpush1.xpose.msra.mxu0 0.0
    %5369 = vmatprep.subr.mxu0 0.0
    %5370 = vmatpush1.xpose.msra.mxu0 0.0
    %5371 = vmatprep.subr.mxu0 0.0
    %5372 = vmatpush1.xpose.msra.mxu0 0.0
    %5373 = vmatprep.subr.mxu0 0.0
    %5374 = vmatpush1.xpose.msra.mxu0 0.0
    %5375 = vmatprep.subr.mxu0 0.0
    %5376 = vmatpush1.xpose.msra.mxu0 0.0
    %5377 = vmatprep.subr.mxu0 0.0
    %5378 = vmatpush1.xpose.msra.mxu0 0.0
    %5379 = vmatprep.subr.mxu0 0.0
    %5380 = vmatpush1.xpose.msra.mxu0 0.0
    %5381 = vmatprep.subr.mxu0 0.0
    %5382 = vmatpush1.xpose.msra.mxu0 0.0
    %5383 = vmatprep.subr.mxu0 0.0
    %5384 = vmatpush1.xpose.msra.mxu0 0.0
    %5385 = vmatprep.subr.mxu0 0.0
    %5386 = vmatpush1.xpose.msra.mxu0 0.0
    %5387 = vmatprep.subr.mxu0 0.0
    %5388 = vmatpush1.xpose.msra.mxu0 0.0
    %5389 = vmatprep.subr.mxu0 0.0
    %5390 = vmatpush1.xpose.msra.mxu0 0.0
    %5391 = vmatprep.subr.mxu0 0.0
    %5392 = vmatpush1.xpose.msra.mxu0 0.0
    %5393 = vmatprep.subr.mxu0 0.0
    %5394 = vmatpush1.xpose.msra.mxu0 0.0
    %5395 = vmatprep.subr.mxu0 0.0
    %5396 = vmatpush1.xpose.msra.mxu0 0.0
    %5397 = vmatprep.subr.mxu0 0.0
    %5398 = vmatpush1.xpose.msra.mxu0 0.0
    %5399 = vmatprep.subr.mxu0 0.0
    %5400 = vmatpush1.xpose.msra.mxu0 0.0
    %5401 = vmatprep.subr.mxu0 0.0
    %5402 = vmatpush1.xpose.msra.mxu0 0.0
    %5403 = vmatprep.subr.mxu0 0.0
    %5404 = vmatpush1.xpose.msra.mxu0 0.0
    %5405 = vmatprep.subr.mxu0 0.0
    %5406 = vmatpush1.xpose.msra.mxu0 0.0
    %5407 = vmatprep.subr.mxu0 0.0
    %5408 = vmatpush1.xpose.msra.mxu0 0.0
    %5409 = vmatprep.subr.mxu0 0.0
    %5410 = vmatpush1.xpose.msra.mxu0 0.0
    %5411 = vmatprep.subr.mxu0 0.0
    %5412 = vmatpush1.xpose.msra.mxu0 0.0
    %5413 = vmatprep.subr.mxu0 0.0
    %5414 = vmatpush1.xpose.msra.mxu0 0.0
    %5415 = vmatprep.subr.mxu0 0.0
    %5416 = vmatpush1.xpose.msra.mxu0 0.0
    %5417 = vmatprep.mubr.f32.mxu0 0.0
    %5418 = vmatmul.mubr.f32.gmra.mrb[0].mxu0 %v5349
    %v5419 = vpop.f32.mrb[0].mxu0
    %v5420 = vadd.f32 %v101, %v5419
    %v5421 = vpop.f32.mrb[0].mxu0
    %5422 = vdwg.mxu0
    %5423 = vrot.lane.b32.xlu0 %v3787, 112
    %v5424 = vpop.permute.xlu0 %5423
    %5425 = vrot.lane.b32.xlu0 %v3765, 80
    %v5426 = vpop.permute.xlu0 %5425
    %v5427 = vsel %vm817, %v5424, 0
    %v5429 = vsel %vm817, %v5426, 0
    %5431 = vmatprep.subr.mxu0 0.0
    %5432 = vmatpush1.xpose.msra.mxu0 %v5429
    %5433 = vmatprep.subr.mxu0 0.0
    %5434 = vmatpush1.xpose.msra.mxu0 0.0
    %5435 = vmatprep.subr.mxu0 0.0
    %5436 = vmatpush1.xpose.msra.mxu0 0.0
    %5437 = vmatprep.subr.mxu0 0.0
    %5438 = vmatpush1.xpose.msra.mxu0 0.0
    %5439 = vmatprep.subr.mxu0 0.0
    %5440 = vmatpush1.xpose.msra.mxu0 0.0
    %5441 = vmatprep.subr.mxu0 0.0
    %5442 = vmatpush1.xpose.msra.mxu0 0.0
    %5443 = vmatprep.subr.mxu0 0.0
    %5444 = vmatpush1.xpose.msra.mxu0 0.0
    %5445 = vmatprep.subr.mxu0 0.0
    %5446 = vmatpush1.xpose.msra.mxu0 0.0
    %5447 = vmatprep.subr.mxu0 0.0
    %5448 = vmatpush1.xpose.msra.mxu0 0.0
    %5449 = vmatprep.subr.mxu0 0.0
    %5450 = vmatpush1.xpose.msra.mxu0 0.0
    %5451 = vmatprep.subr.mxu0 0.0
    %5452 = vmatpush1.xpose.msra.mxu0 0.0
    %5453 = vmatprep.subr.mxu0 0.0
    %5454 = vmatpush1.xpose.msra.mxu0 0.0
    %5455 = vmatprep.subr.mxu0 0.0
    %5456 = vmatpush1.xpose.msra.mxu0 0.0
    %5457 = vmatprep.subr.mxu0 0.0
    %5458 = vmatpush1.xpose.msra.mxu0 0.0
    %5459 = vmatprep.subr.mxu0 0.0
    %5460 = vmatpush1.xpose.msra.mxu0 0.0
    %5461 = vmatprep.subr.mxu0 0.0
    %5462 = vmatpush1.xpose.msra.mxu0 0.0
    %5463 = vmatprep.subr.mxu0 0.0
    %5464 = vmatpush1.xpose.msra.mxu0 0.0
    %5465 = vmatprep.subr.mxu0 0.0
    %5466 = vmatpush1.xpose.msra.mxu0 0.0
    %5467 = vmatprep.subr.mxu0 0.0
    %5468 = vmatpush1.xpose.msra.mxu0 0.0
    %5469 = vmatprep.subr.mxu0 0.0
    %5470 = vmatpush1.xpose.msra.mxu0 0.0
    %5471 = vmatprep.subr.mxu0 0.0
    %5472 = vmatpush1.xpose.msra.mxu0 0.0
    %5473 = vmatprep.subr.mxu0 0.0
    %5474 = vmatpush1.xpose.msra.mxu0 0.0
    %5475 = vmatprep.subr.mxu0 0.0
    %5476 = vmatpush1.xpose.msra.mxu0 0.0
    %5477 = vmatprep.subr.mxu0 0.0
    %5478 = vmatpush1.xpose.msra.mxu0 0.0
    %5479 = vmatprep.subr.mxu0 0.0
    %5480 = vmatpush1.xpose.msra.mxu0 0.0
    %5481 = vmatprep.subr.mxu0 0.0
    %5482 = vmatpush1.xpose.msra.mxu0 0.0
    %5483 = vmatprep.subr.mxu0 0.0
    %5484 = vmatpush1.xpose.msra.mxu0 0.0
    %5485 = vmatprep.subr.mxu0 0.0
    %5486 = vmatpush1.xpose.msra.mxu0 0.0
    %5487 = vmatprep.subr.mxu0 0.0
    %5488 = vmatpush1.xpose.msra.mxu0 0.0
    %5489 = vmatprep.subr.mxu0 0.0
    %5490 = vmatpush1.xpose.msra.mxu0 0.0
    %5491 = vmatprep.subr.mxu0 0.0
    %5492 = vmatpush1.xpose.msra.mxu0 0.0
    %5493 = vmatprep.subr.mxu0 0.0
    %5494 = vmatpush1.xpose.msra.mxu0 0.0
    %5495 = vmatprep.mubr.f32.mxu0 0.0
    %5496 = vmatmul.mubr.f32.gmra.mrb[0].mxu0 %v5427
    %v5497 = vpop.f32.mrb[0].mxu0
    %v5498 = vadd.f32 %v102, %v5497
    %v5499 = vpop.f32.mrb[0].mxu0
    %5500 = vdwg.mxu0
    %5501 = vrot.lane.b32.xlu0 %v3788, 112
    %v5502 = vpop.permute.xlu0 %5501
    %5503 = vrot.lane.b32.xlu0 %v3770, 80
    %v5504 = vpop.permute.xlu0 %5503
    %v5505 = vsel %vm817, %v5502, 0
    %v5507 = vsel %vm817, %v5504, 0
    %5509 = vmatprep.subr.mxu0 0.0
    %5510 = vmatpush1.xpose.msra.mxu0 %v5507
    %5511 = vmatprep.subr.mxu0 0.0
    %5512 = vmatpush1.xpose.msra.mxu0 0.0
    %5513 = vmatprep.subr.mxu0 0.0
    %5514 = vmatpush1.xpose.msra.mxu0 0.0
    %5515 = vmatprep.subr.mxu0 0.0
    %5516 = vmatpush1.xpose.msra.mxu0 0.0
    %5517 = vmatprep.subr.mxu0 0.0
    %5518 = vmatpush1.xpose.msra.mxu0 0.0
    %5519 = vmatprep.subr.mxu0 0.0
    %5520 = vmatpush1.xpose.msra.mxu0 0.0
    %5521 = vmatprep.subr.mxu0 0.0
    %5522 = vmatpush1.xpose.msra.mxu0 0.0
    %5523 = vmatprep.subr.mxu0 0.0
    %5524 = vmatpush1.xpose.msra.mxu0 0.0
    %5525 = vmatprep.subr.mxu0 0.0
    %5526 = vmatpush1.xpose.msra.mxu0 0.0
    %5527 = vmatprep.subr.mxu0 0.0
    %5528 = vmatpush1.xpose.msra.mxu0 0.0
    %5529 = vmatprep.subr.mxu0 0.0
    %5530 = vmatpush1.xpose.msra.mxu0 0.0
    %5531 = vmatprep.subr.mxu0 0.0
    %5532 = vmatpush1.xpose.msra.mxu0 0.0
    %5533 = vmatprep.subr.mxu0 0.0
    %5534 = vmatpush1.xpose.msra.mxu0 0.0
    %5535 = vmatprep.subr.mxu0 0.0
    %5536 = vmatpush1.xpose.msra.mxu0 0.0
    %5537 = vmatprep.subr.mxu0 0.0
    %5538 = vmatpush1.xpose.msra.mxu0 0.0
    %5539 = vmatprep.subr.mxu0 0.0
    %5540 = vmatpush1.xpose.msra.mxu0 0.0
    %5541 = vmatprep.subr.mxu0 0.0
    %5542 = vmatpush1.xpose.msra.mxu0 0.0
    %5543 = vmatprep.subr.mxu0 0.0
    %5544 = vmatpush1.xpose.msra.mxu0 0.0
    %5545 = vmatprep.subr.mxu0 0.0
    %5546 = vmatpush1.xpose.msra.mxu0 0.0
    %5547 = vmatprep.subr.mxu0 0.0
    %5548 = vmatpush1.xpose.msra.mxu0 0.0
    %5549 = vmatprep.subr.mxu0 0.0
    %5550 = vmatpush1.xpose.msra.mxu0 0.0
    %5551 = vmatprep.subr.mxu0 0.0
    %5552 = vmatpush1.xpose.msra.mxu0 0.0
    %5553 = vmatprep.subr.mxu0 0.0
    %5554 = vmatpush1.xpose.msra.mxu0 0.0
    %5555 = vmatprep.subr.mxu0 0.0
    %5556 = vmatpush1.xpose.msra.mxu0 0.0
    %5557 = vmatprep.subr.mxu0 0.0
    %5558 = vmatpush1.xpose.msra.mxu0 0.0
    %5559 = vmatprep.subr.mxu0 0.0
    %5560 = vmatpush1.xpose.msra.mxu0 0.0
    %5561 = vmatprep.subr.mxu0 0.0
    %5562 = vmatpush1.xpose.msra.mxu0 0.0
    %5563 = vmatprep.subr.mxu0 0.0
    %5564 = vmatpush1.xpose.msra.mxu0 0.0
    %5565 = vmatprep.subr.mxu0 0.0
    %5566 = vmatpush1.xpose.msra.mxu0 0.0
    %5567 = vmatprep.subr.mxu0 0.0
    %5568 = vmatpush1.xpose.msra.mxu0 0.0
    %5569 = vmatprep.subr.mxu0 0.0
    %5570 = vmatpush1.xpose.msra.mxu0 0.0
    %5571 = vmatprep.subr.mxu0 0.0
    %5572 = vmatpush1.xpose.msra.mxu0 0.0
    %5573 = vmatprep.mubr.f32.mxu0 0.0
    %5574 = vmatmul.mubr.f32.gmra.mrb[0].mxu0 %v5505
    %v5575 = vpop.f32.mrb[0].mxu0
    %v5576 = vadd.f32 %v103, %v5575
    %v5577 = vpop.f32.mrb[0].mxu0
    %5578 = vdwg.mxu0
    %5579 = vrot.lane.b32.xlu0 %v3789, 112
    %v5580 = vpop.permute.xlu0 %5579
    %5581 = vrot.lane.b32.xlu0 %v3775, 80
    %v5582 = vpop.permute.xlu0 %5581
    %v5583 = vsel %vm817, %v5580, 0
    %v5585 = vsel %vm817, %v5582, 0
    %5587 = vmatprep.subr.mxu0 0.0
    %5588 = vmatpush1.xpose.msra.mxu0 %v5585
    %5589 = vmatprep.subr.mxu0 0.0
    %5590 = vmatpush1.xpose.msra.mxu0 0.0
    %5591 = vmatprep.subr.mxu0 0.0
    %5592 = vmatpush1.xpose.msra.mxu0 0.0
    %5593 = vmatprep.subr.mxu0 0.0
    %5594 = vmatpush1.xpose.msra.mxu0 0.0
    %5595 = vmatprep.subr.mxu0 0.0
    %5596 = vmatpush1.xpose.msra.mxu0 0.0
    %5597 = vmatprep.subr.mxu0 0.0
    %5598 = vmatpush1.xpose.msra.mxu0 0.0
    %5599 = vmatprep.subr.mxu0 0.0
    %5600 = vmatpush1.xpose.msra.mxu0 0.0
    %5601 = vmatprep.subr.mxu0 0.0
    %5602 = vmatpush1.xpose.msra.mxu0 0.0
    %5603 = vmatprep.subr.mxu0 0.0
    %5604 = vmatpush1.xpose.msra.mxu0 0.0
    %5605 = vmatprep.subr.mxu0 0.0
    %5606 = vmatpush1.xpose.msra.mxu0 0.0
    %5607 = vmatprep.subr.mxu0 0.0
    %5608 = vmatpush1.xpose.msra.mxu0 0.0
    %5609 = vmatprep.subr.mxu0 0.0
    %5610 = vmatpush1.xpose.msra.mxu0 0.0
    %5611 = vmatprep.subr.mxu0 0.0
    %5612 = vmatpush1.xpose.msra.mxu0 0.0
    %5613 = vmatprep.subr.mxu0 0.0
    %5614 = vmatpush1.xpose.msra.mxu0 0.0
    %5615 = vmatprep.subr.mxu0 0.0
    %5616 = vmatpush1.xpose.msra.mxu0 0.0
    %5617 = vmatprep.subr.mxu0 0.0
    %5618 = vmatpush1.xpose.msra.mxu0 0.0
    %5619 = vmatprep.subr.mxu0 0.0
    %5620 = vmatpush1.xpose.msra.mxu0 0.0
    %5621 = vmatprep.subr.mxu0 0.0
    %5622 = vmatpush1.xpose.msra.mxu0 0.0
    %5623 = vmatprep.subr.mxu0 0.0
    %5624 = vmatpush1.xpose.msra.mxu0 0.0
    %5625 = vmatprep.subr.mxu0 0.0
    %5626 = vmatpush1.xpose.msra.mxu0 0.0
    %5627 = vmatprep.subr.mxu0 0.0
    %5628 = vmatpush1.xpose.msra.mxu0 0.0
    %5629 = vmatprep.subr.mxu0 0.0
    %5630 = vmatpush1.xpose.msra.mxu0 0.0
    %5631 = vmatprep.subr.mxu0 0.0
    %5632 = vmatpush1.xpose.msra.mxu0 0.0
    %5633 = vmatprep.subr.mxu0 0.0
    %5634 = vmatpush1.xpose.msra.mxu0 0.0
    %5635 = vmatprep.subr.mxu0 0.0
    %5636 = vmatpush1.xpose.msra.mxu0 0.0
    %5637 = vmatprep.subr.mxu0 0.0
    %5638 = vmatpush1.xpose.msra.mxu0 0.0
    %5639 = vmatprep.subr.mxu0 0.0
    %5640 = vmatpush1.xpose.msra.mxu0 0.0
    %5641 = vmatprep.subr.mxu0 0.0
    %5642 = vmatpush1.xpose.msra.mxu0 0.0
    %5643 = vmatprep.subr.mxu0 0.0
    %5644 = vmatpush1.xpose.msra.mxu0 0.0
    %5645 = vmatprep.subr.mxu0 0.0
    %5646 = vmatpush1.xpose.msra.mxu0 0.0
    %5647 = vmatprep.subr.mxu0 0.0
    %5648 = vmatpush1.xpose.msra.mxu0 0.0
    %5649 = vmatprep.subr.mxu0 0.0
    %5650 = vmatpush1.xpose.msra.mxu0 0.0
    %5651 = vmatprep.mubr.f32.mxu0 0.0
    %5652 = vmatmul.mubr.f32.gmra.mrb[0].mxu0 %v5583
    %v5653 = vpop.f32.mrb[0].mxu0
    %v5654 = vadd.f32 %v104, %v5653
    %v5655 = vpop.f32.mrb[0].mxu0
    %5656 = vdwg.mxu0
    %5657 = vrot.lane.b32.xlu0 %v3790, 112
    %v5658 = vpop.permute.xlu0 %5657
    %5659 = vrot.lane.b32.xlu0 %v3780, 80
    %v5660 = vpop.permute.xlu0 %5659
    %v5661 = vsel %vm817, %v5658, 0
    %v5663 = vsel %vm817, %v5660, 0
    %5665 = vmatprep.subr.mxu0 0.0
    %5666 = vmatpush1.xpose.msra.mxu0 %v5663
    %5667 = vmatprep.subr.mxu0 0.0
    %5668 = vmatpush1.xpose.msra.mxu0 0.0
    %5669 = vmatprep.subr.mxu0 0.0
    %5670 = vmatpush1.xpose.msra.mxu0 0.0
    %5671 = vmatprep.subr.mxu0 0.0
    %5672 = vmatpush1.xpose.msra.mxu0 0.0
    %5673 = vmatprep.subr.mxu0 0.0
    %5674 = vmatpush1.xpose.msra.mxu0 0.0
    %5675 = vmatprep.subr.mxu0 0.0
    %5676 = vmatpush1.xpose.msra.mxu0 0.0
    %5677 = vmatprep.subr.mxu0 0.0
    %5678 = vmatpush1.xpose.msra.mxu0 0.0
    %5679 = vmatprep.subr.mxu0 0.0
    %5680 = vmatpush1.xpose.msra.mxu0 0.0
    %5681 = vmatprep.subr.mxu0 0.0
    %5682 = vmatpush1.xpose.msra.mxu0 0.0
    %5683 = vmatprep.subr.mxu0 0.0
    %5684 = vmatpush1.xpose.msra.mxu0 0.0
    %5685 = vmatprep.subr.mxu0 0.0
    %5686 = vmatpush1.xpose.msra.mxu0 0.0
    %5687 = vmatprep.subr.mxu0 0.0
    %5688 = vmatpush1.xpose.msra.mxu0 0.0
    %5689 = vmatprep.subr.mxu0 0.0
    %5690 = vmatpush1.xpose.msra.mxu0 0.0
    %5691 = vmatprep.subr.mxu0 0.0
    %5692 = vmatpush1.xpose.msra.mxu0 0.0
    %5693 = vmatprep.subr.mxu0 0.0
    %5694 = vmatpush1.xpose.msra.mxu0 0.0
    %5695 = vmatprep.subr.mxu0 0.0
    %5696 = vmatpush1.xpose.msra.mxu0 0.0
    %5697 = vmatprep.subr.mxu0 0.0
    %5698 = vmatpush1.xpose.msra.mxu0 0.0
    %5699 = vmatprep.subr.mxu0 0.0
    %5700 = vmatpush1.xpose.msra.mxu0 0.0
    %5701 = vmatprep.subr.mxu0 0.0
    %5702 = vmatpush1.xpose.msra.mxu0 0.0
    %5703 = vmatprep.subr.mxu0 0.0
    %5704 = vmatpush1.xpose.msra.mxu0 0.0
    %5705 = vmatprep.subr.mxu0 0.0
    %5706 = vmatpush1.xpose.msra.mxu0 0.0
    %5707 = vmatprep.subr.mxu0 0.0
    %5708 = vmatpush1.xpose.msra.mxu0 0.0
    %5709 = vmatprep.subr.mxu0 0.0
    %5710 = vmatpush1.xpose.msra.mxu0 0.0
    %5711 = vmatprep.subr.mxu0 0.0
    %5712 = vmatpush1.xpose.msra.mxu0 0.0
    %5713 = vmatprep.subr.mxu0 0.0
    %5714 = vmatpush1.xpose.msra.mxu0 0.0
    %5715 = vmatprep.subr.mxu0 0.0
    %5716 = vmatpush1.xpose.msra.mxu0 0.0
    %5717 = vmatprep.subr.mxu0 0.0
    %5718 = vmatpush1.xpose.msra.mxu0 0.0
    %5719 = vmatprep.subr.mxu0 0.0
    %5720 = vmatpush1.xpose.msra.mxu0 0.0
    %5721 = vmatprep.subr.mxu0 0.0
    %5722 = vmatpush1.xpose.msra.mxu0 0.0
    %5723 = vmatprep.subr.mxu0 0.0
    %5724 = vmatpush1.xpose.msra.mxu0 0.0
    %5725 = vmatprep.subr.mxu0 0.0
    %5726 = vmatpush1.xpose.msra.mxu0 0.0
    %5727 = vmatprep.subr.mxu0 0.0
    %5728 = vmatpush1.xpose.msra.mxu0 0.0
    %5729 = vmatprep.mubr.f32.mxu0 0.0
    %5730 = vmatmul.mubr.f32.gmra.mrb[0].mxu0 %v5661
    %v5731 = vpop.f32.mrb[0].mxu0
    %v5732 = vadd.f32 %v105, %v5731
    %v5733 = vpop.f32.mrb[0].mxu0
    %5734 = vdwg.mxu0
    %v5735 = vsel %vm1439, %v5186, -inf
    %5736 = vmax.xlane.f32.xlu0 %v5735
    %v5737 = vpop.xlane.xlu0 %5736
    %v5738 = vsel %vm1439, %v5264, -inf
    %5739 = vmax.xlane.f32.xlu0 %v5738
    %v5740 = vpop.xlane.xlu0 %5739
    %v5741 = vsel %vm1439, %v5342, -inf
    %5742 = vmax.xlane.f32.xlu0 %v5741
    %v5743 = vpop.xlane.xlu0 %5742
    %v5744 = vsel %vm1439, %v5420, -inf
    %5745 = vmax.xlane.f32.xlu0 %v5744
    %v5746 = vpop.xlane.xlu0 %5745
    %v5747 = vsel %vm1439, %v5498, -inf
    %5748 = vmax.xlane.f32.xlu0 %v5747
    %v5749 = vpop.xlane.xlu0 %5748
    %v5750 = vsel %vm1439, %v5576, -inf
    %5751 = vmax.xlane.f32.xlu0 %v5750
    %v5752 = vpop.xlane.xlu0 %5751
    %v5753 = vsel %vm1439, %v5654, -inf
    %5754 = vmax.xlane.f32.xlu0 %v5753
    %v5755 = vpop.xlane.xlu0 %5754
    %v5756 = vsel %vm1439, %v5732, -inf
    %5757 = vmax.xlane.f32.xlu0 %v5756
    %v5758 = vpop.xlane.xlu0 %5757
    %v5759 = vsub.f32 %v5186, %v5737
    %v5760 = vsub.f32 %v5264, %v5740
    %v5761 = vsub.f32 %v5342, %v5743
    %v5762 = vsub.f32 %v5420, %v5746
    %v5763 = vsub.f32 %v5498, %v5749
    %v5764 = vsub.f32 %v5576, %v5752
    %v5765 = vsub.f32 %v5654, %v5755
    %v5766 = vsub.f32 %v5732, %v5758
    %v5767 = vmul.f32 %v5759, 1.442695
    %v5768 = vpow.pop %v5767
    %v5769 = vmul.f32 %v5760, 1.442695
    %v5770 = vpow.pop %v5769
    %v5771 = vmul.f32 %v5761, 1.442695
    %v5772 = vpow.pop %v5771
    %v5773 = vmul.f32 %v5762, 1.442695
    %v5774 = vpow.pop %v5773
    %v5775 = vmul.f32 %v5763, 1.442695
    %v5776 = vpow.pop %v5775
    %v5777 = vmul.f32 %v5764, 1.442695
    %v5778 = vpow.pop %v5777
    %v5779 = vmul.f32 %v5765, 1.442695
    %v5780 = vpow.pop %v5779
    %v5781 = vmul.f32 %v5766, 1.442695
    %v5782 = vpow.pop %v5781
    %v5783 = vsel %vm1439, %v5768, 0.0
    %5784 = vadd.xlane.f32.xlu0 %v5783
    %v5785 = vpop.xlane.xlu0 %5784
    %v5786 = vsel %vm1439, %v5770, 0.0
    %5787 = vadd.xlane.f32.xlu0 %v5786
    %v5788 = vpop.xlane.xlu0 %5787
    %v5789 = vsel %vm1439, %v5772, 0.0
    %5790 = vadd.xlane.f32.xlu0 %v5789
    %v5791 = vpop.xlane.xlu0 %5790
    %v5792 = vsel %vm1439, %v5774, 0.0
    %5793 = vadd.xlane.f32.xlu0 %v5792
    %v5794 = vpop.xlane.xlu0 %5793
    %v5795 = vsel %vm1439, %v5776, 0.0
    %5796 = vadd.xlane.f32.xlu0 %v5795
    %v5797 = vpop.xlane.xlu0 %5796
    %v5798 = vsel %vm1439, %v5778, 0.0
    %5799 = vadd.xlane.f32.xlu0 %v5798
    %v5800 = vpop.xlane.xlu0 %5799
    %v5801 = vsel %vm1439, %v5780, 0.0
    %5802 = vadd.xlane.f32.xlu0 %v5801
    %v5803 = vpop.xlane.xlu0 %5802
    %v5804 = vsel %vm1439, %v5782, 0.0
    %5805 = vadd.xlane.f32.xlu0 %v5804
    %v5806 = vpop.xlane.xlu0 %5805
    %v5807 = vrcp.pop %v5785
    %v5808 = vmul.f32 %v5768, %v5807
    %v5809 = vrcp.pop %v5788
    %v5810 = vmul.f32 %v5770, %v5809
    %v5811 = vrcp.pop %v5791
    %v5812 = vmul.f32 %v5772, %v5811
    %v5813 = vrcp.pop %v5794
    %v5814 = vmul.f32 %v5774, %v5813
    %v5815 = vrcp.pop %v5797
    %v5816 = vmul.f32 %v5776, %v5815
    %v5817 = vrcp.pop %v5800
    %v5818 = vmul.f32 %v5778, %v5817
    %v5819 = vrcp.pop %v5803
    %v5820 = vmul.f32 %v5780, %v5819
    %v5821 = vrcp.pop %v5806
    %v5822 = vmul.f32 %v5782, %v5821
    %5823 = vrot.lane.b32.xlu0 %v3745, 48
    %v5824 = vpop.permute.xlu0 %5823
    %v5827 = vsel %vm1439, %v5808, 0
    %5829 = vmatprep.subr.mxu0 0.0
    %5830 = vmatpush1.msra.mxu0 %v5824
    %5831 = vmatprep.subr.mxu0 0.0
    %5832 = vmatpush1.msra.mxu0 0.0
    %5833 = vmatprep.subr.mxu0 0.0
    %5834 = vmatpush1.msra.mxu0 0.0
    %5835 = vmatprep.subr.mxu0 0.0
    %5836 = vmatpush1.msra.mxu0 0.0
    %5837 = vmatprep.subr.mxu0 0.0
    %5838 = vmatpush1.msra.mxu0 0.0
    %5839 = vmatprep.subr.mxu0 0.0
    %5840 = vmatpush1.msra.mxu0 0.0
    %5841 = vmatprep.subr.mxu0 0.0
    %5842 = vmatpush1.msra.mxu0 0.0
    %5843 = vmatprep.subr.mxu0 0.0
    %5844 = vmatpush1.msra.mxu0 0.0
    %5845 = vmatprep.subr.mxu0 0.0
    %5846 = vmatpush1.msra.mxu0 0.0
    %5847 = vmatprep.subr.mxu0 0.0
    %5848 = vmatpush1.msra.mxu0 0.0
    %5849 = vmatprep.subr.mxu0 0.0
    %5850 = vmatpush1.msra.mxu0 0.0
    %5851 = vmatprep.subr.mxu0 0.0
    %5852 = vmatpush1.msra.mxu0 0.0
    %5853 = vmatprep.subr.mxu0 0.0
    %5854 = vmatpush1.msra.mxu0 0.0
    %5855 = vmatprep.subr.mxu0 0.0
    %5856 = vmatpush1.msra.mxu0 0.0
    %5857 = vmatprep.subr.mxu0 0.0
    %5858 = vmatpush1.msra.mxu0 0.0
    %5859 = vmatprep.subr.mxu0 0.0
    %5860 = vmatpush1.msra.mxu0 0.0
    %5861 = vmatprep.subr.mxu0 0.0
    %5862 = vmatpush1.msra.mxu0 0.0
    %5863 = vmatprep.subr.mxu0 0.0
    %5864 = vmatpush1.msra.mxu0 0.0
    %5865 = vmatprep.subr.mxu0 0.0
    %5866 = vmatpush1.msra.mxu0 0.0
    %5867 = vmatprep.subr.mxu0 0.0
    %5868 = vmatpush1.msra.mxu0 0.0
    %5869 = vmatprep.subr.mxu0 0.0
    %5870 = vmatpush1.msra.mxu0 0.0
    %5871 = vmatprep.subr.mxu0 0.0
    %5872 = vmatpush1.msra.mxu0 0.0
    %5873 = vmatprep.subr.mxu0 0.0
    %5874 = vmatpush1.msra.mxu0 0.0
    %5875 = vmatprep.subr.mxu0 0.0
    %5876 = vmatpush1.msra.mxu0 0.0
    %5877 = vmatprep.subr.mxu0 0.0
    %5878 = vmatpush1.msra.mxu0 0.0
    %5879 = vmatprep.subr.mxu0 0.0
    %5880 = vmatpush1.msra.mxu0 0.0
    %5881 = vmatprep.subr.mxu0 0.0
    %5882 = vmatpush1.msra.mxu0 0.0
    %5883 = vmatprep.subr.mxu0 0.0
    %5884 = vmatpush1.msra.mxu0 0.0
    %5885 = vmatprep.subr.mxu0 0.0
    %5886 = vmatpush1.msra.mxu0 0.0
    %5887 = vmatprep.subr.mxu0 0.0
    %5888 = vmatpush1.msra.mxu0 0.0
    %5889 = vmatprep.subr.mxu0 0.0
    %5890 = vmatpush1.msra.mxu0 0.0
    %5891 = vmatprep.subr.mxu0 0.0
    %5892 = vmatpush1.msra.mxu0 0.0
    %5893 = vmatprep.mubr.f32.mxu0 0.0
    %5894 = vmatmul.mubr.f32.gmra.mrb[0].mxu0 %v5827
    %v5895 = vpop.f32.mrb[0].mxu0
    %v5896 = vadd.f32 0.0, %v5895
    %v5897 = vpop.f32.mrb[0].mxu0
    %5898 = vdwg.mxu0
    %5899 = vrot.lane.b32.xlu0 %v3750, 48
    %v5900 = vpop.permute.xlu0 %5899
    %v5903 = vsel %vm1439, %v5810, 0
    %5905 = vmatprep.subr.mxu0 0.0
    %5906 = vmatpush1.msra.mxu0 %v5900
    %5907 = vmatprep.subr.mxu0 0.0
    %5908 = vmatpush1.msra.mxu0 0.0
    %5909 = vmatprep.subr.mxu0 0.0
    %5910 = vmatpush1.msra.mxu0 0.0
    %5911 = vmatprep.subr.mxu0 0.0
    %5912 = vmatpush1.msra.mxu0 0.0
    %5913 = vmatprep.subr.mxu0 0.0
    %5914 = vmatpush1.msra.mxu0 0.0
    %5915 = vmatprep.subr.mxu0 0.0
    %5916 = vmatpush1.msra.mxu0 0.0
    %5917 = vmatprep.subr.mxu0 0.0
    %5918 = vmatpush1.msra.mxu0 0.0
    %5919 = vmatprep.subr.mxu0 0.0
    %5920 = vmatpush1.msra.mxu0 0.0
    %5921 = vmatprep.subr.mxu0 0.0
    %5922 = vmatpush1.msra.mxu0 0.0
    %5923 = vmatprep.subr.mxu0 0.0
    %5924 = vmatpush1.msra.mxu0 0.0
    %5925 = vmatprep.subr.mxu0 0.0
    %5926 = vmatpush1.msra.mxu0 0.0
    %5927 = vmatprep.subr.mxu0 0.0
    %5928 = vmatpush1.msra.mxu0 0.0
    %5929 = vmatprep.subr.mxu0 0.0
    %5930 = vmatpush1.msra.mxu0 0.0
    %5931 = vmatprep.subr.mxu0 0.0
    %5932 = vmatpush1.msra.mxu0 0.0
    %5933 = vmatprep.subr.mxu0 0.0
    %5934 = vmatpush1.msra.mxu0 0.0
    %5935 = vmatprep.subr.mxu0 0.0
    %5936 = vmatpush1.msra.mxu0 0.0
    %5937 = vmatprep.subr.mxu0 0.0
    %5938 = vmatpush1.msra.mxu0 0.0
    %5939 = vmatprep.subr.mxu0 0.0
    %5940 = vmatpush1.msra.mxu0 0.0
    %5941 = vmatprep.subr.mxu0 0.0
    %5942 = vmatpush1.msra.mxu0 0.0
    %5943 = vmatprep.subr.mxu0 0.0
    %5944 = vmatpush1.msra.mxu0 0.0
    %5945 = vmatprep.subr.mxu0 0.0
    %5946 = vmatpush1.msra.mxu0 0.0
    %5947 = vmatprep.subr.mxu0 0.0
    %5948 = vmatpush1.msra.mxu0 0.0
    %5949 = vmatprep.subr.mxu0 0.0
    %5950 = vmatpush1.msra.mxu0 0.0
    %5951 = vmatprep.subr.mxu0 0.0
    %5952 = vmatpush1.msra.mxu0 0.0
    %5953 = vmatprep.subr.mxu0 0.0
    %5954 = vmatpush1.msra.mxu0 0.0
    %5955 = vmatprep.subr.mxu0 0.0
    %5956 = vmatpush1.msra.mxu0 0.0
    %5957 = vmatprep.subr.mxu0 0.0
    %5958 = vmatpush1.msra.mxu0 0.0
    %5959 = vmatprep.subr.mxu0 0.0
    %5960 = vmatpush1.msra.mxu0 0.0
    %5961 = vmatprep.subr.mxu0 0.0
    %5962 = vmatpush1.msra.mxu0 0.0
    %5963 = vmatprep.subr.mxu0 0.0
    %5964 = vmatpush1.msra.mxu0 0.0
    %5965 = vmatprep.subr.mxu0 0.0
    %5966 = vmatpush1.msra.mxu0 0.0
    %5967 = vmatprep.subr.mxu0 0.0
    %5968 = vmatpush1.msra.mxu0 0.0
    %5969 = vmatprep.mubr.f32.mxu0 0.0
    %5970 = vmatmul.mubr.f32.gmra.mrb[0].mxu0 %v5903
    %v5971 = vpop.f32.mrb[0].mxu0
    %v5972 = vadd.f32 0.0, %v5971
    %v5973 = vpop.f32.mrb[0].mxu0
    %5974 = vdwg.mxu0
    %5975 = vrot.lane.b32.xlu0 %v3755, 48
    %v5976 = vpop.permute.xlu0 %5975
    %v5979 = vsel %vm1439, %v5812, 0
    %5981 = vmatprep.subr.mxu0 0.0
    %5982 = vmatpush1.msra.mxu0 %v5976
    %5983 = vmatprep.subr.mxu0 0.0
    %5984 = vmatpush1.msra.mxu0 0.0
    %5985 = vmatprep.subr.mxu0 0.0
    %5986 = vmatpush1.msra.mxu0 0.0
    %5987 = vmatprep.subr.mxu0 0.0
    %5988 = vmatpush1.msra.mxu0 0.0
    %5989 = vmatprep.subr.mxu0 0.0
    %5990 = vmatpush1.msra.mxu0 0.0
    %5991 = vmatprep.subr.mxu0 0.0
    %5992 = vmatpush1.msra.mxu0 0.0
    %5993 = vmatprep.subr.mxu0 0.0
    %5994 = vmatpush1.msra.mxu0 0.0
    %5995 = vmatprep.subr.mxu0 0.0
    %5996 = vmatpush1.msra.mxu0 0.0
    %5997 = vmatprep.subr.mxu0 0.0
    %5998 = vmatpush1.msra.mxu0 0.0
    %5999 = vmatprep.subr.mxu0 0.0
    %6000 = vmatpush1.msra.mxu0 0.0
    %6001 = vmatprep.subr.mxu0 0.0
    %6002 = vmatpush1.msra.mxu0 0.0
    %6003 = vmatprep.subr.mxu0 0.0
    %6004 = vmatpush1.msra.mxu0 0.0
    %6005 = vmatprep.subr.mxu0 0.0
    %6006 = vmatpush1.msra.mxu0 0.0
    %6007 = vmatprep.subr.mxu0 0.0
    %6008 = vmatpush1.msra.mxu0 0.0
    %6009 = vmatprep.subr.mxu0 0.0
    %6010 = vmatpush1.msra.mxu0 0.0
    %6011 = vmatprep.subr.mxu0 0.0
    %6012 = vmatpush1.msra.mxu0 0.0
    %6013 = vmatprep.subr.mxu0 0.0
    %6014 = vmatpush1.msra.mxu0 0.0
    %6015 = vmatprep.subr.mxu0 0.0
    %6016 = vmatpush1.msra.mxu0 0.0
    %6017 = vmatprep.subr.mxu0 0.0
    %6018 = vmatpush1.msra.mxu0 0.0
    %6019 = vmatprep.subr.mxu0 0.0
    %6020 = vmatpush1.msra.mxu0 0.0
    %6021 = vmatprep.subr.mxu0 0.0
    %6022 = vmatpush1.msra.mxu0 0.0
    %6023 = vmatprep.subr.mxu0 0.0
    %6024 = vmatpush1.msra.mxu0 0.0
    %6025 = vmatprep.subr.mxu0 0.0
    %6026 = vmatpush1.msra.mxu0 0.0
    %6027 = vmatprep.subr.mxu0 0.0
    %6028 = vmatpush1.msra.mxu0 0.0
    %6029 = vmatprep.subr.mxu0 0.0
    %6030 = vmatpush1.msra.mxu0 0.0
    %6031 = vmatprep.subr.mxu0 0.0
    %6032 = vmatpush1.msra.mxu0 0.0
    %6033 = vmatprep.subr.mxu0 0.0
    %6034 = vmatpush1.msra.mxu0 0.0
    %6035 = vmatprep.subr.mxu0 0.0
    %6036 = vmatpush1.msra.mxu0 0.0
    %6037 = vmatprep.subr.mxu0 0.0
    %6038 = vmatpush1.msra.mxu0 0.0
    %6039 = vmatprep.subr.mxu0 0.0
    %6040 = vmatpush1.msra.mxu0 0.0
    %6041 = vmatprep.subr.mxu0 0.0
    %6042 = vmatpush1.msra.mxu0 0.0
    %6043 = vmatprep.subr.mxu0 0.0
    %6044 = vmatpush1.msra.mxu0 0.0
    %6045 = vmatprep.mubr.f32.mxu0 0.0
    %6046 = vmatmul.mubr.f32.gmra.mrb[0].mxu0 %v5979
    %v6047 = vpop.f32.mrb[0].mxu0
    %v6048 = vadd.f32 0.0, %v6047
    %v6049 = vpop.f32.mrb[0].mxu0
    %6050 = vdwg.mxu0
    %6051 = vrot.lane.b32.xlu0 %v3760, 48
    %v6052 = vpop.permute.xlu0 %6051
    %v6055 = vsel %vm1439, %v5814, 0
    %6057 = vmatprep.subr.mxu0 0.0
    %6058 = vmatpush1.msra.mxu0 %v6052
    %6059 = vmatprep.subr.mxu0 0.0
    %6060 = vmatpush1.msra.mxu0 0.0
    %6061 = vmatprep.subr.mxu0 0.0
    %6062 = vmatpush1.msra.mxu0 0.0
    %6063 = vmatprep.subr.mxu0 0.0
    %6064 = vmatpush1.msra.mxu0 0.0
    %6065 = vmatprep.subr.mxu0 0.0
    %6066 = vmatpush1.msra.mxu0 0.0
    %6067 = vmatprep.subr.mxu0 0.0
    %6068 = vmatpush1.msra.mxu0 0.0
    %6069 = vmatprep.subr.mxu0 0.0
    %6070 = vmatpush1.msra.mxu0 0.0
    %6071 = vmatprep.subr.mxu0 0.0
    %6072 = vmatpush1.msra.mxu0 0.0
    %6073 = vmatprep.subr.mxu0 0.0
    %6074 = vmatpush1.msra.mxu0 0.0
    %6075 = vmatprep.subr.mxu0 0.0
    %6076 = vmatpush1.msra.mxu0 0.0
    %6077 = vmatprep.subr.mxu0 0.0
    %6078 = vmatpush1.msra.mxu0 0.0
    %6079 = vmatprep.subr.mxu0 0.0
    %6080 = vmatpush1.msra.mxu0 0.0
    %6081 = vmatprep.subr.mxu0 0.0
    %6082 = vmatpush1.msra.mxu0 0.0
    %6083 = vmatprep.subr.mxu0 0.0
    %6084 = vmatpush1.msra.mxu0 0.0
    %6085 = vmatprep.subr.mxu0 0.0
    %6086 = vmatpush1.msra.mxu0 0.0
    %6087 = vmatprep.subr.mxu0 0.0
    %6088 = vmatpush1.msra.mxu0 0.0
    %6089 = vmatprep.subr.mxu0 0.0
    %6090 = vmatpush1.msra.mxu0 0.0
    %6091 = vmatprep.subr.mxu0 0.0
    %6092 = vmatpush1.msra.mxu0 0.0
    %6093 = vmatprep.subr.mxu0 0.0
    %6094 = vmatpush1.msra.mxu0 0.0
    %6095 = vmatprep.subr.mxu0 0.0
    %6096 = vmatpush1.msra.mxu0 0.0
    %6097 = vmatprep.subr.mxu0 0.0
    %6098 = vmatpush1.msra.mxu0 0.0
    %6099 = vmatprep.subr.mxu0 0.0
    %6100 = vmatpush1.msra.mxu0 0.0
    %6101 = vmatprep.subr.mxu0 0.0
    %6102 = vmatpush1.msra.mxu0 0.0
    %6103 = vmatprep.subr.mxu0 0.0
    %6104 = vmatpush1.msra.mxu0 0.0
    %6105 = vmatprep.subr.mxu0 0.0
    %6106 = vmatpush1.msra.mxu0 0.0
    %6107 = vmatprep.subr.mxu0 0.0
    %6108 = vmatpush1.msra.mxu0 0.0
    %6109 = vmatprep.subr.mxu0 0.0
    %6110 = vmatpush1.msra.mxu0 0.0
    %6111 = vmatprep.subr.mxu0 0.0
    %6112 = vmatpush1.msra.mxu0 0.0
    %6113 = vmatprep.subr.mxu0 0.0
    %6114 = vmatpush1.msra.mxu0 0.0
    %6115 = vmatprep.subr.mxu0 0.0
    %6116 = vmatpush1.msra.mxu0 0.0
    %6117 = vmatprep.subr.mxu0 0.0
    %6118 = vmatpush1.msra.mxu0 0.0
    %6119 = vmatprep.subr.mxu0 0.0
    %6120 = vmatpush1.msra.mxu0 0.0
    %6121 = vmatprep.mubr.f32.mxu0 0.0
    %6122 = vmatmul.mubr.f32.gmra.mrb[0].mxu0 %v6055
    %v6123 = vpop.f32.mrb[0].mxu0
    %v6124 = vadd.f32 0.0, %v6123
    %v6125 = vpop.f32.mrb[0].mxu0
    %6126 = vdwg.mxu0
    %6127 = vrot.lane.b32.xlu0 %v3765, 48
    %v6128 = vpop.permute.xlu0 %6127
    %v6131 = vsel %vm1439, %v5816, 0
    %6133 = vmatprep.subr.mxu0 0.0
    %6134 = vmatpush1.msra.mxu0 %v6128
    %6135 = vmatprep.subr.mxu0 0.0
    %6136 = vmatpush1.msra.mxu0 0.0
    %6137 = vmatprep.subr.mxu0 0.0
    %6138 = vmatpush1.msra.mxu0 0.0
    %6139 = vmatprep.subr.mxu0 0.0
    %6140 = vmatpush1.msra.mxu0 0.0
    %6141 = vmatprep.subr.mxu0 0.0
    %6142 = vmatpush1.msra.mxu0 0.0
    %6143 = vmatprep.subr.mxu0 0.0
    %6144 = vmatpush1.msra.mxu0 0.0
    %6145 = vmatprep.subr.mxu0 0.0
    %6146 = vmatpush1.msra.mxu0 0.0
    %6147 = vmatprep.subr.mxu0 0.0
    %6148 = vmatpush1.msra.mxu0 0.0
    %6149 = vmatprep.subr.mxu0 0.0
    %6150 = vmatpush1.msra.mxu0 0.0
    %6151 = vmatprep.subr.mxu0 0.0
    %6152 = vmatpush1.msra.mxu0 0.0
    %6153 = vmatprep.subr.mxu0 0.0
    %6154 = vmatpush1.msra.mxu0 0.0
    %6155 = vmatprep.subr.mxu0 0.0
    %6156 = vmatpush1.msra.mxu0 0.0
    %6157 = vmatprep.subr.mxu0 0.0
    %6158 = vmatpush1.msra.mxu0 0.0
    %6159 = vmatprep.subr.mxu0 0.0
    %6160 = vmatpush1.msra.mxu0 0.0
    %6161 = vmatprep.subr.mxu0 0.0
    %6162 = vmatpush1.msra.mxu0 0.0
    %6163 = vmatprep.subr.mxu0 0.0
    %6164 = vmatpush1.msra.mxu0 0.0
    %6165 = vmatprep.subr.mxu0 0.0
    %6166 = vmatpush1.msra.mxu0 0.0
    %6167 = vmatprep.subr.mxu0 0.0
    %6168 = vmatpush1.msra.mxu0 0.0
    %6169 = vmatprep.subr.mxu0 0.0
    %6170 = vmatpush1.msra.mxu0 0.0
    %6171 = vmatprep.subr.mxu0 0.0
    %6172 = vmatpush1.msra.mxu0 0.0
    %6173 = vmatprep.subr.mxu0 0.0
    %6174 = vmatpush1.msra.mxu0 0.0
    %6175 = vmatprep.subr.mxu0 0.0
    %6176 = vmatpush1.msra.mxu0 0.0
    %6177 = vmatprep.subr.mxu0 0.0
    %6178 = vmatpush1.msra.mxu0 0.0
    %6179 = vmatprep.subr.mxu0 0.0
    %6180 = vmatpush1.msra.mxu0 0.0
    %6181 = vmatprep.subr.mxu0 0.0
    %6182 = vmatpush1.msra.mxu0 0.0
    %6183 = vmatprep.subr.mxu0 0.0
    %6184 = vmatpush1.msra.mxu0 0.0
    %6185 = vmatprep.subr.mxu0 0.0
    %6186 = vmatpush1.msra.mxu0 0.0
    %6187 = vmatprep.subr.mxu0 0.0
    %6188 = vmatpush1.msra.mxu0 0.0
    %6189 = vmatprep.subr.mxu0 0.0
    %6190 = vmatpush1.msra.mxu0 0.0
    %6191 = vmatprep.subr.mxu0 0.0
    %6192 = vmatpush1.msra.mxu0 0.0
    %6193 = vmatprep.subr.mxu0 0.0
    %6194 = vmatpush1.msra.mxu0 0.0
    %6195 = vmatprep.subr.mxu0 0.0
    %6196 = vmatpush1.msra.mxu0 0.0
    %6197 = vmatprep.mubr.f32.mxu0 0.0
    %6198 = vmatmul.mubr.f32.gmra.mrb[0].mxu0 %v6131
    %v6199 = vpop.f32.mrb[0].mxu0
    %v6200 = vadd.f32 0.0, %v6199
    %v6201 = vpop.f32.mrb[0].mxu0
    %6202 = vdwg.mxu0
    %6203 = vrot.lane.b32.xlu0 %v3770, 48
    %v6204 = vpop.permute.xlu0 %6203
    %v6207 = vsel %vm1439, %v5818, 0
    %6209 = vmatprep.subr.mxu0 0.0
    %6210 = vmatpush1.msra.mxu0 %v6204
    %6211 = vmatprep.subr.mxu0 0.0
    %6212 = vmatpush1.msra.mxu0 0.0
    %6213 = vmatprep.subr.mxu0 0.0
    %6214 = vmatpush1.msra.mxu0 0.0
    %6215 = vmatprep.subr.mxu0 0.0
    %6216 = vmatpush1.msra.mxu0 0.0
    %6217 = vmatprep.subr.mxu0 0.0
    %6218 = vmatpush1.msra.mxu0 0.0
    %6219 = vmatprep.subr.mxu0 0.0
    %6220 = vmatpush1.msra.mxu0 0.0
    %6221 = vmatprep.subr.mxu0 0.0
    %6222 = vmatpush1.msra.mxu0 0.0
    %6223 = vmatprep.subr.mxu0 0.0
    %6224 = vmatpush1.msra.mxu0 0.0
    %6225 = vmatprep.subr.mxu0 0.0
    %6226 = vmatpush1.msra.mxu0 0.0
    %6227 = vmatprep.subr.mxu0 0.0
    %6228 = vmatpush1.msra.mxu0 0.0
    %6229 = vmatprep.subr.mxu0 0.0
    %6230 = vmatpush1.msra.mxu0 0.0
    %6231 = vmatprep.subr.mxu0 0.0
    %6232 = vmatpush1.msra.mxu0 0.0
    %6233 = vmatprep.subr.mxu0 0.0
    %6234 = vmatpush1.msra.mxu0 0.0
    %6235 = vmatprep.subr.mxu0 0.0
    %6236 = vmatpush1.msra.mxu0 0.0
    %6237 = vmatprep.subr.mxu0 0.0
    %6238 = vmatpush1.msra.mxu0 0.0
    %6239 = vmatprep.subr.mxu0 0.0
    %6240 = vmatpush1.msra.mxu0 0.0
    %6241 = vmatprep.subr.mxu0 0.0
    %6242 = vmatpush1.msra.mxu0 0.0
    %6243 = vmatprep.subr.mxu0 0.0
    %6244 = vmatpush1.msra.mxu0 0.0
    %6245 = vmatprep.subr.mxu0 0.0
    %6246 = vmatpush1.msra.mxu0 0.0
    %6247 = vmatprep.subr.mxu0 0.0
    %6248 = vmatpush1.msra.mxu0 0.0
    %6249 = vmatprep.subr.mxu0 0.0
    %6250 = vmatpush1.msra.mxu0 0.0
    %6251 = vmatprep.subr.mxu0 0.0
    %6252 = vmatpush1.msra.mxu0 0.0
    %6253 = vmatprep.subr.mxu0 0.0
    %6254 = vmatpush1.msra.mxu0 0.0
    %6255 = vmatprep.subr.mxu0 0.0
    %6256 = vmatpush1.msra.mxu0 0.0
    %6257 = vmatprep.subr.mxu0 0.0
    %6258 = vmatpush1.msra.mxu0 0.0
    %6259 = vmatprep.subr.mxu0 0.0
    %6260 = vmatpush1.msra.mxu0 0.0
    %6261 = vmatprep.subr.mxu0 0.0
    %6262 = vmatpush1.msra.mxu0 0.0
    %6263 = vmatprep.subr.mxu0 0.0
    %6264 = vmatpush1.msra.mxu0 0.0
    %6265 = vmatprep.subr.mxu0 0.0
    %6266 = vmatpush1.msra.mxu0 0.0
    %6267 = vmatprep.subr.mxu0 0.0
    %6268 = vmatpush1.msra.mxu0 0.0
    %6269 = vmatprep.subr.mxu0 0.0
    %6270 = vmatpush1.msra.mxu0 0.0
    %6271 = vmatprep.subr.mxu0 0.0
    %6272 = vmatpush1.msra.mxu0 0.0
    %6273 = vmatprep.mubr.f32.mxu0 0.0
    %6274 = vmatmul.mubr.f32.gmra.mrb[0].mxu0 %v6207
    %v6275 = vpop.f32.mrb[0].mxu0
    %v6276 = vadd.f32 0.0, %v6275
    %v6277 = vpop.f32.mrb[0].mxu0
    %6278 = vdwg.mxu0
    %6279 = vrot.lane.b32.xlu0 %v3775, 48
    %v6280 = vpop.permute.xlu0 %6279
    %v6283 = vsel %vm1439, %v5820, 0
    %6285 = vmatprep.subr.mxu0 0.0
    %6286 = vmatpush1.msra.mxu0 %v6280
    %6287 = vmatprep.subr.mxu0 0.0
    %6288 = vmatpush1.msra.mxu0 0.0
    %6289 = vmatprep.subr.mxu0 0.0
    %6290 = vmatpush1.msra.mxu0 0.0
    %6291 = vmatprep.subr.mxu0 0.0
    %6292 = vmatpush1.msra.mxu0 0.0
    %6293 = vmatprep.subr.mxu0 0.0
    %6294 = vmatpush1.msra.mxu0 0.0
    %6295 = vmatprep.subr.mxu0 0.0
    %6296 = vmatpush1.msra.mxu0 0.0
    %6297 = vmatprep.subr.mxu0 0.0
    %6298 = vmatpush1.msra.mxu0 0.0
    %6299 = vmatprep.subr.mxu0 0.0
    %6300 = vmatpush1.msra.mxu0 0.0
    %6301 = vmatprep.subr.mxu0 0.0
    %6302 = vmatpush1.msra.mxu0 0.0
    %6303 = vmatprep.subr.mxu0 0.0
    %6304 = vmatpush1.msra.mxu0 0.0
    %6305 = vmatprep.subr.mxu0 0.0
    %6306 = vmatpush1.msra.mxu0 0.0
    %6307 = vmatprep.subr.mxu0 0.0
    %6308 = vmatpush1.msra.mxu0 0.0
    %6309 = vmatprep.subr.mxu0 0.0
    %6310 = vmatpush1.msra.mxu0 0.0
    %6311 = vmatprep.subr.mxu0 0.0
    %6312 = vmatpush1.msra.mxu0 0.0
    %6313 = vmatprep.subr.mxu0 0.0
    %6314 = vmatpush1.msra.mxu0 0.0
    %6315 = vmatprep.subr.mxu0 0.0
    %6316 = vmatpush1.msra.mxu0 0.0
    %6317 = vmatprep.subr.mxu0 0.0
    %6318 = vmatpush1.msra.mxu0 0.0
    %6319 = vmatprep.subr.mxu0 0.0
    %6320 = vmatpush1.msra.mxu0 0.0
    %6321 = vmatprep.subr.mxu0 0.0
    %6322 = vmatpush1.msra.mxu0 0.0
    %6323 = vmatprep.subr.mxu0 0.0
    %6324 = vmatpush1.msra.mxu0 0.0
    %6325 = vmatprep.subr.mxu0 0.0
    %6326 = vmatpush1.msra.mxu0 0.0
    %6327 = vmatprep.subr.mxu0 0.0
    %6328 = vmatpush1.msra.mxu0 0.0
    %6329 = vmatprep.subr.mxu0 0.0
    %6330 = vmatpush1.msra.mxu0 0.0
    %6331 = vmatprep.subr.mxu0 0.0
    %6332 = vmatpush1.msra.mxu0 0.0
    %6333 = vmatprep.subr.mxu0 0.0
    %6334 = vmatpush1.msra.mxu0 0.0
    %6335 = vmatprep.subr.mxu0 0.0
    %6336 = vmatpush1.msra.mxu0 0.0
    %6337 = vmatprep.subr.mxu0 0.0
    %6338 = vmatpush1.msra.mxu0 0.0
    %6339 = vmatprep.subr.mxu0 0.0
    %6340 = vmatpush1.msra.mxu0 0.0
    %6341 = vmatprep.subr.mxu0 0.0
    %6342 = vmatpush1.msra.mxu0 0.0
    %6343 = vmatprep.subr.mxu0 0.0
    %6344 = vmatpush1.msra.mxu0 0.0
    %6345 = vmatprep.subr.mxu0 0.0
    %6346 = vmatpush1.msra.mxu0 0.0
    %6347 = vmatprep.subr.mxu0 0.0
    %6348 = vmatpush1.msra.mxu0 0.0
    %6349 = vmatprep.mubr.f32.mxu0 0.0
    %6350 = vmatmul.mubr.f32.gmra.mrb[0].mxu0 %v6283
    %v6351 = vpop.f32.mrb[0].mxu0
    %v6352 = vadd.f32 0.0, %v6351
    %v6353 = vpop.f32.mrb[0].mxu0
    %6354 = vdwg.mxu0
    %6355 = vrot.lane.b32.xlu0 %v3780, 48
    %v6356 = vpop.permute.xlu0 %6355
    %v6359 = vsel %vm1439, %v5822, 0
    %6361 = vmatprep.subr.mxu0 0.0
    %6362 = vmatpush1.msra.mxu0 %v6356
    %6363 = vmatprep.subr.mxu0 0.0
    %6364 = vmatpush1.msra.mxu0 0.0
    %6365 = vmatprep.subr.mxu0 0.0
    %6366 = vmatpush1.msra.mxu0 0.0
    %6367 = vmatprep.subr.mxu0 0.0
    %6368 = vmatpush1.msra.mxu0 0.0
    %6369 = vmatprep.subr.mxu0 0.0
    %6370 = vmatpush1.msra.mxu0 0.0
    %6371 = vmatprep.subr.mxu0 0.0
    %6372 = vmatpush1.msra.mxu0 0.0
    %6373 = vmatprep.subr.mxu0 0.0
    %6374 = vmatpush1.msra.mxu0 0.0
    %6375 = vmatprep.subr.mxu0 0.0
    %6376 = vmatpush1.msra.mxu0 0.0
    %6377 = vmatprep.subr.mxu0 0.0
    %6378 = vmatpush1.msra.mxu0 0.0
    %6379 = vmatprep.subr.mxu0 0.0
    %6380 = vmatpush1.msra.mxu0 0.0
    %6381 = vmatprep.subr.mxu0 0.0
    %6382 = vmatpush1.msra.mxu0 0.0
    %6383 = vmatprep.subr.mxu0 0.0
    %6384 = vmatpush1.msra.mxu0 0.0
    %6385 = vmatprep.subr.mxu0 0.0
    %6386 = vmatpush1.msra.mxu0 0.0
    %6387 = vmatprep.subr.mxu0 0.0
    %6388 = vmatpush1.msra.mxu0 0.0
    %6389 = vmatprep.subr.mxu0 0.0
    %6390 = vmatpush1.msra.mxu0 0.0
    %6391 = vmatprep.subr.mxu0 0.0
    %6392 = vmatpush1.msra.mxu0 0.0
    %6393 = vmatprep.subr.mxu0 0.0
    %6394 = vmatpush1.msra.mxu0 0.0
    %6395 = vmatprep.subr.mxu0 0.0
    %6396 = vmatpush1.msra.mxu0 0.0
    %6397 = vmatprep.subr.mxu0 0.0
    %6398 = vmatpush1.msra.mxu0 0.0
    %6399 = vmatprep.subr.mxu0 0.0
    %6400 = vmatpush1.msra.mxu0 0.0
    %6401 = vmatprep.subr.mxu0 0.0
    %6402 = vmatpush1.msra.mxu0 0.0
    %6403 = vmatprep.subr.mxu0 0.0
    %6404 = vmatpush1.msra.mxu0 0.0
    %6405 = vmatprep.subr.mxu0 0.0
    %6406 = vmatpush1.msra.mxu0 0.0
    %6407 = vmatprep.subr.mxu0 0.0
    %6408 = vmatpush1.msra.mxu0 0.0
    %6409 = vmatprep.subr.mxu0 0.0
    %6410 = vmatpush1.msra.mxu0 0.0
    %6411 = vmatprep.subr.mxu0 0.0
    %6412 = vmatpush1.msra.mxu0 0.0
    %6413 = vmatprep.subr.mxu0 0.0
    %6414 = vmatpush1.msra.mxu0 0.0
    %6415 = vmatprep.subr.mxu0 0.0
    %6416 = vmatpush1.msra.mxu0 0.0
    %6417 = vmatprep.subr.mxu0 0.0
    %6418 = vmatpush1.msra.mxu0 0.0
    %6419 = vmatprep.subr.mxu0 0.0
    %6420 = vmatpush1.msra.mxu0 0.0
    %6421 = vmatprep.subr.mxu0 0.0
    %6422 = vmatpush1.msra.mxu0 0.0
    %6423 = vmatprep.subr.mxu0 0.0
    %6424 = vmatpush1.msra.mxu0 0.0
    %6425 = vmatprep.mubr.f32.mxu0 0.0
    %6426 = vmatmul.mubr.f32.gmra.mrb[0].mxu0 %v6359
    %v6427 = vpop.f32.mrb[0].mxu0
    %v6428 = vadd.f32 0.0, %v6427
    %v6429 = vpop.f32.mrb[0].mxu0
    %6430 = vdwg.mxu0
    %6439 = vrot.lane.b32.xlu0 %v5896, 16
    %v6440 = vpop.permute.xlu0 %6439
    %6441 = vrot.lane.b32.xlu0 %v5972, 16
    %v6442 = vpop.permute.xlu0 %6441
    %6443 = vrot.lane.b32.xlu0 %v6048, 16
    %v6444 = vpop.permute.xlu0 %6443
    %6445 = vrot.lane.b32.xlu0 %v6124, 16
    %v6446 = vpop.permute.xlu0 %6445
    %6447 = vrot.lane.b32.xlu0 %v6200, 16
    %v6448 = vpop.permute.xlu0 %6447
    %6449 = vrot.lane.b32.xlu0 %v6276, 16
    %v6450 = vpop.permute.xlu0 %6449
    %6451 = vrot.lane.b32.xlu0 %v6352, 16
    %v6452 = vpop.permute.xlu0 %6451
    %6453 = vrot.lane.b32.xlu0 %v6428, 16
    %v6454 = vpop.permute.xlu0 %6453
    %v6463 = vsel %vm817, %v4576, %v6440
    %v6464 = vsel %vm817, %v4652, %v6442
    %v6465 = vsel %vm817, %v4728, %v6444
    %v6466 = vsel %vm817, %v4804, %v6446
    %v6467 = vsel %vm817, %v4880, %v6448
    %v6468 = vsel %vm817, %v4956, %v6450
    %v6469 = vsel %vm817, %v5032, %v6452
    %v6470 = vsel %vm817, %v5108, %v6454
    %v6471 = vmax.f32 %v6463, 0.0
    %v6472 = vmax.f32 %v6464, 0.0
    %v6473 = vmax.f32 %v6465, 0.0
    %v6474 = vmax.f32 %v6466, 0.0
    %v6475 = vmax.f32 %v6467, 0.0
    %v6476 = vmax.f32 %v6468, 0.0
    %v6477 = vmax.f32 %v6469, 0.0
    %v6478 = vmax.f32 %v6470, 0.0
    %v6479 = vadd.f32 %v6471, %v3633
    %v6480 = vadd.f32 %v6472, %v3634
    %v6481 = vadd.f32 %v6473, %v3635
    %v6482 = vadd.f32 %v6474, %v3636
    %v6483 = vadd.f32 %v6475, %v3637
    %v6484 = vadd.f32 %v6476, %v3638
    %v6485 = vadd.f32 %v6477, %v3639
    %v6486 = vadd.f32 %v6478, %v3640
    %s6487 = scalar_lea.vmem %s6, 2
    %v6488 = vld [vmem:[%s6487] sm:$0x3]
    %v6489 = vsel %vm123, %v6479, 0.0
    %6490 = vadd.xlane.f32.xlu0 %v6489
    %v6491 = vpop.xlane.xlu0 %6490
    %v6492 = vsel %vm123, %v6480, 0.0
    %6493 = vadd.xlane.f32.xlu0 %v6492
    %v6494 = vpop.xlane.xlu0 %6493
    %v6495 = vsel %vm123, %v6481, 0.0
    %6496 = vadd.xlane.f32.xlu0 %v6495
    %v6497 = vpop.xlane.xlu0 %6496
    %v6498 = vsel %vm123, %v6482, 0.0
    %6499 = vadd.xlane.f32.xlu0 %v6498
    %v6500 = vpop.xlane.xlu0 %6499
    %v6501 = vsel %vm123, %v6483, 0.0
    %6502 = vadd.xlane.f32.xlu0 %v6501
    %v6503 = vpop.xlane.xlu0 %6502
    %v6504 = vsel %vm123, %v6484, 0.0
    %6505 = vadd.xlane.f32.xlu0 %v6504
    %v6506 = vpop.xlane.xlu0 %6505
    %v6507 = vsel %vm123, %v6485, 0.0
    %6508 = vadd.xlane.f32.xlu0 %v6507
    %v6509 = vpop.xlane.xlu0 %6508
    %v6510 = vsel %vm123, %v6486, 0.0
    %6511 = vadd.xlane.f32.xlu0 %v6510
    %v6512 = vpop.xlane.xlu0 %6511
    %v6513 = vmul.f32 %v6491, %v277
    %v6514 = vmul.f32 %v6494, %v277
    %v6515 = vmul.f32 %v6497, %v277
    %v6516 = vmul.f32 %v6500, %v277
    %v6517 = vmul.f32 %v6503, %v277
    %v6518 = vmul.f32 %v6506, %v277
    %v6519 = vmul.f32 %v6509, %v277
    %v6520 = vmul.f32 %v6512, %v277
    %v6521 = vsub.f32 %v6479, %v6513
    %v6522 = vsub.f32 %v6480, %v6514
    %v6523 = vsub.f32 %v6481, %v6515
    %v6524 = vsub.f32 %v6482, %v6516
    %v6525 = vsub.f32 %v6483, %v6517
    %v6526 = vsub.f32 %v6484, %v6518
    %v6527 = vsub.f32 %v6485, %v6519
    %v6528 = vsub.f32 %v6486, %v6520
    %v6529 = vmul.f32 %v6521, %v6521
    %v6530 = vmul.f32 %v6522, %v6522
    %v6531 = vmul.f32 %v6523, %v6523
    %v6532 = vmul.f32 %v6524, %v6524
    %v6533 = vmul.f32 %v6525, %v6525
    %v6534 = vmul.f32 %v6526, %v6526
    %v6535 = vmul.f32 %v6527, %v6527
    %v6536 = vmul.f32 %v6528, %v6528
    %v6537 = vsel %vm123, %v6529, 0.0
    %6538 = vadd.xlane.f32.xlu0 %v6537
    %v6539 = vpop.xlane.xlu0 %6538
    %v6540 = vsel %vm123, %v6530, 0.0
    %6541 = vadd.xlane.f32.xlu0 %v6540
    %v6542 = vpop.xlane.xlu0 %6541
    %v6543 = vsel %vm123, %v6531, 0.0
    %6544 = vadd.xlane.f32.xlu0 %v6543
    %v6545 = vpop.xlane.xlu0 %6544
    %v6546 = vsel %vm123, %v6532, 0.0
    %6547 = vadd.xlane.f32.xlu0 %v6546
    %v6548 = vpop.xlane.xlu0 %6547
    %v6549 = vsel %vm123, %v6533, 0.0
    %6550 = vadd.xlane.f32.xlu0 %v6549
    %v6551 = vpop.xlane.xlu0 %6550
    %v6552 = vsel %vm123, %v6534, 0.0
    %6553 = vadd.xlane.f32.xlu0 %v6552
    %v6554 = vpop.xlane.xlu0 %6553
    %v6555 = vsel %vm123, %v6535, 0.0
    %6556 = vadd.xlane.f32.xlu0 %v6555
    %v6557 = vpop.xlane.xlu0 %6556
    %v6558 = vsel %vm123, %v6536, 0.0
    %6559 = vadd.xlane.f32.xlu0 %v6558
    %v6560 = vpop.xlane.xlu0 %6559
    %v6561 = vmul.f32 %v6539, %v277
    %v6562 = vmul.f32 %v6542, %v277
    %v6563 = vmul.f32 %v6545, %v277
    %v6564 = vmul.f32 %v6548, %v277
    %v6565 = vmul.f32 %v6551, %v277
    %v6566 = vmul.f32 %v6554, %v277
    %v6567 = vmul.f32 %v6557, %v277
    %v6568 = vmul.f32 %v6560, %v277
    %v6569 = vadd.f32 %v6561, 1e-05
    %v6570 = vadd.f32 %v6562, 1e-05
    %v6571 = vadd.f32 %v6563, 1e-05
    %v6572 = vadd.f32 %v6564, 1e-05
    %v6573 = vadd.f32 %v6565, 1e-05
    %v6574 = vadd.f32 %v6566, 1e-05
    %v6575 = vadd.f32 %v6567, 1e-05
    %v6576 = vadd.f32 %v6568, 1e-05
    %v6577 = vrsqrt.pop %v6569
    %v6578 = vrsqrt.pop %v6570
    %v6579 = vrsqrt.pop %v6571
    %v6580 = vrsqrt.pop %v6572
    %v6581 = vrsqrt.pop %v6573
    %v6582 = vrsqrt.pop %v6574
    %v6583 = vrsqrt.pop %v6575
    %v6584 = vrsqrt.pop %v6576
    %v6585 = vmul.f32 %v6521, %v6577
    %v6586 = vmul.f32 %v6522, %v6578
    %v6587 = vmul.f32 %v6523, %v6579
    %v6588 = vmul.f32 %v6524, %v6580
    %v6589 = vmul.f32 %v6525, %v6581
    %v6590 = vmul.f32 %v6526, %v6582
    %v6591 = vmul.f32 %v6527, %v6583
    %v6592 = vmul.f32 %v6528, %v6584
    %v6593 = vlaneseq
    %v6594 = vshrl.u32 %v6593, 7
    %v6595 = vsub.s32 0, %v6594
    %v6596 = vrot.slane %v6488, %v6595
    %v6597 = vmul.f32 %v6585, %v6596
    %v6598 = vmul.f32 %v6586, %v6596
    %v6599 = vmul.f32 %v6587, %v6596
    %v6600 = vmul.f32 %v6588, %v6596
    %v6601 = vmul.f32 %v6589, %v6596
    %v6602 = vmul.f32 %v6590, %v6596
    %v6603 = vmul.f32 %v6591, %v6596
    %v6604 = vmul.f32 %v6592, %v6596
    %v6605 = vlaneseq
    %v6606 = vshrl.u32 %v6605, 7
    %v6607 = vsub.s32 1, %v6606
    %v6608 = vrot.slane %v6488, %v6607
    %v6609 = vadd.f32 %v6597, %v6608
    %v6610 = vadd.f32 %v6598, %v6608
    %v6611 = vadd.f32 %v6599, %v6608
    %v6612 = vadd.f32 %v6600, %v6608
    %v6613 = vadd.f32 %v6601, %v6608
    %v6614 = vadd.f32 %v6602, %v6608
    %v6615 = vadd.f32 %v6603, %v6608
    %v6616 = vadd.f32 %v6604, %v6608
    %s6617 = scalar_lea.vmem [#allocation8], 64
    %v6618 = vld [vmem:[%s6617] sm:$0xff]
    %v6619 = vld [vmem:[%s6617 + $0x8] sm:$0xff]
    %v6620 = vld [vmem:[%s6617 + $0x10] sm:$0xff]
    %v6621 = vld [vmem:[%s6617 + $0x18] sm:$0xff]
    %s6622 = scalar_lea.vmem %s5, 2
    %v6623 = vld [vmem:[%s6622] sm:$0x1]
    %v6625 = vlaneseq
    %v6626 = vshrl.u32 %v6625, 7
    %v6627 = vsub.s32 0, %v6626
    %v6628 = vrot.slane %v6623, %v6627
    %v6631 = vsel %vm123, %v6609, 0
    %v6634 = vsel %vm123, %v6610, 0
    %v6637 = vsel %vm123, %v6611, 0
    %v6640 = vsel %vm123, %v6612, 0
    %v6643 = vsel %vm123, %v6613, 0
    %v6646 = vsel %vm123, %v6614, 0
    %v6649 = vsel %vm123, %v6615, 0
    %v6652 = vsel %vm123, %v6616, 0
    %6654 = vmatprep.subr.mxu0 0.0
    %6655 = vmatpush1.msra.mxu0 %v6618
    %6656 = vmatprep.subr.mxu0 0.0
    %6657 = vmatpush1.msra.mxu0 %v6619
    %6658 = vmatprep.subr.mxu0 0.0
    %6659 = vmatpush1.msra.mxu0 %v6620
    %6660 = vmatprep.subr.mxu0 0.0
    %6661 = vmatpush1.msra.mxu0 %v6621
    %6662 = vmatprep.subr.mxu0 0.0
    %6663 = vmatpush1.msra.mxu0 0.0
    %6664 = vmatprep.subr.mxu0 0.0
    %6665 = vmatpush1.msra.mxu0 0.0
    %6666 = vmatprep.subr.mxu0 0.0
    %6667 = vmatpush1.msra.mxu0 0.0
    %6668 = vmatprep.subr.mxu0 0.0
    %6669 = vmatpush1.msra.mxu0 0.0
    %6670 = vmatprep.subr.mxu0 0.0
    %6671 = vmatpush1.msra.mxu0 0.0
    %6672 = vmatprep.subr.mxu0 0.0
    %6673 = vmatpush1.msra.mxu0 0.0
    %6674 = vmatprep.subr.mxu0 0.0
    %6675 = vmatpush1.msra.mxu0 0.0
    %6676 = vmatprep.subr.mxu0 0.0
    %6677 = vmatpush1.msra.mxu0 0.0
    %6678 = vmatprep.subr.mxu0 0.0
    %6679 = vmatpush1.msra.mxu0 0.0
    %6680 = vmatprep.subr.mxu0 0.0
    %6681 = vmatpush1.msra.mxu0 0.0
    %6682 = vmatprep.subr.mxu0 0.0
    %6683 = vmatpush1.msra.mxu0 0.0
    %6684 = vmatprep.subr.mxu0 0.0
    %6685 = vmatpush1.msra.mxu0 0.0
    %6686 = vmatprep.subr.mxu0 0.0
    %6687 = vmatpush1.msra.mxu0 0.0
    %6688 = vmatprep.subr.mxu0 0.0
    %6689 = vmatpush1.msra.mxu0 0.0
    %6690 = vmatprep.subr.mxu0 0.0
    %6691 = vmatpush1.msra.mxu0 0.0
    %6692 = vmatprep.subr.mxu0 0.0
    %6693 = vmatpush1.msra.mxu0 0.0
    %6694 = vmatprep.subr.mxu0 0.0
    %6695 = vmatpush1.msra.mxu0 0.0
    %6696 = vmatprep.subr.mxu0 0.0
    %6697 = vmatpush1.msra.mxu0 0.0
    %6698 = vmatprep.subr.mxu0 0.0
    %6699 = vmatpush1.msra.mxu0 0.0
    %6700 = vmatprep.subr.mxu0 0.0
    %6701 = vmatpush1.msra.mxu0 0.0
    %6702 = vmatprep.subr.mxu0 0.0
    %6703 = vmatpush1.msra.mxu0 0.0
    %6704 = vmatprep.subr.mxu0 0.0
    %6705 = vmatpush1.msra.mxu0 0.0
    %6706 = vmatprep.subr.mxu0 0.0
    %6707 = vmatpush1.msra.mxu0 0.0
    %6708 = vmatprep.subr.mxu0 0.0
    %6709 = vmatpush1.msra.mxu0 0.0
    %6710 = vmatprep.subr.mxu0 0.0
    %6711 = vmatpush1.msra.mxu0 0.0
    %6712 = vmatprep.subr.mxu0 0.0
    %6713 = vmatpush1.msra.mxu0 0.0
    %6714 = vmatprep.subr.mxu0 0.0
    %6715 = vmatpush1.msra.mxu0 0.0
    %6716 = vmatprep.subr.mxu0 0.0
    %6717 = vmatpush1.msra.mxu0 0.0
    %6718 = vmatprep.mubr.f32.mxu0 0.0
    %6719 = vmatmul.mubr.f32.gmra.mrb[0].mxu0 %v6631
    %v6720 = vpop.f32.mrb[0].mxu0
    %v6721 = vadd.f32 %v6628, %v6720
    %v6722 = vpop.f32.mrb[0].mxu0
    %6723 = vmatprep.mubr.f32.mxu0 0.0
    %6724 = vmatmul.mubr.f32.gmra.mrb[0].mxu0 %v6634
    %v6725 = vpop.f32.mrb[0].mxu0
    %v6726 = vadd.f32 %v6628, %v6725
    %v6727 = vpop.f32.mrb[0].mxu0
    %6728 = vmatprep.mubr.f32.mxu0 0.0
    %6729 = vmatmul.mubr.f32.gmra.mrb[0].mxu0 %v6637
    %v6730 = vpop.f32.mrb[0].mxu0
    %v6731 = vadd.f32 %v6628, %v6730
    %v6732 = vpop.f32.mrb[0].mxu0
    %6733 = vmatprep.mubr.f32.mxu0 0.0
    %6734 = vmatmul.mubr.f32.gmra.mrb[0].mxu0 %v6640
    %v6735 = vpop.f32.mrb[0].mxu0
    %v6736 = vadd.f32 %v6628, %v6735
    %v6737 = vpop.f32.mrb[0].mxu0
    %6738 = vmatprep.mubr.f32.mxu0 0.0
    %6739 = vmatmul.mubr.f32.gmra.mrb[0].mxu0 %v6643
    %v6740 = vpop.f32.mrb[0].mxu0
    %v6741 = vadd.f32 %v6628, %v6740
    %v6742 = vpop.f32.mrb[0].mxu0
    %6743 = vmatprep.mubr.f32.mxu0 0.0
    %6744 = vmatmul.mubr.f32.gmra.mrb[0].mxu0 %v6646
    %v6745 = vpop.f32.mrb[0].mxu0
    %v6746 = vadd.f32 %v6628, %v6745
    %v6747 = vpop.f32.mrb[0].mxu0
    %6748 = vmatprep.mubr.f32.mxu0 0.0
    %6749 = vmatmul.mubr.f32.gmra.mrb[0].mxu0 %v6649
    %v6750 = vpop.f32.mrb[0].mxu0
    %v6751 = vadd.f32 %v6628, %v6750
    %v6752 = vpop.f32.mrb[0].mxu0
    %6753 = vmatprep.mubr.f32.mxu0 0.0
    %6754 = vmatmul.mubr.f32.gmra.mrb[0].mxu0 %v6652
    %v6755 = vpop.f32.mrb[0].mxu0
    %v6756 = vadd.f32 %v6628, %v6755
    %v6757 = vpop.f32.mrb[0].mxu0
    %6758 = vdwg.mxu0
    %v6759 = vmul.f32 %v6721, 0.25
    %v6760 = vmul.f32 %v6726, 0.25
    %v6761 = vmul.f32 %v6731, 0.25
    %v6762 = vmul.f32 %v6736, 0.25
    %v6763 = vmul.f32 %v6741, 0.25
    %v6764 = vmul.f32 %v6746, 0.25
    %v6765 = vmul.f32 %v6751, 0.25
    %v6766 = vmul.f32 %v6756, 0.25
    %6768 = vrot.lane.b32.xlu0 %v6721, 96
    %v6769 = vpop.permute.xlu0 %6768
    %v6771 = vsel %vm817, %v6759, 0
    %v6773 = vsel %vm817, %v6769, 0
    %6775 = vmatprep.subr.mxu0 0.0
    %6776 = vmatpush1.xpose.msra.mxu0 %v6773
    %6777 = vmatprep.subr.mxu0 0.0
    %6778 = vmatpush1.xpose.msra.mxu0 0.0
    %6779 = vmatprep.subr.mxu0 0.0
    %6780 = vmatpush1.xpose.msra.mxu0 0.0
    %6781 = vmatprep.subr.mxu0 0.0
    %6782 = vmatpush1.xpose.msra.mxu0 0.0
    %6783 = vmatprep.subr.mxu0 0.0
    %6784 = vmatpush1.xpose.msra.mxu0 0.0
    %6785 = vmatprep.subr.mxu0 0.0
    %6786 = vmatpush1.xpose.msra.mxu0 0.0
    %6787 = vmatprep.subr.mxu0 0.0
    %6788 = vmatpush1.xpose.msra.mxu0 0.0
    %6789 = vmatprep.subr.mxu0 0.0
    %6790 = vmatpush1.xpose.msra.mxu0 0.0
    %6791 = vmatprep.subr.mxu0 0.0
    %6792 = vmatpush1.xpose.msra.mxu0 0.0
    %6793 = vmatprep.subr.mxu0 0.0
    %6794 = vmatpush1.xpose.msra.mxu0 0.0
    %6795 = vmatprep.subr.mxu0 0.0
    %6796 = vmatpush1.xpose.msra.mxu0 0.0
    %6797 = vmatprep.subr.mxu0 0.0
    %6798 = vmatpush1.xpose.msra.mxu0 0.0
    %6799 = vmatprep.subr.mxu0 0.0
    %6800 = vmatpush1.xpose.msra.mxu0 0.0
    %6801 = vmatprep.subr.mxu0 0.0
    %6802 = vmatpush1.xpose.msra.mxu0 0.0
    %6803 = vmatprep.subr.mxu0 0.0
    %6804 = vmatpush1.xpose.msra.mxu0 0.0
    %6805 = vmatprep.subr.mxu0 0.0
    %6806 = vmatpush1.xpose.msra.mxu0 0.0
    %6807 = vmatprep.subr.mxu0 0.0
    %6808 = vmatpush1.xpose.msra.mxu0 0.0
    %6809 = vmatprep.subr.mxu0 0.0
    %6810 = vmatpush1.xpose.msra.mxu0 0.0
    %6811 = vmatprep.subr.mxu0 0.0
    %6812 = vmatpush1.xpose.msra.mxu0 0.0
    %6813 = vmatprep.subr.mxu0 0.0
    %6814 = vmatpush1.xpose.msra.mxu0 0.0
    %6815 = vmatprep.subr.mxu0 0.0
    %6816 = vmatpush1.xpose.msra.mxu0 0.0
    %6817 = vmatprep.subr.mxu0 0.0
    %6818 = vmatpush1.xpose.msra.mxu0 0.0
    %6819 = vmatprep.subr.mxu0 0.0
    %6820 = vmatpush1.xpose.msra.mxu0 0.0
    %6821 = vmatprep.subr.mxu0 0.0
    %6822 = vmatpush1.xpose.msra.mxu0 0.0
    %6823 = vmatprep.subr.mxu0 0.0
    %6824 = vmatpush1.xpose.msra.mxu0 0.0
    %6825 = vmatprep.subr.mxu0 0.0
    %6826 = vmatpush1.xpose.msra.mxu0 0.0
    %6827 = vmatprep.subr.mxu0 0.0
    %6828 = vmatpush1.xpose.msra.mxu0 0.0
    %6829 = vmatprep.subr.mxu0 0.0
    %6830 = vmatpush1.xpose.msra.mxu0 0.0
    %6831 = vmatprep.subr.mxu0 0.0
    %6832 = vmatpush1.xpose.msra.mxu0 0.0
    %6833 = vmatprep.subr.mxu0 0.0
    %6834 = vmatpush1.xpose.msra.mxu0 0.0
    %6835 = vmatprep.subr.mxu0 0.0
    %6836 = vmatpush1.xpose.msra.mxu0 0.0
    %6837 = vmatprep.subr.mxu0 0.0
    %6838 = vmatpush1.xpose.msra.mxu0 0.0
    %6839 = vmatprep.mubr.f32.mxu0 0.0
    %6840 = vmatmul.mubr.f32.gmra.mrb[0].mxu0 %v6771
    %v6841 = vpop.f32.mrb[0].mxu0
    %v6842 = vadd.f32 %v98, %v6841
    %v6843 = vpop.f32.mrb[0].mxu0
    %6844 = vdwg.mxu0
    %6846 = vrot.lane.b32.xlu0 %v6726, 96
    %v6847 = vpop.permute.xlu0 %6846
    %v6849 = vsel %vm817, %v6760, 0
    %v6851 = vsel %vm817, %v6847, 0
    %6853 = vmatprep.subr.mxu0 0.0
    %6854 = vmatpush1.xpose.msra.mxu0 %v6851
    %6855 = vmatprep.subr.mxu0 0.0
    %6856 = vmatpush1.xpose.msra.mxu0 0.0
    %6857 = vmatprep.subr.mxu0 0.0
    %6858 = vmatpush1.xpose.msra.mxu0 0.0
    %6859 = vmatprep.subr.mxu0 0.0
    %6860 = vmatpush1.xpose.msra.mxu0 0.0
    %6861 = vmatprep.subr.mxu0 0.0
    %6862 = vmatpush1.xpose.msra.mxu0 0.0
    %6863 = vmatprep.subr.mxu0 0.0
    %6864 = vmatpush1.xpose.msra.mxu0 0.0
    %6865 = vmatprep.subr.mxu0 0.0
    %6866 = vmatpush1.xpose.msra.mxu0 0.0
    %6867 = vmatprep.subr.mxu0 0.0
    %6868 = vmatpush1.xpose.msra.mxu0 0.0
    %6869 = vmatprep.subr.mxu0 0.0
    %6870 = vmatpush1.xpose.msra.mxu0 0.0
    %6871 = vmatprep.subr.mxu0 0.0
    %6872 = vmatpush1.xpose.msra.mxu0 0.0
    %6873 = vmatprep.subr.mxu0 0.0
    %6874 = vmatpush1.xpose.msra.mxu0 0.0
    %6875 = vmatprep.subr.mxu0 0.0
    %6876 = vmatpush1.xpose.msra.mxu0 0.0
    %6877 = vmatprep.subr.mxu0 0.0
    %6878 = vmatpush1.xpose.msra.mxu0 0.0
    %6879 = vmatprep.subr.mxu0 0.0
    %6880 = vmatpush1.xpose.msra.mxu0 0.0
    %6881 = vmatprep.subr.mxu0 0.0
    %6882 = vmatpush1.xpose.msra.mxu0 0.0
    %6883 = vmatprep.subr.mxu0 0.0
    %6884 = vmatpush1.xpose.msra.mxu0 0.0
    %6885 = vmatprep.subr.mxu0 0.0
    %6886 = vmatpush1.xpose.msra.mxu0 0.0
    %6887 = vmatprep.subr.mxu0 0.0
    %6888 = vmatpush1.xpose.msra.mxu0 0.0
    %6889 = vmatprep.subr.mxu0 0.0
    %6890 = vmatpush1.xpose.msra.mxu0 0.0
    %6891 = vmatprep.subr.mxu0 0.0
    %6892 = vmatpush1.xpose.msra.mxu0 0.0
    %6893 = vmatprep.subr.mxu0 0.0
    %6894 = vmatpush1.xpose.msra.mxu0 0.0
    %6895 = vmatprep.subr.mxu0 0.0
    %6896 = vmatpush1.xpose.msra.mxu0 0.0
    %6897 = vmatprep.subr.mxu0 0.0
    %6898 = vmatpush1.xpose.msra.mxu0 0.0
    %6899 = vmatprep.subr.mxu0 0.0
    %6900 = vmatpush1.xpose.msra.mxu0 0.0
    %6901 = vmatprep.subr.mxu0 0.0
    %6902 = vmatpush1.xpose.msra.mxu0 0.0
    %6903 = vmatprep.subr.mxu0 0.0
    %6904 = vmatpush1.xpose.msra.mxu0 0.0
    %6905 = vmatprep.subr.mxu0 0.0
    %6906 = vmatpush1.xpose.msra.mxu0 0.0
    %6907 = vmatprep.subr.mxu0 0.0
    %6908 = vmatpush1.xpose.msra.mxu0 0.0
    %6909 = vmatprep.subr.mxu0 0.0
    %6910 = vmatpush1.xpose.msra.mxu0 0.0
    %6911 = vmatprep.subr.mxu0 0.0
    %6912 = vmatpush1.xpose.msra.mxu0 0.0
    %6913 = vmatprep.subr.mxu0 0.0
    %6914 = vmatpush1.xpose.msra.mxu0 0.0
    %6915 = vmatprep.subr.mxu0 0.0
    %6916 = vmatpush1.xpose.msra.mxu0 0.0
    %6917 = vmatprep.mubr.f32.mxu0 0.0
    %6918 = vmatmul.mubr.f32.gmra.mrb[0].mxu0 %v6849
    %v6919 = vpop.f32.mrb[0].mxu0
    %v6920 = vadd.f32 %v99, %v6919
    %v6921 = vpop.f32.mrb[0].mxu0
    %6922 = vdwg.mxu0
    %6924 = vrot.lane.b32.xlu0 %v6731, 96
    %v6925 = vpop.permute.xlu0 %6924
    %v6927 = vsel %vm817, %v6761, 0
    %v6929 = vsel %vm817, %v6925, 0
    %6931 = vmatprep.subr.mxu0 0.0
    %6932 = vmatpush1.xpose.msra.mxu0 %v6929
    %6933 = vmatprep.subr.mxu0 0.0
    %6934 = vmatpush1.xpose.msra.mxu0 0.0
    %6935 = vmatprep.subr.mxu0 0.0
    %6936 = vmatpush1.xpose.msra.mxu0 0.0
    %6937 = vmatprep.subr.mxu0 0.0
    %6938 = vmatpush1.xpose.msra.mxu0 0.0
    %6939 = vmatprep.subr.mxu0 0.0
    %6940 = vmatpush1.xpose.msra.mxu0 0.0
    %6941 = vmatprep.subr.mxu0 0.0
    %6942 = vmatpush1.xpose.msra.mxu0 0.0
    %6943 = vmatprep.subr.mxu0 0.0
    %6944 = vmatpush1.xpose.msra.mxu0 0.0
    %6945 = vmatprep.subr.mxu0 0.0
    %6946 = vmatpush1.xpose.msra.mxu0 0.0
    %6947 = vmatprep.subr.mxu0 0.0
    %6948 = vmatpush1.xpose.msra.mxu0 0.0
    %6949 = vmatprep.subr.mxu0 0.0
    %6950 = vmatpush1.xpose.msra.mxu0 0.0
    %6951 = vmatprep.subr.mxu0 0.0
    %6952 = vmatpush1.xpose.msra.mxu0 0.0
    %6953 = vmatprep.subr.mxu0 0.0
    %6954 = vmatpush1.xpose.msra.mxu0 0.0
    %6955 = vmatprep.subr.mxu0 0.0
    %6956 = vmatpush1.xpose.msra.mxu0 0.0
    %6957 = vmatprep.subr.mxu0 0.0
    %6958 = vmatpush1.xpose.msra.mxu0 0.0
    %6959 = vmatprep.subr.mxu0 0.0
    %6960 = vmatpush1.xpose.msra.mxu0 0.0
    %6961 = vmatprep.subr.mxu0 0.0
    %6962 = vmatpush1.xpose.msra.mxu0 0.0
    %6963 = vmatprep.subr.mxu0 0.0
    %6964 = vmatpush1.xpose.msra.mxu0 0.0
    %6965 = vmatprep.subr.mxu0 0.0
    %6966 = vmatpush1.xpose.msra.mxu0 0.0
    %6967 = vmatprep.subr.mxu0 0.0
    %6968 = vmatpush1.xpose.msra.mxu0 0.0
    %6969 = vmatprep.subr.mxu0 0.0
    %6970 = vmatpush1.xpose.msra.mxu0 0.0
    %6971 = vmatprep.subr.mxu0 0.0
    %6972 = vmatpush1.xpose.msra.mxu0 0.0
    %6973 = vmatprep.subr.mxu0 0.0
    %6974 = vmatpush1.xpose.msra.mxu0 0.0
    %6975 = vmatprep.subr.mxu0 0.0
    %6976 = vmatpush1.xpose.msra.mxu0 0.0
    %6977 = vmatprep.subr.mxu0 0.0
    %6978 = vmatpush1.xpose.msra.mxu0 0.0
    %6979 = vmatprep.subr.mxu0 0.0
    %6980 = vmatpush1.xpose.msra.mxu0 0.0
    %6981 = vmatprep.subr.mxu0 0.0
    %6982 = vmatpush1.xpose.msra.mxu0 0.0
    %6983 = vmatprep.subr.mxu0 0.0
    %6984 = vmatpush1.xpose.msra.mxu0 0.0
    %6985 = vmatprep.subr.mxu0 0.0
    %6986 = vmatpush1.xpose.msra.mxu0 0.0
    %6987 = vmatprep.subr.mxu0 0.0
    %6988 = vmatpush1.xpose.msra.mxu0 0.0
    %6989 = vmatprep.subr.mxu0 0.0
    %6990 = vmatpush1.xpose.msra.mxu0 0.0
    %6991 = vmatprep.subr.mxu0 0.0
    %6992 = vmatpush1.xpose.msra.mxu0 0.0
    %6993 = vmatprep.subr.mxu0 0.0
    %6994 = vmatpush1.xpose.msra.mxu0 0.0
    %6995 = vmatprep.mubr.f32.mxu0 0.0
    %6996 = vmatmul.mubr.f32.gmra.mrb[0].mxu0 %v6927
    %v6997 = vpop.f32.mrb[0].mxu0
    %v6998 = vadd.f32 %v100, %v6997
    %v6999 = vpop.f32.mrb[0].mxu0
    %7000 = vdwg.mxu0
    %7002 = vrot.lane.b32.xlu0 %v6736, 96
    %v7003 = vpop.permute.xlu0 %7002
    %v7005 = vsel %vm817, %v6762, 0
    %v7007 = vsel %vm817, %v7003, 0
    %7009 = vmatprep.subr.mxu0 0.0
    %7010 = vmatpush1.xpose.msra.mxu0 %v7007
    %7011 = vmatprep.subr.mxu0 0.0
    %7012 = vmatpush1.xpose.msra.mxu0 0.0
    %7013 = vmatprep.subr.mxu0 0.0
    %7014 = vmatpush1.xpose.msra.mxu0 0.0
    %7015 = vmatprep.subr.mxu0 0.0
    %7016 = vmatpush1.xpose.msra.mxu0 0.0
    %7017 = vmatprep.subr.mxu0 0.0
    %7018 = vmatpush1.xpose.msra.mxu0 0.0
    %7019 = vmatprep.subr.mxu0 0.0
    %7020 = vmatpush1.xpose.msra.mxu0 0.0
    %7021 = vmatprep.subr.mxu0 0.0
    %7022 = vmatpush1.xpose.msra.mxu0 0.0
    %7023 = vmatprep.subr.mxu0 0.0
    %7024 = vmatpush1.xpose.msra.mxu0 0.0
    %7025 = vmatprep.subr.mxu0 0.0
    %7026 = vmatpush1.xpose.msra.mxu0 0.0
    %7027 = vmatprep.subr.mxu0 0.0
    %7028 = vmatpush1.xpose.msra.mxu0 0.0
    %7029 = vmatprep.subr.mxu0 0.0
    %7030 = vmatpush1.xpose.msra.mxu0 0.0
    %7031 = vmatprep.subr.mxu0 0.0
    %7032 = vmatpush1.xpose.msra.mxu0 0.0
    %7033 = vmatprep.subr.mxu0 0.0
    %7034 = vmatpush1.xpose.msra.mxu0 0.0
    %7035 = vmatprep.subr.mxu0 0.0
    %7036 = vmatpush1.xpose.msra.mxu0 0.0
    %7037 = vmatprep.subr.mxu0 0.0
    %7038 = vmatpush1.xpose.msra.mxu0 0.0
    %7039 = vmatprep.subr.mxu0 0.0
    %7040 = vmatpush1.xpose.msra.mxu0 0.0
    %7041 = vmatprep.subr.mxu0 0.0
    %7042 = vmatpush1.xpose.msra.mxu0 0.0
    %7043 = vmatprep.subr.mxu0 0.0
    %7044 = vmatpush1.xpose.msra.mxu0 0.0
    %7045 = vmatprep.subr.mxu0 0.0
    %7046 = vmatpush1.xpose.msra.mxu0 0.0
    %7047 = vmatprep.subr.mxu0 0.0
    %7048 = vmatpush1.xpose.msra.mxu0 0.0
    %7049 = vmatprep.subr.mxu0 0.0
    %7050 = vmatpush1.xpose.msra.mxu0 0.0
    %7051 = vmatprep.subr.mxu0 0.0
    %7052 = vmatpush1.xpose.msra.mxu0 0.0
    %7053 = vmatprep.subr.mxu0 0.0
    %7054 = vmatpush1.xpose.msra.mxu0 0.0
    %7055 = vmatprep.subr.mxu0 0.0
    %7056 = vmatpush1.xpose.msra.mxu0 0.0
    %7057 = vmatprep.subr.mxu0 0.0
    %7058 = vmatpush1.xpose.msra.mxu0 0.0
    %7059 = vmatprep.subr.mxu0 0.0
    %7060 = vmatpush1.xpose.msra.mxu0 0.0
    %7061 = vmatprep.subr.mxu0 0.0
    %7062 = vmatpush1.xpose.msra.mxu0 0.0
    %7063 = vmatprep.subr.mxu0 0.0
    %7064 = vmatpush1.xpose.msra.mxu0 0.0
    %7065 = vmatprep.subr.mxu0 0.0
    %7066 = vmatpush1.xpose.msra.mxu0 0.0
    %7067 = vmatprep.subr.mxu0 0.0
    %7068 = vmatpush1.xpose.msra.mxu0 0.0
    %7069 = vmatprep.subr.mxu0 0.0
    %7070 = vmatpush1.xpose.msra.mxu0 0.0
    %7071 = vmatprep.subr.mxu0 0.0
    %7072 = vmatpush1.xpose.msra.mxu0 0.0
    %7073 = vmatprep.mubr.f32.mxu0 0.0
    %7074 = vmatmul.mubr.f32.gmra.mrb[0].mxu0 %v7005
    %v7075 = vpop.f32.mrb[0].mxu0
    %v7076 = vadd.f32 %v101, %v7075
    %v7077 = vpop.f32.mrb[0].mxu0
    %7078 = vdwg.mxu0
    %7080 = vrot.lane.b32.xlu0 %v6741, 96
    %v7081 = vpop.permute.xlu0 %7080
    %v7083 = vsel %vm817, %v6763, 0
    %v7085 = vsel %vm817, %v7081, 0
    %7087 = vmatprep.subr.mxu0 0.0
    %7088 = vmatpush1.xpose.msra.mxu0 %v7085
    %7089 = vmatprep.subr.mxu0 0.0
    %7090 = vmatpush1.xpose.msra.mxu0 0.0
    %7091 = vmatprep.subr.mxu0 0.0
    %7092 = vmatpush1.xpose.msra.mxu0 0.0
    %7093 = vmatprep.subr.mxu0 0.0
    %7094 = vmatpush1.xpose.msra.mxu0 0.0
    %7095 = vmatprep.subr.mxu0 0.0
    %7096 = vmatpush1.xpose.msra.mxu0 0.0
    %7097 = vmatprep.subr.mxu0 0.0
    %7098 = vmatpush1.xpose.msra.mxu0 0.0
    %7099 = vmatprep.subr.mxu0 0.0
    %7100 = vmatpush1.xpose.msra.mxu0 0.0
    %7101 = vmatprep.subr.mxu0 0.0
    %7102 = vmatpush1.xpose.msra.mxu0 0.0
    %7103 = vmatprep.subr.mxu0 0.0
    %7104 = vmatpush1.xpose.msra.mxu0 0.0
    %7105 = vmatprep.subr.mxu0 0.0
    %7106 = vmatpush1.xpose.msra.mxu0 0.0
    %7107 = vmatprep.subr.mxu0 0.0
    %7108 = vmatpush1.xpose.msra.mxu0 0.0
    %7109 = vmatprep.subr.mxu0 0.0
    %7110 = vmatpush1.xpose.msra.mxu0 0.0
    %7111 = vmatprep.subr.mxu0 0.0
    %7112 = vmatpush1.xpose.msra.mxu0 0.0
    %7113 = vmatprep.subr.mxu0 0.0
    %7114 = vmatpush1.xpose.msra.mxu0 0.0
    %7115 = vmatprep.subr.mxu0 0.0
    %7116 = vmatpush1.xpose.msra.mxu0 0.0
    %7117 = vmatprep.subr.mxu0 0.0
    %7118 = vmatpush1.xpose.msra.mxu0 0.0
    %7119 = vmatprep.subr.mxu0 0.0
    %7120 = vmatpush1.xpose.msra.mxu0 0.0
    %7121 = vmatprep.subr.mxu0 0.0
    %7122 = vmatpush1.xpose.msra.mxu0 0.0
    %7123 = vmatprep.subr.mxu0 0.0
    %7124 = vmatpush1.xpose.msra.mxu0 0.0
    %7125 = vmatprep.subr.mxu0 0.0
    %7126 = vmatpush1.xpose.msra.mxu0 0.0
    %7127 = vmatprep.subr.mxu0 0.0
    %7128 = vmatpush1.xpose.msra.mxu0 0.0
    %7129 = vmatprep.subr.mxu0 0.0
    %7130 = vmatpush1.xpose.msra.mxu0 0.0
    %7131 = vmatprep.subr.mxu0 0.0
    %7132 = vmatpush1.xpose.msra.mxu0 0.0
    %7133 = vmatprep.subr.mxu0 0.0
    %7134 = vmatpush1.xpose.msra.mxu0 0.0
    %7135 = vmatprep.subr.mxu0 0.0
    %7136 = vmatpush1.xpose.msra.mxu0 0.0
    %7137 = vmatprep.subr.mxu0 0.0
    %7138 = vmatpush1.xpose.msra.mxu0 0.0
    %7139 = vmatprep.subr.mxu0 0.0
    %7140 = vmatpush1.xpose.msra.mxu0 0.0
    %7141 = vmatprep.subr.mxu0 0.0
    %7142 = vmatpush1.xpose.msra.mxu0 0.0
    %7143 = vmatprep.subr.mxu0 0.0
    %7144 = vmatpush1.xpose.msra.mxu0 0.0
    %7145 = vmatprep.subr.mxu0 0.0
    %7146 = vmatpush1.xpose.msra.mxu0 0.0
    %7147 = vmatprep.subr.mxu0 0.0
    %7148 = vmatpush1.xpose.msra.mxu0 0.0
    %7149 = vmatprep.subr.mxu0 0.0
    %7150 = vmatpush1.xpose.msra.mxu0 0.0
    %7151 = vmatprep.mubr.f32.mxu0 0.0
    %7152 = vmatmul.mubr.f32.gmra.mrb[0].mxu0 %v7083
    %v7153 = vpop.f32.mrb[0].mxu0
    %v7154 = vadd.f32 %v102, %v7153
    %v7155 = vpop.f32.mrb[0].mxu0
    %7156 = vdwg.mxu0
    %7158 = vrot.lane.b32.xlu0 %v6746, 96
    %v7159 = vpop.permute.xlu0 %7158
    %v7161 = vsel %vm817, %v6764, 0
    %v7163 = vsel %vm817, %v7159, 0
    %7165 = vmatprep.subr.mxu0 0.0
    %7166 = vmatpush1.xpose.msra.mxu0 %v7163
    %7167 = vmatprep.subr.mxu0 0.0
    %7168 = vmatpush1.xpose.msra.mxu0 0.0
    %7169 = vmatprep.subr.mxu0 0.0
    %7170 = vmatpush1.xpose.msra.mxu0 0.0
    %7171 = vmatprep.subr.mxu0 0.0
    %7172 = vmatpush1.xpose.msra.mxu0 0.0
    %7173 = vmatprep.subr.mxu0 0.0
    %7174 = vmatpush1.xpose.msra.mxu0 0.0
    %7175 = vmatprep.subr.mxu0 0.0
    %7176 = vmatpush1.xpose.msra.mxu0 0.0
    %7177 = vmatprep.subr.mxu0 0.0
    %7178 = vmatpush1.xpose.msra.mxu0 0.0
    %7179 = vmatprep.subr.mxu0 0.0
    %7180 = vmatpush1.xpose.msra.mxu0 0.0
    %7181 = vmatprep.subr.mxu0 0.0
    %7182 = vmatpush1.xpose.msra.mxu0 0.0
    %7183 = vmatprep.subr.mxu0 0.0
    %7184 = vmatpush1.xpose.msra.mxu0 0.0
    %7185 = vmatprep.subr.mxu0 0.0
    %7186 = vmatpush1.xpose.msra.mxu0 0.0
    %7187 = vmatprep.subr.mxu0 0.0
    %7188 = vmatpush1.xpose.msra.mxu0 0.0
    %7189 = vmatprep.subr.mxu0 0.0
    %7190 = vmatpush1.xpose.msra.mxu0 0.0
    %7191 = vmatprep.subr.mxu0 0.0
    %7192 = vmatpush1.xpose.msra.mxu0 0.0
    %7193 = vmatprep.subr.mxu0 0.0
    %7194 = vmatpush1.xpose.msra.mxu0 0.0
    %7195 = vmatprep.subr.mxu0 0.0
    %7196 = vmatpush1.xpose.msra.mxu0 0.0
    %7197 = vmatprep.subr.mxu0 0.0
    %7198 = vmatpush1.xpose.msra.mxu0 0.0
    %7199 = vmatprep.subr.mxu0 0.0
    %7200 = vmatpush1.xpose.msra.mxu0 0.0
    %7201 = vmatprep.subr.mxu0 0.0
    %7202 = vmatpush1.xpose.msra.mxu0 0.0
    %7203 = vmatprep.subr.mxu0 0.0
    %7204 = vmatpush1.xpose.msra.mxu0 0.0
    %7205 = vmatprep.subr.mxu0 0.0
    %7206 = vmatpush1.xpose.msra.mxu0 0.0
    %7207 = vmatprep.subr.mxu0 0.0
    %7208 = vmatpush1.xpose.msra.mxu0 0.0
    %7209 = vmatprep.subr.mxu0 0.0
    %7210 = vmatpush1.xpose.msra.mxu0 0.0
    %7211 = vmatprep.subr.mxu0 0.0
    %7212 = vmatpush1.xpose.msra.mxu0 0.0
    %7213 = vmatprep.subr.mxu0 0.0
    %7214 = vmatpush1.xpose.msra.mxu0 0.0
    %7215 = vmatprep.subr.mxu0 0.0
    %7216 = vmatpush1.xpose.msra.mxu0 0.0
    %7217 = vmatprep.subr.mxu0 0.0
    %7218 = vmatpush1.xpose.msra.mxu0 0.0
    %7219 = vmatprep.subr.mxu0 0.0
    %7220 = vmatpush1.xpose.msra.mxu0 0.0
    %7221 = vmatprep.subr.mxu0 0.0
    %7222 = vmatpush1.xpose.msra.mxu0 0.0
    %7223 = vmatprep.subr.mxu0 0.0
    %7224 = vmatpush1.xpose.msra.mxu0 0.0
    %7225 = vmatprep.subr.mxu0 0.0
    %7226 = vmatpush1.xpose.msra.mxu0 0.0
    %7227 = vmatprep.subr.mxu0 0.0
    %7228 = vmatpush1.xpose.msra.mxu0 0.0
    %7229 = vmatprep.mubr.f32.mxu0 0.0
    %7230 = vmatmul.mubr.f32.gmra.mrb[0].mxu0 %v7161
    %v7231 = vpop.f32.mrb[0].mxu0
    %v7232 = vadd.f32 %v103, %v7231
    %v7233 = vpop.f32.mrb[0].mxu0
    %7234 = vdwg.mxu0
    %7236 = vrot.lane.b32.xlu0 %v6751, 96
    %v7237 = vpop.permute.xlu0 %7236
    %v7239 = vsel %vm817, %v6765, 0
    %v7241 = vsel %vm817, %v7237, 0
    %7243 = vmatprep.subr.mxu0 0.0
    %7244 = vmatpush1.xpose.msra.mxu0 %v7241
    %7245 = vmatprep.subr.mxu0 0.0
    %7246 = vmatpush1.xpose.msra.mxu0 0.0
    %7247 = vmatprep.subr.mxu0 0.0
    %7248 = vmatpush1.xpose.msra.mxu0 0.0
    %7249 = vmatprep.subr.mxu0 0.0
    %7250 = vmatpush1.xpose.msra.mxu0 0.0
    %7251 = vmatprep.subr.mxu0 0.0
    %7252 = vmatpush1.xpose.msra.mxu0 0.0
    %7253 = vmatprep.subr.mxu0 0.0
    %7254 = vmatpush1.xpose.msra.mxu0 0.0
    %7255 = vmatprep.subr.mxu0 0.0
    %7256 = vmatpush1.xpose.msra.mxu0 0.0
    %7257 = vmatprep.subr.mxu0 0.0
    %7258 = vmatpush1.xpose.msra.mxu0 0.0
    %7259 = vmatprep.subr.mxu0 0.0
    %7260 = vmatpush1.xpose.msra.mxu0 0.0
    %7261 = vmatprep.subr.mxu0 0.0
    %7262 = vmatpush1.xpose.msra.mxu0 0.0
    %7263 = vmatprep.subr.mxu0 0.0
    %7264 = vmatpush1.xpose.msra.mxu0 0.0
    %7265 = vmatprep.subr.mxu0 0.0
    %7266 = vmatpush1.xpose.msra.mxu0 0.0
    %7267 = vmatprep.subr.mxu0 0.0
    %7268 = vmatpush1.xpose.msra.mxu0 0.0
    %7269 = vmatprep.subr.mxu0 0.0
    %7270 = vmatpush1.xpose.msra.mxu0 0.0
    %7271 = vmatprep.subr.mxu0 0.0
    %7272 = vmatpush1.xpose.msra.mxu0 0.0
    %7273 = vmatprep.subr.mxu0 0.0
    %7274 = vmatpush1.xpose.msra.mxu0 0.0
    %7275 = vmatprep.subr.mxu0 0.0
    %7276 = vmatpush1.xpose.msra.mxu0 0.0
    %7277 = vmatprep.subr.mxu0 0.0
    %7278 = vmatpush1.xpose.msra.mxu0 0.0
    %7279 = vmatprep.subr.mxu0 0.0
    %7280 = vmatpush1.xpose.msra.mxu0 0.0
    %7281 = vmatprep.subr.mxu0 0.0
    %7282 = vmatpush1.xpose.msra.mxu0 0.0
    %7283 = vmatprep.subr.mxu0 0.0
    %7284 = vmatpush1.xpose.msra.mxu0 0.0
    %7285 = vmatprep.subr.mxu0 0.0
    %7286 = vmatpush1.xpose.msra.mxu0 0.0
    %7287 = vmatprep.subr.mxu0 0.0
    %7288 = vmatpush1.xpose.msra.mxu0 0.0
    %7289 = vmatprep.subr.mxu0 0.0
    %7290 = vmatpush1.xpose.msra.mxu0 0.0
    %7291 = vmatprep.subr.mxu0 0.0
    %7292 = vmatpush1.xpose.msra.mxu0 0.0
    %7293 = vmatprep.subr.mxu0 0.0
    %7294 = vmatpush1.xpose.msra.mxu0 0.0
    %7295 = vmatprep.subr.mxu0 0.0
    %7296 = vmatpush1.xpose.msra.mxu0 0.0
    %7297 = vmatprep.subr.mxu0 0.0
    %7298 = vmatpush1.xpose.msra.mxu0 0.0
    %7299 = vmatprep.subr.mxu0 0.0
    %7300 = vmatpush1.xpose.msra.mxu0 0.0
    %7301 = vmatprep.subr.mxu0 0.0
    %7302 = vmatpush1.xpose.msra.mxu0 0.0
    %7303 = vmatprep.subr.mxu0 0.0
    %7304 = vmatpush1.xpose.msra.mxu0 0.0
    %7305 = vmatprep.subr.mxu0 0.0
    %7306 = vmatpush1.xpose.msra.mxu0 0.0
    %7307 = vmatprep.mubr.f32.mxu0 0.0
    %7308 = vmatmul.mubr.f32.gmra.mrb[0].mxu0 %v7239
    %v7309 = vpop.f32.mrb[0].mxu0
    %v7310 = vadd.f32 %v104, %v7309
    %v7311 = vpop.f32.mrb[0].mxu0
    %7312 = vdwg.mxu0
    %7314 = vrot.lane.b32.xlu0 %v6756, 96
    %v7315 = vpop.permute.xlu0 %7314
    %v7317 = vsel %vm817, %v6766, 0
    %v7319 = vsel %vm817, %v7315, 0
    %7321 = vmatprep.subr.mxu0 0.0
    %7322 = vmatpush1.xpose.msra.mxu0 %v7319
    %7323 = vmatprep.subr.mxu0 0.0
    %7324 = vmatpush1.xpose.msra.mxu0 0.0
    %7325 = vmatprep.subr.mxu0 0.0
    %7326 = vmatpush1.xpose.msra.mxu0 0.0
    %7327 = vmatprep.subr.mxu0 0.0
    %7328 = vmatpush1.xpose.msra.mxu0 0.0
    %7329 = vmatprep.subr.mxu0 0.0
    %7330 = vmatpush1.xpose.msra.mxu0 0.0
    %7331 = vmatprep.subr.mxu0 0.0
    %7332 = vmatpush1.xpose.msra.mxu0 0.0
    %7333 = vmatprep.subr.mxu0 0.0
    %7334 = vmatpush1.xpose.msra.mxu0 0.0
    %7335 = vmatprep.subr.mxu0 0.0
    %7336 = vmatpush1.xpose.msra.mxu0 0.0
    %7337 = vmatprep.subr.mxu0 0.0
    %7338 = vmatpush1.xpose.msra.mxu0 0.0
    %7339 = vmatprep.subr.mxu0 0.0
    %7340 = vmatpush1.xpose.msra.mxu0 0.0
    %7341 = vmatprep.subr.mxu0 0.0
    %7342 = vmatpush1.xpose.msra.mxu0 0.0
    %7343 = vmatprep.subr.mxu0 0.0
    %7344 = vmatpush1.xpose.msra.mxu0 0.0
    %7345 = vmatprep.subr.mxu0 0.0
    %7346 = vmatpush1.xpose.msra.mxu0 0.0
    %7347 = vmatprep.subr.mxu0 0.0
    %7348 = vmatpush1.xpose.msra.mxu0 0.0
    %7349 = vmatprep.subr.mxu0 0.0
    %7350 = vmatpush1.xpose.msra.mxu0 0.0
    %7351 = vmatprep.subr.mxu0 0.0
    %7352 = vmatpush1.xpose.msra.mxu0 0.0
    %7353 = vmatprep.subr.mxu0 0.0
    %7354 = vmatpush1.xpose.msra.mxu0 0.0
    %7355 = vmatprep.subr.mxu0 0.0
    %7356 = vmatpush1.xpose.msra.mxu0 0.0
    %7357 = vmatprep.subr.mxu0 0.0
    %7358 = vmatpush1.xpose.msra.mxu0 0.0
    %7359 = vmatprep.subr.mxu0 0.0
    %7360 = vmatpush1.xpose.msra.mxu0 0.0
    %7361 = vmatprep.subr.mxu0 0.0
    %7362 = vmatpush1.xpose.msra.mxu0 0.0
    %7363 = vmatprep.subr.mxu0 0.0
    %7364 = vmatpush1.xpose.msra.mxu0 0.0
    %7365 = vmatprep.subr.mxu0 0.0
    %7366 = vmatpush1.xpose.msra.mxu0 0.0
    %7367 = vmatprep.subr.mxu0 0.0
    %7368 = vmatpush1.xpose.msra.mxu0 0.0
    %7369 = vmatprep.subr.mxu0 0.0
    %7370 = vmatpush1.xpose.msra.mxu0 0.0
    %7371 = vmatprep.subr.mxu0 0.0
    %7372 = vmatpush1.xpose.msra.mxu0 0.0
    %7373 = vmatprep.subr.mxu0 0.0
    %7374 = vmatpush1.xpose.msra.mxu0 0.0
    %7375 = vmatprep.subr.mxu0 0.0
    %7376 = vmatpush1.xpose.msra.mxu0 0.0
    %7377 = vmatprep.subr.mxu0 0.0
    %7378 = vmatpush1.xpose.msra.mxu0 0.0
    %7379 = vmatprep.subr.mxu0 0.0
    %7380 = vmatpush1.xpose.msra.mxu0 0.0
    %7381 = vmatprep.subr.mxu0 0.0
    %7382 = vmatpush1.xpose.msra.mxu0 0.0
    %7383 = vmatprep.subr.mxu0 0.0
    %7384 = vmatpush1.xpose.msra.mxu0 0.0
    %7385 = vmatprep.mubr.f32.mxu0 0.0
    %7386 = vmatmul.mubr.f32.gmra.mrb[0].mxu0 %v7317
    %v7387 = vpop.f32.mrb[0].mxu0
    %v7388 = vadd.f32 %v105, %v7387
    %v7389 = vpop.f32.mrb[0].mxu0
    %7390 = vdwg.mxu0
    %v7391 = vsel %vm1439, %v6842, -inf
    %7392 = vmax.xlane.f32.xlu0 %v7391
    %v7393 = vpop.xlane.xlu0 %7392
    %v7394 = vsel %vm1439, %v6920, -inf
    %7395 = vmax.xlane.f32.xlu0 %v7394
    %v7396 = vpop.xlane.xlu0 %7395
    %v7397 = vsel %vm1439, %v6998, -inf
    %7398 = vmax.xlane.f32.xlu0 %v7397
    %v7399 = vpop.xlane.xlu0 %7398
    %v7400 = vsel %vm1439, %v7076, -inf
    %7401 = vmax.xlane.f32.xlu0 %v7400
    %v7402 = vpop.xlane.xlu0 %7401
    %v7403 = vsel %vm1439, %v7154, -inf
    %7404 = vmax.xlane.f32.xlu0 %v7403
    %v7405 = vpop.xlane.xlu0 %7404
    %v7406 = vsel %vm1439, %v7232, -inf
    %7407 = vmax.xlane.f32.xlu0 %v7406
    %v7408 = vpop.xlane.xlu0 %7407
    %v7409 = vsel %vm1439, %v7310, -inf
    %7410 = vmax.xlane.f32.xlu0 %v7409
    %v7411 = vpop.xlane.xlu0 %7410
    %v7412 = vsel %vm1439, %v7388, -inf
    %7413 = vmax.xlane.f32.xlu0 %v7412
    %v7414 = vpop.xlane.xlu0 %7413
    %v7415 = vsub.f32 %v6842, %v7393
    %v7416 = vsub.f32 %v6920, %v7396
    %v7417 = vsub.f32 %v6998, %v7399
    %v7418 = vsub.f32 %v7076, %v7402
    %v7419 = vsub.f32 %v7154, %v7405
    %v7420 = vsub.f32 %v7232, %v7408
    %v7421 = vsub.f32 %v7310, %v7411
    %v7422 = vsub.f32 %v7388, %v7414
    %v7423 = vmul.f32 %v7415, 1.442695
    %v7424 = vpow.pop %v7423
    %v7425 = vmul.f32 %v7416, 1.442695
    %v7426 = vpow.pop %v7425
    %v7427 = vmul.f32 %v7417, 1.442695
    %v7428 = vpow.pop %v7427
    %v7429 = vmul.f32 %v7418, 1.442695
    %v7430 = vpow.pop %v7429
    %v7431 = vmul.f32 %v7419, 1.442695
    %v7432 = vpow.pop %v7431
    %v7433 = vmul.f32 %v7420, 1.442695
    %v7434 = vpow.pop %v7433
    %v7435 = vmul.f32 %v7421, 1.442695
    %v7436 = vpow.pop %v7435
    %v7437 = vmul.f32 %v7422, 1.442695
    %v7438 = vpow.pop %v7437
    %v7439 = vsel %vm1439, %v7424, 0.0
    %7440 = vadd.xlane.f32.xlu0 %v7439
    %v7441 = vpop.xlane.xlu0 %7440
    %v7442 = vsel %vm1439, %v7426, 0.0
    %7443 = vadd.xlane.f32.xlu0 %v7442
    %v7444 = vpop.xlane.xlu0 %7443
    %v7445 = vsel %vm1439, %v7428, 0.0
    %7446 = vadd.xlane.f32.xlu0 %v7445
    %v7447 = vpop.xlane.xlu0 %7446
    %v7448 = vsel %vm1439, %v7430, 0.0
    %7449 = vadd.xlane.f32.xlu0 %v7448
    %v7450 = vpop.xlane.xlu0 %7449
    %v7451 = vsel %vm1439, %v7432, 0.0
    %7452 = vadd.xlane.f32.xlu0 %v7451
    %v7453 = vpop.xlane.xlu0 %7452
    %v7454 = vsel %vm1439, %v7434, 0.0
    %7455 = vadd.xlane.f32.xlu0 %v7454
    %v7456 = vpop.xlane.xlu0 %7455
    %v7457 = vsel %vm1439, %v7436, 0.0
    %7458 = vadd.xlane.f32.xlu0 %v7457
    %v7459 = vpop.xlane.xlu0 %7458
    %v7460 = vsel %vm1439, %v7438, 0.0
    %7461 = vadd.xlane.f32.xlu0 %v7460
    %v7462 = vpop.xlane.xlu0 %7461
    %v7463 = vrcp.pop %v7441
    %v7464 = vmul.f32 %v7424, %v7463
    %v7465 = vrcp.pop %v7444
    %v7466 = vmul.f32 %v7426, %v7465
    %v7467 = vrcp.pop %v7447
    %v7468 = vmul.f32 %v7428, %v7467
    %v7469 = vrcp.pop %v7450
    %v7470 = vmul.f32 %v7430, %v7469
    %v7471 = vrcp.pop %v7453
    %v7472 = vmul.f32 %v7432, %v7471
    %v7473 = vrcp.pop %v7456
    %v7474 = vmul.f32 %v7434, %v7473
    %v7475 = vrcp.pop %v7459
    %v7476 = vmul.f32 %v7436, %v7475
    %v7477 = vrcp.pop %v7462
    %v7478 = vmul.f32 %v7438, %v7477
    %7479 = vrot.lane.b32.xlu0 %v6721, 64
    %v7480 = vpop.permute.xlu0 %7479
    %v7483 = vsel %vm1439, %v7464, 0
    %7485 = vmatprep.subr.mxu0 0.0
    %7486 = vmatpush1.msra.mxu0 %v7480
    %7487 = vmatprep.subr.mxu0 0.0
    %7488 = vmatpush1.msra.mxu0 0.0
    %7489 = vmatprep.subr.mxu0 0.0
    %7490 = vmatpush1.msra.mxu0 0.0
    %7491 = vmatprep.subr.mxu0 0.0
    %7492 = vmatpush1.msra.mxu0 0.0
    %7493 = vmatprep.subr.mxu0 0.0
    %7494 = vmatpush1.msra.mxu0 0.0
    %7495 = vmatprep.subr.mxu0 0.0
    %7496 = vmatpush1.msra.mxu0 0.0
    %7497 = vmatprep.subr.mxu0 0.0
    %7498 = vmatpush1.msra.mxu0 0.0
    %7499 = vmatprep.subr.mxu0 0.0
    %7500 = vmatpush1.msra.mxu0 0.0
    %7501 = vmatprep.subr.mxu0 0.0
    %7502 = vmatpush1.msra.mxu0 0.0
    %7503 = vmatprep.subr.mxu0 0.0
    %7504 = vmatpush1.msra.mxu0 0.0
    %7505 = vmatprep.subr.mxu0 0.0
    %7506 = vmatpush1.msra.mxu0 0.0
    %7507 = vmatprep.subr.mxu0 0.0
    %7508 = vmatpush1.msra.mxu0 0.0
    %7509 = vmatprep.subr.mxu0 0.0
    %7510 = vmatpush1.msra.mxu0 0.0
    %7511 = vmatprep.subr.mxu0 0.0
    %7512 = vmatpush1.msra.mxu0 0.0
    %7513 = vmatprep.subr.mxu0 0.0
    %7514 = vmatpush1.msra.mxu0 0.0
    %7515 = vmatprep.subr.mxu0 0.0
    %7516 = vmatpush1.msra.mxu0 0.0
    %7517 = vmatprep.subr.mxu0 0.0
    %7518 = vmatpush1.msra.mxu0 0.0
    %7519 = vmatprep.subr.mxu0 0.0
    %7520 = vmatpush1.msra.mxu0 0.0
    %7521 = vmatprep.subr.mxu0 0.0
    %7522 = vmatpush1.msra.mxu0 0.0
    %7523 = vmatprep.subr.mxu0 0.0
    %7524 = vmatpush1.msra.mxu0 0.0
    %7525 = vmatprep.subr.mxu0 0.0
    %7526 = vmatpush1.msra.mxu0 0.0
    %7527 = vmatprep.subr.mxu0 0.0
    %7528 = vmatpush1.msra.mxu0 0.0
    %7529 = vmatprep.subr.mxu0 0.0
    %7530 = vmatpush1.msra.mxu0 0.0
    %7531 = vmatprep.subr.mxu0 0.0
    %7532 = vmatpush1.msra.mxu0 0.0
    %7533 = vmatprep.subr.mxu0 0.0
    %7534 = vmatpush1.msra.mxu0 0.0
    %7535 = vmatprep.subr.mxu0 0.0
    %7536 = vmatpush1.msra.mxu0 0.0
    %7537 = vmatprep.subr.mxu0 0.0
    %7538 = vmatpush1.msra.mxu0 0.0
    %7539 = vmatprep.subr.mxu0 0.0
    %7540 = vmatpush1.msra.mxu0 0.0
    %7541 = vmatprep.subr.mxu0 0.0
    %7542 = vmatpush1.msra.mxu0 0.0
    %7543 = vmatprep.subr.mxu0 0.0
    %7544 = vmatpush1.msra.mxu0 0.0
    %7545 = vmatprep.subr.mxu0 0.0
    %7546 = vmatpush1.msra.mxu0 0.0
    %7547 = vmatprep.subr.mxu0 0.0
    %7548 = vmatpush1.msra.mxu0 0.0
    %7549 = vmatprep.mubr.f32.mxu0 0.0
    %7550 = vmatmul.mubr.f32.gmra.mrb[0].mxu0 %v7483
    %v7551 = vpop.f32.mrb[0].mxu0
    %v7552 = vadd.f32 0.0, %v7551
    %v7553 = vpop.f32.mrb[0].mxu0
    %7554 = vdwg.mxu0
    %7555 = vrot.lane.b32.xlu0 %v6726, 64
    %v7556 = vpop.permute.xlu0 %7555
    %v7559 = vsel %vm1439, %v7466, 0
    %7561 = vmatprep.subr.mxu0 0.0
    %7562 = vmatpush1.msra.mxu0 %v7556
    %7563 = vmatprep.subr.mxu0 0.0
    %7564 = vmatpush1.msra.mxu0 0.0
    %7565 = vmatprep.subr.mxu0 0.0
    %7566 = vmatpush1.msra.mxu0 0.0
    %7567 = vmatprep.subr.mxu0 0.0
    %7568 = vmatpush1.msra.mxu0 0.0
    %7569 = vmatprep.subr.mxu0 0.0
    %7570 = vmatpush1.msra.mxu0 0.0
    %7571 = vmatprep.subr.mxu0 0.0
    %7572 = vmatpush1.msra.mxu0 0.0
    %7573 = vmatprep.subr.mxu0 0.0
    %7574 = vmatpush1.msra.mxu0 0.0
    %7575 = vmatprep.subr.mxu0 0.0
    %7576 = vmatpush1.msra.mxu0 0.0
    %7577 = vmatprep.subr.mxu0 0.0
    %7578 = vmatpush1.msra.mxu0 0.0
    %7579 = vmatprep.subr.mxu0 0.0
    %7580 = vmatpush1.msra.mxu0 0.0
    %7581 = vmatprep.subr.mxu0 0.0
    %7582 = vmatpush1.msra.mxu0 0.0
    %7583 = vmatprep.subr.mxu0 0.0
    %7584 = vmatpush1.msra.mxu0 0.0
    %7585 = vmatprep.subr.mxu0 0.0
    %7586 = vmatpush1.msra.mxu0 0.0
    %7587 = vmatprep.subr.mxu0 0.0
    %7588 = vmatpush1.msra.mxu0 0.0
    %7589 = vmatprep.subr.mxu0 0.0
    %7590 = vmatpush1.msra.mxu0 0.0
    %7591 = vmatprep.subr.mxu0 0.0
    %7592 = vmatpush1.msra.mxu0 0.0
    %7593 = vmatprep.subr.mxu0 0.0
    %7594 = vmatpush1.msra.mxu0 0.0
    %7595 = vmatprep.subr.mxu0 0.0
    %7596 = vmatpush1.msra.mxu0 0.0
    %7597 = vmatprep.subr.mxu0 0.0
    %7598 = vmatpush1.msra.mxu0 0.0
    %7599 = vmatprep.subr.mxu0 0.0
    %7600 = vmatpush1.msra.mxu0 0.0
    %7601 = vmatprep.subr.mxu0 0.0
    %7602 = vmatpush1.msra.mxu0 0.0
    %7603 = vmatprep.subr.mxu0 0.0
    %7604 = vmatpush1.msra.mxu0 0.0
    %7605 = vmatprep.subr.mxu0 0.0
    %7606 = vmatpush1.msra.mxu0 0.0
    %7607 = vmatprep.subr.mxu0 0.0
    %7608 = vmatpush1.msra.mxu0 0.0
    %7609 = vmatprep.subr.mxu0 0.0
    %7610 = vmatpush1.msra.mxu0 0.0
    %7611 = vmatprep.subr.mxu0 0.0
    %7612 = vmatpush1.msra.mxu0 0.0
    %7613 = vmatprep.subr.mxu0 0.0
    %7614 = vmatpush1.msra.mxu0 0.0
    %7615 = vmatprep.subr.mxu0 0.0
    %7616 = vmatpush1.msra.mxu0 0.0
    %7617 = vmatprep.subr.mxu0 0.0
    %7618 = vmatpush1.msra.mxu0 0.0
    %7619 = vmatprep.subr.mxu0 0.0
    %7620 = vmatpush1.msra.mxu0 0.0
    %7621 = vmatprep.subr.mxu0 0.0
    %7622 = vmatpush1.msra.mxu0 0.0
    %7623 = vmatprep.subr.mxu0 0.0
    %7624 = vmatpush1.msra.mxu0 0.0
    %7625 = vmatprep.mubr.f32.mxu0 0.0
    %7626 = vmatmul.mubr.f32.gmra.mrb[0].mxu0 %v7559
    %v7627 = vpop.f32.mrb[0].mxu0
    %v7628 = vadd.f32 0.0, %v7627
    %v7629 = vpop.f32.mrb[0].mxu0
    %7630 = vdwg.mxu0
    %7631 = vrot.lane.b32.xlu0 %v6731, 64
    %v7632 = vpop.permute.xlu0 %7631
    %v7635 = vsel %vm1439, %v7468, 0
    %7637 = vmatprep.subr.mxu0 0.0
    %7638 = vmatpush1.msra.mxu0 %v7632
    %7639 = vmatprep.subr.mxu0 0.0
    %7640 = vmatpush1.msra.mxu0 0.0
    %7641 = vmatprep.subr.mxu0 0.0
    %7642 = vmatpush1.msra.mxu0 0.0
    %7643 = vmatprep.subr.mxu0 0.0
    %7644 = vmatpush1.msra.mxu0 0.0
    %7645 = vmatprep.subr.mxu0 0.0
    %7646 = vmatpush1.msra.mxu0 0.0
    %7647 = vmatprep.subr.mxu0 0.0
    %7648 = vmatpush1.msra.mxu0 0.0
    %7649 = vmatprep.subr.mxu0 0.0
    %7650 = vmatpush1.msra.mxu0 0.0
    %7651 = vmatprep.subr.mxu0 0.0
    %7652 = vmatpush1.msra.mxu0 0.0
    %7653 = vmatprep.subr.mxu0 0.0
    %7654 = vmatpush1.msra.mxu0 0.0
    %7655 = vmatprep.subr.mxu0 0.0
    %7656 = vmatpush1.msra.mxu0 0.0
    %7657 = vmatprep.subr.mxu0 0.0
    %7658 = vmatpush1.msra.mxu0 0.0
    %7659 = vmatprep.subr.mxu0 0.0
    %7660 = vmatpush1.msra.mxu0 0.0
    %7661 = vmatprep.subr.mxu0 0.0
    %7662 = vmatpush1.msra.mxu0 0.0
    %7663 = vmatprep.subr.mxu0 0.0
    %7664 = vmatpush1.msra.mxu0 0.0
    %7665 = vmatprep.subr.mxu0 0.0
    %7666 = vmatpush1.msra.mxu0 0.0
    %7667 = vmatprep.subr.mxu0 0.0
    %7668 = vmatpush1.msra.mxu0 0.0
    %7669 = vmatprep.subr.mxu0 0.0
    %7670 = vmatpush1.msra.mxu0 0.0
    %7671 = vmatprep.subr.mxu0 0.0
    %7672 = vmatpush1.msra.mxu0 0.0
    %7673 = vmatprep.subr.mxu0 0.0
    %7674 = vmatpush1.msra.mxu0 0.0
    %7675 = vmatprep.subr.mxu0 0.0
    %7676 = vmatpush1.msra.mxu0 0.0
    %7677 = vmatprep.subr.mxu0 0.0
    %7678 = vmatpush1.msra.mxu0 0.0
    %7679 = vmatprep.subr.mxu0 0.0
    %7680 = vmatpush1.msra.mxu0 0.0
    %7681 = vmatprep.subr.mxu0 0.0
    %7682 = vmatpush1.msra.mxu0 0.0
    %7683 = vmatprep.subr.mxu0 0.0
    %7684 = vmatpush1.msra.mxu0 0.0
    %7685 = vmatprep.subr.mxu0 0.0
    %7686 = vmatpush1.msra.mxu0 0.0
    %7687 = vmatprep.subr.mxu0 0.0
    %7688 = vmatpush1.msra.mxu0 0.0
    %7689 = vmatprep.subr.mxu0 0.0
    %7690 = vmatpush1.msra.mxu0 0.0
    %7691 = vmatprep.subr.mxu0 0.0
    %7692 = vmatpush1.msra.mxu0 0.0
    %7693 = vmatprep.subr.mxu0 0.0
    %7694 = vmatpush1.msra.mxu0 0.0
    %7695 = vmatprep.subr.mxu0 0.0
    %7696 = vmatpush1.msra.mxu0 0.0
    %7697 = vmatprep.subr.mxu0 0.0
    %7698 = vmatpush1.msra.mxu0 0.0
    %7699 = vmatprep.subr.mxu0 0.0
    %7700 = vmatpush1.msra.mxu0 0.0
    %7701 = vmatprep.mubr.f32.mxu0 0.0
    %7702 = vmatmul.mubr.f32.gmra.mrb[0].mxu0 %v7635
    %v7703 = vpop.f32.mrb[0].mxu0
    %v7704 = vadd.f32 0.0, %v7703
    %v7705 = vpop.f32.mrb[0].mxu0
    %7706 = vdwg.mxu0
    %7707 = vrot.lane.b32.xlu0 %v6736, 64
    %v7708 = vpop.permute.xlu0 %7707
    %v7711 = vsel %vm1439, %v7470, 0
    %7713 = vmatprep.subr.mxu0 0.0
    %7714 = vmatpush1.msra.mxu0 %v7708
    %7715 = vmatprep.subr.mxu0 0.0
    %7716 = vmatpush1.msra.mxu0 0.0
    %7717 = vmatprep.subr.mxu0 0.0
    %7718 = vmatpush1.msra.mxu0 0.0
    %7719 = vmatprep.subr.mxu0 0.0
    %7720 = vmatpush1.msra.mxu0 0.0
    %7721 = vmatprep.subr.mxu0 0.0
    %7722 = vmatpush1.msra.mxu0 0.0
    %7723 = vmatprep.subr.mxu0 0.0
    %7724 = vmatpush1.msra.mxu0 0.0
    %7725 = vmatprep.subr.mxu0 0.0
    %7726 = vmatpush1.msra.mxu0 0.0
    %7727 = vmatprep.subr.mxu0 0.0
    %7728 = vmatpush1.msra.mxu0 0.0
    %7729 = vmatprep.subr.mxu0 0.0
    %7730 = vmatpush1.msra.mxu0 0.0
    %7731 = vmatprep.subr.mxu0 0.0
    %7732 = vmatpush1.msra.mxu0 0.0
    %7733 = vmatprep.subr.mxu0 0.0
    %7734 = vmatpush1.msra.mxu0 0.0
    %7735 = vmatprep.subr.mxu0 0.0
    %7736 = vmatpush1.msra.mxu0 0.0
    %7737 = vmatprep.subr.mxu0 0.0
    %7738 = vmatpush1.msra.mxu0 0.0
    %7739 = vmatprep.subr.mxu0 0.0
    %7740 = vmatpush1.msra.mxu0 0.0
    %7741 = vmatprep.subr.mxu0 0.0
    %7742 = vmatpush1.msra.mxu0 0.0
    %7743 = vmatprep.subr.mxu0 0.0
    %7744 = vmatpush1.msra.mxu0 0.0
    %7745 = vmatprep.subr.mxu0 0.0
    %7746 = vmatpush1.msra.mxu0 0.0
    %7747 = vmatprep.subr.mxu0 0.0
    %7748 = vmatpush1.msra.mxu0 0.0
    %7749 = vmatprep.subr.mxu0 0.0
    %7750 = vmatpush1.msra.mxu0 0.0
    %7751 = vmatprep.subr.mxu0 0.0
    %7752 = vmatpush1.msra.mxu0 0.0
    %7753 = vmatprep.subr.mxu0 0.0
    %7754 = vmatpush1.msra.mxu0 0.0
    %7755 = vmatprep.subr.mxu0 0.0
    %7756 = vmatpush1.msra.mxu0 0.0
    %7757 = vmatprep.subr.mxu0 0.0
    %7758 = vmatpush1.msra.mxu0 0.0
    %7759 = vmatprep.subr.mxu0 0.0
    %7760 = vmatpush1.msra.mxu0 0.0
    %7761 = vmatprep.subr.mxu0 0.0
    %7762 = vmatpush1.msra.mxu0 0.0
    %7763 = vmatprep.subr.mxu0 0.0
    %7764 = vmatpush1.msra.mxu0 0.0
    %7765 = vmatprep.subr.mxu0 0.0
    %7766 = vmatpush1.msra.mxu0 0.0
    %7767 = vmatprep.subr.mxu0 0.0
    %7768 = vmatpush1.msra.mxu0 0.0
    %7769 = vmatprep.subr.mxu0 0.0
    %7770 = vmatpush1.msra.mxu0 0.0
    %7771 = vmatprep.subr.mxu0 0.0
    %7772 = vmatpush1.msra.mxu0 0.0
    %7773 = vmatprep.subr.mxu0 0.0
    %7774 = vmatpush1.msra.mxu0 0.0
    %7775 = vmatprep.subr.mxu0 0.0
    %7776 = vmatpush1.msra.mxu0 0.0
    %7777 = vmatprep.mubr.f32.mxu0 0.0
    %7778 = vmatmul.mubr.f32.gmra.mrb[0].mxu0 %v7711
    %v7779 = vpop.f32.mrb[0].mxu0
    %v7780 = vadd.f32 0.0, %v7779
    %v7781 = vpop.f32.mrb[0].mxu0
    %7782 = vdwg.mxu0
    %7783 = vrot.lane.b32.xlu0 %v6741, 64
    %v7784 = vpop.permute.xlu0 %7783
    %v7787 = vsel %vm1439, %v7472, 0
    %7789 = vmatprep.subr.mxu0 0.0
    %7790 = vmatpush1.msra.mxu0 %v7784
    %7791 = vmatprep.subr.mxu0 0.0
    %7792 = vmatpush1.msra.mxu0 0.0
    %7793 = vmatprep.subr.mxu0 0.0
    %7794 = vmatpush1.msra.mxu0 0.0
    %7795 = vmatprep.subr.mxu0 0.0
    %7796 = vmatpush1.msra.mxu0 0.0
    %7797 = vmatprep.subr.mxu0 0.0
    %7798 = vmatpush1.msra.mxu0 0.0
    %7799 = vmatprep.subr.mxu0 0.0
    %7800 = vmatpush1.msra.mxu0 0.0
    %7801 = vmatprep.subr.mxu0 0.0
    %7802 = vmatpush1.msra.mxu0 0.0
    %7803 = vmatprep.subr.mxu0 0.0
    %7804 = vmatpush1.msra.mxu0 0.0
    %7805 = vmatprep.subr.mxu0 0.0
    %7806 = vmatpush1.msra.mxu0 0.0
    %7807 = vmatprep.subr.mxu0 0.0
    %7808 = vmatpush1.msra.mxu0 0.0
    %7809 = vmatprep.subr.mxu0 0.0
    %7810 = vmatpush1.msra.mxu0 0.0
    %7811 = vmatprep.subr.mxu0 0.0
    %7812 = vmatpush1.msra.mxu0 0.0
    %7813 = vmatprep.subr.mxu0 0.0
    %7814 = vmatpush1.msra.mxu0 0.0
    %7815 = vmatprep.subr.mxu0 0.0
    %7816 = vmatpush1.msra.mxu0 0.0
    %7817 = vmatprep.subr.mxu0 0.0
    %7818 = vmatpush1.msra.mxu0 0.0
    %7819 = vmatprep.subr.mxu0 0.0
    %7820 = vmatpush1.msra.mxu0 0.0
    %7821 = vmatprep.subr.mxu0 0.0
    %7822 = vmatpush1.msra.mxu0 0.0
    %7823 = vmatprep.subr.mxu0 0.0
    %7824 = vmatpush1.msra.mxu0 0.0
    %7825 = vmatprep.subr.mxu0 0.0
    %7826 = vmatpush1.msra.mxu0 0.0
    %7827 = vmatprep.subr.mxu0 0.0
    %7828 = vmatpush1.msra.mxu0 0.0
    %7829 = vmatprep.subr.mxu0 0.0
    %7830 = vmatpush1.msra.mxu0 0.0
    %7831 = vmatprep.subr.mxu0 0.0
    %7832 = vmatpush1.msra.mxu0 0.0
    %7833 = vmatprep.subr.mxu0 0.0
    %7834 = vmatpush1.msra.mxu0 0.0
    %7835 = vmatprep.subr.mxu0 0.0
    %7836 = vmatpush1.msra.mxu0 0.0
    %7837 = vmatprep.subr.mxu0 0.0
    %7838 = vmatpush1.msra.mxu0 0.0
    %7839 = vmatprep.subr.mxu0 0.0
    %7840 = vmatpush1.msra.mxu0 0.0
    %7841 = vmatprep.subr.mxu0 0.0
    %7842 = vmatpush1.msra.mxu0 0.0
    %7843 = vmatprep.subr.mxu0 0.0
    %7844 = vmatpush1.msra.mxu0 0.0
    %7845 = vmatprep.subr.mxu0 0.0
    %7846 = vmatpush1.msra.mxu0 0.0
    %7847 = vmatprep.subr.mxu0 0.0
    %7848 = vmatpush1.msra.mxu0 0.0
    %7849 = vmatprep.subr.mxu0 0.0
    %7850 = vmatpush1.msra.mxu0 0.0
    %7851 = vmatprep.subr.mxu0 0.0
    %7852 = vmatpush1.msra.mxu0 0.0
    %7853 = vmatprep.mubr.f32.mxu0 0.0
    %7854 = vmatmul.mubr.f32.gmra.mrb[0].mxu0 %v7787
    %v7855 = vpop.f32.mrb[0].mxu0
    %v7856 = vadd.f32 0.0, %v7855
    %v7857 = vpop.f32.mrb[0].mxu0
    %7858 = vdwg.mxu0
    %7859 = vrot.lane.b32.xlu0 %v6746, 64
    %v7860 = vpop.permute.xlu0 %7859
    %v7863 = vsel %vm1439, %v7474, 0
    %7865 = vmatprep.subr.mxu0 0.0
    %7866 = vmatpush1.msra.mxu0 %v7860
    %7867 = vmatprep.subr.mxu0 0.0
    %7868 = vmatpush1.msra.mxu0 0.0
    %7869 = vmatprep.subr.mxu0 0.0
    %7870 = vmatpush1.msra.mxu0 0.0
    %7871 = vmatprep.subr.mxu0 0.0
    %7872 = vmatpush1.msra.mxu0 0.0
    %7873 = vmatprep.subr.mxu0 0.0
    %7874 = vmatpush1.msra.mxu0 0.0
    %7875 = vmatprep.subr.mxu0 0.0
    %7876 = vmatpush1.msra.mxu0 0.0
    %7877 = vmatprep.subr.mxu0 0.0
    %7878 = vmatpush1.msra.mxu0 0.0
    %7879 = vmatprep.subr.mxu0 0.0
    %7880 = vmatpush1.msra.mxu0 0.0
    %7881 = vmatprep.subr.mxu0 0.0
    %7882 = vmatpush1.msra.mxu0 0.0
    %7883 = vmatprep.subr.mxu0 0.0
    %7884 = vmatpush1.msra.mxu0 0.0
    %7885 = vmatprep.subr.mxu0 0.0
    %7886 = vmatpush1.msra.mxu0 0.0
    %7887 = vmatprep.subr.mxu0 0.0
    %7888 = vmatpush1.msra.mxu0 0.0
    %7889 = vmatprep.subr.mxu0 0.0
    %7890 = vmatpush1.msra.mxu0 0.0
    %7891 = vmatprep.subr.mxu0 0.0
    %7892 = vmatpush1.msra.mxu0 0.0
    %7893 = vmatprep.subr.mxu0 0.0
    %7894 = vmatpush1.msra.mxu0 0.0
    %7895 = vmatprep.subr.mxu0 0.0
    %7896 = vmatpush1.msra.mxu0 0.0
    %7897 = vmatprep.subr.mxu0 0.0
    %7898 = vmatpush1.msra.mxu0 0.0
    %7899 = vmatprep.subr.mxu0 0.0
    %7900 = vmatpush1.msra.mxu0 0.0
    %7901 = vmatprep.subr.mxu0 0.0
    %7902 = vmatpush1.msra.mxu0 0.0
    %7903 = vmatprep.subr.mxu0 0.0
    %7904 = vmatpush1.msra.mxu0 0.0
    %7905 = vmatprep.subr.mxu0 0.0
    %7906 = vmatpush1.msra.mxu0 0.0
    %7907 = vmatprep.subr.mxu0 0.0
    %7908 = vmatpush1.msra.mxu0 0.0
    %7909 = vmatprep.subr.mxu0 0.0
    %7910 = vmatpush1.msra.mxu0 0.0
    %7911 = vmatprep.subr.mxu0 0.0
    %7912 = vmatpush1.msra.mxu0 0.0
    %7913 = vmatprep.subr.mxu0 0.0
    %7914 = vmatpush1.msra.mxu0 0.0
    %7915 = vmatprep.subr.mxu0 0.0
    %7916 = vmatpush1.msra.mxu0 0.0
    %7917 = vmatprep.subr.mxu0 0.0
    %7918 = vmatpush1.msra.mxu0 0.0
    %7919 = vmatprep.subr.mxu0 0.0
    %7920 = vmatpush1.msra.mxu0 0.0
    %7921 = vmatprep.subr.mxu0 0.0
    %7922 = vmatpush1.msra.mxu0 0.0
    %7923 = vmatprep.subr.mxu0 0.0
    %7924 = vmatpush1.msra.mxu0 0.0
    %7925 = vmatprep.subr.mxu0 0.0
    %7926 = vmatpush1.msra.mxu0 0.0
    %7927 = vmatprep.subr.mxu0 0.0
    %7928 = vmatpush1.msra.mxu0 0.0
    %7929 = vmatprep.mubr.f32.mxu0 0.0
    %7930 = vmatmul.mubr.f32.gmra.mrb[0].mxu0 %v7863
    %v7931 = vpop.f32.mrb[0].mxu0
    %v7932 = vadd.f32 0.0, %v7931
    %v7933 = vpop.f32.mrb[0].mxu0
    %7934 = vdwg.mxu0
    %7935 = vrot.lane.b32.xlu0 %v6751, 64
    %v7936 = vpop.permute.xlu0 %7935
    %v7939 = vsel %vm1439, %v7476, 0
    %7941 = vmatprep.subr.mxu0 0.0
    %7942 = vmatpush1.msra.mxu0 %v7936
    %7943 = vmatprep.subr.mxu0 0.0
    %7944 = vmatpush1.msra.mxu0 0.0
    %7945 = vmatprep.subr.mxu0 0.0
    %7946 = vmatpush1.msra.mxu0 0.0
    %7947 = vmatprep.subr.mxu0 0.0
    %7948 = vmatpush1.msra.mxu0 0.0
    %7949 = vmatprep.subr.mxu0 0.0
    %7950 = vmatpush1.msra.mxu0 0.0
    %7951 = vmatprep.subr.mxu0 0.0
    %7952 = vmatpush1.msra.mxu0 0.0
    %7953 = vmatprep.subr.mxu0 0.0
    %7954 = vmatpush1.msra.mxu0 0.0
    %7955 = vmatprep.subr.mxu0 0.0
    %7956 = vmatpush1.msra.mxu0 0.0
    %7957 = vmatprep.subr.mxu0 0.0
    %7958 = vmatpush1.msra.mxu0 0.0
    %7959 = vmatprep.subr.mxu0 0.0
    %7960 = vmatpush1.msra.mxu0 0.0
    %7961 = vmatprep.subr.mxu0 0.0
    %7962 = vmatpush1.msra.mxu0 0.0
    %7963 = vmatprep.subr.mxu0 0.0
    %7964 = vmatpush1.msra.mxu0 0.0
    %7965 = vmatprep.subr.mxu0 0.0
    %7966 = vmatpush1.msra.mxu0 0.0
    %7967 = vmatprep.subr.mxu0 0.0
    %7968 = vmatpush1.msra.mxu0 0.0
    %7969 = vmatprep.subr.mxu0 0.0
    %7970 = vmatpush1.msra.mxu0 0.0
    %7971 = vmatprep.subr.mxu0 0.0
    %7972 = vmatpush1.msra.mxu0 0.0
    %7973 = vmatprep.subr.mxu0 0.0
    %7974 = vmatpush1.msra.mxu0 0.0
    %7975 = vmatprep.subr.mxu0 0.0
    %7976 = vmatpush1.msra.mxu0 0.0
    %7977 = vmatprep.subr.mxu0 0.0
    %7978 = vmatpush1.msra.mxu0 0.0
    %7979 = vmatprep.subr.mxu0 0.0
    %7980 = vmatpush1.msra.mxu0 0.0
    %7981 = vmatprep.subr.mxu0 0.0
    %7982 = vmatpush1.msra.mxu0 0.0
    %7983 = vmatprep.subr.mxu0 0.0
    %7984 = vmatpush1.msra.mxu0 0.0
    %7985 = vmatprep.subr.mxu0 0.0
    %7986 = vmatpush1.msra.mxu0 0.0
    %7987 = vmatprep.subr.mxu0 0.0
    %7988 = vmatpush1.msra.mxu0 0.0
    %7989 = vmatprep.subr.mxu0 0.0
    %7990 = vmatpush1.msra.mxu0 0.0
    %7991 = vmatprep.subr.mxu0 0.0
    %7992 = vmatpush1.msra.mxu0 0.0
    %7993 = vmatprep.subr.mxu0 0.0
    %7994 = vmatpush1.msra.mxu0 0.0
    %7995 = vmatprep.subr.mxu0 0.0
    %7996 = vmatpush1.msra.mxu0 0.0
    %7997 = vmatprep.subr.mxu0 0.0
    %7998 = vmatpush1.msra.mxu0 0.0
    %7999 = vmatprep.subr.mxu0 0.0
    %8000 = vmatpush1.msra.mxu0 0.0
    %8001 = vmatprep.subr.mxu0 0.0
    %8002 = vmatpush1.msra.mxu0 0.0
    %8003 = vmatprep.subr.mxu0 0.0
    %8004 = vmatpush1.msra.mxu0 0.0
    %8005 = vmatprep.mubr.f32.mxu0 0.0
    %8006 = vmatmul.mubr.f32.gmra.mrb[0].mxu0 %v7939
    %v8007 = vpop.f32.mrb[0].mxu0
    %v8008 = vadd.f32 0.0, %v8007
    %v8009 = vpop.f32.mrb[0].mxu0
    %8010 = vdwg.mxu0
    %8011 = vrot.lane.b32.xlu0 %v6756, 64
    %v8012 = vpop.permute.xlu0 %8011
    %v8015 = vsel %vm1439, %v7478, 0
    %8017 = vmatprep.subr.mxu0 0.0
    %8018 = vmatpush1.msra.mxu0 %v8012
    %8019 = vmatprep.subr.mxu0 0.0
    %8020 = vmatpush1.msra.mxu0 0.0
    %8021 = vmatprep.subr.mxu0 0.0
    %8022 = vmatpush1.msra.mxu0 0.0
    %8023 = vmatprep.subr.mxu0 0.0
    %8024 = vmatpush1.msra.mxu0 0.0
    %8025 = vmatprep.subr.mxu0 0.0
    %8026 = vmatpush1.msra.mxu0 0.0
    %8027 = vmatprep.subr.mxu0 0.0
    %8028 = vmatpush1.msra.mxu0 0.0
    %8029 = vmatprep.subr.mxu0 0.0
    %8030 = vmatpush1.msra.mxu0 0.0
    %8031 = vmatprep.subr.mxu0 0.0
    %8032 = vmatpush1.msra.mxu0 0.0
    %8033 = vmatprep.subr.mxu0 0.0
    %8034 = vmatpush1.msra.mxu0 0.0
    %8035 = vmatprep.subr.mxu0 0.0
    %8036 = vmatpush1.msra.mxu0 0.0
    %8037 = vmatprep.subr.mxu0 0.0
    %8038 = vmatpush1.msra.mxu0 0.0
    %8039 = vmatprep.subr.mxu0 0.0
    %8040 = vmatpush1.msra.mxu0 0.0
    %8041 = vmatprep.subr.mxu0 0.0
    %8042 = vmatpush1.msra.mxu0 0.0
    %8043 = vmatprep.subr.mxu0 0.0
    %8044 = vmatpush1.msra.mxu0 0.0
    %8045 = vmatprep.subr.mxu0 0.0
    %8046 = vmatpush1.msra.mxu0 0.0
    %8047 = vmatprep.subr.mxu0 0.0
    %8048 = vmatpush1.msra.mxu0 0.0
    %8049 = vmatprep.subr.mxu0 0.0
    %8050 = vmatpush1.msra.mxu0 0.0
    %8051 = vmatprep.subr.mxu0 0.0
    %8052 = vmatpush1.msra.mxu0 0.0
    %8053 = vmatprep.subr.mxu0 0.0
    %8054 = vmatpush1.msra.mxu0 0.0
    %8055 = vmatprep.subr.mxu0 0.0
    %8056 = vmatpush1.msra.mxu0 0.0
    %8057 = vmatprep.subr.mxu0 0.0
    %8058 = vmatpush1.msra.mxu0 0.0
    %8059 = vmatprep.subr.mxu0 0.0
    %8060 = vmatpush1.msra.mxu0 0.0
    %8061 = vmatprep.subr.mxu0 0.0
    %8062 = vmatpush1.msra.mxu0 0.0
    %8063 = vmatprep.subr.mxu0 0.0
    %8064 = vmatpush1.msra.mxu0 0.0
    %8065 = vmatprep.subr.mxu0 0.0
    %8066 = vmatpush1.msra.mxu0 0.0
    %8067 = vmatprep.subr.mxu0 0.0
    %8068 = vmatpush1.msra.mxu0 0.0
    %8069 = vmatprep.subr.mxu0 0.0
    %8070 = vmatpush1.msra.mxu0 0.0
    %8071 = vmatprep.subr.mxu0 0.0
    %8072 = vmatpush1.msra.mxu0 0.0
    %8073 = vmatprep.subr.mxu0 0.0
    %8074 = vmatpush1.msra.mxu0 0.0
    %8075 = vmatprep.subr.mxu0 0.0
    %8076 = vmatpush1.msra.mxu0 0.0
    %8077 = vmatprep.subr.mxu0 0.0
    %8078 = vmatpush1.msra.mxu0 0.0
    %8079 = vmatprep.subr.mxu0 0.0
    %8080 = vmatpush1.msra.mxu0 0.0
    %8081 = vmatprep.mubr.f32.mxu0 0.0
    %8082 = vmatmul.mubr.f32.gmra.mrb[0].mxu0 %v8015
    %v8083 = vpop.f32.mrb[0].mxu0
    %v8084 = vadd.f32 0.0, %v8083
    %v8085 = vpop.f32.mrb[0].mxu0
    %8086 = vdwg.mxu0
    %8087 = vrot.lane.b32.xlu0 %v6759, 112
    %v8088 = vpop.permute.xlu0 %8087
    %8089 = vrot.lane.b32.xlu0 %v6721, 80
    %v8090 = vpop.permute.xlu0 %8089
    %v8091 = vsel %vm817, %v8088, 0
    %v8093 = vsel %vm817, %v8090, 0
    %8095 = vmatprep.subr.mxu0 0.0
    %8096 = vmatpush1.xpose.msra.mxu0 %v8093
    %8097 = vmatprep.subr.mxu0 0.0
    %8098 = vmatpush1.xpose.msra.mxu0 0.0
    %8099 = vmatprep.subr.mxu0 0.0
    %8100 = vmatpush1.xpose.msra.mxu0 0.0
    %8101 = vmatprep.subr.mxu0 0.0
    %8102 = vmatpush1.xpose.msra.mxu0 0.0
    %8103 = vmatprep.subr.mxu0 0.0
    %8104 = vmatpush1.xpose.msra.mxu0 0.0
    %8105 = vmatprep.subr.mxu0 0.0
    %8106 = vmatpush1.xpose.msra.mxu0 0.0
    %8107 = vmatprep.subr.mxu0 0.0
    %8108 = vmatpush1.xpose.msra.mxu0 0.0
    %8109 = vmatprep.subr.mxu0 0.0
    %8110 = vmatpush1.xpose.msra.mxu0 0.0
    %8111 = vmatprep.subr.mxu0 0.0
    %8112 = vmatpush1.xpose.msra.mxu0 0.0
    %8113 = vmatprep.subr.mxu0 0.0
    %8114 = vmatpush1.xpose.msra.mxu0 0.0
    %8115 = vmatprep.subr.mxu0 0.0
    %8116 = vmatpush1.xpose.msra.mxu0 0.0
    %8117 = vmatprep.subr.mxu0 0.0
    %8118 = vmatpush1.xpose.msra.mxu0 0.0
    %8119 = vmatprep.subr.mxu0 0.0
    %8120 = vmatpush1.xpose.msra.mxu0 0.0
    %8121 = vmatprep.subr.mxu0 0.0
    %8122 = vmatpush1.xpose.msra.mxu0 0.0
    %8123 = vmatprep.subr.mxu0 0.0
    %8124 = vmatpush1.xpose.msra.mxu0 0.0
    %8125 = vmatprep.subr.mxu0 0.0
    %8126 = vmatpush1.xpose.msra.mxu0 0.0
    %8127 = vmatprep.subr.mxu0 0.0
    %8128 = vmatpush1.xpose.msra.mxu0 0.0
    %8129 = vmatprep.subr.mxu0 0.0
    %8130 = vmatpush1.xpose.msra.mxu0 0.0
    %8131 = vmatprep.subr.mxu0 0.0
    %8132 = vmatpush1.xpose.msra.mxu0 0.0
    %8133 = vmatprep.subr.mxu0 0.0
    %8134 = vmatpush1.xpose.msra.mxu0 0.0
    %8135 = vmatprep.subr.mxu0 0.0
    %8136 = vmatpush1.xpose.msra.mxu0 0.0
    %8137 = vmatprep.subr.mxu0 0.0
    %8138 = vmatpush1.xpose.msra.mxu0 0.0
    %8139 = vmatprep.subr.mxu0 0.0
    %8140 = vmatpush1.xpose.msra.mxu0 0.0
    %8141 = vmatprep.subr.mxu0 0.0
    %8142 = vmatpush1.xpose.msra.mxu0 0.0
    %8143 = vmatprep.subr.mxu0 0.0
    %8144 = vmatpush1.xpose.msra.mxu0 0.0
    %8145 = vmatprep.subr.mxu0 0.0
    %8146 = vmatpush1.xpose.msra.mxu0 0.0
    %8147 = vmatprep.subr.mxu0 0.0
    %8148 = vmatpush1.xpose.msra.mxu0 0.0
    %8149 = vmatprep.subr.mxu0 0.0
    %8150 = vmatpush1.xpose.msra.mxu0 0.0
    %8151 = vmatprep.subr.mxu0 0.0
    %8152 = vmatpush1.xpose.msra.mxu0 0.0
    %8153 = vmatprep.subr.mxu0 0.0
    %8154 = vmatpush1.xpose.msra.mxu0 0.0
    %8155 = vmatprep.subr.mxu0 0.0
    %8156 = vmatpush1.xpose.msra.mxu0 0.0
    %8157 = vmatprep.subr.mxu0 0.0
    %8158 = vmatpush1.xpose.msra.mxu0 0.0
    %8159 = vmatprep.mubr.f32.mxu0 0.0
    %8160 = vmatmul.mubr.f32.gmra.mrb[0].mxu0 %v8091
    %v8161 = vpop.f32.mrb[0].mxu0
    %v8162 = vadd.f32 %v98, %v8161
    %v8163 = vpop.f32.mrb[0].mxu0
    %8164 = vdwg.mxu0
    %8165 = vrot.lane.b32.xlu0 %v6760, 112
    %v8166 = vpop.permute.xlu0 %8165
    %8167 = vrot.lane.b32.xlu0 %v6726, 80
    %v8168 = vpop.permute.xlu0 %8167
    %v8169 = vsel %vm817, %v8166, 0
    %v8171 = vsel %vm817, %v8168, 0
    %8173 = vmatprep.subr.mxu0 0.0
    %8174 = vmatpush1.xpose.msra.mxu0 %v8171
    %8175 = vmatprep.subr.mxu0 0.0
    %8176 = vmatpush1.xpose.msra.mxu0 0.0
    %8177 = vmatprep.subr.mxu0 0.0
    %8178 = vmatpush1.xpose.msra.mxu0 0.0
    %8179 = vmatprep.subr.mxu0 0.0
    %8180 = vmatpush1.xpose.msra.mxu0 0.0
    %8181 = vmatprep.subr.mxu0 0.0
    %8182 = vmatpush1.xpose.msra.mxu0 0.0
    %8183 = vmatprep.subr.mxu0 0.0
    %8184 = vmatpush1.xpose.msra.mxu0 0.0
    %8185 = vmatprep.subr.mxu0 0.0
    %8186 = vmatpush1.xpose.msra.mxu0 0.0
    %8187 = vmatprep.subr.mxu0 0.0
    %8188 = vmatpush1.xpose.msra.mxu0 0.0
    %8189 = vmatprep.subr.mxu0 0.0
    %8190 = vmatpush1.xpose.msra.mxu0 0.0
    %8191 = vmatprep.subr.mxu0 0.0
    %8192 = vmatpush1.xpose.msra.mxu0 0.0
    %8193 = vmatprep.subr.mxu0 0.0
    %8194 = vmatpush1.xpose.msra.mxu0 0.0
    %8195 = vmatprep.subr.mxu0 0.0
    %8196 = vmatpush1.xpose.msra.mxu0 0.0
    %8197 = vmatprep.subr.mxu0 0.0
    %8198 = vmatpush1.xpose.msra.mxu0 0.0
    %8199 = vmatprep.subr.mxu0 0.0
    %8200 = vmatpush1.xpose.msra.mxu0 0.0
    %8201 = vmatprep.subr.mxu0 0.0
    %8202 = vmatpush1.xpose.msra.mxu0 0.0
    %8203 = vmatprep.subr.mxu0 0.0
    %8204 = vmatpush1.xpose.msra.mxu0 0.0
    %8205 = vmatprep.subr.mxu0 0.0
    %8206 = vmatpush1.xpose.msra.mxu0 0.0
    %8207 = vmatprep.subr.mxu0 0.0
    %8208 = vmatpush1.xpose.msra.mxu0 0.0
    %8209 = vmatprep.subr.mxu0 0.0
    %8210 = vmatpush1.xpose.msra.mxu0 0.0
    %8211 = vmatprep.subr.mxu0 0.0
    %8212 = vmatpush1.xpose.msra.mxu0 0.0
    %8213 = vmatprep.subr.mxu0 0.0
    %8214 = vmatpush1.xpose.msra.mxu0 0.0
    %8215 = vmatprep.subr.mxu0 0.0
    %8216 = vmatpush1.xpose.msra.mxu0 0.0
    %8217 = vmatprep.subr.mxu0 0.0
    %8218 = vmatpush1.xpose.msra.mxu0 0.0
    %8219 = vmatprep.subr.mxu0 0.0
    %8220 = vmatpush1.xpose.msra.mxu0 0.0
    %8221 = vmatprep.subr.mxu0 0.0
    %8222 = vmatpush1.xpose.msra.mxu0 0.0
    %8223 = vmatprep.subr.mxu0 0.0
    %8224 = vmatpush1.xpose.msra.mxu0 0.0
    %8225 = vmatprep.subr.mxu0 0.0
    %8226 = vmatpush1.xpose.msra.mxu0 0.0
    %8227 = vmatprep.subr.mxu0 0.0
    %8228 = vmatpush1.xpose.msra.mxu0 0.0
    %8229 = vmatprep.subr.mxu0 0.0
    %8230 = vmatpush1.xpose.msra.mxu0 0.0
    %8231 = vmatprep.subr.mxu0 0.0
    %8232 = vmatpush1.xpose.msra.mxu0 0.0
    %8233 = vmatprep.subr.mxu0 0.0
    %8234 = vmatpush1.xpose.msra.mxu0 0.0
    %8235 = vmatprep.subr.mxu0 0.0
    %8236 = vmatpush1.xpose.msra.mxu0 0.0
    %8237 = vmatprep.mubr.f32.mxu0 0.0
    %8238 = vmatmul.mubr.f32.gmra.mrb[0].mxu0 %v8169
    %v8239 = vpop.f32.mrb[0].mxu0
    %v8240 = vadd.f32 %v99, %v8239
    %v8241 = vpop.f32.mrb[0].mxu0
    %8242 = vdwg.mxu0
    %8243 = vrot.lane.b32.xlu0 %v6761, 112
    %v8244 = vpop.permute.xlu0 %8243
    %8245 = vrot.lane.b32.xlu0 %v6731, 80
    %v8246 = vpop.permute.xlu0 %8245
    %v8247 = vsel %vm817, %v8244, 0
    %v8249 = vsel %vm817, %v8246, 0
    %8251 = vmatprep.subr.mxu0 0.0
    %8252 = vmatpush1.xpose.msra.mxu0 %v8249
    %8253 = vmatprep.subr.mxu0 0.0
    %8254 = vmatpush1.xpose.msra.mxu0 0.0
    %8255 = vmatprep.subr.mxu0 0.0
    %8256 = vmatpush1.xpose.msra.mxu0 0.0
    %8257 = vmatprep.subr.mxu0 0.0
    %8258 = vmatpush1.xpose.msra.mxu0 0.0
    %8259 = vmatprep.subr.mxu0 0.0
    %8260 = vmatpush1.xpose.msra.mxu0 0.0
    %8261 = vmatprep.subr.mxu0 0.0
    %8262 = vmatpush1.xpose.msra.mxu0 0.0
    %8263 = vmatprep.subr.mxu0 0.0
    %8264 = vmatpush1.xpose.msra.mxu0 0.0
    %8265 = vmatprep.subr.mxu0 0.0
    %8266 = vmatpush1.xpose.msra.mxu0 0.0
    %8267 = vmatprep.subr.mxu0 0.0
    %8268 = vmatpush1.xpose.msra.mxu0 0.0
    %8269 = vmatprep.subr.mxu0 0.0
    %8270 = vmatpush1.xpose.msra.mxu0 0.0
    %8271 = vmatprep.subr.mxu0 0.0
    %8272 = vmatpush1.xpose.msra.mxu0 0.0
    %8273 = vmatprep.subr.mxu0 0.0
    %8274 = vmatpush1.xpose.msra.mxu0 0.0
    %8275 = vmatprep.subr.mxu0 0.0
    %8276 = vmatpush1.xpose.msra.mxu0 0.0
    %8277 = vmatprep.subr.mxu0 0.0
    %8278 = vmatpush1.xpose.msra.mxu0 0.0
    %8279 = vmatprep.subr.mxu0 0.0
    %8280 = vmatpush1.xpose.msra.mxu0 0.0
    %8281 = vmatprep.subr.mxu0 0.0
    %8282 = vmatpush1.xpose.msra.mxu0 0.0
    %8283 = vmatprep.subr.mxu0 0.0
    %8284 = vmatpush1.xpose.msra.mxu0 0.0
    %8285 = vmatprep.subr.mxu0 0.0
    %8286 = vmatpush1.xpose.msra.mxu0 0.0
    %8287 = vmatprep.subr.mxu0 0.0
    %8288 = vmatpush1.xpose.msra.mxu0 0.0
    %8289 = vmatprep.subr.mxu0 0.0
    %8290 = vmatpush1.xpose.msra.mxu0 0.0
    %8291 = vmatprep.subr.mxu0 0.0
    %8292 = vmatpush1.xpose.msra.mxu0 0.0
    %8293 = vmatprep.subr.mxu0 0.0
    %8294 = vmatpush1.xpose.msra.mxu0 0.0
    %8295 = vmatprep.subr.mxu0 0.0
    %8296 = vmatpush1.xpose.msra.mxu0 0.0
    %8297 = vmatprep.subr.mxu0 0.0
    %8298 = vmatpush1.xpose.msra.mxu0 0.0
    %8299 = vmatprep.subr.mxu0 0.0
    %8300 = vmatpush1.xpose.msra.mxu0 0.0
    %8301 = vmatprep.subr.mxu0 0.0
    %8302 = vmatpush1.xpose.msra.mxu0 0.0
    %8303 = vmatprep.subr.mxu0 0.0
    %8304 = vmatpush1.xpose.msra.mxu0 0.0
    %8305 = vmatprep.subr.mxu0 0.0
    %8306 = vmatpush1.xpose.msra.mxu0 0.0
    %8307 = vmatprep.subr.mxu0 0.0
    %8308 = vmatpush1.xpose.msra.mxu0 0.0
    %8309 = vmatprep.subr.mxu0 0.0
    %8310 = vmatpush1.xpose.msra.mxu0 0.0
    %8311 = vmatprep.subr.mxu0 0.0
    %8312 = vmatpush1.xpose.msra.mxu0 0.0
    %8313 = vmatprep.subr.mxu0 0.0
    %8314 = vmatpush1.xpose.msra.mxu0 0.0
    %8315 = vmatprep.mubr.f32.mxu0 0.0
    %8316 = vmatmul.mubr.f32.gmra.mrb[0].mxu0 %v8247
    %v8317 = vpop.f32.mrb[0].mxu0
    %v8318 = vadd.f32 %v100, %v8317
    %v8319 = vpop.f32.mrb[0].mxu0
    %8320 = vdwg.mxu0
    %8321 = vrot.lane.b32.xlu0 %v6762, 112
    %v8322 = vpop.permute.xlu0 %8321
    %8323 = vrot.lane.b32.xlu0 %v6736, 80
    %v8324 = vpop.permute.xlu0 %8323
    %v8325 = vsel %vm817, %v8322, 0
    %v8327 = vsel %vm817, %v8324, 0
    %8329 = vmatprep.subr.mxu0 0.0
    %8330 = vmatpush1.xpose.msra.mxu0 %v8327
    %8331 = vmatprep.subr.mxu0 0.0
    %8332 = vmatpush1.xpose.msra.mxu0 0.0
    %8333 = vmatprep.subr.mxu0 0.0
    %8334 = vmatpush1.xpose.msra.mxu0 0.0
    %8335 = vmatprep.subr.mxu0 0.0
    %8336 = vmatpush1.xpose.msra.mxu0 0.0
    %8337 = vmatprep.subr.mxu0 0.0
    %8338 = vmatpush1.xpose.msra.mxu0 0.0
    %8339 = vmatprep.subr.mxu0 0.0
    %8340 = vmatpush1.xpose.msra.mxu0 0.0
    %8341 = vmatprep.subr.mxu0 0.0
    %8342 = vmatpush1.xpose.msra.mxu0 0.0
    %8343 = vmatprep.subr.mxu0 0.0
    %8344 = vmatpush1.xpose.msra.mxu0 0.0
    %8345 = vmatprep.subr.mxu0 0.0
    %8346 = vmatpush1.xpose.msra.mxu0 0.0
    %8347 = vmatprep.subr.mxu0 0.0
    %8348 = vmatpush1.xpose.msra.mxu0 0.0
    %8349 = vmatprep.subr.mxu0 0.0
    %8350 = vmatpush1.xpose.msra.mxu0 0.0
    %8351 = vmatprep.subr.mxu0 0.0
    %8352 = vmatpush1.xpose.msra.mxu0 0.0
    %8353 = vmatprep.subr.mxu0 0.0
    %8354 = vmatpush1.xpose.msra.mxu0 0.0
    %8355 = vmatprep.subr.mxu0 0.0
    %8356 = vmatpush1.xpose.msra.mxu0 0.0
    %8357 = vmatprep.subr.mxu0 0.0
    %8358 = vmatpush1.xpose.msra.mxu0 0.0
    %8359 = vmatprep.subr.mxu0 0.0
    %8360 = vmatpush1.xpose.msra.mxu0 0.0
    %8361 = vmatprep.subr.mxu0 0.0
    %8362 = vmatpush1.xpose.msra.mxu0 0.0
    %8363 = vmatprep.subr.mxu0 0.0
    %8364 = vmatpush1.xpose.msra.mxu0 0.0
    %8365 = vmatprep.subr.mxu0 0.0
    %8366 = vmatpush1.xpose.msra.mxu0 0.0
    %8367 = vmatprep.subr.mxu0 0.0
    %8368 = vmatpush1.xpose.msra.mxu0 0.0
    %8369 = vmatprep.subr.mxu0 0.0
    %8370 = vmatpush1.xpose.msra.mxu0 0.0
    %8371 = vmatprep.subr.mxu0 0.0
    %8372 = vmatpush1.xpose.msra.mxu0 0.0
    %8373 = vmatprep.subr.mxu0 0.0
    %8374 = vmatpush1.xpose.msra.mxu0 0.0
    %8375 = vmatprep.subr.mxu0 0.0
    %8376 = vmatpush1.xpose.msra.mxu0 0.0
    %8377 = vmatprep.subr.mxu0 0.0
    %8378 = vmatpush1.xpose.msra.mxu0 0.0
    %8379 = vmatprep.subr.mxu0 0.0
    %8380 = vmatpush1.xpose.msra.mxu0 0.0
    %8381 = vmatprep.subr.mxu0 0.0
    %8382 = vmatpush1.xpose.msra.mxu0 0.0
    %8383 = vmatprep.subr.mxu0 0.0
    %8384 = vmatpush1.xpose.msra.mxu0 0.0
    %8385 = vmatprep.subr.mxu0 0.0
    %8386 = vmatpush1.xpose.msra.mxu0 0.0
    %8387 = vmatprep.subr.mxu0 0.0
    %8388 = vmatpush1.xpose.msra.mxu0 0.0
    %8389 = vmatprep.subr.mxu0 0.0
    %8390 = vmatpush1.xpose.msra.mxu0 0.0
    %8391 = vmatprep.subr.mxu0 0.0
    %8392 = vmatpush1.xpose.msra.mxu0 0.0
    %8393 = vmatprep.mubr.f32.mxu0 0.0
    %8394 = vmatmul.mubr.f32.gmra.mrb[0].mxu0 %v8325
    %v8395 = vpop.f32.mrb[0].mxu0
    %v8396 = vadd.f32 %v101, %v8395
    %v8397 = vpop.f32.mrb[0].mxu0
    %8398 = vdwg.mxu0
    %8399 = vrot.lane.b32.xlu0 %v6763, 112
    %v8400 = vpop.permute.xlu0 %8399
    %8401 = vrot.lane.b32.xlu0 %v6741, 80
    %v8402 = vpop.permute.xlu0 %8401
    %v8403 = vsel %vm817, %v8400, 0
    %v8405 = vsel %vm817, %v8402, 0
    %8407 = vmatprep.subr.mxu0 0.0
    %8408 = vmatpush1.xpose.msra.mxu0 %v8405
    %8409 = vmatprep.subr.mxu0 0.0
    %8410 = vmatpush1.xpose.msra.mxu0 0.0
    %8411 = vmatprep.subr.mxu0 0.0
    %8412 = vmatpush1.xpose.msra.mxu0 0.0
    %8413 = vmatprep.subr.mxu0 0.0
    %8414 = vmatpush1.xpose.msra.mxu0 0.0
    %8415 = vmatprep.subr.mxu0 0.0
    %8416 = vmatpush1.xpose.msra.mxu0 0.0
    %8417 = vmatprep.subr.mxu0 0.0
    %8418 = vmatpush1.xpose.msra.mxu0 0.0
    %8419 = vmatprep.subr.mxu0 0.0
    %8420 = vmatpush1.xpose.msra.mxu0 0.0
    %8421 = vmatprep.subr.mxu0 0.0
    %8422 = vmatpush1.xpose.msra.mxu0 0.0
    %8423 = vmatprep.subr.mxu0 0.0
    %8424 = vmatpush1.xpose.msra.mxu0 0.0
    %8425 = vmatprep.subr.mxu0 0.0
    %8426 = vmatpush1.xpose.msra.mxu0 0.0
    %8427 = vmatprep.subr.mxu0 0.0
    %8428 = vmatpush1.xpose.msra.mxu0 0.0
    %8429 = vmatprep.subr.mxu0 0.0
    %8430 = vmatpush1.xpose.msra.mxu0 0.0
    %8431 = vmatprep.subr.mxu0 0.0
    %8432 = vmatpush1.xpose.msra.mxu0 0.0
    %8433 = vmatprep.subr.mxu0 0.0
    %8434 = vmatpush1.xpose.msra.mxu0 0.0
    %8435 = vmatprep.subr.mxu0 0.0
    %8436 = vmatpush1.xpose.msra.mxu0 0.0
    %8437 = vmatprep.subr.mxu0 0.0
    %8438 = vmatpush1.xpose.msra.mxu0 0.0
    %8439 = vmatprep.subr.mxu0 0.0
    %8440 = vmatpush1.xpose.msra.mxu0 0.0
    %8441 = vmatprep.subr.mxu0 0.0
    %8442 = vmatpush1.xpose.msra.mxu0 0.0
    %8443 = vmatprep.subr.mxu0 0.0
    %8444 = vmatpush1.xpose.msra.mxu0 0.0
    %8445 = vmatprep.subr.mxu0 0.0
    %8446 = vmatpush1.xpose.msra.mxu0 0.0
    %8447 = vmatprep.subr.mxu0 0.0
    %8448 = vmatpush1.xpose.msra.mxu0 0.0
    %8449 = vmatprep.subr.mxu0 0.0
    %8450 = vmatpush1.xpose.msra.mxu0 0.0
    %8451 = vmatprep.subr.mxu0 0.0
    %8452 = vmatpush1.xpose.msra.mxu0 0.0
    %8453 = vmatprep.subr.mxu0 0.0
    %8454 = vmatpush1.xpose.msra.mxu0 0.0
    %8455 = vmatprep.subr.mxu0 0.0
    %8456 = vmatpush1.xpose.msra.mxu0 0.0
    %8457 = vmatprep.subr.mxu0 0.0
    %8458 = vmatpush1.xpose.msra.mxu0 0.0
    %8459 = vmatprep.subr.mxu0 0.0
    %8460 = vmatpush1.xpose.msra.mxu0 0.0
    %8461 = vmatprep.subr.mxu0 0.0
    %8462 = vmatpush1.xpose.msra.mxu0 0.0
    %8463 = vmatprep.subr.mxu0 0.0
    %8464 = vmatpush1.xpose.msra.mxu0 0.0
    %8465 = vmatprep.subr.mxu0 0.0
    %8466 = vmatpush1.xpose.msra.mxu0 0.0
    %8467 = vmatprep.subr.mxu0 0.0
    %8468 = vmatpush1.xpose.msra.mxu0 0.0
    %8469 = vmatprep.subr.mxu0 0.0
    %8470 = vmatpush1.xpose.msra.mxu0 0.0
    %8471 = vmatprep.mubr.f32.mxu0 0.0
    %8472 = vmatmul.mubr.f32.gmra.mrb[0].mxu0 %v8403
    %v8473 = vpop.f32.mrb[0].mxu0
    %v8474 = vadd.f32 %v102, %v8473
    %v8475 = vpop.f32.mrb[0].mxu0
    %8476 = vdwg.mxu0
    %8477 = vrot.lane.b32.xlu0 %v6764, 112
    %v8478 = vpop.permute.xlu0 %8477
    %8479 = vrot.lane.b32.xlu0 %v6746, 80
    %v8480 = vpop.permute.xlu0 %8479
    %v8481 = vsel %vm817, %v8478, 0
    %v8483 = vsel %vm817, %v8480, 0
    %8485 = vmatprep.subr.mxu0 0.0
    %8486 = vmatpush1.xpose.msra.mxu0 %v8483
    %8487 = vmatprep.subr.mxu0 0.0
    %8488 = vmatpush1.xpose.msra.mxu0 0.0
    %8489 = vmatprep.subr.mxu0 0.0
    %8490 = vmatpush1.xpose.msra.mxu0 0.0
    %8491 = vmatprep.subr.mxu0 0.0
    %8492 = vmatpush1.xpose.msra.mxu0 0.0
    %8493 = vmatprep.subr.mxu0 0.0
    %8494 = vmatpush1.xpose.msra.mxu0 0.0
    %8495 = vmatprep.subr.mxu0 0.0
    %8496 = vmatpush1.xpose.msra.mxu0 0.0
    %8497 = vmatprep.subr.mxu0 0.0
    %8498 = vmatpush1.xpose.msra.mxu0 0.0
    %8499 = vmatprep.subr.mxu0 0.0
    %8500 = vmatpush1.xpose.msra.mxu0 0.0
    %8501 = vmatprep.subr.mxu0 0.0
    %8502 = vmatpush1.xpose.msra.mxu0 0.0
    %8503 = vmatprep.subr.mxu0 0.0
    %8504 = vmatpush1.xpose.msra.mxu0 0.0
    %8505 = vmatprep.subr.mxu0 0.0
    %8506 = vmatpush1.xpose.msra.mxu0 0.0
    %8507 = vmatprep.subr.mxu0 0.0
    %8508 = vmatpush1.xpose.msra.mxu0 0.0
    %8509 = vmatprep.subr.mxu0 0.0
    %8510 = vmatpush1.xpose.msra.mxu0 0.0
    %8511 = vmatprep.subr.mxu0 0.0
    %8512 = vmatpush1.xpose.msra.mxu0 0.0
    %8513 = vmatprep.subr.mxu0 0.0
    %8514 = vmatpush1.xpose.msra.mxu0 0.0
    %8515 = vmatprep.subr.mxu0 0.0
    %8516 = vmatpush1.xpose.msra.mxu0 0.0
    %8517 = vmatprep.subr.mxu0 0.0
    %8518 = vmatpush1.xpose.msra.mxu0 0.0
    %8519 = vmatprep.subr.mxu0 0.0
    %8520 = vmatpush1.xpose.msra.mxu0 0.0
    %8521 = vmatprep.subr.mxu0 0.0
    %8522 = vmatpush1.xpose.msra.mxu0 0.0
    %8523 = vmatprep.subr.mxu0 0.0
    %8524 = vmatpush1.xpose.msra.mxu0 0.0
    %8525 = vmatprep.subr.mxu0 0.0
    %8526 = vmatpush1.xpose.msra.mxu0 0.0
    %8527 = vmatprep.subr.mxu0 0.0
    %8528 = vmatpush1.xpose.msra.mxu0 0.0
    %8529 = vmatprep.subr.mxu0 0.0
    %8530 = vmatpush1.xpose.msra.mxu0 0.0
    %8531 = vmatprep.subr.mxu0 0.0
    %8532 = vmatpush1.xpose.msra.mxu0 0.0
    %8533 = vmatprep.subr.mxu0 0.0
    %8534 = vmatpush1.xpose.msra.mxu0 0.0
    %8535 = vmatprep.subr.mxu0 0.0
    %8536 = vmatpush1.xpose.msra.mxu0 0.0
    %8537 = vmatprep.subr.mxu0 0.0
    %8538 = vmatpush1.xpose.msra.mxu0 0.0
    %8539 = vmatprep.subr.mxu0 0.0
    %8540 = vmatpush1.xpose.msra.mxu0 0.0
    %8541 = vmatprep.subr.mxu0 0.0
    %8542 = vmatpush1.xpose.msra.mxu0 0.0
    %8543 = vmatprep.subr.mxu0 0.0
    %8544 = vmatpush1.xpose.msra.mxu0 0.0
    %8545 = vmatprep.subr.mxu0 0.0
    %8546 = vmatpush1.xpose.msra.mxu0 0.0
    %8547 = vmatprep.subr.mxu0 0.0
    %8548 = vmatpush1.xpose.msra.mxu0 0.0
    %8549 = vmatprep.mubr.f32.mxu0 0.0
    %8550 = vmatmul.mubr.f32.gmra.mrb[0].mxu0 %v8481
    %v8551 = vpop.f32.mrb[0].mxu0
    %v8552 = vadd.f32 %v103, %v8551
    %v8553 = vpop.f32.mrb[0].mxu0
    %8554 = vdwg.mxu0
    %8555 = vrot.lane.b32.xlu0 %v6765, 112
    %v8556 = vpop.permute.xlu0 %8555
    %8557 = vrot.lane.b32.xlu0 %v6751, 80
    %v8558 = vpop.permute.xlu0 %8557
    %v8559 = vsel %vm817, %v8556, 0
    %v8561 = vsel %vm817, %v8558, 0
    %8563 = vmatprep.subr.mxu0 0.0
    %8564 = vmatpush1.xpose.msra.mxu0 %v8561
    %8565 = vmatprep.subr.mxu0 0.0
    %8566 = vmatpush1.xpose.msra.mxu0 0.0
    %8567 = vmatprep.subr.mxu0 0.0
    %8568 = vmatpush1.xpose.msra.mxu0 0.0
    %8569 = vmatprep.subr.mxu0 0.0
    %8570 = vmatpush1.xpose.msra.mxu0 0.0
    %8571 = vmatprep.subr.mxu0 0.0
    %8572 = vmatpush1.xpose.msra.mxu0 0.0
    %8573 = vmatprep.subr.mxu0 0.0
    %8574 = vmatpush1.xpose.msra.mxu0 0.0
    %8575 = vmatprep.subr.mxu0 0.0
    %8576 = vmatpush1.xpose.msra.mxu0 0.0
    %8577 = vmatprep.subr.mxu0 0.0
    %8578 = vmatpush1.xpose.msra.mxu0 0.0
    %8579 = vmatprep.subr.mxu0 0.0
    %8580 = vmatpush1.xpose.msra.mxu0 0.0
    %8581 = vmatprep.subr.mxu0 0.0
    %8582 = vmatpush1.xpose.msra.mxu0 0.0
    %8583 = vmatprep.subr.mxu0 0.0
    %8584 = vmatpush1.xpose.msra.mxu0 0.0
    %8585 = vmatprep.subr.mxu0 0.0
    %8586 = vmatpush1.xpose.msra.mxu0 0.0
    %8587 = vmatprep.subr.mxu0 0.0
    %8588 = vmatpush1.xpose.msra.mxu0 0.0
    %8589 = vmatprep.subr.mxu0 0.0
    %8590 = vmatpush1.xpose.msra.mxu0 0.0
    %8591 = vmatprep.subr.mxu0 0.0
    %8592 = vmatpush1.xpose.msra.mxu0 0.0
    %8593 = vmatprep.subr.mxu0 0.0
    %8594 = vmatpush1.xpose.msra.mxu0 0.0
    %8595 = vmatprep.subr.mxu0 0.0
    %8596 = vmatpush1.xpose.msra.mxu0 0.0
    %8597 = vmatprep.subr.mxu0 0.0
    %8598 = vmatpush1.xpose.msra.mxu0 0.0
    %8599 = vmatprep.subr.mxu0 0.0
    %8600 = vmatpush1.xpose.msra.mxu0 0.0
    %8601 = vmatprep.subr.mxu0 0.0
    %8602 = vmatpush1.xpose.msra.mxu0 0.0
    %8603 = vmatprep.subr.mxu0 0.0
    %8604 = vmatpush1.xpose.msra.mxu0 0.0
    %8605 = vmatprep.subr.mxu0 0.0
    %8606 = vmatpush1.xpose.msra.mxu0 0.0
    %8607 = vmatprep.subr.mxu0 0.0
    %8608 = vmatpush1.xpose.msra.mxu0 0.0
    %8609 = vmatprep.subr.mxu0 0.0
    %8610 = vmatpush1.xpose.msra.mxu0 0.0
    %8611 = vmatprep.subr.mxu0 0.0
    %8612 = vmatpush1.xpose.msra.mxu0 0.0
    %8613 = vmatprep.subr.mxu0 0.0
    %8614 = vmatpush1.xpose.msra.mxu0 0.0
    %8615 = vmatprep.subr.mxu0 0.0
    %8616 = vmatpush1.xpose.msra.mxu0 0.0
    %8617 = vmatprep.subr.mxu0 0.0
    %8618 = vmatpush1.xpose.msra.mxu0 0.0
    %8619 = vmatprep.subr.mxu0 0.0
    %8620 = vmatpush1.xpose.msra.mxu0 0.0
    %8621 = vmatprep.subr.mxu0 0.0
    %8622 = vmatpush1.xpose.msra.mxu0 0.0
    %8623 = vmatprep.subr.mxu0 0.0
    %8624 = vmatpush1.xpose.msra.mxu0 0.0
    %8625 = vmatprep.subr.mxu0 0.0
    %8626 = vmatpush1.xpose.msra.mxu0 0.0
    %8627 = vmatprep.mubr.f32.mxu0 0.0
    %8628 = vmatmul.mubr.f32.gmra.mrb[0].mxu0 %v8559
    %v8629 = vpop.f32.mrb[0].mxu0
    %v8630 = vadd.f32 %v104, %v8629
    %v8631 = vpop.f32.mrb[0].mxu0
    %8632 = vdwg.mxu0
    %8633 = vrot.lane.b32.xlu0 %v6766, 112
    %v8634 = vpop.permute.xlu0 %8633
    %8635 = vrot.lane.b32.xlu0 %v6756, 80
    %v8636 = vpop.permute.xlu0 %8635
    %v8637 = vsel %vm817, %v8634, 0
    %v8639 = vsel %vm817, %v8636, 0
    %8641 = vmatprep.subr.mxu0 0.0
    %8642 = vmatpush1.xpose.msra.mxu0 %v8639
    %8643 = vmatprep.subr.mxu0 0.0
    %8644 = vmatpush1.xpose.msra.mxu0 0.0
    %8645 = vmatprep.subr.mxu0 0.0
    %8646 = vmatpush1.xpose.msra.mxu0 0.0
    %8647 = vmatprep.subr.mxu0 0.0
    %8648 = vmatpush1.xpose.msra.mxu0 0.0
    %8649 = vmatprep.subr.mxu0 0.0
    %8650 = vmatpush1.xpose.msra.mxu0 0.0
    %8651 = vmatprep.subr.mxu0 0.0
    %8652 = vmatpush1.xpose.msra.mxu0 0.0
    %8653 = vmatprep.subr.mxu0 0.0
    %8654 = vmatpush1.xpose.msra.mxu0 0.0
    %8655 = vmatprep.subr.mxu0 0.0
    %8656 = vmatpush1.xpose.msra.mxu0 0.0
    %8657 = vmatprep.subr.mxu0 0.0
    %8658 = vmatpush1.xpose.msra.mxu0 0.0
    %8659 = vmatprep.subr.mxu0 0.0
    %8660 = vmatpush1.xpose.msra.mxu0 0.0
    %8661 = vmatprep.subr.mxu0 0.0
    %8662 = vmatpush1.xpose.msra.mxu0 0.0
    %8663 = vmatprep.subr.mxu0 0.0
    %8664 = vmatpush1.xpose.msra.mxu0 0.0
    %8665 = vmatprep.subr.mxu0 0.0
    %8666 = vmatpush1.xpose.msra.mxu0 0.0
    %8667 = vmatprep.subr.mxu0 0.0
    %8668 = vmatpush1.xpose.msra.mxu0 0.0
    %8669 = vmatprep.subr.mxu0 0.0
    %8670 = vmatpush1.xpose.msra.mxu0 0.0
    %8671 = vmatprep.subr.mxu0 0.0
    %8672 = vmatpush1.xpose.msra.mxu0 0.0
    %8673 = vmatprep.subr.mxu0 0.0
    %8674 = vmatpush1.xpose.msra.mxu0 0.0
    %8675 = vmatprep.subr.mxu0 0.0
    %8676 = vmatpush1.xpose.msra.mxu0 0.0
    %8677 = vmatprep.subr.mxu0 0.0
    %8678 = vmatpush1.xpose.msra.mxu0 0.0
    %8679 = vmatprep.subr.mxu0 0.0
    %8680 = vmatpush1.xpose.msra.mxu0 0.0
    %8681 = vmatprep.subr.mxu0 0.0
    %8682 = vmatpush1.xpose.msra.mxu0 0.0
    %8683 = vmatprep.subr.mxu0 0.0
    %8684 = vmatpush1.xpose.msra.mxu0 0.0
    %8685 = vmatprep.subr.mxu0 0.0
    %8686 = vmatpush1.xpose.msra.mxu0 0.0
    %8687 = vmatprep.subr.mxu0 0.0
    %8688 = vmatpush1.xpose.msra.mxu0 0.0
    %8689 = vmatprep.subr.mxu0 0.0
    %8690 = vmatpush1.xpose.msra.mxu0 0.0
    %8691 = vmatprep.subr.mxu0 0.0
    %8692 = vmatpush1.xpose.msra.mxu0 0.0
    %8693 = vmatprep.subr.mxu0 0.0
    %8694 = vmatpush1.xpose.msra.mxu0 0.0
    %8695 = vmatprep.subr.mxu0 0.0
    %8696 = vmatpush1.xpose.msra.mxu0 0.0
    %8697 = vmatprep.subr.mxu0 0.0
    %8698 = vmatpush1.xpose.msra.mxu0 0.0
    %8699 = vmatprep.subr.mxu0 0.0
    %8700 = vmatpush1.xpose.msra.mxu0 0.0
    %8701 = vmatprep.subr.mxu0 0.0
    %8702 = vmatpush1.xpose.msra.mxu0 0.0
    %8703 = vmatprep.subr.mxu0 0.0
    %8704 = vmatpush1.xpose.msra.mxu0 0.0
    %8705 = vmatprep.mubr.f32.mxu0 0.0
    %8706 = vmatmul.mubr.f32.gmra.mrb[0].mxu0 %v8637
    %v8707 = vpop.f32.mrb[0].mxu0
    %v8708 = vadd.f32 %v105, %v8707
    %v8709 = vpop.f32.mrb[0].mxu0
    %8710 = vdwg.mxu0
    %v8711 = vsel %vm1439, %v8162, -inf
    %8712 = vmax.xlane.f32.xlu0 %v8711
    %v8713 = vpop.xlane.xlu0 %8712
    %v8714 = vsel %vm1439, %v8240, -inf
    %8715 = vmax.xlane.f32.xlu0 %v8714
    %v8716 = vpop.xlane.xlu0 %8715
    %v8717 = vsel %vm1439, %v8318, -inf
    %8718 = vmax.xlane.f32.xlu0 %v8717
    %v8719 = vpop.xlane.xlu0 %8718
    %v8720 = vsel %vm1439, %v8396, -inf
    %8721 = vmax.xlane.f32.xlu0 %v8720
    %v8722 = vpop.xlane.xlu0 %8721
    %v8723 = vsel %vm1439, %v8474, -inf
    %8724 = vmax.xlane.f32.xlu0 %v8723
    %v8725 = vpop.xlane.xlu0 %8724
    %v8726 = vsel %vm1439, %v8552, -inf
    %8727 = vmax.xlane.f32.xlu0 %v8726
    %v8728 = vpop.xlane.xlu0 %8727
    %v8729 = vsel %vm1439, %v8630, -inf
    %8730 = vmax.xlane.f32.xlu0 %v8729
    %v8731 = vpop.xlane.xlu0 %8730
    %v8732 = vsel %vm1439, %v8708, -inf
    %8733 = vmax.xlane.f32.xlu0 %v8732
    %v8734 = vpop.xlane.xlu0 %8733
    %v8735 = vsub.f32 %v8162, %v8713
    %v8736 = vsub.f32 %v8240, %v8716
    %v8737 = vsub.f32 %v8318, %v8719
    %v8738 = vsub.f32 %v8396, %v8722
    %v8739 = vsub.f32 %v8474, %v8725
    %v8740 = vsub.f32 %v8552, %v8728
    %v8741 = vsub.f32 %v8630, %v8731
    %v8742 = vsub.f32 %v8708, %v8734
    %v8743 = vmul.f32 %v8735, 1.442695
    %v8744 = vpow.pop %v8743
    %v8745 = vmul.f32 %v8736, 1.442695
    %v8746 = vpow.pop %v8745
    %v8747 = vmul.f32 %v8737, 1.442695
    %v8748 = vpow.pop %v8747
    %v8749 = vmul.f32 %v8738, 1.442695
    %v8750 = vpow.pop %v8749
    %v8751 = vmul.f32 %v8739, 1.442695
    %v8752 = vpow.pop %v8751
    %v8753 = vmul.f32 %v8740, 1.442695
    %v8754 = vpow.pop %v8753
    %v8755 = vmul.f32 %v8741, 1.442695
    %v8756 = vpow.pop %v8755
    %v8757 = vmul.f32 %v8742, 1.442695
    %v8758 = vpow.pop %v8757
    %v8759 = vsel %vm1439, %v8744, 0.0
    %8760 = vadd.xlane.f32.xlu0 %v8759
    %v8761 = vpop.xlane.xlu0 %8760
    %v8762 = vsel %vm1439, %v8746, 0.0
    %8763 = vadd.xlane.f32.xlu0 %v8762
    %v8764 = vpop.xlane.xlu0 %8763
    %v8765 = vsel %vm1439, %v8748, 0.0
    %8766 = vadd.xlane.f32.xlu0 %v8765
    %v8767 = vpop.xlane.xlu0 %8766
    %v8768 = vsel %vm1439, %v8750, 0.0
    %8769 = vadd.xlane.f32.xlu0 %v8768
    %v8770 = vpop.xlane.xlu0 %8769
    %v8771 = vsel %vm1439, %v8752, 0.0
    %8772 = vadd.xlane.f32.xlu0 %v8771
    %v8773 = vpop.xlane.xlu0 %8772
    %v8774 = vsel %vm1439, %v8754, 0.0
    %8775 = vadd.xlane.f32.xlu0 %v8774
    %v8776 = vpop.xlane.xlu0 %8775
    %v8777 = vsel %vm1439, %v8756, 0.0
    %8778 = vadd.xlane.f32.xlu0 %v8777
    %v8779 = vpop.xlane.xlu0 %8778
    %v8780 = vsel %vm1439, %v8758, 0.0
    %8781 = vadd.xlane.f32.xlu0 %v8780
    %v8782 = vpop.xlane.xlu0 %8781
    %v8783 = vrcp.pop %v8761
    %v8784 = vmul.f32 %v8744, %v8783
    %v8785 = vrcp.pop %v8764
    %v8786 = vmul.f32 %v8746, %v8785
    %v8787 = vrcp.pop %v8767
    %v8788 = vmul.f32 %v8748, %v8787
    %v8789 = vrcp.pop %v8770
    %v8790 = vmul.f32 %v8750, %v8789
    %v8791 = vrcp.pop %v8773
    %v8792 = vmul.f32 %v8752, %v8791
    %v8793 = vrcp.pop %v8776
    %v8794 = vmul.f32 %v8754, %v8793
    %v8795 = vrcp.pop %v8779
    %v8796 = vmul.f32 %v8756, %v8795
    %v8797 = vrcp.pop %v8782
    %v8798 = vmul.f32 %v8758, %v8797
    %8799 = vrot.lane.b32.xlu0 %v6721, 48
    %v8800 = vpop.permute.xlu0 %8799
    %v8803 = vsel %vm1439, %v8784, 0
    %8805 = vmatprep.subr.mxu0 0.0
    %8806 = vmatpush1.msra.mxu0 %v8800
    %8807 = vmatprep.subr.mxu0 0.0
    %8808 = vmatpush1.msra.mxu0 0.0
    %8809 = vmatprep.subr.mxu0 0.0
    %8810 = vmatpush1.msra.mxu0 0.0
    %8811 = vmatprep.subr.mxu0 0.0
    %8812 = vmatpush1.msra.mxu0 0.0
    %8813 = vmatprep.subr.mxu0 0.0
    %8814 = vmatpush1.msra.mxu0 0.0
    %8815 = vmatprep.subr.mxu0 0.0
    %8816 = vmatpush1.msra.mxu0 0.0
    %8817 = vmatprep.subr.mxu0 0.0
    %8818 = vmatpush1.msra.mxu0 0.0
    %8819 = vmatprep.subr.mxu0 0.0
    %8820 = vmatpush1.msra.mxu0 0.0
    %8821 = vmatprep.subr.mxu0 0.0
    %8822 = vmatpush1.msra.mxu0 0.0
    %8823 = vmatprep.subr.mxu0 0.0
    %8824 = vmatpush1.msra.mxu0 0.0
    %8825 = vmatprep.subr.mxu0 0.0
    %8826 = vmatpush1.msra.mxu0 0.0
    %8827 = vmatprep.subr.mxu0 0.0
    %8828 = vmatpush1.msra.mxu0 0.0
    %8829 = vmatprep.subr.mxu0 0.0
    %8830 = vmatpush1.msra.mxu0 0.0
    %8831 = vmatprep.subr.mxu0 0.0
    %8832 = vmatpush1.msra.mxu0 0.0
    %8833 = vmatprep.subr.mxu0 0.0
    %8834 = vmatpush1.msra.mxu0 0.0
    %8835 = vmatprep.subr.mxu0 0.0
    %8836 = vmatpush1.msra.mxu0 0.0
    %8837 = vmatprep.subr.mxu0 0.0
    %8838 = vmatpush1.msra.mxu0 0.0
    %8839 = vmatprep.subr.mxu0 0.0
    %8840 = vmatpush1.msra.mxu0 0.0
    %8841 = vmatprep.subr.mxu0 0.0
    %8842 = vmatpush1.msra.mxu0 0.0
    %8843 = vmatprep.subr.mxu0 0.0
    %8844 = vmatpush1.msra.mxu0 0.0
    %8845 = vmatprep.subr.mxu0 0.0
    %8846 = vmatpush1.msra.mxu0 0.0
    %8847 = vmatprep.subr.mxu0 0.0
    %8848 = vmatpush1.msra.mxu0 0.0
    %8849 = vmatprep.subr.mxu0 0.0
    %8850 = vmatpush1.msra.mxu0 0.0
    %8851 = vmatprep.subr.mxu0 0.0
    %8852 = vmatpush1.msra.mxu0 0.0
    %8853 = vmatprep.subr.mxu0 0.0
    %8854 = vmatpush1.msra.mxu0 0.0
    %8855 = vmatprep.subr.mxu0 0.0
    %8856 = vmatpush1.msra.mxu0 0.0
    %8857 = vmatprep.subr.mxu0 0.0
    %8858 = vmatpush1.msra.mxu0 0.0
    %8859 = vmatprep.subr.mxu0 0.0
    %8860 = vmatpush1.msra.mxu0 0.0
    %8861 = vmatprep.subr.mxu0 0.0
    %8862 = vmatpush1.msra.mxu0 0.0
    %8863 = vmatprep.subr.mxu0 0.0
    %8864 = vmatpush1.msra.mxu0 0.0
    %8865 = vmatprep.subr.mxu0 0.0
    %8866 = vmatpush1.msra.mxu0 0.0
    %8867 = vmatprep.subr.mxu0 0.0
    %8868 = vmatpush1.msra.mxu0 0.0
    %8869 = vmatprep.mubr.f32.mxu0 0.0
    %8870 = vmatmul.mubr.f32.gmra.mrb[0].mxu0 %v8803
    %v8871 = vpop.f32.mrb[0].mxu0
    %v8872 = vadd.f32 0.0, %v8871
    %v8873 = vpop.f32.mrb[0].mxu0
    %8874 = vdwg.mxu0
    %8875 = vrot.lane.b32.xlu0 %v6726, 48
    %v8876 = vpop.permute.xlu0 %8875
    %v8879 = vsel %vm1439, %v8786, 0
    %8881 = vmatprep.subr.mxu0 0.0
    %8882 = vmatpush1.msra.mxu0 %v8876
    %8883 = vmatprep.subr.mxu0 0.0
    %8884 = vmatpush1.msra.mxu0 0.0
    %8885 = vmatprep.subr.mxu0 0.0
    %8886 = vmatpush1.msra.mxu0 0.0
    %8887 = vmatprep.subr.mxu0 0.0
    %8888 = vmatpush1.msra.mxu0 0.0
    %8889 = vmatprep.subr.mxu0 0.0
    %8890 = vmatpush1.msra.mxu0 0.0
    %8891 = vmatprep.subr.mxu0 0.0
    %8892 = vmatpush1.msra.mxu0 0.0
    %8893 = vmatprep.subr.mxu0 0.0
    %8894 = vmatpush1.msra.mxu0 0.0
    %8895 = vmatprep.subr.mxu0 0.0
    %8896 = vmatpush1.msra.mxu0 0.0
    %8897 = vmatprep.subr.mxu0 0.0
    %8898 = vmatpush1.msra.mxu0 0.0
    %8899 = vmatprep.subr.mxu0 0.0
    %8900 = vmatpush1.msra.mxu0 0.0
    %8901 = vmatprep.subr.mxu0 0.0
    %8902 = vmatpush1.msra.mxu0 0.0
    %8903 = vmatprep.subr.mxu0 0.0
    %8904 = vmatpush1.msra.mxu0 0.0
    %8905 = vmatprep.subr.mxu0 0.0
    %8906 = vmatpush1.msra.mxu0 0.0
    %8907 = vmatprep.subr.mxu0 0.0
    %8908 = vmatpush1.msra.mxu0 0.0
    %8909 = vmatprep.subr.mxu0 0.0
    %8910 = vmatpush1.msra.mxu0 0.0
    %8911 = vmatprep.subr.mxu0 0.0
    %8912 = vmatpush1.msra.mxu0 0.0
    %8913 = vmatprep.subr.mxu0 0.0
    %8914 = vmatpush1.msra.mxu0 0.0
    %8915 = vmatprep.subr.mxu0 0.0
    %8916 = vmatpush1.msra.mxu0 0.0
    %8917 = vmatprep.subr.mxu0 0.0
    %8918 = vmatpush1.msra.mxu0 0.0
    %8919 = vmatprep.subr.mxu0 0.0
    %8920 = vmatpush1.msra.mxu0 0.0
    %8921 = vmatprep.subr.mxu0 0.0
    %8922 = vmatpush1.msra.mxu0 0.0
    %8923 = vmatprep.subr.mxu0 0.0
    %8924 = vmatpush1.msra.mxu0 0.0
    %8925 = vmatprep.subr.mxu0 0.0
    %8926 = vmatpush1.msra.mxu0 0.0
    %8927 = vmatprep.subr.mxu0 0.0
    %8928 = vmatpush1.msra.mxu0 0.0
    %8929 = vmatprep.subr.mxu0 0.0
    %8930 = vmatpush1.msra.mxu0 0.0
    %8931 = vmatprep.subr.mxu0 0.0
    %8932 = vmatpush1.msra.mxu0 0.0
    %8933 = vmatprep.subr.mxu0 0.0
    %8934 = vmatpush1.msra.mxu0 0.0
    %8935 = vmatprep.subr.mxu0 0.0
    %8936 = vmatpush1.msra.mxu0 0.0
    %8937 = vmatprep.subr.mxu0 0.0
    %8938 = vmatpush1.msra.mxu0 0.0
    %8939 = vmatprep.subr.mxu0 0.0
    %8940 = vmatpush1.msra.mxu0 0.0
    %8941 = vmatprep.subr.mxu0 0.0
    %8942 = vmatpush1.msra.mxu0 0.0
    %8943 = vmatprep.subr.mxu0 0.0
    %8944 = vmatpush1.msra.mxu0 0.0
    %8945 = vmatprep.mubr.f32.mxu0 0.0
    %8946 = vmatmul.mubr.f32.gmra.mrb[0].mxu0 %v8879
    %v8947 = vpop.f32.mrb[0].mxu0
    %v8948 = vadd.f32 0.0, %v8947
    %v8949 = vpop.f32.mrb[0].mxu0
    %8950 = vdwg.mxu0
    %8951 = vrot.lane.b32.xlu0 %v6731, 48
    %v8952 = vpop.permute.xlu0 %8951
    %v8955 = vsel %vm1439, %v8788, 0
    %8957 = vmatprep.subr.mxu0 0.0
    %8958 = vmatpush1.msra.mxu0 %v8952
    %8959 = vmatprep.subr.mxu0 0.0
    %8960 = vmatpush1.msra.mxu0 0.0
    %8961 = vmatprep.subr.mxu0 0.0
    %8962 = vmatpush1.msra.mxu0 0.0
    %8963 = vmatprep.subr.mxu0 0.0
    %8964 = vmatpush1.msra.mxu0 0.0
    %8965 = vmatprep.subr.mxu0 0.0
    %8966 = vmatpush1.msra.mxu0 0.0
    %8967 = vmatprep.subr.mxu0 0.0
    %8968 = vmatpush1.msra.mxu0 0.0
    %8969 = vmatprep.subr.mxu0 0.0
    %8970 = vmatpush1.msra.mxu0 0.0
    %8971 = vmatprep.subr.mxu0 0.0
    %8972 = vmatpush1.msra.mxu0 0.0
    %8973 = vmatprep.subr.mxu0 0.0
    %8974 = vmatpush1.msra.mxu0 0.0
    %8975 = vmatprep.subr.mxu0 0.0
    %8976 = vmatpush1.msra.mxu0 0.0
    %8977 = vmatprep.subr.mxu0 0.0
    %8978 = vmatpush1.msra.mxu0 0.0
    %8979 = vmatprep.subr.mxu0 0.0
    %8980 = vmatpush1.msra.mxu0 0.0
    %8981 = vmatprep.subr.mxu0 0.0
    %8982 = vmatpush1.msra.mxu0 0.0
    %8983 = vmatprep.subr.mxu0 0.0
    %8984 = vmatpush1.msra.mxu0 0.0
    %8985 = vmatprep.subr.mxu0 0.0
    %8986 = vmatpush1.msra.mxu0 0.0
    %8987 = vmatprep.subr.mxu0 0.0
    %8988 = vmatpush1.msra.mxu0 0.0
    %8989 = vmatprep.subr.mxu0 0.0
    %8990 = vmatpush1.msra.mxu0 0.0
    %8991 = vmatprep.subr.mxu0 0.0
    %8992 = vmatpush1.msra.mxu0 0.0
    %8993 = vmatprep.subr.mxu0 0.0
    %8994 = vmatpush1.msra.mxu0 0.0
    %8995 = vmatprep.subr.mxu0 0.0
    %8996 = vmatpush1.msra.mxu0 0.0
    %8997 = vmatprep.subr.mxu0 0.0
    %8998 = vmatpush1.msra.mxu0 0.0
    %8999 = vmatprep.subr.mxu0 0.0
    %9000 = vmatpush1.msra.mxu0 0.0
    %9001 = vmatprep.subr.mxu0 0.0
    %9002 = vmatpush1.msra.mxu0 0.0
    %9003 = vmatprep.subr.mxu0 0.0
    %9004 = vmatpush1.msra.mxu0 0.0
    %9005 = vmatprep.subr.mxu0 0.0
    %9006 = vmatpush1.msra.mxu0 0.0
    %9007 = vmatprep.subr.mxu0 0.0
    %9008 = vmatpush1.msra.mxu0 0.0
    %9009 = vmatprep.subr.mxu0 0.0
    %9010 = vmatpush1.msra.mxu0 0.0
    %9011 = vmatprep.subr.mxu0 0.0
    %9012 = vmatpush1.msra.mxu0 0.0
    %9013 = vmatprep.subr.mxu0 0.0
    %9014 = vmatpush1.msra.mxu0 0.0
    %9015 = vmatprep.subr.mxu0 0.0
    %9016 = vmatpush1.msra.mxu0 0.0
    %9017 = vmatprep.subr.mxu0 0.0
    %9018 = vmatpush1.msra.mxu0 0.0
    %9019 = vmatprep.subr.mxu0 0.0
    %9020 = vmatpush1.msra.mxu0 0.0
    %9021 = vmatprep.mubr.f32.mxu0 0.0
    %9022 = vmatmul.mubr.f32.gmra.mrb[0].mxu0 %v8955
    %v9023 = vpop.f32.mrb[0].mxu0
    %v9024 = vadd.f32 0.0, %v9023
    %v9025 = vpop.f32.mrb[0].mxu0
    %9026 = vdwg.mxu0
    %9027 = vrot.lane.b32.xlu0 %v6736, 48
    %v9028 = vpop.permute.xlu0 %9027
    %v9031 = vsel %vm1439, %v8790, 0
    %9033 = vmatprep.subr.mxu0 0.0
    %9034 = vmatpush1.msra.mxu0 %v9028
    %9035 = vmatprep.subr.mxu0 0.0
    %9036 = vmatpush1.msra.mxu0 0.0
    %9037 = vmatprep.subr.mxu0 0.0
    %9038 = vmatpush1.msra.mxu0 0.0
    %9039 = vmatprep.subr.mxu0 0.0
    %9040 = vmatpush1.msra.mxu0 0.0
    %9041 = vmatprep.subr.mxu0 0.0
    %9042 = vmatpush1.msra.mxu0 0.0
    %9043 = vmatprep.subr.mxu0 0.0
    %9044 = vmatpush1.msra.mxu0 0.0
    %9045 = vmatprep.subr.mxu0 0.0
    %9046 = vmatpush1.msra.mxu0 0.0
    %9047 = vmatprep.subr.mxu0 0.0
    %9048 = vmatpush1.msra.mxu0 0.0
    %9049 = vmatprep.subr.mxu0 0.0
    %9050 = vmatpush1.msra.mxu0 0.0
    %9051 = vmatprep.subr.mxu0 0.0
    %9052 = vmatpush1.msra.mxu0 0.0
    %9053 = vmatprep.subr.mxu0 0.0
    %9054 = vmatpush1.msra.mxu0 0.0
    %9055 = vmatprep.subr.mxu0 0.0
    %9056 = vmatpush1.msra.mxu0 0.0
    %9057 = vmatprep.subr.mxu0 0.0
    %9058 = vmatpush1.msra.mxu0 0.0
    %9059 = vmatprep.subr.mxu0 0.0
    %9060 = vmatpush1.msra.mxu0 0.0
    %9061 = vmatprep.subr.mxu0 0.0
    %9062 = vmatpush1.msra.mxu0 0.0
    %9063 = vmatprep.subr.mxu0 0.0
    %9064 = vmatpush1.msra.mxu0 0.0
    %9065 = vmatprep.subr.mxu0 0.0
    %9066 = vmatpush1.msra.mxu0 0.0
    %9067 = vmatprep.subr.mxu0 0.0
    %9068 = vmatpush1.msra.mxu0 0.0
    %9069 = vmatprep.subr.mxu0 0.0
    %9070 = vmatpush1.msra.mxu0 0.0
    %9071 = vmatprep.subr.mxu0 0.0
    %9072 = vmatpush1.msra.mxu0 0.0
    %9073 = vmatprep.subr.mxu0 0.0
    %9074 = vmatpush1.msra.mxu0 0.0
    %9075 = vmatprep.subr.mxu0 0.0
    %9076 = vmatpush1.msra.mxu0 0.0
    %9077 = vmatprep.subr.mxu0 0.0
    %9078 = vmatpush1.msra.mxu0 0.0
    %9079 = vmatprep.subr.mxu0 0.0
    %9080 = vmatpush1.msra.mxu0 0.0
    %9081 = vmatprep.subr.mxu0 0.0
    %9082 = vmatpush1.msra.mxu0 0.0
    %9083 = vmatprep.subr.mxu0 0.0
    %9084 = vmatpush1.msra.mxu0 0.0
    %9085 = vmatprep.subr.mxu0 0.0
    %9086 = vmatpush1.msra.mxu0 0.0
    %9087 = vmatprep.subr.mxu0 0.0
    %9088 = vmatpush1.msra.mxu0 0.0
    %9089 = vmatprep.subr.mxu0 0.0
    %9090 = vmatpush1.msra.mxu0 0.0
    %9091 = vmatprep.subr.mxu0 0.0
    %9092 = vmatpush1.msra.mxu0 0.0
    %9093 = vmatprep.subr.mxu0 0.0
    %9094 = vmatpush1.msra.mxu0 0.0
    %9095 = vmatprep.subr.mxu0 0.0
    %9096 = vmatpush1.msra.mxu0 0.0
    %9097 = vmatprep.mubr.f32.mxu0 0.0
    %9098 = vmatmul.mubr.f32.gmra.mrb[0].mxu0 %v9031
    %v9099 = vpop.f32.mrb[0].mxu0
    %v9100 = vadd.f32 0.0, %v9099
    %v9101 = vpop.f32.mrb[0].mxu0
    %9102 = vdwg.mxu0
    %9103 = vrot.lane.b32.xlu0 %v6741, 48
    %v9104 = vpop.permute.xlu0 %9103
    %v9107 = vsel %vm1439, %v8792, 0
    %9109 = vmatprep.subr.mxu0 0.0
    %9110 = vmatpush1.msra.mxu0 %v9104
    %9111 = vmatprep.subr.mxu0 0.0
    %9112 = vmatpush1.msra.mxu0 0.0
    %9113 = vmatprep.subr.mxu0 0.0
    %9114 = vmatpush1.msra.mxu0 0.0
    %9115 = vmatprep.subr.mxu0 0.0
    %9116 = vmatpush1.msra.mxu0 0.0
    %9117 = vmatprep.subr.mxu0 0.0
    %9118 = vmatpush1.msra.mxu0 0.0
    %9119 = vmatprep.subr.mxu0 0.0
    %9120 = vmatpush1.msra.mxu0 0.0
    %9121 = vmatprep.subr.mxu0 0.0
    %9122 = vmatpush1.msra.mxu0 0.0
    %9123 = vmatprep.subr.mxu0 0.0
    %9124 = vmatpush1.msra.mxu0 0.0
    %9125 = vmatprep.subr.mxu0 0.0
    %9126 = vmatpush1.msra.mxu0 0.0
    %9127 = vmatprep.subr.mxu0 0.0
    %9128 = vmatpush1.msra.mxu0 0.0
    %9129 = vmatprep.subr.mxu0 0.0
    %9130 = vmatpush1.msra.mxu0 0.0
    %9131 = vmatprep.subr.mxu0 0.0
    %9132 = vmatpush1.msra.mxu0 0.0
    %9133 = vmatprep.subr.mxu0 0.0
    %9134 = vmatpush1.msra.mxu0 0.0
    %9135 = vmatprep.subr.mxu0 0.0
    %9136 = vmatpush1.msra.mxu0 0.0
    %9137 = vmatprep.subr.mxu0 0.0
    %9138 = vmatpush1.msra.mxu0 0.0
    %9139 = vmatprep.subr.mxu0 0.0
    %9140 = vmatpush1.msra.mxu0 0.0
    %9141 = vmatprep.subr.mxu0 0.0
    %9142 = vmatpush1.msra.mxu0 0.0
    %9143 = vmatprep.subr.mxu0 0.0
    %9144 = vmatpush1.msra.mxu0 0.0
    %9145 = vmatprep.subr.mxu0 0.0
    %9146 = vmatpush1.msra.mxu0 0.0
    %9147 = vmatprep.subr.mxu0 0.0
    %9148 = vmatpush1.msra.mxu0 0.0
    %9149 = vmatprep.subr.mxu0 0.0
    %9150 = vmatpush1.msra.mxu0 0.0
    %9151 = vmatprep.subr.mxu0 0.0
    %9152 = vmatpush1.msra.mxu0 0.0
    %9153 = vmatprep.subr.mxu0 0.0
    %9154 = vmatpush1.msra.mxu0 0.0
    %9155 = vmatprep.subr.mxu0 0.0
    %9156 = vmatpush1.msra.mxu0 0.0
    %9157 = vmatprep.subr.mxu0 0.0
    %9158 = vmatpush1.msra.mxu0 0.0
    %9159 = vmatprep.subr.mxu0 0.0
    %9160 = vmatpush1.msra.mxu0 0.0
    %9161 = vmatprep.subr.mxu0 0.0
    %9162 = vmatpush1.msra.mxu0 0.0
    %9163 = vmatprep.subr.mxu0 0.0
    %9164 = vmatpush1.msra.mxu0 0.0
    %9165 = vmatprep.subr.mxu0 0.0
    %9166 = vmatpush1.msra.mxu0 0.0
    %9167 = vmatprep.subr.mxu0 0.0
    %9168 = vmatpush1.msra.mxu0 0.0
    %9169 = vmatprep.subr.mxu0 0.0
    %9170 = vmatpush1.msra.mxu0 0.0
    %9171 = vmatprep.subr.mxu0 0.0
    %9172 = vmatpush1.msra.mxu0 0.0
    %9173 = vmatprep.mubr.f32.mxu0 0.0
    %9174 = vmatmul.mubr.f32.gmra.mrb[0].mxu0 %v9107
    %v9175 = vpop.f32.mrb[0].mxu0
    %v9176 = vadd.f32 0.0, %v9175
    %v9177 = vpop.f32.mrb[0].mxu0
    %9178 = vdwg.mxu0
    %9179 = vrot.lane.b32.xlu0 %v6746, 48
    %v9180 = vpop.permute.xlu0 %9179
    %v9183 = vsel %vm1439, %v8794, 0
    %9185 = vmatprep.subr.mxu0 0.0
    %9186 = vmatpush1.msra.mxu0 %v9180
    %9187 = vmatprep.subr.mxu0 0.0
    %9188 = vmatpush1.msra.mxu0 0.0
    %9189 = vmatprep.subr.mxu0 0.0
    %9190 = vmatpush1.msra.mxu0 0.0
    %9191 = vmatprep.subr.mxu0 0.0
    %9192 = vmatpush1.msra.mxu0 0.0
    %9193 = vmatprep.subr.mxu0 0.0
    %9194 = vmatpush1.msra.mxu0 0.0
    %9195 = vmatprep.subr.mxu0 0.0
    %9196 = vmatpush1.msra.mxu0 0.0
    %9197 = vmatprep.subr.mxu0 0.0
    %9198 = vmatpush1.msra.mxu0 0.0
    %9199 = vmatprep.subr.mxu0 0.0
    %9200 = vmatpush1.msra.mxu0 0.0
    %9201 = vmatprep.subr.mxu0 0.0
    %9202 = vmatpush1.msra.mxu0 0.0
    %9203 = vmatprep.subr.mxu0 0.0
    %9204 = vmatpush1.msra.mxu0 0.0
    %9205 = vmatprep.subr.mxu0 0.0
    %9206 = vmatpush1.msra.mxu0 0.0
    %9207 = vmatprep.subr.mxu0 0.0
    %9208 = vmatpush1.msra.mxu0 0.0
    %9209 = vmatprep.subr.mxu0 0.0
    %9210 = vmatpush1.msra.mxu0 0.0
    %9211 = vmatprep.subr.mxu0 0.0
    %9212 = vmatpush1.msra.mxu0 0.0
    %9213 = vmatprep.subr.mxu0 0.0
    %9214 = vmatpush1.msra.mxu0 0.0
    %9215 = vmatprep.subr.mxu0 0.0
    %9216 = vmatpush1.msra.mxu0 0.0
    %9217 = vmatprep.subr.mxu0 0.0
    %9218 = vmatpush1.msra.mxu0 0.0
    %9219 = vmatprep.subr.mxu0 0.0
    %9220 = vmatpush1.msra.mxu0 0.0
    %9221 = vmatprep.subr.mxu0 0.0
    %9222 = vmatpush1.msra.mxu0 0.0
    %9223 = vmatprep.subr.mxu0 0.0
    %9224 = vmatpush1.msra.mxu0 0.0
    %9225 = vmatprep.subr.mxu0 0.0
    %9226 = vmatpush1.msra.mxu0 0.0
    %9227 = vmatprep.subr.mxu0 0.0
    %9228 = vmatpush1.msra.mxu0 0.0
    %9229 = vmatprep.subr.mxu0 0.0
    %9230 = vmatpush1.msra.mxu0 0.0
    %9231 = vmatprep.subr.mxu0 0.0
    %9232 = vmatpush1.msra.mxu0 0.0
    %9233 = vmatprep.subr.mxu0 0.0
    %9234 = vmatpush1.msra.mxu0 0.0
    %9235 = vmatprep.subr.mxu0 0.0
    %9236 = vmatpush1.msra.mxu0 0.0
    %9237 = vmatprep.subr.mxu0 0.0
    %9238 = vmatpush1.msra.mxu0 0.0
    %9239 = vmatprep.subr.mxu0 0.0
    %9240 = vmatpush1.msra.mxu0 0.0
    %9241 = vmatprep.subr.mxu0 0.0
    %9242 = vmatpush1.msra.mxu0 0.0
    %9243 = vmatprep.subr.mxu0 0.0
    %9244 = vmatpush1.msra.mxu0 0.0
    %9245 = vmatprep.subr.mxu0 0.0
    %9246 = vmatpush1.msra.mxu0 0.0
    %9247 = vmatprep.subr.mxu0 0.0
    %9248 = vmatpush1.msra.mxu0 0.0
    %9249 = vmatprep.mubr.f32.mxu0 0.0
    %9250 = vmatmul.mubr.f32.gmra.mrb[0].mxu0 %v9183
    %v9251 = vpop.f32.mrb[0].mxu0
    %v9252 = vadd.f32 0.0, %v9251
    %v9253 = vpop.f32.mrb[0].mxu0
    %9254 = vdwg.mxu0
    %9255 = vrot.lane.b32.xlu0 %v6751, 48
    %v9256 = vpop.permute.xlu0 %9255
    %v9259 = vsel %vm1439, %v8796, 0
    %9261 = vmatprep.subr.mxu0 0.0
    %9262 = vmatpush1.msra.mxu0 %v9256
    %9263 = vmatprep.subr.mxu0 0.0
    %9264 = vmatpush1.msra.mxu0 0.0
    %9265 = vmatprep.subr.mxu0 0.0
    %9266 = vmatpush1.msra.mxu0 0.0
    %9267 = vmatprep.subr.mxu0 0.0
    %9268 = vmatpush1.msra.mxu0 0.0
    %9269 = vmatprep.subr.mxu0 0.0
    %9270 = vmatpush1.msra.mxu0 0.0
    %9271 = vmatprep.subr.mxu0 0.0
    %9272 = vmatpush1.msra.mxu0 0.0
    %9273 = vmatprep.subr.mxu0 0.0
    %9274 = vmatpush1.msra.mxu0 0.0
    %9275 = vmatprep.subr.mxu0 0.0
    %9276 = vmatpush1.msra.mxu0 0.0
    %9277 = vmatprep.subr.mxu0 0.0
    %9278 = vmatpush1.msra.mxu0 0.0
    %9279 = vmatprep.subr.mxu0 0.0
    %9280 = vmatpush1.msra.mxu0 0.0
    %9281 = vmatprep.subr.mxu0 0.0
    %9282 = vmatpush1.msra.mxu0 0.0
    %9283 = vmatprep.subr.mxu0 0.0
    %9284 = vmatpush1.msra.mxu0 0.0
    %9285 = vmatprep.subr.mxu0 0.0
    %9286 = vmatpush1.msra.mxu0 0.0
    %9287 = vmatprep.subr.mxu0 0.0
    %9288 = vmatpush1.msra.mxu0 0.0
    %9289 = vmatprep.subr.mxu0 0.0
    %9290 = vmatpush1.msra.mxu0 0.0
    %9291 = vmatprep.subr.mxu0 0.0
    %9292 = vmatpush1.msra.mxu0 0.0
    %9293 = vmatprep.subr.mxu0 0.0
    %9294 = vmatpush1.msra.mxu0 0.0
    %9295 = vmatprep.subr.mxu0 0.0
    %9296 = vmatpush1.msra.mxu0 0.0
    %9297 = vmatprep.subr.mxu0 0.0
    %9298 = vmatpush1.msra.mxu0 0.0
    %9299 = vmatprep.subr.mxu0 0.0
    %9300 = vmatpush1.msra.mxu0 0.0
    %9301 = vmatprep.subr.mxu0 0.0
    %9302 = vmatpush1.msra.mxu0 0.0
    %9303 = vmatprep.subr.mxu0 0.0
    %9304 = vmatpush1.msra.mxu0 0.0
    %9305 = vmatprep.subr.mxu0 0.0
    %9306 = vmatpush1.msra.mxu0 0.0
    %9307 = vmatprep.subr.mxu0 0.0
    %9308 = vmatpush1.msra.mxu0 0.0
    %9309 = vmatprep.subr.mxu0 0.0
    %9310 = vmatpush1.msra.mxu0 0.0
    %9311 = vmatprep.subr.mxu0 0.0
    %9312 = vmatpush1.msra.mxu0 0.0
    %9313 = vmatprep.subr.mxu0 0.0
    %9314 = vmatpush1.msra.mxu0 0.0
    %9315 = vmatprep.subr.mxu0 0.0
    %9316 = vmatpush1.msra.mxu0 0.0
    %9317 = vmatprep.subr.mxu0 0.0
    %9318 = vmatpush1.msra.mxu0 0.0
    %9319 = vmatprep.subr.mxu0 0.0
    %9320 = vmatpush1.msra.mxu0 0.0
    %9321 = vmatprep.subr.mxu0 0.0
    %9322 = vmatpush1.msra.mxu0 0.0
    %9323 = vmatprep.subr.mxu0 0.0
    %9324 = vmatpush1.msra.mxu0 0.0
    %9325 = vmatprep.mubr.f32.mxu0 0.0
    %9326 = vmatmul.mubr.f32.gmra.mrb[0].mxu0 %v9259
    %v9327 = vpop.f32.mrb[0].mxu0
    %v9328 = vadd.f32 0.0, %v9327
    %v9329 = vpop.f32.mrb[0].mxu0
    %9330 = vdwg.mxu0
    %9331 = vrot.lane.b32.xlu0 %v6756, 48
    %v9332 = vpop.permute.xlu0 %9331
    %v9335 = vsel %vm1439, %v8798, 0
    %9337 = vmatprep.subr.mxu0 0.0
    %9338 = vmatpush1.msra.mxu0 %v9332
    %9339 = vmatprep.subr.mxu0 0.0
    %9340 = vmatpush1.msra.mxu0 0.0
    %9341 = vmatprep.subr.mxu0 0.0
    %9342 = vmatpush1.msra.mxu0 0.0
    %9343 = vmatprep.subr.mxu0 0.0
    %9344 = vmatpush1.msra.mxu0 0.0
    %9345 = vmatprep.subr.mxu0 0.0
    %9346 = vmatpush1.msra.mxu0 0.0
    %9347 = vmatprep.subr.mxu0 0.0
    %9348 = vmatpush1.msra.mxu0 0.0
    %9349 = vmatprep.subr.mxu0 0.0
    %9350 = vmatpush1.msra.mxu0 0.0
    %9351 = vmatprep.subr.mxu0 0.0
    %9352 = vmatpush1.msra.mxu0 0.0
    %9353 = vmatprep.subr.mxu0 0.0
    %9354 = vmatpush1.msra.mxu0 0.0
    %9355 = vmatprep.subr.mxu0 0.0
    %9356 = vmatpush1.msra.mxu0 0.0
    %9357 = vmatprep.subr.mxu0 0.0
    %9358 = vmatpush1.msra.mxu0 0.0
    %9359 = vmatprep.subr.mxu0 0.0
    %9360 = vmatpush1.msra.mxu0 0.0
    %9361 = vmatprep.subr.mxu0 0.0
    %9362 = vmatpush1.msra.mxu0 0.0
    %9363 = vmatprep.subr.mxu0 0.0
    %9364 = vmatpush1.msra.mxu0 0.0
    %9365 = vmatprep.subr.mxu0 0.0
    %9366 = vmatpush1.msra.mxu0 0.0
    %9367 = vmatprep.subr.mxu0 0.0
    %9368 = vmatpush1.msra.mxu0 0.0
    %9369 = vmatprep.subr.mxu0 0.0
    %9370 = vmatpush1.msra.mxu0 0.0
    %9371 = vmatprep.subr.mxu0 0.0
    %9372 = vmatpush1.msra.mxu0 0.0
    %9373 = vmatprep.subr.mxu0 0.0
    %9374 = vmatpush1.msra.mxu0 0.0
    %9375 = vmatprep.subr.mxu0 0.0
    %9376 = vmatpush1.msra.mxu0 0.0
    %9377 = vmatprep.subr.mxu0 0.0
    %9378 = vmatpush1.msra.mxu0 0.0
    %9379 = vmatprep.subr.mxu0 0.0
    %9380 = vmatpush1.msra.mxu0 0.0
    %9381 = vmatprep.subr.mxu0 0.0
    %9382 = vmatpush1.msra.mxu0 0.0
    %9383 = vmatprep.subr.mxu0 0.0
    %9384 = vmatpush1.msra.mxu0 0.0
    %9385 = vmatprep.subr.mxu0 0.0
    %9386 = vmatpush1.msra.mxu0 0.0
    %9387 = vmatprep.subr.mxu0 0.0
    %9388 = vmatpush1.msra.mxu0 0.0
    %9389 = vmatprep.subr.mxu0 0.0
    %9390 = vmatpush1.msra.mxu0 0.0
    %9391 = vmatprep.subr.mxu0 0.0
    %9392 = vmatpush1.msra.mxu0 0.0
    %9393 = vmatprep.subr.mxu0 0.0
    %9394 = vmatpush1.msra.mxu0 0.0
    %9395 = vmatprep.subr.mxu0 0.0
    %9396 = vmatpush1.msra.mxu0 0.0
    %9397 = vmatprep.subr.mxu0 0.0
    %9398 = vmatpush1.msra.mxu0 0.0
    %9399 = vmatprep.subr.mxu0 0.0
    %9400 = vmatpush1.msra.mxu0 0.0
    %9401 = vmatprep.mubr.f32.mxu0 0.0
    %9402 = vmatmul.mubr.f32.gmra.mrb[0].mxu0 %v9335
    %v9403 = vpop.f32.mrb[0].mxu0
    %v9404 = vadd.f32 0.0, %v9403
    %v9405 = vpop.f32.mrb[0].mxu0
    %9406 = vdwg.mxu0
    %9415 = vrot.lane.b32.xlu0 %v8872, 16
    %v9416 = vpop.permute.xlu0 %9415
    %9417 = vrot.lane.b32.xlu0 %v8948, 16
    %v9418 = vpop.permute.xlu0 %9417
    %9419 = vrot.lane.b32.xlu0 %v9024, 16
    %v9420 = vpop.permute.xlu0 %9419
    %9421 = vrot.lane.b32.xlu0 %v9100, 16
    %v9422 = vpop.permute.xlu0 %9421
    %9423 = vrot.lane.b32.xlu0 %v9176, 16
    %v9424 = vpop.permute.xlu0 %9423
    %9425 = vrot.lane.b32.xlu0 %v9252, 16
    %v9426 = vpop.permute.xlu0 %9425
    %9427 = vrot.lane.b32.xlu0 %v9328, 16
    %v9428 = vpop.permute.xlu0 %9427
    %9429 = vrot.lane.b32.xlu0 %v9404, 16
    %v9430 = vpop.permute.xlu0 %9429
    %v9439 = vsel %vm817, %v7552, %v9416
    %v9440 = vsel %vm817, %v7628, %v9418
    %v9441 = vsel %vm817, %v7704, %v9420
    %v9442 = vsel %vm817, %v7780, %v9422
    %v9443 = vsel %vm817, %v7856, %v9424
    %v9444 = vsel %vm817, %v7932, %v9426
    %v9445 = vsel %vm817, %v8008, %v9428
    %v9446 = vsel %vm817, %v8084, %v9430
    %v9447 = vmax.f32 %v9439, 0.0
    %v9448 = vmax.f32 %v9440, 0.0
    %v9449 = vmax.f32 %v9441, 0.0
    %v9450 = vmax.f32 %v9442, 0.0
    %v9451 = vmax.f32 %v9443, 0.0
    %v9452 = vmax.f32 %v9444, 0.0
    %v9453 = vmax.f32 %v9445, 0.0
    %v9454 = vmax.f32 %v9446, 0.0
    %v9455 = vadd.f32 %v9447, %v6609
    %v9456 = vadd.f32 %v9448, %v6610
    %v9457 = vadd.f32 %v9449, %v6611
    %v9458 = vadd.f32 %v9450, %v6612
    %v9459 = vadd.f32 %v9451, %v6613
    %v9460 = vadd.f32 %v9452, %v6614
    %v9461 = vadd.f32 %v9453, %v6615
    %v9462 = vadd.f32 %v9454, %v6616
    %s9463 = scalar_lea.vmem %s6, 4
    %v9464 = vld [vmem:[%s9463] sm:$0x3]
    %v9465 = vsel %vm123, %v9455, 0.0
    %9466 = vadd.xlane.f32.xlu0 %v9465
    %v9467 = vpop.xlane.xlu0 %9466
    %v9468 = vsel %vm123, %v9456, 0.0
    %9469 = vadd.xlane.f32.xlu0 %v9468
    %v9470 = vpop.xlane.xlu0 %9469
    %v9471 = vsel %vm123, %v9457, 0.0
    %9472 = vadd.xlane.f32.xlu0 %v9471
    %v9473 = vpop.xlane.xlu0 %9472
    %v9474 = vsel %vm123, %v9458, 0.0
    %9475 = vadd.xlane.f32.xlu0 %v9474
    %v9476 = vpop.xlane.xlu0 %9475
    %v9477 = vsel %vm123, %v9459, 0.0
    %9478 = vadd.xlane.f32.xlu0 %v9477
    %v9479 = vpop.xlane.xlu0 %9478
    %v9480 = vsel %vm123, %v9460, 0.0
    %9481 = vadd.xlane.f32.xlu0 %v9480
    %v9482 = vpop.xlane.xlu0 %9481
    %v9483 = vsel %vm123, %v9461, 0.0
    %9484 = vadd.xlane.f32.xlu0 %v9483
    %v9485 = vpop.xlane.xlu0 %9484
    %v9486 = vsel %vm123, %v9462, 0.0
    %9487 = vadd.xlane.f32.xlu0 %v9486
    %v9488 = vpop.xlane.xlu0 %9487
    %v9489 = vmul.f32 %v9467, %v277
    %v9490 = vmul.f32 %v9470, %v277
    %v9491 = vmul.f32 %v9473, %v277
    %v9492 = vmul.f32 %v9476, %v277
    %v9493 = vmul.f32 %v9479, %v277
    %v9494 = vmul.f32 %v9482, %v277
    %v9495 = vmul.f32 %v9485, %v277
    %v9496 = vmul.f32 %v9488, %v277
    %v9497 = vsub.f32 %v9455, %v9489
    %v9498 = vsub.f32 %v9456, %v9490
    %v9499 = vsub.f32 %v9457, %v9491
    %v9500 = vsub.f32 %v9458, %v9492
    %v9501 = vsub.f32 %v9459, %v9493
    %v9502 = vsub.f32 %v9460, %v9494
    %v9503 = vsub.f32 %v9461, %v9495
    %v9504 = vsub.f32 %v9462, %v9496
    %v9505 = vmul.f32 %v9497, %v9497
    %v9506 = vmul.f32 %v9498, %v9498
    %v9507 = vmul.f32 %v9499, %v9499
    %v9508 = vmul.f32 %v9500, %v9500
    %v9509 = vmul.f32 %v9501, %v9501
    %v9510 = vmul.f32 %v9502, %v9502
    %v9511 = vmul.f32 %v9503, %v9503
    %v9512 = vmul.f32 %v9504, %v9504
    %v9513 = vsel %vm123, %v9505, 0.0
    %9514 = vadd.xlane.f32.xlu0 %v9513
    %v9515 = vpop.xlane.xlu0 %9514
    %v9516 = vsel %vm123, %v9506, 0.0
    %9517 = vadd.xlane.f32.xlu0 %v9516
    %v9518 = vpop.xlane.xlu0 %9517
    %v9519 = vsel %vm123, %v9507, 0.0
    %9520 = vadd.xlane.f32.xlu0 %v9519
    %v9521 = vpop.xlane.xlu0 %9520
    %v9522 = vsel %vm123, %v9508, 0.0
    %9523 = vadd.xlane.f32.xlu0 %v9522
    %v9524 = vpop.xlane.xlu0 %9523
    %v9525 = vsel %vm123, %v9509, 0.0
    %9526 = vadd.xlane.f32.xlu0 %v9525
    %v9527 = vpop.xlane.xlu0 %9526
    %v9528 = vsel %vm123, %v9510, 0.0
    %9529 = vadd.xlane.f32.xlu0 %v9528
    %v9530 = vpop.xlane.xlu0 %9529
    %v9531 = vsel %vm123, %v9511, 0.0
    %9532 = vadd.xlane.f32.xlu0 %v9531
    %v9533 = vpop.xlane.xlu0 %9532
    %v9534 = vsel %vm123, %v9512, 0.0
    %9535 = vadd.xlane.f32.xlu0 %v9534
    %v9536 = vpop.xlane.xlu0 %9535
    %v9537 = vmul.f32 %v9515, %v277
    %v9538 = vmul.f32 %v9518, %v277
    %v9539 = vmul.f32 %v9521, %v277
    %v9540 = vmul.f32 %v9524, %v277
    %v9541 = vmul.f32 %v9527, %v277
    %v9542 = vmul.f32 %v9530, %v277
    %v9543 = vmul.f32 %v9533, %v277
    %v9544 = vmul.f32 %v9536, %v277
    %v9545 = vadd.f32 %v9537, 1e-05
    %v9546 = vadd.f32 %v9538, 1e-05
    %v9547 = vadd.f32 %v9539, 1e-05
    %v9548 = vadd.f32 %v9540, 1e-05
    %v9549 = vadd.f32 %v9541, 1e-05
    %v9550 = vadd.f32 %v9542, 1e-05
    %v9551 = vadd.f32 %v9543, 1e-05
    %v9552 = vadd.f32 %v9544, 1e-05
    %v9553 = vrsqrt.pop %v9545
    %v9554 = vrsqrt.pop %v9546
    %v9555 = vrsqrt.pop %v9547
    %v9556 = vrsqrt.pop %v9548
    %v9557 = vrsqrt.pop %v9549
    %v9558 = vrsqrt.pop %v9550
    %v9559 = vrsqrt.pop %v9551
    %v9560 = vrsqrt.pop %v9552
    %v9561 = vmul.f32 %v9497, %v9553
    %v9562 = vmul.f32 %v9498, %v9554
    %v9563 = vmul.f32 %v9499, %v9555
    %v9564 = vmul.f32 %v9500, %v9556
    %v9565 = vmul.f32 %v9501, %v9557
    %v9566 = vmul.f32 %v9502, %v9558
    %v9567 = vmul.f32 %v9503, %v9559
    %v9568 = vmul.f32 %v9504, %v9560
    %v9569 = vlaneseq
    %v9570 = vshrl.u32 %v9569, 7
    %v9571 = vsub.s32 0, %v9570
    %v9572 = vrot.slane %v9464, %v9571
    %v9573 = vmul.f32 %v9561, %v9572
    %v9574 = vmul.f32 %v9562, %v9572
    %v9575 = vmul.f32 %v9563, %v9572
    %v9576 = vmul.f32 %v9564, %v9572
    %v9577 = vmul.f32 %v9565, %v9572
    %v9578 = vmul.f32 %v9566, %v9572
    %v9579 = vmul.f32 %v9567, %v9572
    %v9580 = vmul.f32 %v9568, %v9572
    %v9581 = vlaneseq
    %v9582 = vshrl.u32 %v9581, 7
    %v9583 = vsub.s32 1, %v9582
    %v9584 = vrot.slane %v9464, %v9583
    %v9585 = vadd.f32 %v9573, %v9584
    %v9586 = vadd.f32 %v9574, %v9584
    %v9587 = vadd.f32 %v9575, %v9584
    %v9588 = vadd.f32 %v9576, %v9584
    %v9589 = vadd.f32 %v9577, %v9584
    %v9590 = vadd.f32 %v9578, %v9584
    %v9591 = vadd.f32 %v9579, %v9584
    %v9592 = vadd.f32 %v9580, %v9584
    %v9593 = vsel %vm123, %v9585, -inf
    %v9594 = vrot.slane %v9593, 4
    %v9595 = vmax.f32 %v9593, %v9594
    %v9596 = vrot.slane %v9595, 2
    %v9597 = vmax.f32 %v9595, %v9596
    %v9598 = vrot.slane %v9597, 1
    %v9599 = vmax.f32 %v9597, %v9598
    %v9600 = vsel %vm123, %v9586, -inf
    %v9601 = vrot.slane %v9600, 4
    %v9602 = vmax.f32 %v9600, %v9601
    %v9603 = vrot.slane %v9602, 2
    %v9604 = vmax.f32 %v9602, %v9603
    %v9605 = vrot.slane %v9604, 1
    %v9606 = vmax.f32 %v9604, %v9605
    %v9607 = vsel %vm123, %v9587, -inf
    %v9608 = vrot.slane %v9607, 4
    %v9609 = vmax.f32 %v9607, %v9608
    %v9610 = vrot.slane %v9609, 2
    %v9611 = vmax.f32 %v9609, %v9610
    %v9612 = vrot.slane %v9611, 1
    %v9613 = vmax.f32 %v9611, %v9612
    %v9614 = vsel %vm123, %v9588, -inf
    %v9615 = vrot.slane %v9614, 4
    %v9616 = vmax.f32 %v9614, %v9615
    %v9617 = vrot.slane %v9616, 2
    %v9618 = vmax.f32 %v9616, %v9617
    %v9619 = vrot.slane %v9618, 1
    %v9620 = vmax.f32 %v9618, %v9619
    %v9621 = vsel %vm123, %v9589, -inf
    %v9622 = vrot.slane %v9621, 4
    %v9623 = vmax.f32 %v9621, %v9622
    %v9624 = vrot.slane %v9623, 2
    %v9625 = vmax.f32 %v9623, %v9624
    %v9626 = vrot.slane %v9625, 1
    %v9627 = vmax.f32 %v9625, %v9626
    %v9628 = vsel %vm123, %v9590, -inf
    %v9629 = vrot.slane %v9628, 4
    %v9630 = vmax.f32 %v9628, %v9629
    %v9631 = vrot.slane %v9630, 2
    %v9632 = vmax.f32 %v9630, %v9631
    %v9633 = vrot.slane %v9632, 1
    %v9634 = vmax.f32 %v9632, %v9633
    %v9635 = vsel %vm123, %v9591, -inf
    %v9636 = vrot.slane %v9635, 4
    %v9637 = vmax.f32 %v9635, %v9636
    %v9638 = vrot.slane %v9637, 2
    %v9639 = vmax.f32 %v9637, %v9638
    %v9640 = vrot.slane %v9639, 1
    %v9641 = vmax.f32 %v9639, %v9640
    %v9642 = vsel %vm123, %v9592, -inf
    %v9643 = vrot.slane %v9642, 4
    %v9644 = vmax.f32 %v9642, %v9643
    %v9645 = vrot.slane %v9644, 2
    %v9646 = vmax.f32 %v9644, %v9645
    %v9647 = vrot.slane %v9646, 1
    %v9648 = vmax.f32 %v9646, %v9647
    %vm9657 = vcmask 1041409
    %v9658 = vsel %vm9657, %v9606, %v9599
    %vm9659 = vcmask 1042434
    %v9660 = vsel %vm9659, %v9613, %v9658
    %vm9661 = vcmask 1043459
    %v9662 = vsel %vm9661, %v9620, %v9660
    %vm9663 = vcmask 1044484
    %v9664 = vsel %vm9663, %v9627, %v9662
    %vm9665 = vcmask 1045509
    %v9666 = vsel %vm9665, %v9634, %v9664
    %vm9667 = vcmask 1046534
    %v9668 = vsel %vm9667, %v9641, %v9666
    %vm9669 = vcmask 1047559
    %v9670 = vsel %vm9669, %v9648, %v9668
    %9672 = vst.msk [vmem:[#allocation10] sm:$0xff] %vm123, %v9670
    // Predicated region
    $region46: #{tpu_custom_call.1} parent=1 // pred_check
      _
    $region47: #{tpu_custom_call.1} parent=1 // pred_check_branch
      %9674 = sbr.rel (0) target = $region49
    $region48: #{tpu_custom_call.1} parent=1 // pred_region
      %s9676 = ssub.s32 128, 128
      %9677 = vsyncadd [#allocation4], %s9676
      %s9679 = sshll.u32 [#allocation10], 4
      %s9680 = int_to_ptr.vmem [resolvable:$true] %s9679
      %9682 = dma.vmem_to_hbm [thread:$0]  %s9680, 128, %s7, [#allocation4]
    $region49: #{tpu_custom_call.1} parent=1 // pred_fallthru
      _
    // Predicated region
    $region50: #{tpu_custom_call.1} parent=1 // pred_check
      _
    $region51: #{tpu_custom_call.1} parent=1 // pred_check_branch
      %9684 = sbr.rel (0) target = $region53
    $region52: #{tpu_custom_call.1} parent=1 // pred_region
      %9685 = dma.done [#allocation4], 128
    $region53: #{tpu_custom_call.1} parent=1 // pred_fallthru
      _
    %9686 = vsyncpa [#allocation3], 1
    %9687 = vsyncpa [#allocation6], 1
    %9688 = vsyncpa [#allocation9], 1
    %9689 = vsyncpa [#allocation4], 1

</llo_original>
